<compile_context>
chip_gen: v7x
topology: tpu7x:2x2x1
jax: 0.10.0
libtpu: 0.0.40
codegen_flags: <defaults>
</compile_context>

<pallas_src>
import jax
import jax.numpy as jnp
from jax.experimental import pallas as pl
from jax.experimental.pallas import tpu as pltpu

CONV_LEN = 13
PAD = CONV_LEN // 2
NUM_FILTERS = 25
NUM_PHASES = 16          # 2 ** (number of pooling layers)
BN_EPS = 1e-5


def _elu(z):
    # ELU(alpha=1); clamp the exp branch so the unused lane never overflows.
    return jnp.where(z > 0, z, jnp.exp(jnp.minimum(z, 0.0)) - 1.0)


def _shifted_phase(phase, s):
    # value[l] = phase[l + s], with the zero "halo" supplied by the >= |s|
    # zero pad lanes at the tail of every phase buffer (L_pad >= L + 4).
    if s == 0:
        return phase
    return jnp.roll(phase, -s, axis=1)


def _extended_phases(phases):
    """phases: list of P arrays (C, L_pad).  Entry i of the result is
    'extended phase' r = i - PAD, i.e. the signal sample at original time
    l*P + r (zero outside the valid range)."""
    n_ph = len(phases)
    ext = []
    for i in range(n_ph + 2 * PAD):
        r = i - PAD
        ext.append(_shifted_phase(phases[r % n_ph], r // n_ph))
    return ext


def _im2col(phases):
    """(13*C_in, P*L_pad) im2col tile; rows are k-major / channel-minor to
    match the weight flattening w_flat[c_out, k*C_in + c_in]."""
    n_ph = len(phases)
    ext = _extended_phases(phases)
    rows = []
    for k in range(CONV_LEN):
        rows.append(jnp.concatenate([ext[j + k] for j in range(n_ph)], axis=1))
    return jnp.concatenate(rows, axis=0)


def _pool(act_wide, n_phases, l_pad, half_mask, to_bf16):
    """AvgPool(1,2): pooled phase j = 0.5*(phase 2j + phase 2j+1).  half_mask
    folds the 0.5 and the zeroing of the padded tail lanes into one multiply."""
    outs = []
    for j in range(n_phases // 2):
        a = act_wide[:, (2 * j) * l_pad:(2 * j + 1) * l_pad]
        b = act_wide[:, (2 * j + 1) * l_pad:(2 * j + 2) * l_pad]
        y = (a + b) * half_mask
        outs.append(y.astype(jnp.bfloat16) if to_bf16 else y)
    return outs


def _make_kernel(n_elec, length, l_pad, cls):
    def kernel(x_ref, w1_ref, b1_ref, wdw_ref, sh2_ref,
               w2_ref, b2_ref, w3_ref, b3_ref, w4_ref, b4_ref,
               wfc_ref, bfc_ref, o_ref):
        lane = jax.lax.broadcasted_iota(jnp.int32, (1, l_pad), 1)
        half_mask = jnp.where(lane < length, 0.5, 0.0).astype(jnp.float32)

        # ------------------------------------------------------------ block1
        x = x_ref[0]                                      # (16*E, Lp) bf16
        phases = [x[p * n_elec:(p + 1) * n_elec, :] for p in range(NUM_PHASES)]
        xcol = _im2col(phases)                            # (13*E, 16*Lp) bf16
        z = jnp.dot(w1_ref[...], xcol,
                    preferred_element_type=jnp.float32) + b1_ref[...]
        z = _elu(z).astype(jnp.bfloat16)                  # (E*25, 16*Lp)
        # depthwise conv_spat + folded BN2, expressed as a (25, E*25) matmul
        y = jnp.dot(wdw_ref[...], z,
                    preferred_element_type=jnp.float32) + sh2_ref[...]
        y = _elu(y)                                       # (25, 16*Lp) f32
        phases = _pool(y, NUM_PHASES, l_pad, half_mask, True)   # 8 x (25, Lp)

        # --------------------------------------------------------- block2..4
        def conv_block(ph, w_ref, b_ref, to_bf16):
            xc = _im2col(ph)                              # (13*Cin, P*Lp) bf16
            acc = jnp.dot(w_ref[...], xc,
                          preferred_element_type=jnp.float32) + b_ref[...]
            return _pool(_elu(acc), len(ph), l_pad, half_mask, to_bf16)

        phases = conv_block(phases, w2_ref, b2_ref, True)   # 4 x (50,  Lp)
        phases = conv_block(phases, w3_ref, b3_ref, True)   # 2 x (100, Lp)
        phases = conv_block(phases, w4_ref, b4_ref, False)  # 1 x (200, Lp) f32
        feat = phases[0]

        # -------------------------------------------------------------- fc1
        if cls:
            prod = feat * wfc_ref[...]      # padded wfc columns are zero
            logit = jnp.sum(jnp.sum(prod, axis=1, keepdims=True),
                            axis=0, keepdims=True) + bfc_ref[...]
            o_ref[0] = 1.0 / (1.0 + jnp.exp(-logit))         # Sigmoid
        else:
            o_ref[0] = feat

    return kernel


def deep4net_forward(x, params, cls=True):
    """x: (B, 1, E, T) float32, NCHW like the PyTorch module."""
    b, _, n_elec, t = x.shape
    assert t % NUM_PHASES == 0, "time length must be divisible by 16 (4 pools)"
    length = t // NUM_PHASES
    # lane-dense per-phase length with >= 4 spare zero lanes for the tap rolls
    l_pad = (-(-(length + 4) // 128)) * 128
    f1 = NUM_FILTERS

    # ---- host side: polyphase split, lane pad, collapse (phase, elec) ----
    x_ph = x[:, 0].reshape(b, n_elec, length, NUM_PHASES).transpose(0, 3, 1, 2)
    x_ph = jnp.pad(x_ph, ((0, 0), (0, 0), (0, 0), (0, l_pad - length)))
    x_ph = x_ph.reshape(b, NUM_PHASES * n_elec, l_pad).astype(jnp.bfloat16)

    def fold_bn(gamma, beta, mean, var):
        scale = gamma / jnp.sqrt(var + BN_EPS)
        return scale, beta - mean * scale

    # ------------------------------ block1 packing ------------------------
    p1 = params["block1"]
    w1 = p1["conv_w"].reshape(f1, CONV_LEN)              # (25,1,1,13)->(25,13)
    b1 = p1["conv_b"]
    sc1, sh1 = fold_bn(*p1["bn1"])
    wdw = p1["spat_w"].reshape(f1, n_elec)               # (25,1,E,1)->(25,E)
    sc2, sh2 = fold_bn(*p1["bn2"])

    w1s = sc1[:, None] * w1                               # fold BN1 into conv
    # block-diagonal weight: row e*25+c, col k*E+e' -> (e==e') * w1s[c,k]
    w1blk = (jnp.eye(n_elec)[:, None, None, :] * w1s[None, :, :, None])
    w1blk = w1blk.reshape(n_elec * f1, CONV_LEN * n_elec).astype(jnp.bfloat16)
    b1blk = jnp.tile((sc1 * b1 + sh1)[:, None], (n_elec, 1))       # (E*25, 1)

    wdws = sc2[:, None] * wdw                             # fold BN2 scale
    # (25, E*25): col e*25+c' -> (c==c') * wdws[c, e]
    wdwmat = (jnp.eye(f1)[:, None, :] * wdws[:, :, None]).reshape(
        f1, n_elec * f1).astype(jnp.bfloat16)
    sh2col = sh2[:, None]                                 # (25, 1)

    # ------------------------------ block2..4 packing ---------------------
    def fold_block(p):
        w, bias = p["conv_w"], p["conv_b"]
        c_out, c_in = w.shape[0], w.shape[1]
        w = w.reshape(c_out, c_in, CONV_LEN)
        scale, shift = fold_bn(*p["bn"])
        wf = (scale[:, None, None] * w).transpose(0, 2, 1).reshape(
            c_out, CONV_LEN * c_in).astype(jnp.bfloat16)
        return wf, (scale * bias + shift)[:, None]

    w2f, b2f = fold_block(params["block2"])
    w3f, b3f = fold_block(params["block3"])
    w4f, b4f = fold_block(params["block4"])
    c4 = w4f.shape[0]

    # ------------------------------ fc packing ----------------------------
    wfc, bfc = params["fc"]["w"], params["fc"]["b"]       # (1, dim_feat), (1,)
    wfc2d = wfc.reshape(c4, length)                        # flatten order (c, t)
    wfc2d = jnp.pad(wfc2d, ((0, 0), (0, l_pad - length)))  # zero pad columns
    bfc2d = bfc.reshape(1, 1)

    def full_spec(a):
        return pl.BlockSpec(a.shape, lambda i, nd=a.ndim: (0,) * nd)

    in_specs = [
        pl.BlockSpec((1, NUM_PHASES * n_elec, l_pad), lambda i: (i, 0, 0)),
        full_spec(w1blk), full_spec(b1blk), full_spec(wdwmat), full_spec(sh2col),
        full_spec(w2f), full_spec(b2f), full_spec(w3f), full_spec(b3f),
        full_spec(w4f), full_spec(b4f), full_spec(wfc2d), full_spec(bfc2d),
    ]
    if cls:
        out_shape = jax.ShapeDtypeStruct((b, 1, 1), jnp.float32)
        out_spec = pl.BlockSpec((1, 1, 1), lambda i: (i, 0, 0))
    else:
        out_shape = jax.ShapeDtypeStruct((b, c4, l_pad), jnp.float32)
        out_spec = pl.BlockSpec((1, c4, l_pad), lambda i: (i, 0, 0))

    out = pl.pallas_call(
        _make_kernel(n_elec, length, l_pad, cls),
        out_shape=out_shape,
        grid=(b,),
        in_specs=in_specs,
        out_specs=out_spec,
        compiler_params=pltpu.CompilerParams(
            dimension_semantics=("parallel",),
            vmem_limit_bytes=48 * 1024 * 1024),
    )(x_ph, w1blk, b1blk, wdwmat, sh2col, w2f, b2f, w3f, b3f, w4f, b4f,
      wfc2d, bfc2d)

    if cls:
        return out.reshape(b, 1)
    return out[:, :, :length].reshape(b, c4 * length)


# --------------------------------------------------------------------------
# Pure-JAX (f32) reference of the PyTorch forward pass, for validation.
# --------------------------------------------------------------------------
def _reference_forward(x, params, cls=True):
    def conv1x13(inp, w, bias):
        out = jax.lax.conv_general_dilated(
            inp, w, window_strides=(1, 1), padding=((0, 0), (PAD, PAD)),
            dimension_numbers=("NCHW", "OIHW", "NCHW"))
        return out + bias.reshape(1, -1, 1, 1)

    def bn(z, gamma, beta, mean, var):
        s = gamma / jnp.sqrt(var + BN_EPS)
        return z * s.reshape(1, -1, 1, 1) + (beta - mean * s).reshape(1, -1, 1, 1)

    def pool(z):
        bb, cc, hh, tt = z.shape
        return z.reshape(bb, cc, hh, tt // 2, 2).mean(-1)

    p1 = params["block1"]
    z = _elu(bn(conv1x13(x, p1["conv_w"], p1["conv_b"]), *p1["bn1"]))
    z = jax.lax.conv_general_dilated(
        z, p1["spat_w"], window_strides=(1, 1), padding="VALID",
        dimension_numbers=("NCHW", "OIHW", "NCHW"),
        feature_group_count=NUM_FILTERS)
    z = pool(_elu(bn(z, *p1["bn2"])))
    for name in ("block2", "block3", "block4"):
        p = params[name]
        z = pool(_elu(bn(conv1x13(z, p["conv_w"], p["conv_b"]), *p["bn"])))
    feat = z.reshape(z.shape[0], -1)
    if not cls:
        return feat
    logit = feat @ params["fc"]["w"].T + params["fc"]["b"]
    return jax.nn.sigmoid(logit)


# --------------------------------------------------------------------------
# Deterministic parameter construction + run
# --------------------------------------------------------------------------
if __name__ == "__main__":
    B, E, T = 2, 3, 256          # small stand-in for input_size=[3, 7680]
    F1 = NUM_FILTERS
    F2, F3, F4 = F1 * 2, F1 * 4, F1 * 8

    keys = iter(jax.random.split(jax.random.PRNGKey(0), 40))

    def normal(shape, scale=0.1):
        return scale * jax.random.normal(next(keys), shape, jnp.float32)

    def bn_params(c):
        gamma = 1.0 + 0.1 * jax.random.normal(next(keys), (c,), jnp.float32)
        beta = 0.1 * jax.random.normal(next(keys), (c,), jnp.float32)
        mean = 0.05 * jax.random.normal(next(keys), (c,), jnp.float32)
        var = 1.0 + 0.1 * jax.random.uniform(next(keys), (c,), jnp.float32)
        return (gamma, beta, mean, var)

    params = {
        "block1": dict(conv_w=normal((F1, 1, 1, CONV_LEN)),
                       conv_b=normal((F1,), 0.05),
                       bn1=bn_params(F1),
                       spat_w=normal((F1, 1, E, 1), 0.3),
                       bn2=bn_params(F1)),
        "block2": dict(conv_w=normal((F2, F1, 1, CONV_LEN)),
                       conv_b=normal((F2,), 0.05), bn=bn_params(F2)),
        "block3": dict(conv_w=normal((F3, F2, 1, CONV_LEN)),
                       conv_b=normal((F3,), 0.05), bn=bn_params(F3)),
        "block4": dict(conv_w=normal((F4, F3, 1, CONV_LEN)),
                       conv_b=normal((F4,), 0.05), bn=bn_params(F4)),
    }
    dim_feat = F4 * (T // 16)
    params["fc"] = dict(w=normal((1, dim_feat), 0.05), b=normal((1,), 0.05))

    x = jax.random.normal(next(keys), (B, 1, E, T), jnp.float32)

    fwd = jax.jit(deep4net_forward, static_argnames=("cls",))
    feat = jax.block_until_ready(fwd(x, params, cls=False))
    prob = jax.block_until_ready(fwd(x, params, cls=True))

    feat_ref = _reference_forward(x, params, cls=False)
    prob_ref = _reference_forward(x, params, cls=True)

    assert prob.shape == (B, 1), prob.shape
    assert feat.shape == (B, dim_feat), feat.shape
    assert bool(jnp.all(jnp.isfinite(prob))) and bool(jnp.all(jnp.isfinite(feat)))
    assert bool(jnp.all((prob >= 0.0) & (prob <= 1.0)))

    # bf16 matmul operands -> loose, robust error statistics vs the f32 ref
    feat_err = float(jnp.mean(jnp.abs(feat - feat_ref)))
    prob_err = float(jnp.max(jnp.abs(prob - prob_ref)))
    assert feat_err < 8e-2, f"feature mean abs err too large: {feat_err}"
    assert prob_err < 8e-2, f"probability max abs err too large: {prob_err}"

    print("KERNEL_OK")
</pallas_src>

<mosaic_0001>
module attributes {stable_mosaic.version = 11 : i64} {
  func.func @kernel(%arg0: i32, %arg1: memref<1x48x128xbf16, #tpu.memory_space<vmem>>, %arg2: memref<75x39xbf16, #tpu.memory_space<vmem>>, %arg3: memref<75x1xf32, #tpu.memory_space<vmem>>, %arg4: memref<25x75xbf16, #tpu.memory_space<vmem>>, %arg5: memref<25x1xf32, #tpu.memory_space<vmem>>, %arg6: memref<50x325xbf16, #tpu.memory_space<vmem>>, %arg7: memref<50x1xf32, #tpu.memory_space<vmem>>, %arg8: memref<100x650xbf16, #tpu.memory_space<vmem>>, %arg9: memref<100x1xf32, #tpu.memory_space<vmem>>, %arg10: memref<200x1300xbf16, #tpu.memory_space<vmem>>, %arg11: memref<200x1xf32, #tpu.memory_space<vmem>>, %arg12: memref<200x128xf32, #tpu.memory_space<vmem>>, %arg13: memref<1x1xf32, #tpu.memory_space<vmem>>, %arg14: memref<1x200x128xf32, #tpu.memory_space<vmem>>) attributes {dimension_semantics = [#tpu.dimension_semantics<parallel>], iteration_bounds = array<i64: 2>, scalar_prefetch = 0 : i64, scratch_operands = 0 : i64, tpu.core_type = #tpu.core_type<tc>, window_params = [{transform_indices = @transform_0, window_bounds = array<i64: 1, 48, 128>}, {pipeline_mode = #tpu.pipeline_mode<synchronous>, transform_indices = @transform_1, window_bounds = array<i64: 75, 39>}, {pipeline_mode = #tpu.pipeline_mode<synchronous>, transform_indices = @transform_2, window_bounds = array<i64: 75, 1>}, {pipeline_mode = #tpu.pipeline_mode<synchronous>, transform_indices = @transform_3, window_bounds = array<i64: 25, 75>}, {pipeline_mode = #tpu.pipeline_mode<synchronous>, transform_indices = @transform_4, window_bounds = array<i64: 25, 1>}, {pipeline_mode = #tpu.pipeline_mode<synchronous>, transform_indices = @transform_5, window_bounds = array<i64: 50, 325>}, {pipeline_mode = #tpu.pipeline_mode<synchronous>, transform_indices = @transform_6, window_bounds = array<i64: 50, 1>}, {pipeline_mode = #tpu.pipeline_mode<synchronous>, transform_indices = @transform_7, window_bounds = array<i64: 100, 650>}, {pipeline_mode = #tpu.pipeline_mode<synchronous>, transform_indices = @transform_8, window_bounds = array<i64: 100, 1>}, {pipeline_mode = #tpu.pipeline_mode<synchronous>, transform_indices = @transform_9, window_bounds = array<i64: 200, 1300>}, {pipeline_mode = #tpu.pipeline_mode<synchronous>, transform_indices = @transform_10, window_bounds = array<i64: 200, 1>}, {pipeline_mode = #tpu.pipeline_mode<synchronous>, transform_indices = @transform_11, window_bounds = array<i64: 200, 128>}, {pipeline_mode = #tpu.pipeline_mode<synchronous>, transform_indices = @transform_12, window_bounds = array<i64: 1, 1>}, {transform_indices = @transform_13, window_bounds = array<i64: 1, 200, 128>}]} {
    %0 = tpu.iota {dimensions = array<i32: 1>} : vector<1x128xi32>
    %c16_i32 = arith.constant 16 : i32
    %1 = vector.broadcast %c16_i32 : i32 to vector<1x128xi32>
    %2 = arith.cmpi slt, %0, %1 : vector<1x128xi32>
    %cst = arith.constant 5.000000e-01 : f32
    %cst_0 = arith.constant 0.000000e+00 : f32
    %3 = vector.broadcast %cst : f32 to vector<1x128xf32>
    %4 = vector.broadcast %cst_0 : f32 to vector<1x128xf32>
    %5 = arith.select %2, %3, %4 : vector<1x128xi1>, vector<1x128xf32>
    %c0 = arith.constant 0 : index
    %c0_1 = arith.constant 0 : index
    %c0_2 = arith.constant 0 : index
    %6 = vector.load %arg1[%c0, %c0_1, %c0_2] : memref<1x48x128xbf16, #tpu.memory_space<vmem>>, vector<1x48x128xbf16>
    %7 = vector.shape_cast %6 : vector<1x48x128xbf16> to vector<48x128xbf16>
    %8 = vector.extract_strided_slice %7 {offsets = [0, 0], sizes = [3, 128], strides = [1, 1]} : vector<48x128xbf16> to vector<3x128xbf16>
    %9 = vector.extract_strided_slice %7 {offsets = [3, 0], sizes = [3, 128], strides = [1, 1]} : vector<48x128xbf16> to vector<3x128xbf16>
    %10 = vector.extract_strided_slice %7 {offsets = [6, 0], sizes = [3, 128], strides = [1, 1]} : vector<48x128xbf16> to vector<3x128xbf16>
    %11 = vector.extract_strided_slice %7 {offsets = [9, 0], sizes = [3, 128], strides = [1, 1]} : vector<48x128xbf16> to vector<3x128xbf16>
    %12 = vector.extract_strided_slice %7 {offsets = [12, 0], sizes = [3, 128], strides = [1, 1]} : vector<48x128xbf16> to vector<3x128xbf16>
    %13 = vector.extract_strided_slice %7 {offsets = [15, 0], sizes = [3, 128], strides = [1, 1]} : vector<48x128xbf16> to vector<3x128xbf16>
    %14 = vector.extract_strided_slice %7 {offsets = [18, 0], sizes = [3, 128], strides = [1, 1]} : vector<48x128xbf16> to vector<3x128xbf16>
    %15 = vector.extract_strided_slice %7 {offsets = [21, 0], sizes = [3, 128], strides = [1, 1]} : vector<48x128xbf16> to vector<3x128xbf16>
    %16 = vector.extract_strided_slice %7 {offsets = [24, 0], sizes = [3, 128], strides = [1, 1]} : vector<48x128xbf16> to vector<3x128xbf16>
    %17 = vector.extract_strided_slice %7 {offsets = [27, 0], sizes = [3, 128], strides = [1, 1]} : vector<48x128xbf16> to vector<3x128xbf16>
    %18 = vector.extract_strided_slice %7 {offsets = [30, 0], sizes = [3, 128], strides = [1, 1]} : vector<48x128xbf16> to vector<3x128xbf16>
    %19 = vector.extract_strided_slice %7 {offsets = [33, 0], sizes = [3, 128], strides = [1, 1]} : vector<48x128xbf16> to vector<3x128xbf16>
    %20 = vector.extract_strided_slice %7 {offsets = [36, 0], sizes = [3, 128], strides = [1, 1]} : vector<48x128xbf16> to vector<3x128xbf16>
    %21 = vector.extract_strided_slice %7 {offsets = [39, 0], sizes = [3, 128], strides = [1, 1]} : vector<48x128xbf16> to vector<3x128xbf16>
    %22 = vector.extract_strided_slice %7 {offsets = [42, 0], sizes = [3, 128], strides = [1, 1]} : vector<48x128xbf16> to vector<3x128xbf16>
    %23 = vector.extract_strided_slice %7 {offsets = [45, 0], sizes = [3, 128], strides = [1, 1]} : vector<48x128xbf16> to vector<3x128xbf16>
    %24 = vector.extract_strided_slice %18 {offsets = [0, 127], sizes = [3, 1], strides = [1, 1]} : vector<3x128xbf16> to vector<3x1xbf16>
    %25 = vector.extract_strided_slice %18 {offsets = [0, 0], sizes = [3, 127], strides = [1, 1]} : vector<3x128xbf16> to vector<3x127xbf16>
    %26 = tpu.concatenate %24, %25 in 1 : vector<3x1xbf16>, vector<3x127xbf16> -> vector<3x128xbf16>
    %27 = vector.extract_strided_slice %19 {offsets = [0, 127], sizes = [3, 1], strides = [1, 1]} : vector<3x128xbf16> to vector<3x1xbf16>
    %28 = vector.extract_strided_slice %19 {offsets = [0, 0], sizes = [3, 127], strides = [1, 1]} : vector<3x128xbf16> to vector<3x127xbf16>
    %29 = tpu.concatenate %27, %28 in 1 : vector<3x1xbf16>, vector<3x127xbf16> -> vector<3x128xbf16>
    %30 = vector.extract_strided_slice %20 {offsets = [0, 127], sizes = [3, 1], strides = [1, 1]} : vector<3x128xbf16> to vector<3x1xbf16>
    %31 = vector.extract_strided_slice %20 {offsets = [0, 0], sizes = [3, 127], strides = [1, 1]} : vector<3x128xbf16> to vector<3x127xbf16>
    %32 = tpu.concatenate %30, %31 in 1 : vector<3x1xbf16>, vector<3x127xbf16> -> vector<3x128xbf16>
    %33 = vector.extract_strided_slice %21 {offsets = [0, 127], sizes = [3, 1], strides = [1, 1]} : vector<3x128xbf16> to vector<3x1xbf16>
    %34 = vector.extract_strided_slice %21 {offsets = [0, 0], sizes = [3, 127], strides = [1, 1]} : vector<3x128xbf16> to vector<3x127xbf16>
    %35 = tpu.concatenate %33, %34 in 1 : vector<3x1xbf16>, vector<3x127xbf16> -> vector<3x128xbf16>
    %36 = vector.extract_strided_slice %22 {offsets = [0, 127], sizes = [3, 1], strides = [1, 1]} : vector<3x128xbf16> to vector<3x1xbf16>
    %37 = vector.extract_strided_slice %22 {offsets = [0, 0], sizes = [3, 127], strides = [1, 1]} : vector<3x128xbf16> to vector<3x127xbf16>
    %38 = tpu.concatenate %36, %37 in 1 : vector<3x1xbf16>, vector<3x127xbf16> -> vector<3x128xbf16>
    %39 = vector.extract_strided_slice %23 {offsets = [0, 127], sizes = [3, 1], strides = [1, 1]} : vector<3x128xbf16> to vector<3x1xbf16>
    %40 = vector.extract_strided_slice %23 {offsets = [0, 0], sizes = [3, 127], strides = [1, 1]} : vector<3x128xbf16> to vector<3x127xbf16>
    %41 = tpu.concatenate %39, %40 in 1 : vector<3x1xbf16>, vector<3x127xbf16> -> vector<3x128xbf16>
    %42 = vector.extract_strided_slice %8 {offsets = [0, 1], sizes = [3, 127], strides = [1, 1]} : vector<3x128xbf16> to vector<3x127xbf16>
    %43 = vector.extract_strided_slice %8 {offsets = [0, 0], sizes = [3, 1], strides = [1, 1]} : vector<3x128xbf16> to vector<3x1xbf16>
    %44 = tpu.concatenate %42, %43 in 1 : vector<3x127xbf16>, vector<3x1xbf16> -> vector<3x128xbf16>
    %45 = vector.extract_strided_slice %9 {offsets = [0, 1], sizes = [3, 127], strides = [1, 1]} : vector<3x128xbf16> to vector<3x127xbf16>
    %46 = vector.extract_strided_slice %9 {offsets = [0, 0], sizes = [3, 1], strides = [1, 1]} : vector<3x128xbf16> to vector<3x1xbf16>
    %47 = tpu.concatenate %45, %46 in 1 : vector<3x127xbf16>, vector<3x1xbf16> -> vector<3x128xbf16>
    %48 = vector.extract_strided_slice %10 {offsets = [0, 1], sizes = [3, 127], strides = [1, 1]} : vector<3x128xbf16> to vector<3x127xbf16>
    %49 = vector.extract_strided_slice %10 {offsets = [0, 0], sizes = [3, 1], strides = [1, 1]} : vector<3x128xbf16> to vector<3x1xbf16>
    %50 = tpu.concatenate %48, %49 in 1 : vector<3x127xbf16>, vector<3x1xbf16> -> vector<3x128xbf16>
    %51 = vector.extract_strided_slice %11 {offsets = [0, 1], sizes = [3, 127], strides = [1, 1]} : vector<3x128xbf16> to vector<3x127xbf16>
    %52 = vector.extract_strided_slice %11 {offsets = [0, 0], sizes = [3, 1], strides = [1, 1]} : vector<3x128xbf16> to vector<3x1xbf16>
    %53 = tpu.concatenate %51, %52 in 1 : vector<3x127xbf16>, vector<3x1xbf16> -> vector<3x128xbf16>
    %54 = vector.extract_strided_slice %12 {offsets = [0, 1], sizes = [3, 127], strides = [1, 1]} : vector<3x128xbf16> to vector<3x127xbf16>
    %55 = vector.extract_strided_slice %12 {offsets = [0, 0], sizes = [3, 1], strides = [1, 1]} : vector<3x128xbf16> to vector<3x1xbf16>
    %56 = tpu.concatenate %54, %55 in 1 : vector<3x127xbf16>, vector<3x1xbf16> -> vector<3x128xbf16>
    %57 = vector.extract_strided_slice %13 {offsets = [0, 1], sizes = [3, 127], strides = [1, 1]} : vector<3x128xbf16> to vector<3x127xbf16>
    %58 = vector.extract_strided_slice %13 {offsets = [0, 0], sizes = [3, 1], strides = [1, 1]} : vector<3x128xbf16> to vector<3x1xbf16>
    %59 = tpu.concatenate %57, %58 in 1 : vector<3x127xbf16>, vector<3x1xbf16> -> vector<3x128xbf16>
    %60 = tpu.concatenate %26, %29, %32, %35, %38, %41, %8, %9, %10, %11, %12, %13, %14, %15, %16, %17 in 1 : vector<3x128xbf16>, vector<3x128xbf16>, vector<3x128xbf16>, vector<3x128xbf16>, vector<3x128xbf16>, vector<3x128xbf16>, vector<3x128xbf16>, vector<3x128xbf16>, vector<3x128xbf16>, vector<3x128xbf16>, vector<3x128xbf16>, vector<3x128xbf16>, vector<3x128xbf16>, vector<3x128xbf16>, vector<3x128xbf16>, vector<3x128xbf16> -> vector<3x2048xbf16>
    %61 = tpu.concatenate %29, %32, %35, %38, %41, %8, %9, %10, %11, %12, %13, %14, %15, %16, %17, %18 in 1 : vector<3x128xbf16>, vector<3x128xbf16>, vector<3x128xbf16>, vector<3x128xbf16>, vector<3x128xbf16>, vector<3x128xbf16>, vector<3x128xbf16>, vector<3x128xbf16>, vector<3x128xbf16>, vector<3x128xbf16>, vector<3x128xbf16>, vector<3x128xbf16>, vector<3x128xbf16>, vector<3x128xbf16>, vector<3x128xbf16>, vector<3x128xbf16> -> vector<3x2048xbf16>
    %62 = tpu.concatenate %32, %35, %38, %41, %8, %9, %10, %11, %12, %13, %14, %15, %16, %17, %18, %19 in 1 : vector<3x128xbf16>, vector<3x128xbf16>, vector<3x128xbf16>, vector<3x128xbf16>, vector<3x128xbf16>, vector<3x128xbf16>, vector<3x128xbf16>, vector<3x128xbf16>, vector<3x128xbf16>, vector<3x128xbf16>, vector<3x128xbf16>, vector<3x128xbf16>, vector<3x128xbf16>, vector<3x128xbf16>, vector<3x128xbf16>, vector<3x128xbf16> -> vector<3x2048xbf16>
    %63 = tpu.concatenate %35, %38, %41, %8, %9, %10, %11, %12, %13, %14, %15, %16, %17, %18, %19, %20 in 1 : vector<3x128xbf16>, vector<3x128xbf16>, vector<3x128xbf16>, vector<3x128xbf16>, vector<3x128xbf16>, vector<3x128xbf16>, vector<3x128xbf16>, vector<3x128xbf16>, vector<3x128xbf16>, vector<3x128xbf16>, vector<3x128xbf16>, vector<3x128xbf16>, vector<3x128xbf16>, vector<3x128xbf16>, vector<3x128xbf16>, vector<3x128xbf16> -> vector<3x2048xbf16>
    %64 = tpu.concatenate %38, %41, %8, %9, %10, %11, %12, %13, %14, %15, %16, %17, %18, %19, %20, %21 in 1 : vector<3x128xbf16>, vector<3x128xbf16>, vector<3x128xbf16>, vector<3x128xbf16>, vector<3x128xbf16>, vector<3x128xbf16>, vector<3x128xbf16>, vector<3x128xbf16>, vector<3x128xbf16>, vector<3x128xbf16>, vector<3x128xbf16>, vector<3x128xbf16>, vector<3x128xbf16>, vector<3x128xbf16>, vector<3x128xbf16>, vector<3x128xbf16> -> vector<3x2048xbf16>
    %65 = tpu.concatenate %41, %8, %9, %10, %11, %12, %13, %14, %15, %16, %17, %18, %19, %20, %21, %22 in 1 : vector<3x128xbf16>, vector<3x128xbf16>, vector<3x128xbf16>, vector<3x128xbf16>, vector<3x128xbf16>, vector<3x128xbf16>, vector<3x128xbf16>, vector<3x128xbf16>, vector<3x128xbf16>, vector<3x128xbf16>, vector<3x128xbf16>, vector<3x128xbf16>, vector<3x128xbf16>, vector<3x128xbf16>, vector<3x128xbf16>, vector<3x128xbf16> -> vector<3x2048xbf16>
    %66 = tpu.concatenate %8, %9, %10, %11, %12, %13, %14, %15, %16, %17, %18, %19, %20, %21, %22, %23 in 1 : vector<3x128xbf16>, vector<3x128xbf16>, vector<3x128xbf16>, vector<3x128xbf16>, vector<3x128xbf16>, vector<3x128xbf16>, vector<3x128xbf16>, vector<3x128xbf16>, vector<3x128xbf16>, vector<3x128xbf16>, vector<3x128xbf16>, vector<3x128xbf16>, vector<3x128xbf16>, vector<3x128xbf16>, vector<3x128xbf16>, vector<3x128xbf16> -> vector<3x2048xbf16>
    %67 = tpu.concatenate %9, %10, %11, %12, %13, %14, %15, %16, %17, %18, %19, %20, %21, %22, %23, %44 in 1 : vector<3x128xbf16>, vector<3x128xbf16>, vector<3x128xbf16>, vector<3x128xbf16>, vector<3x128xbf16>, vector<3x128xbf16>, vector<3x128xbf16>, vector<3x128xbf16>, vector<3x128xbf16>, vector<3x128xbf16>, vector<3x128xbf16>, vector<3x128xbf16>, vector<3x128xbf16>, vector<3x128xbf16>, vector<3x128xbf16>, vector<3x128xbf16> -> vector<3x2048xbf16>
    %68 = tpu.concatenate %10, %11, %12, %13, %14, %15, %16, %17, %18, %19, %20, %21, %22, %23, %44, %47 in 1 : vector<3x128xbf16>, vector<3x128xbf16>, vector<3x128xbf16>, vector<3x128xbf16>, vector<3x128xbf16>, vector<3x128xbf16>, vector<3x128xbf16>, vector<3x128xbf16>, vector<3x128xbf16>, vector<3x128xbf16>, vector<3x128xbf16>, vector<3x128xbf16>, vector<3x128xbf16>, vector<3x128xbf16>, vector<3x128xbf16>, vector<3x128xbf16> -> vector<3x2048xbf16>
    %69 = tpu.concatenate %11, %12, %13, %14, %15, %16, %17, %18, %19, %20, %21, %22, %23, %44, %47, %50 in 1 : vector<3x128xbf16>, vector<3x128xbf16>, vector<3x128xbf16>, vector<3x128xbf16>, vector<3x128xbf16>, vector<3x128xbf16>, vector<3x128xbf16>, vector<3x128xbf16>, vector<3x128xbf16>, vector<3x128xbf16>, vector<3x128xbf16>, vector<3x128xbf16>, vector<3x128xbf16>, vector<3x128xbf16>, vector<3x128xbf16>, vector<3x128xbf16> -> vector<3x2048xbf16>
    %70 = tpu.concatenate %12, %13, %14, %15, %16, %17, %18, %19, %20, %21, %22, %23, %44, %47, %50, %53 in 1 : vector<3x128xbf16>, vector<3x128xbf16>, vector<3x128xbf16>, vector<3x128xbf16>, vector<3x128xbf16>, vector<3x128xbf16>, vector<3x128xbf16>, vector<3x128xbf16>, vector<3x128xbf16>, vector<3x128xbf16>, vector<3x128xbf16>, vector<3x128xbf16>, vector<3x128xbf16>, vector<3x128xbf16>, vector<3x128xbf16>, vector<3x128xbf16> -> vector<3x2048xbf16>
    %71 = tpu.concatenate %13, %14, %15, %16, %17, %18, %19, %20, %21, %22, %23, %44, %47, %50, %53, %56 in 1 : vector<3x128xbf16>, vector<3x128xbf16>, vector<3x128xbf16>, vector<3x128xbf16>, vector<3x128xbf16>, vector<3x128xbf16>, vector<3x128xbf16>, vector<3x128xbf16>, vector<3x128xbf16>, vector<3x128xbf16>, vector<3x128xbf16>, vector<3x128xbf16>, vector<3x128xbf16>, vector<3x128xbf16>, vector<3x128xbf16>, vector<3x128xbf16> -> vector<3x2048xbf16>
    %72 = tpu.concatenate %14, %15, %16, %17, %18, %19, %20, %21, %22, %23, %44, %47, %50, %53, %56, %59 in 1 : vector<3x128xbf16>, vector<3x128xbf16>, vector<3x128xbf16>, vector<3x128xbf16>, vector<3x128xbf16>, vector<3x128xbf16>, vector<3x128xbf16>, vector<3x128xbf16>, vector<3x128xbf16>, vector<3x128xbf16>, vector<3x128xbf16>, vector<3x128xbf16>, vector<3x128xbf16>, vector<3x128xbf16>, vector<3x128xbf16>, vector<3x128xbf16> -> vector<3x2048xbf16>
    %73 = tpu.concatenate %60, %61, %62, %63, %64, %65, %66, %67, %68, %69, %70, %71, %72 in 0 : vector<3x2048xbf16>, vector<3x2048xbf16>, vector<3x2048xbf16>, vector<3x2048xbf16>, vector<3x2048xbf16>, vector<3x2048xbf16>, vector<3x2048xbf16>, vector<3x2048xbf16>, vector<3x2048xbf16>, vector<3x2048xbf16>, vector<3x2048xbf16>, vector<3x2048xbf16>, vector<3x2048xbf16> -> vector<39x2048xbf16>
    %c0_3 = arith.constant 0 : index
    %c0_4 = arith.constant 0 : index
    %74 = vector.load %arg2[%c0_3, %c0_4] : memref<75x39xbf16, #tpu.memory_space<vmem>>, vector<75x39xbf16>
    %cst_5 = arith.constant dense<0.000000e+00> : vector<75x2048xf32>
    %75 = tpu.matmul %74, %73, %cst_5 {dimension_numbers = #tpu.dot_dimension_numbers<[1], [0], [0], [1], [0, 0, 1, 1], [], []>} : vector<75x39xbf16>, vector<39x2048xbf16>, vector<75x2048xf32> -> vector<75x2048xf32>
    %c0_6 = arith.constant 0 : index
    %c0_7 = arith.constant 0 : index
    %76 = vector.load %arg3[%c0_6, %c0_7] : memref<75x1xf32, #tpu.memory_space<vmem>>, vector<75x1xf32>
    %77 = vector.broadcast %76 : vector<75x1xf32> to vector<75x2048xf32>
    %78 = arith.addf %75, %77 : vector<75x2048xf32>
    %cst_8 = arith.constant 0.000000e+00 : f32
    %79 = vector.broadcast %cst_8 : f32 to vector<75x2048xf32>
    %80 = arith.cmpf ogt, %78, %79 : vector<75x2048xf32>
    %cst_9 = arith.constant 0.000000e+00 : f32
    %81 = vector.broadcast %cst_9 : f32 to vector<75x2048xf32>
    %82 = arith.minimumf %78, %81 : vector<75x2048xf32>
    %83 = math.exp %82 : vector<75x2048xf32>
    %cst_10 = arith.constant 1.000000e+00 : f32
    %84 = vector.broadcast %cst_10 : f32 to vector<75x2048xf32>
    %85 = arith.subf %83, %84 : vector<75x2048xf32>
    %86 = arith.select %80, %78, %85 : vector<75x2048xi1>, vector<75x2048xf32>
    %87 = arith.truncf %86 : vector<75x2048xf32> to vector<75x2048xbf16>
    %c0_11 = arith.constant 0 : index
    %c0_12 = arith.constant 0 : index
    %88 = vector.load %arg4[%c0_11, %c0_12] : memref<25x75xbf16, #tpu.memory_space<vmem>>, vector<25x75xbf16>
    %cst_13 = arith.constant dense<0.000000e+00> : vector<25x2048xf32>
    %89 = tpu.matmul %88, %87, %cst_13 {dimension_numbers = #tpu.dot_dimension_numbers<[1], [0], [0], [1], [0, 0, 1, 1], [], []>} : vector<25x75xbf16>, vector<75x2048xbf16>, vector<25x2048xf32> -> vector<25x2048xf32>
    %c0_14 = arith.constant 0 : index
    %c0_15 = arith.constant 0 : index
    %90 = vector.load %arg5[%c0_14, %c0_15] : memref<25x1xf32, #tpu.memory_space<vmem>>, vector<25x1xf32>
    %91 = vector.broadcast %90 : vector<25x1xf32> to vector<25x2048xf32>
    %92 = arith.addf %89, %91 : vector<25x2048xf32>
    %cst_16 = arith.constant 0.000000e+00 : f32
    %93 = vector.broadcast %cst_16 : f32 to vector<25x2048xf32>
    %94 = arith.cmpf ogt, %92, %93 : vector<25x2048xf32>
    %cst_17 = arith.constant 0.000000e+00 : f32
    %95 = vector.broadcast %cst_17 : f32 to vector<25x2048xf32>
    %96 = arith.minimumf %92, %95 : vector<25x2048xf32>
    %97 = math.exp %96 : vector<25x2048xf32>
    %cst_18 = arith.constant 1.000000e+00 : f32
    %98 = vector.broadcast %cst_18 : f32 to vector<25x2048xf32>
    %99 = arith.subf %97, %98 : vector<25x2048xf32>
    %100 = arith.select %94, %92, %99 : vector<25x2048xi1>, vector<25x2048xf32>
    %101 = vector.extract_strided_slice %100 {offsets = [0, 0], sizes = [25, 128], strides = [1, 1]} : vector<25x2048xf32> to vector<25x128xf32>
    %102 = vector.extract_strided_slice %100 {offsets = [0, 128], sizes = [25, 128], strides = [1, 1]} : vector<25x2048xf32> to vector<25x128xf32>
    %103 = arith.addf %101, %102 : vector<25x128xf32>
    %104 = vector.broadcast %5 : vector<1x128xf32> to vector<25x128xf32>
    %105 = arith.mulf %103, %104 : vector<25x128xf32>
    %106 = arith.truncf %105 : vector<25x128xf32> to vector<25x128xbf16>
    %107 = vector.extract_strided_slice %100 {offsets = [0, 256], sizes = [25, 128], strides = [1, 1]} : vector<25x2048xf32> to vector<25x128xf32>
    %108 = vector.extract_strided_slice %100 {offsets = [0, 384], sizes = [25, 128], strides = [1, 1]} : vector<25x2048xf32> to vector<25x128xf32>
    %109 = arith.addf %107, %108 : vector<25x128xf32>
    %110 = vector.broadcast %5 : vector<1x128xf32> to vector<25x128xf32>
    %111 = arith.mulf %109, %110 : vector<25x128xf32>
    %112 = arith.truncf %111 : vector<25x128xf32> to vector<25x128xbf16>
    %113 = vector.extract_strided_slice %100 {offsets = [0, 512], sizes = [25, 128], strides = [1, 1]} : vector<25x2048xf32> to vector<25x128xf32>
    %114 = vector.extract_strided_slice %100 {offsets = [0, 640], sizes = [25, 128], strides = [1, 1]} : vector<25x2048xf32> to vector<25x128xf32>
    %115 = arith.addf %113, %114 : vector<25x128xf32>
    %116 = vector.broadcast %5 : vector<1x128xf32> to vector<25x128xf32>
    %117 = arith.mulf %115, %116 : vector<25x128xf32>
    %118 = arith.truncf %117 : vector<25x128xf32> to vector<25x128xbf16>
    %119 = vector.extract_strided_slice %100 {offsets = [0, 768], sizes = [25, 128], strides = [1, 1]} : vector<25x2048xf32> to vector<25x128xf32>
    %120 = vector.extract_strided_slice %100 {offsets = [0, 896], sizes = [25, 128], strides = [1, 1]} : vector<25x2048xf32> to vector<25x128xf32>
    %121 = arith.addf %119, %120 : vector<25x128xf32>
    %122 = vector.broadcast %5 : vector<1x128xf32> to vector<25x128xf32>
    %123 = arith.mulf %121, %122 : vector<25x128xf32>
    %124 = arith.truncf %123 : vector<25x128xf32> to vector<25x128xbf16>
    %125 = vector.extract_strided_slice %100 {offsets = [0, 1024], sizes = [25, 128], strides = [1, 1]} : vector<25x2048xf32> to vector<25x128xf32>
    %126 = vector.extract_strided_slice %100 {offsets = [0, 1152], sizes = [25, 128], strides = [1, 1]} : vector<25x2048xf32> to vector<25x128xf32>
    %127 = arith.addf %125, %126 : vector<25x128xf32>
    %128 = vector.broadcast %5 : vector<1x128xf32> to vector<25x128xf32>
    %129 = arith.mulf %127, %128 : vector<25x128xf32>
    %130 = arith.truncf %129 : vector<25x128xf32> to vector<25x128xbf16>
    %131 = vector.extract_strided_slice %100 {offsets = [0, 1280], sizes = [25, 128], strides = [1, 1]} : vector<25x2048xf32> to vector<25x128xf32>
    %132 = vector.extract_strided_slice %100 {offsets = [0, 1408], sizes = [25, 128], strides = [1, 1]} : vector<25x2048xf32> to vector<25x128xf32>
    %133 = arith.addf %131, %132 : vector<25x128xf32>
    %134 = vector.broadcast %5 : vector<1x128xf32> to vector<25x128xf32>
    %135 = arith.mulf %133, %134 : vector<25x128xf32>
    %136 = arith.truncf %135 : vector<25x128xf32> to vector<25x128xbf16>
    %137 = vector.extract_strided_slice %100 {offsets = [0, 1536], sizes = [25, 128], strides = [1, 1]} : vector<25x2048xf32> to vector<25x128xf32>
    %138 = vector.extract_strided_slice %100 {offsets = [0, 1664], sizes = [25, 128], strides = [1, 1]} : vector<25x2048xf32> to vector<25x128xf32>
    %139 = arith.addf %137, %138 : vector<25x128xf32>
    %140 = vector.broadcast %5 : vector<1x128xf32> to vector<25x128xf32>
    %141 = arith.mulf %139, %140 : vector<25x128xf32>
    %142 = arith.truncf %141 : vector<25x128xf32> to vector<25x128xbf16>
    %143 = vector.extract_strided_slice %100 {offsets = [0, 1792], sizes = [25, 128], strides = [1, 1]} : vector<25x2048xf32> to vector<25x128xf32>
    %144 = vector.extract_strided_slice %100 {offsets = [0, 1920], sizes = [25, 128], strides = [1, 1]} : vector<25x2048xf32> to vector<25x128xf32>
    %145 = arith.addf %143, %144 : vector<25x128xf32>
    %146 = vector.broadcast %5 : vector<1x128xf32> to vector<25x128xf32>
    %147 = arith.mulf %145, %146 : vector<25x128xf32>
    %148 = arith.truncf %147 : vector<25x128xf32> to vector<25x128xbf16>
    %149 = vector.extract_strided_slice %118 {offsets = [0, 127], sizes = [25, 1], strides = [1, 1]} : vector<25x128xbf16> to vector<25x1xbf16>
    %150 = vector.extract_strided_slice %118 {offsets = [0, 0], sizes = [25, 127], strides = [1, 1]} : vector<25x128xbf16> to vector<25x127xbf16>
    %151 = tpu.concatenate %149, %150 in 1 : vector<25x1xbf16>, vector<25x127xbf16> -> vector<25x128xbf16>
    %152 = vector.extract_strided_slice %124 {offsets = [0, 127], sizes = [25, 1], strides = [1, 1]} : vector<25x128xbf16> to vector<25x1xbf16>
    %153 = vector.extract_strided_slice %124 {offsets = [0, 0], sizes = [25, 127], strides = [1, 1]} : vector<25x128xbf16> to vector<25x127xbf16>
    %154 = tpu.concatenate %152, %153 in 1 : vector<25x1xbf16>, vector<25x127xbf16> -> vector<25x128xbf16>
    %155 = vector.extract_strided_slice %130 {offsets = [0, 127], sizes = [25, 1], strides = [1, 1]} : vector<25x128xbf16> to vector<25x1xbf16>
    %156 = vector.extract_strided_slice %130 {offsets = [0, 0], sizes = [25, 127], strides = [1, 1]} : vector<25x128xbf16> to vector<25x127xbf16>
    %157 = tpu.concatenate %155, %156 in 1 : vector<25x1xbf16>, vector<25x127xbf16> -> vector<25x128xbf16>
    %158 = vector.extract_strided_slice %136 {offsets = [0, 127], sizes = [25, 1], strides = [1, 1]} : vector<25x128xbf16> to vector<25x1xbf16>
    %159 = vector.extract_strided_slice %136 {offsets = [0, 0], sizes = [25, 127], strides = [1, 1]} : vector<25x128xbf16> to vector<25x127xbf16>
    %160 = tpu.concatenate %158, %159 in 1 : vector<25x1xbf16>, vector<25x127xbf16> -> vector<25x128xbf16>
    %161 = vector.extract_strided_slice %142 {offsets = [0, 127], sizes = [25, 1], strides = [1, 1]} : vector<25x128xbf16> to vector<25x1xbf16>
    %162 = vector.extract_strided_slice %142 {offsets = [0, 0], sizes = [25, 127], strides = [1, 1]} : vector<25x128xbf16> to vector<25x127xbf16>
    %163 = tpu.concatenate %161, %162 in 1 : vector<25x1xbf16>, vector<25x127xbf16> -> vector<25x128xbf16>
    %164 = vector.extract_strided_slice %148 {offsets = [0, 127], sizes = [25, 1], strides = [1, 1]} : vector<25x128xbf16> to vector<25x1xbf16>
    %165 = vector.extract_strided_slice %148 {offsets = [0, 0], sizes = [25, 127], strides = [1, 1]} : vector<25x128xbf16> to vector<25x127xbf16>
    %166 = tpu.concatenate %164, %165 in 1 : vector<25x1xbf16>, vector<25x127xbf16> -> vector<25x128xbf16>
    %167 = vector.extract_strided_slice %106 {offsets = [0, 1], sizes = [25, 127], strides = [1, 1]} : vector<25x128xbf16> to vector<25x127xbf16>
    %168 = vector.extract_strided_slice %106 {offsets = [0, 0], sizes = [25, 1], strides = [1, 1]} : vector<25x128xbf16> to vector<25x1xbf16>
    %169 = tpu.concatenate %167, %168 in 1 : vector<25x127xbf16>, vector<25x1xbf16> -> vector<25x128xbf16>
    %170 = vector.extract_strided_slice %112 {offsets = [0, 1], sizes = [25, 127], strides = [1, 1]} : vector<25x128xbf16> to vector<25x127xbf16>
    %171 = vector.extract_strided_slice %112 {offsets = [0, 0], sizes = [25, 1], strides = [1, 1]} : vector<25x128xbf16> to vector<25x1xbf16>
    %172 = tpu.concatenate %170, %171 in 1 : vector<25x127xbf16>, vector<25x1xbf16> -> vector<25x128xbf16>
    %173 = vector.extract_strided_slice %118 {offsets = [0, 1], sizes = [25, 127], strides = [1, 1]} : vector<25x128xbf16> to vector<25x127xbf16>
    %174 = vector.extract_strided_slice %118 {offsets = [0, 0], sizes = [25, 1], strides = [1, 1]} : vector<25x128xbf16> to vector<25x1xbf16>
    %175 = tpu.concatenate %173, %174 in 1 : vector<25x127xbf16>, vector<25x1xbf16> -> vector<25x128xbf16>
    %176 = vector.extract_strided_slice %124 {offsets = [0, 1], sizes = [25, 127], strides = [1, 1]} : vector<25x128xbf16> to vector<25x127xbf16>
    %177 = vector.extract_strided_slice %124 {offsets = [0, 0], sizes = [25, 1], strides = [1, 1]} : vector<25x128xbf16> to vector<25x1xbf16>
    %178 = tpu.concatenate %176, %177 in 1 : vector<25x127xbf16>, vector<25x1xbf16> -> vector<25x128xbf16>
    %179 = vector.extract_strided_slice %130 {offsets = [0, 1], sizes = [25, 127], strides = [1, 1]} : vector<25x128xbf16> to vector<25x127xbf16>
    %180 = vector.extract_strided_slice %130 {offsets = [0, 0], sizes = [25, 1], strides = [1, 1]} : vector<25x128xbf16> to vector<25x1xbf16>
    %181 = tpu.concatenate %179, %180 in 1 : vector<25x127xbf16>, vector<25x1xbf16> -> vector<25x128xbf16>
    %182 = vector.extract_strided_slice %136 {offsets = [0, 1], sizes = [25, 127], strides = [1, 1]} : vector<25x128xbf16> to vector<25x127xbf16>
    %183 = vector.extract_strided_slice %136 {offsets = [0, 0], sizes = [25, 1], strides = [1, 1]} : vector<25x128xbf16> to vector<25x1xbf16>
    %184 = tpu.concatenate %182, %183 in 1 : vector<25x127xbf16>, vector<25x1xbf16> -> vector<25x128xbf16>
    %185 = tpu.concatenate %151, %154, %157, %160, %163, %166, %106, %112 in 1 : vector<25x128xbf16>, vector<25x128xbf16>, vector<25x128xbf16>, vector<25x128xbf16>, vector<25x128xbf16>, vector<25x128xbf16>, vector<25x128xbf16>, vector<25x128xbf16> -> vector<25x1024xbf16>
    %186 = tpu.concatenate %154, %157, %160, %163, %166, %106, %112, %118 in 1 : vector<25x128xbf16>, vector<25x128xbf16>, vector<25x128xbf16>, vector<25x128xbf16>, vector<25x128xbf16>, vector<25x128xbf16>, vector<25x128xbf16>, vector<25x128xbf16> -> vector<25x1024xbf16>
    %187 = tpu.concatenate %157, %160, %163, %166, %106, %112, %118, %124 in 1 : vector<25x128xbf16>, vector<25x128xbf16>, vector<25x128xbf16>, vector<25x128xbf16>, vector<25x128xbf16>, vector<25x128xbf16>, vector<25x128xbf16>, vector<25x128xbf16> -> vector<25x1024xbf16>
    %188 = tpu.concatenate %160, %163, %166, %106, %112, %118, %124, %130 in 1 : vector<25x128xbf16>, vector<25x128xbf16>, vector<25x128xbf16>, vector<25x128xbf16>, vector<25x128xbf16>, vector<25x128xbf16>, vector<25x128xbf16>, vector<25x128xbf16> -> vector<25x1024xbf16>
    %189 = tpu.concatenate %163, %166, %106, %112, %118, %124, %130, %136 in 1 : vector<25x128xbf16>, vector<25x128xbf16>, vector<25x128xbf16>, vector<25x128xbf16>, vector<25x128xbf16>, vector<25x128xbf16>, vector<25x128xbf16>, vector<25x128xbf16> -> vector<25x1024xbf16>
    %190 = tpu.concatenate %166, %106, %112, %118, %124, %130, %136, %142 in 1 : vector<25x128xbf16>, vector<25x128xbf16>, vector<25x128xbf16>, vector<25x128xbf16>, vector<25x128xbf16>, vector<25x128xbf16>, vector<25x128xbf16>, vector<25x128xbf16> -> vector<25x1024xbf16>
    %191 = tpu.concatenate %106, %112, %118, %124, %130, %136, %142, %148 in 1 : vector<25x128xbf16>, vector<25x128xbf16>, vector<25x128xbf16>, vector<25x128xbf16>, vector<25x128xbf16>, vector<25x128xbf16>, vector<25x128xbf16>, vector<25x128xbf16> -> vector<25x1024xbf16>
    %192 = tpu.concatenate %112, %118, %124, %130, %136, %142, %148, %169 in 1 : vector<25x128xbf16>, vector<25x128xbf16>, vector<25x128xbf16>, vector<25x128xbf16>, vector<25x128xbf16>, vector<25x128xbf16>, vector<25x128xbf16>, vector<25x128xbf16> -> vector<25x1024xbf16>
    %193 = tpu.concatenate %118, %124, %130, %136, %142, %148, %169, %172 in 1 : vector<25x128xbf16>, vector<25x128xbf16>, vector<25x128xbf16>, vector<25x128xbf16>, vector<25x128xbf16>, vector<25x128xbf16>, vector<25x128xbf16>, vector<25x128xbf16> -> vector<25x1024xbf16>
    %194 = tpu.concatenate %124, %130, %136, %142, %148, %169, %172, %175 in 1 : vector<25x128xbf16>, vector<25x128xbf16>, vector<25x128xbf16>, vector<25x128xbf16>, vector<25x128xbf16>, vector<25x128xbf16>, vector<25x128xbf16>, vector<25x128xbf16> -> vector<25x1024xbf16>
    %195 = tpu.concatenate %130, %136, %142, %148, %169, %172, %175, %178 in 1 : vector<25x128xbf16>, vector<25x128xbf16>, vector<25x128xbf16>, vector<25x128xbf16>, vector<25x128xbf16>, vector<25x128xbf16>, vector<25x128xbf16>, vector<25x128xbf16> -> vector<25x1024xbf16>
    %196 = tpu.concatenate %136, %142, %148, %169, %172, %175, %178, %181 in 1 : vector<25x128xbf16>, vector<25x128xbf16>, vector<25x128xbf16>, vector<25x128xbf16>, vector<25x128xbf16>, vector<25x128xbf16>, vector<25x128xbf16>, vector<25x128xbf16> -> vector<25x1024xbf16>
    %197 = tpu.concatenate %142, %148, %169, %172, %175, %178, %181, %184 in 1 : vector<25x128xbf16>, vector<25x128xbf16>, vector<25x128xbf16>, vector<25x128xbf16>, vector<25x128xbf16>, vector<25x128xbf16>, vector<25x128xbf16>, vector<25x128xbf16> -> vector<25x1024xbf16>
    %198 = tpu.concatenate %185, %186, %187, %188, %189, %190, %191, %192, %193, %194, %195, %196, %197 in 0 : vector<25x1024xbf16>, vector<25x1024xbf16>, vector<25x1024xbf16>, vector<25x1024xbf16>, vector<25x1024xbf16>, vector<25x1024xbf16>, vector<25x1024xbf16>, vector<25x1024xbf16>, vector<25x1024xbf16>, vector<25x1024xbf16>, vector<25x1024xbf16>, vector<25x1024xbf16>, vector<25x1024xbf16> -> vector<325x1024xbf16>
    %c0_19 = arith.constant 0 : index
    %c0_20 = arith.constant 0 : index
    %199 = vector.load %arg6[%c0_19, %c0_20] : memref<50x325xbf16, #tpu.memory_space<vmem>>, vector<50x325xbf16>
    %cst_21 = arith.constant dense<0.000000e+00> : vector<50x1024xf32>
    %200 = tpu.matmul %199, %198, %cst_21 {dimension_numbers = #tpu.dot_dimension_numbers<[1], [0], [0], [1], [0, 0, 1, 1], [], []>} : vector<50x325xbf16>, vector<325x1024xbf16>, vector<50x1024xf32> -> vector<50x1024xf32>
    %c0_22 = arith.constant 0 : index
    %c0_23 = arith.constant 0 : index
    %201 = vector.load %arg7[%c0_22, %c0_23] : memref<50x1xf32, #tpu.memory_space<vmem>>, vector<50x1xf32>
    %202 = vector.broadcast %201 : vector<50x1xf32> to vector<50x1024xf32>
    %203 = arith.addf %200, %202 : vector<50x1024xf32>
    %cst_24 = arith.constant 0.000000e+00 : f32
    %204 = vector.broadcast %cst_24 : f32 to vector<50x1024xf32>
    %205 = arith.cmpf ogt, %203, %204 : vector<50x1024xf32>
    %cst_25 = arith.constant 0.000000e+00 : f32
    %206 = vector.broadcast %cst_25 : f32 to vector<50x1024xf32>
    %207 = arith.minimumf %203, %206 : vector<50x1024xf32>
    %208 = math.exp %207 : vector<50x1024xf32>
    %cst_26 = arith.constant 1.000000e+00 : f32
    %209 = vector.broadcast %cst_26 : f32 to vector<50x1024xf32>
    %210 = arith.subf %208, %209 : vector<50x1024xf32>
    %211 = arith.select %205, %203, %210 : vector<50x1024xi1>, vector<50x1024xf32>
    %212 = vector.extract_strided_slice %211 {offsets = [0, 0], sizes = [50, 128], strides = [1, 1]} : vector<50x1024xf32> to vector<50x128xf32>
    %213 = vector.extract_strided_slice %211 {offsets = [0, 128], sizes = [50, 128], strides = [1, 1]} : vector<50x1024xf32> to vector<50x128xf32>
    %214 = arith.addf %212, %213 : vector<50x128xf32>
    %215 = vector.broadcast %5 : vector<1x128xf32> to vector<50x128xf32>
    %216 = arith.mulf %214, %215 : vector<50x128xf32>
    %217 = arith.truncf %216 : vector<50x128xf32> to vector<50x128xbf16>
    %218 = vector.extract_strided_slice %211 {offsets = [0, 256], sizes = [50, 128], strides = [1, 1]} : vector<50x1024xf32> to vector<50x128xf32>
    %219 = vector.extract_strided_slice %211 {offsets = [0, 384], sizes = [50, 128], strides = [1, 1]} : vector<50x1024xf32> to vector<50x128xf32>
    %220 = arith.addf %218, %219 : vector<50x128xf32>
    %221 = vector.broadcast %5 : vector<1x128xf32> to vector<50x128xf32>
    %222 = arith.mulf %220, %221 : vector<50x128xf32>
    %223 = arith.truncf %222 : vector<50x128xf32> to vector<50x128xbf16>
    %224 = vector.extract_strided_slice %211 {offsets = [0, 512], sizes = [50, 128], strides = [1, 1]} : vector<50x1024xf32> to vector<50x128xf32>
    %225 = vector.extract_strided_slice %211 {offsets = [0, 640], sizes = [50, 128], strides = [1, 1]} : vector<50x1024xf32> to vector<50x128xf32>
    %226 = arith.addf %224, %225 : vector<50x128xf32>
    %227 = vector.broadcast %5 : vector<1x128xf32> to vector<50x128xf32>
    %228 = arith.mulf %226, %227 : vector<50x128xf32>
    %229 = arith.truncf %228 : vector<50x128xf32> to vector<50x128xbf16>
    %230 = vector.extract_strided_slice %211 {offsets = [0, 768], sizes = [50, 128], strides = [1, 1]} : vector<50x1024xf32> to vector<50x128xf32>
    %231 = vector.extract_strided_slice %211 {offsets = [0, 896], sizes = [50, 128], strides = [1, 1]} : vector<50x1024xf32> to vector<50x128xf32>
    %232 = arith.addf %230, %231 : vector<50x128xf32>
    %233 = vector.broadcast %5 : vector<1x128xf32> to vector<50x128xf32>
    %234 = arith.mulf %232, %233 : vector<50x128xf32>
    %235 = arith.truncf %234 : vector<50x128xf32> to vector<50x128xbf16>
    %236 = vector.extract_strided_slice %229 {offsets = [0, 126], sizes = [50, 2], strides = [1, 1]} : vector<50x128xbf16> to vector<50x2xbf16>
    %237 = vector.extract_strided_slice %229 {offsets = [0, 0], sizes = [50, 126], strides = [1, 1]} : vector<50x128xbf16> to vector<50x126xbf16>
    %238 = tpu.concatenate %236, %237 in 1 : vector<50x2xbf16>, vector<50x126xbf16> -> vector<50x128xbf16>
    %239 = vector.extract_strided_slice %235 {offsets = [0, 126], sizes = [50, 2], strides = [1, 1]} : vector<50x128xbf16> to vector<50x2xbf16>
    %240 = vector.extract_strided_slice %235 {offsets = [0, 0], sizes = [50, 126], strides = [1, 1]} : vector<50x128xbf16> to vector<50x126xbf16>
    %241 = tpu.concatenate %239, %240 in 1 : vector<50x2xbf16>, vector<50x126xbf16> -> vector<50x128xbf16>
    %242 = vector.extract_strided_slice %217 {offsets = [0, 127], sizes = [50, 1], strides = [1, 1]} : vector<50x128xbf16> to vector<50x1xbf16>
    %243 = vector.extract_strided_slice %217 {offsets = [0, 0], sizes = [50, 127], strides = [1, 1]} : vector<50x128xbf16> to vector<50x127xbf16>
    %244 = tpu.concatenate %242, %243 in 1 : vector<50x1xbf16>, vector<50x127xbf16> -> vector<50x128xbf16>
    %245 = vector.extract_strided_slice %223 {offsets = [0, 127], sizes = [50, 1], strides = [1, 1]} : vector<50x128xbf16> to vector<50x1xbf16>
    %246 = vector.extract_strided_slice %223 {offsets = [0, 0], sizes = [50, 127], strides = [1, 1]} : vector<50x128xbf16> to vector<50x127xbf16>
    %247 = tpu.concatenate %245, %246 in 1 : vector<50x1xbf16>, vector<50x127xbf16> -> vector<50x128xbf16>
    %248 = vector.extract_strided_slice %229 {offsets = [0, 127], sizes = [50, 1], strides = [1, 1]} : vector<50x128xbf16> to vector<50x1xbf16>
    %249 = vector.extract_strided_slice %229 {offsets = [0, 0], sizes = [50, 127], strides = [1, 1]} : vector<50x128xbf16> to vector<50x127xbf16>
    %250 = tpu.concatenate %248, %249 in 1 : vector<50x1xbf16>, vector<50x127xbf16> -> vector<50x128xbf16>
    %251 = vector.extract_strided_slice %235 {offsets = [0, 127], sizes = [50, 1], strides = [1, 1]} : vector<50x128xbf16> to vector<50x1xbf16>
    %252 = vector.extract_strided_slice %235 {offsets = [0, 0], sizes = [50, 127], strides = [1, 1]} : vector<50x128xbf16> to vector<50x127xbf16>
    %253 = tpu.concatenate %251, %252 in 1 : vector<50x1xbf16>, vector<50x127xbf16> -> vector<50x128xbf16>
    %254 = vector.extract_strided_slice %217 {offsets = [0, 1], sizes = [50, 127], strides = [1, 1]} : vector<50x128xbf16> to vector<50x127xbf16>
    %255 = vector.extract_strided_slice %217 {offsets = [0, 0], sizes = [50, 1], strides = [1, 1]} : vector<50x128xbf16> to vector<50x1xbf16>
    %256 = tpu.concatenate %254, %255 in 1 : vector<50x127xbf16>, vector<50x1xbf16> -> vector<50x128xbf16>
    %257 = vector.extract_strided_slice %223 {offsets = [0, 1], sizes = [50, 127], strides = [1, 1]} : vector<50x128xbf16> to vector<50x127xbf16>
    %258 = vector.extract_strided_slice %223 {offsets = [0, 0], sizes = [50, 1], strides = [1, 1]} : vector<50x128xbf16> to vector<50x1xbf16>
    %259 = tpu.concatenate %257, %258 in 1 : vector<50x127xbf16>, vector<50x1xbf16> -> vector<50x128xbf16>
    %260 = vector.extract_strided_slice %229 {offsets = [0, 1], sizes = [50, 127], strides = [1, 1]} : vector<50x128xbf16> to vector<50x127xbf16>
    %261 = vector.extract_strided_slice %229 {offsets = [0, 0], sizes = [50, 1], strides = [1, 1]} : vector<50x128xbf16> to vector<50x1xbf16>
    %262 = tpu.concatenate %260, %261 in 1 : vector<50x127xbf16>, vector<50x1xbf16> -> vector<50x128xbf16>
    %263 = vector.extract_strided_slice %235 {offsets = [0, 1], sizes = [50, 127], strides = [1, 1]} : vector<50x128xbf16> to vector<50x127xbf16>
    %264 = vector.extract_strided_slice %235 {offsets = [0, 0], sizes = [50, 1], strides = [1, 1]} : vector<50x128xbf16> to vector<50x1xbf16>
    %265 = tpu.concatenate %263, %264 in 1 : vector<50x127xbf16>, vector<50x1xbf16> -> vector<50x128xbf16>
    %266 = vector.extract_strided_slice %217 {offsets = [0, 2], sizes = [50, 126], strides = [1, 1]} : vector<50x128xbf16> to vector<50x126xbf16>
    %267 = vector.extract_strided_slice %217 {offsets = [0, 0], sizes = [50, 2], strides = [1, 1]} : vector<50x128xbf16> to vector<50x2xbf16>
    %268 = tpu.concatenate %266, %267 in 1 : vector<50x126xbf16>, vector<50x2xbf16> -> vector<50x128xbf16>
    %269 = vector.extract_strided_slice %223 {offsets = [0, 2], sizes = [50, 126], strides = [1, 1]} : vector<50x128xbf16> to vector<50x126xbf16>
    %270 = vector.extract_strided_slice %223 {offsets = [0, 0], sizes = [50, 2], strides = [1, 1]} : vector<50x128xbf16> to vector<50x2xbf16>
    %271 = tpu.concatenate %269, %270 in 1 : vector<50x126xbf16>, vector<50x2xbf16> -> vector<50x128xbf16>
    %272 = tpu.concatenate %238, %241, %244, %247 in 1 : vector<50x128xbf16>, vector<50x128xbf16>, vector<50x128xbf16>, vector<50x128xbf16> -> vector<50x512xbf16>
    %273 = tpu.concatenate %241, %244, %247, %250 in 1 : vector<50x128xbf16>, vector<50x128xbf16>, vector<50x128xbf16>, vector<50x128xbf16> -> vector<50x512xbf16>
    %274 = tpu.concatenate %244, %247, %250, %253 in 1 : vector<50x128xbf16>, vector<50x128xbf16>, vector<50x128xbf16>, vector<50x128xbf16> -> vector<50x512xbf16>
    %275 = tpu.concatenate %247, %250, %253, %217 in 1 : vector<50x128xbf16>, vector<50x128xbf16>, vector<50x128xbf16>, vector<50x128xbf16> -> vector<50x512xbf16>
    %276 = tpu.concatenate %250, %253, %217, %223 in 1 : vector<50x128xbf16>, vector<50x128xbf16>, vector<50x128xbf16>, vector<50x128xbf16> -> vector<50x512xbf16>
    %277 = tpu.concatenate %253, %217, %223, %229 in 1 : vector<50x128xbf16>, vector<50x128xbf16>, vector<50x128xbf16>, vector<50x128xbf16> -> vector<50x512xbf16>
    %278 = tpu.concatenate %217, %223, %229, %235 in 1 : vector<50x128xbf16>, vector<50x128xbf16>, vector<50x128xbf16>, vector<50x128xbf16> -> vector<50x512xbf16>
    %279 = tpu.concatenate %223, %229, %235, %256 in 1 : vector<50x128xbf16>, vector<50x128xbf16>, vector<50x128xbf16>, vector<50x128xbf16> -> vector<50x512xbf16>
    %280 = tpu.concatenate %229, %235, %256, %259 in 1 : vector<50x128xbf16>, vector<50x128xbf16>, vector<50x128xbf16>, vector<50x128xbf16> -> vector<50x512xbf16>
    %281 = tpu.concatenate %235, %256, %259, %262 in 1 : vector<50x128xbf16>, vector<50x128xbf16>, vector<50x128xbf16>, vector<50x128xbf16> -> vector<50x512xbf16>
    %282 = tpu.concatenate %256, %259, %262, %265 in 1 : vector<50x128xbf16>, vector<50x128xbf16>, vector<50x128xbf16>, vector<50x128xbf16> -> vector<50x512xbf16>
    %283 = tpu.concatenate %259, %262, %265, %268 in 1 : vector<50x128xbf16>, vector<50x128xbf16>, vector<50x128xbf16>, vector<50x128xbf16> -> vector<50x512xbf16>
    %284 = tpu.concatenate %262, %265, %268, %271 in 1 : vector<50x128xbf16>, vector<50x128xbf16>, vector<50x128xbf16>, vector<50x128xbf16> -> vector<50x512xbf16>
    %285 = tpu.concatenate %272, %273, %274, %275, %276, %277, %278, %279, %280, %281, %282, %283, %284 in 0 : vector<50x512xbf16>, vector<50x512xbf16>, vector<50x512xbf16>, vector<50x512xbf16>, vector<50x512xbf16>, vector<50x512xbf16>, vector<50x512xbf16>, vector<50x512xbf16>, vector<50x512xbf16>, vector<50x512xbf16>, vector<50x512xbf16>, vector<50x512xbf16>, vector<50x512xbf16> -> vector<650x512xbf16>
    %c0_27 = arith.constant 0 : index
    %c0_28 = arith.constant 0 : index
    %286 = vector.load %arg8[%c0_27, %c0_28] : memref<100x650xbf16, #tpu.memory_space<vmem>>, vector<100x650xbf16>
    %cst_29 = arith.constant dense<0.000000e+00> : vector<100x512xf32>
    %287 = tpu.matmul %286, %285, %cst_29 {dimension_numbers = #tpu.dot_dimension_numbers<[1], [0], [0], [1], [0, 0, 1, 1], [], []>} : vector<100x650xbf16>, vector<650x512xbf16>, vector<100x512xf32> -> vector<100x512xf32>
    %c0_30 = arith.constant 0 : index
    %c0_31 = arith.constant 0 : index
    %288 = vector.load %arg9[%c0_30, %c0_31] : memref<100x1xf32, #tpu.memory_space<vmem>>, vector<100x1xf32>
    %289 = vector.broadcast %288 : vector<100x1xf32> to vector<100x512xf32>
    %290 = arith.addf %287, %289 : vector<100x512xf32>
    %cst_32 = arith.constant 0.000000e+00 : f32
    %291 = vector.broadcast %cst_32 : f32 to vector<100x512xf32>
    %292 = arith.cmpf ogt, %290, %291 : vector<100x512xf32>
    %cst_33 = arith.constant 0.000000e+00 : f32
    %293 = vector.broadcast %cst_33 : f32 to vector<100x512xf32>
    %294 = arith.minimumf %290, %293 : vector<100x512xf32>
    %295 = math.exp %294 : vector<100x512xf32>
    %cst_34 = arith.constant 1.000000e+00 : f32
    %296 = vector.broadcast %cst_34 : f32 to vector<100x512xf32>
    %297 = arith.subf %295, %296 : vector<100x512xf32>
    %298 = arith.select %292, %290, %297 : vector<100x512xi1>, vector<100x512xf32>
    %299 = vector.extract_strided_slice %298 {offsets = [0, 0], sizes = [100, 128], strides = [1, 1]} : vector<100x512xf32> to vector<100x128xf32>
    %300 = vector.extract_strided_slice %298 {offsets = [0, 128], sizes = [100, 128], strides = [1, 1]} : vector<100x512xf32> to vector<100x128xf32>
    %301 = arith.addf %299, %300 : vector<100x128xf32>
    %302 = vector.broadcast %5 : vector<1x128xf32> to vector<100x128xf32>
    %303 = arith.mulf %301, %302 : vector<100x128xf32>
    %304 = arith.truncf %303 : vector<100x128xf32> to vector<100x128xbf16>
    %305 = vector.extract_strided_slice %298 {offsets = [0, 256], sizes = [100, 128], strides = [1, 1]} : vector<100x512xf32> to vector<100x128xf32>
    %306 = vector.extract_strided_slice %298 {offsets = [0, 384], sizes = [100, 128], strides = [1, 1]} : vector<100x512xf32> to vector<100x128xf32>
    %307 = arith.addf %305, %306 : vector<100x128xf32>
    %308 = vector.broadcast %5 : vector<1x128xf32> to vector<100x128xf32>
    %309 = arith.mulf %307, %308 : vector<100x128xf32>
    %310 = arith.truncf %309 : vector<100x128xf32> to vector<100x128xbf16>
    %311 = vector.extract_strided_slice %304 {offsets = [0, 125], sizes = [100, 3], strides = [1, 1]} : vector<100x128xbf16> to vector<100x3xbf16>
    %312 = vector.extract_strided_slice %304 {offsets = [0, 0], sizes = [100, 125], strides = [1, 1]} : vector<100x128xbf16> to vector<100x125xbf16>
    %313 = tpu.concatenate %311, %312 in 1 : vector<100x3xbf16>, vector<100x125xbf16> -> vector<100x128xbf16>
    %314 = vector.extract_strided_slice %310 {offsets = [0, 125], sizes = [100, 3], strides = [1, 1]} : vector<100x128xbf16> to vector<100x3xbf16>
    %315 = vector.extract_strided_slice %310 {offsets = [0, 0], sizes = [100, 125], strides = [1, 1]} : vector<100x128xbf16> to vector<100x125xbf16>
    %316 = tpu.concatenate %314, %315 in 1 : vector<100x3xbf16>, vector<100x125xbf16> -> vector<100x128xbf16>
    %317 = vector.extract_strided_slice %304 {offsets = [0, 126], sizes = [100, 2], strides = [1, 1]} : vector<100x128xbf16> to vector<100x2xbf16>
    %318 = vector.extract_strided_slice %304 {offsets = [0, 0], sizes = [100, 126], strides = [1, 1]} : vector<100x128xbf16> to vector<100x126xbf16>
    %319 = tpu.concatenate %317, %318 in 1 : vector<100x2xbf16>, vector<100x126xbf16> -> vector<100x128xbf16>
    %320 = vector.extract_strided_slice %310 {offsets = [0, 126], sizes = [100, 2], strides = [1, 1]} : vector<100x128xbf16> to vector<100x2xbf16>
    %321 = vector.extract_strided_slice %310 {offsets = [0, 0], sizes = [100, 126], strides = [1, 1]} : vector<100x128xbf16> to vector<100x126xbf16>
    %322 = tpu.concatenate %320, %321 in 1 : vector<100x2xbf16>, vector<100x126xbf16> -> vector<100x128xbf16>
    %323 = vector.extract_strided_slice %304 {offsets = [0, 127], sizes = [100, 1], strides = [1, 1]} : vector<100x128xbf16> to vector<100x1xbf16>
    %324 = vector.extract_strided_slice %304 {offsets = [0, 0], sizes = [100, 127], strides = [1, 1]} : vector<100x128xbf16> to vector<100x127xbf16>
    %325 = tpu.concatenate %323, %324 in 1 : vector<100x1xbf16>, vector<100x127xbf16> -> vector<100x128xbf16>
    %326 = vector.extract_strided_slice %310 {offsets = [0, 127], sizes = [100, 1], strides = [1, 1]} : vector<100x128xbf16> to vector<100x1xbf16>
    %327 = vector.extract_strided_slice %310 {offsets = [0, 0], sizes = [100, 127], strides = [1, 1]} : vector<100x128xbf16> to vector<100x127xbf16>
    %328 = tpu.concatenate %326, %327 in 1 : vector<100x1xbf16>, vector<100x127xbf16> -> vector<100x128xbf16>
    %329 = vector.extract_strided_slice %304 {offsets = [0, 1], sizes = [100, 127], strides = [1, 1]} : vector<100x128xbf16> to vector<100x127xbf16>
    %330 = vector.extract_strided_slice %304 {offsets = [0, 0], sizes = [100, 1], strides = [1, 1]} : vector<100x128xbf16> to vector<100x1xbf16>
    %331 = tpu.concatenate %329, %330 in 1 : vector<100x127xbf16>, vector<100x1xbf16> -> vector<100x128xbf16>
    %332 = vector.extract_strided_slice %310 {offsets = [0, 1], sizes = [100, 127], strides = [1, 1]} : vector<100x128xbf16> to vector<100x127xbf16>
    %333 = vector.extract_strided_slice %310 {offsets = [0, 0], sizes = [100, 1], strides = [1, 1]} : vector<100x128xbf16> to vector<100x1xbf16>
    %334 = tpu.concatenate %332, %333 in 1 : vector<100x127xbf16>, vector<100x1xbf16> -> vector<100x128xbf16>
    %335 = vector.extract_strided_slice %304 {offsets = [0, 2], sizes = [100, 126], strides = [1, 1]} : vector<100x128xbf16> to vector<100x126xbf16>
    %336 = vector.extract_strided_slice %304 {offsets = [0, 0], sizes = [100, 2], strides = [1, 1]} : vector<100x128xbf16> to vector<100x2xbf16>
    %337 = tpu.concatenate %335, %336 in 1 : vector<100x126xbf16>, vector<100x2xbf16> -> vector<100x128xbf16>
    %338 = vector.extract_strided_slice %310 {offsets = [0, 2], sizes = [100, 126], strides = [1, 1]} : vector<100x128xbf16> to vector<100x126xbf16>
    %339 = vector.extract_strided_slice %310 {offsets = [0, 0], sizes = [100, 2], strides = [1, 1]} : vector<100x128xbf16> to vector<100x2xbf16>
    %340 = tpu.concatenate %338, %339 in 1 : vector<100x126xbf16>, vector<100x2xbf16> -> vector<100x128xbf16>
    %341 = vector.extract_strided_slice %304 {offsets = [0, 3], sizes = [100, 125], strides = [1, 1]} : vector<100x128xbf16> to vector<100x125xbf16>
    %342 = vector.extract_strided_slice %304 {offsets = [0, 0], sizes = [100, 3], strides = [1, 1]} : vector<100x128xbf16> to vector<100x3xbf16>
    %343 = tpu.concatenate %341, %342 in 1 : vector<100x125xbf16>, vector<100x3xbf16> -> vector<100x128xbf16>
    %344 = vector.extract_strided_slice %310 {offsets = [0, 3], sizes = [100, 125], strides = [1, 1]} : vector<100x128xbf16> to vector<100x125xbf16>
    %345 = vector.extract_strided_slice %310 {offsets = [0, 0], sizes = [100, 3], strides = [1, 1]} : vector<100x128xbf16> to vector<100x3xbf16>
    %346 = tpu.concatenate %344, %345 in 1 : vector<100x125xbf16>, vector<100x3xbf16> -> vector<100x128xbf16>
    %347 = tpu.concatenate %313, %316 in 1 : vector<100x128xbf16>, vector<100x128xbf16> -> vector<100x256xbf16>
    %348 = tpu.concatenate %316, %319 in 1 : vector<100x128xbf16>, vector<100x128xbf16> -> vector<100x256xbf16>
    %349 = tpu.concatenate %319, %322 in 1 : vector<100x128xbf16>, vector<100x128xbf16> -> vector<100x256xbf16>
    %350 = tpu.concatenate %322, %325 in 1 : vector<100x128xbf16>, vector<100x128xbf16> -> vector<100x256xbf16>
    %351 = tpu.concatenate %325, %328 in 1 : vector<100x128xbf16>, vector<100x128xbf16> -> vector<100x256xbf16>
    %352 = tpu.concatenate %328, %304 in 1 : vector<100x128xbf16>, vector<100x128xbf16> -> vector<100x256xbf16>
    %353 = tpu.concatenate %304, %310 in 1 : vector<100x128xbf16>, vector<100x128xbf16> -> vector<100x256xbf16>
    %354 = tpu.concatenate %310, %331 in 1 : vector<100x128xbf16>, vector<100x128xbf16> -> vector<100x256xbf16>
    %355 = tpu.concatenate %331, %334 in 1 : vector<100x128xbf16>, vector<100x128xbf16> -> vector<100x256xbf16>
    %356 = tpu.concatenate %334, %337 in 1 : vector<100x128xbf16>, vector<100x128xbf16> -> vector<100x256xbf16>
    %357 = tpu.concatenate %337, %340 in 1 : vector<100x128xbf16>, vector<100x128xbf16> -> vector<100x256xbf16>
    %358 = tpu.concatenate %340, %343 in 1 : vector<100x128xbf16>, vector<100x128xbf16> -> vector<100x256xbf16>
    %359 = tpu.concatenate %343, %346 in 1 : vector<100x128xbf16>, vector<100x128xbf16> -> vector<100x256xbf16>
    %360 = tpu.concatenate %347, %348, %349, %350, %351, %352, %353, %354, %355, %356, %357, %358, %359 in 0 : vector<100x256xbf16>, vector<100x256xbf16>, vector<100x256xbf16>, vector<100x256xbf16>, vector<100x256xbf16>, vector<100x256xbf16>, vector<100x256xbf16>, vector<100x256xbf16>, vector<100x256xbf16>, vector<100x256xbf16>, vector<100x256xbf16>, vector<100x256xbf16>, vector<100x256xbf16> -> vector<1300x256xbf16>
    %c0_35 = arith.constant 0 : index
    %c0_36 = arith.constant 0 : index
    %361 = vector.load %arg10[%c0_35, %c0_36] : memref<200x1300xbf16, #tpu.memory_space<vmem>>, vector<200x1300xbf16>
    %cst_37 = arith.constant dense<0.000000e+00> : vector<200x256xf32>
    %362 = tpu.matmul %361, %360, %cst_37 {dimension_numbers = #tpu.dot_dimension_numbers<[1], [0], [0], [1], [0, 0, 1, 1], [], []>} : vector<200x1300xbf16>, vector<1300x256xbf16>, vector<200x256xf32> -> vector<200x256xf32>
    %c0_38 = arith.constant 0 : index
    %c0_39 = arith.constant 0 : index
    %363 = vector.load %arg11[%c0_38, %c0_39] : memref<200x1xf32, #tpu.memory_space<vmem>>, vector<200x1xf32>
    %364 = vector.broadcast %363 : vector<200x1xf32> to vector<200x256xf32>
    %365 = arith.addf %362, %364 : vector<200x256xf32>
    %cst_40 = arith.constant 0.000000e+00 : f32
    %366 = vector.broadcast %cst_40 : f32 to vector<200x256xf32>
    %367 = arith.cmpf ogt, %365, %366 : vector<200x256xf32>
    %cst_41 = arith.constant 0.000000e+00 : f32
    %368 = vector.broadcast %cst_41 : f32 to vector<200x256xf32>
    %369 = arith.minimumf %365, %368 : vector<200x256xf32>
    %370 = math.exp %369 : vector<200x256xf32>
    %cst_42 = arith.constant 1.000000e+00 : f32
    %371 = vector.broadcast %cst_42 : f32 to vector<200x256xf32>
    %372 = arith.subf %370, %371 : vector<200x256xf32>
    %373 = arith.select %367, %365, %372 : vector<200x256xi1>, vector<200x256xf32>
    %374 = vector.extract_strided_slice %373 {offsets = [0, 0], sizes = [200, 128], strides = [1, 1]} : vector<200x256xf32> to vector<200x128xf32>
    %375 = vector.extract_strided_slice %373 {offsets = [0, 128], sizes = [200, 128], strides = [1, 1]} : vector<200x256xf32> to vector<200x128xf32>
    %376 = arith.addf %374, %375 : vector<200x128xf32>
    %377 = vector.broadcast %5 : vector<1x128xf32> to vector<200x128xf32>
    %378 = arith.mulf %376, %377 : vector<200x128xf32>
    %c0_43 = arith.constant 0 : index
    %c0_44 = arith.constant 0 : index
    %c0_45 = arith.constant 0 : index
    %379 = vector.load %arg14[%c0_43, %c0_44, %c0_45] : memref<1x200x128xf32, #tpu.memory_space<vmem>>, vector<1x200x128xf32>
    %380 = vector.shape_cast %379 : vector<1x200x128xf32> to vector<200x128xf32>
    %381 = vector.shape_cast %378 : vector<200x128xf32> to vector<1x200x128xf32>
    tpu.vector_store %arg14[%c0_43, %c0_44, %c0_45], %381 {strides = array<i32>} : memref<1x200x128xf32, #tpu.memory_space<vmem>>, vector<1x200x128xf32>,
    return
  }
  func.func @transform_0(%arg0: i32) -> (i32, i32, i32) {
    %c0_i32 = arith.constant 0 : i32
    %c0_i32_0 = arith.constant 0 : i32
    %c0_i32_1 = arith.constant 0 : i32
    return %arg0, %c0_i32, %c0_i32_0 : i32, i32, i32
  }
  func.func @transform_1(%arg0: i32) -> (i32, i32) {
    %c0_i32 = arith.constant 0 : i32
    %c0_i32_0 = arith.constant 0 : i32
    %c0_i32_1 = arith.constant 0 : i32
    return %c0_i32, %c0_i32_0 : i32, i32
  }
  func.func @transform_2(%arg0: i32) -> (i32, i32) {
    %c0_i32 = arith.constant 0 : i32
    %c0_i32_0 = arith.constant 0 : i32
    %c0_i32_1 = arith.constant 0 : i32
    return %c0_i32, %c0_i32_0 : i32, i32
  }
  func.func @transform_3(%arg0: i32) -> (i32, i32) {
    %c0_i32 = arith.constant 0 : i32
    %c0_i32_0 = arith.constant 0 : i32
    %c0_i32_1 = arith.constant 0 : i32
    return %c0_i32, %c0_i32_0 : i32, i32
  }
  func.func @transform_4(%arg0: i32) -> (i32, i32) {
    %c0_i32 = arith.constant 0 : i32
    %c0_i32_0 = arith.constant 0 : i32
    %c0_i32_1 = arith.constant 0 : i32
    return %c0_i32, %c0_i32_0 : i32, i32
  }
  func.func @transform_5(%arg0: i32) -> (i32, i32) {
    %c0_i32 = arith.constant 0 : i32
    %c0_i32_0 = arith.constant 0 : i32
    %c0_i32_1 = arith.constant 0 : i32
    return %c0_i32, %c0_i32_0 : i32, i32
  }
  func.func @transform_6(%arg0: i32) -> (i32, i32) {
    %c0_i32 = arith.constant 0 : i32
    %c0_i32_0 = arith.constant 0 : i32
    %c0_i32_1 = arith.constant 0 : i32
    return %c0_i32, %c0_i32_0 : i32, i32
  }
  func.func @transform_7(%arg0: i32) -> (i32, i32) {
    %c0_i32 = arith.constant 0 : i32
    %c0_i32_0 = arith.constant 0 : i32
    %c0_i32_1 = arith.constant 0 : i32
    return %c0_i32, %c0_i32_0 : i32, i32
  }
  func.func @transform_8(%arg0: i32) -> (i32, i32) {
    %c0_i32 = arith.constant 0 : i32
    %c0_i32_0 = arith.constant 0 : i32
    %c0_i32_1 = arith.constant 0 : i32
    return %c0_i32, %c0_i32_0 : i32, i32
  }
  func.func @transform_9(%arg0: i32) -> (i32, i32) {
    %c0_i32 = arith.constant 0 : i32
    %c0_i32_0 = arith.constant 0 : i32
    %c0_i32_1 = arith.constant 0 : i32
    return %c0_i32, %c0_i32_0 : i32, i32
  }
  func.func @transform_10(%arg0: i32) -> (i32, i32) {
    %c0_i32 = arith.constant 0 : i32
    %c0_i32_0 = arith.constant 0 : i32
    %c0_i32_1 = arith.constant 0 : i32
    return %c0_i32, %c0_i32_0 : i32, i32
  }
  func.func @transform_11(%arg0: i32) -> (i32, i32) {
    %c0_i32 = arith.constant 0 : i32
    %c0_i32_0 = arith.constant 0 : i32
    %c0_i32_1 = arith.constant 0 : i32
    return %c0_i32, %c0_i32_0 : i32, i32
  }
  func.func @transform_12(%arg0: i32) -> (i32, i32) {
    %c0_i32 = arith.constant 0 : i32
    %c0_i32_0 = arith.constant 0 : i32
    %c0_i32_1 = arith.constant 0 : i32
    return %c0_i32, %c0_i32_0 : i32, i32
  }
  func.func @transform_13(%arg0: i32) -> (i32, i32, i32) {
    %c0_i32 = arith.constant 0 : i32
    %c0_i32_0 = arith.constant 0 : i32
    %c0_i32_1 = arith.constant 0 : i32
    return %arg0, %c0_i32, %c0_i32_0 : i32, i32, i32
  }
}

</mosaic_0001>

<llo_original>
// kernel: squeeze.0
$region0: #{squeeze.0}
  %s0 = inlined_call_operand.vmem [shape: bf16[2,3,256], index: 0, kind: input, shape index: {}]
  %s1 = inlined_call_operand.vmem [shape: bf16[2,3,16,16], index: 1, kind: output, shape index: {}]
  $region1: #{squeeze.0} parent=0
    #allocation0 [shape = 'u8[49152]{0}', space=vmem, size = 0xc000, scoped, tag = 'scoped mem for output reshape']
    #allocation1 [shape = 'u8[16384]{0}', space=vmem, size = 0x4000, scoped, tag = 'scoped mem for input reshape']
    %s3 = smul.u32 2, 2
    %s4 = sshllo.u32 0, %s3
    %s5 = smul.addr 2, 3
    %s6 = scalar_lea.vmem %s0, %s5
    %s7 = sshrl.u32 %s4, 1
    %s8 = sor.u32 %s4, %s7
    %s9 = sand.u32 %s8, 85
    %s10 = sshrl.u32 %s9, 1
    %s11 = sor.u32 %s9, %s10
    %s12 = sand.u32 51, %s11
    %s13 = sshrl.u32 %s12, 2
    %s14 = sor.u32 %s12, %s13
    %s15 = sand.u32 15, %s14
    %v16 = vld [vmem:[%s6] sm:%s15]
    %v17 = vunpack.c.l.bf16 %v16
    %v18 = vunpack.c.h.bf16 %v16
    %s19 = scalar_lea.vmem [#allocation1], 24
    %20 = vst [vmem:[%s19] sm:%s4] %v17
    %s21 = smul.addr 2, 2
    %s22 = scalar_lea.vmem %s0, %s21
    %s23 = sshrl.u32 %s4, 1
    %s24 = sor.u32 %s4, %s23
    %s25 = sand.u32 %s24, 85
    %s26 = sshrl.u32 %s25, 1
    %s27 = sor.u32 %s25, %s26
    %s28 = sand.u32 51, %s27
    %s29 = sshrl.u32 %s28, 2
    %s30 = sor.u32 %s28, %s29
    %s31 = sand.u32 15, %s30
    %v32 = vld [vmem:[%s22] sm:%s31]
    %v33 = vunpack.c.l.bf16 %v32
    %v34 = vunpack.c.h.bf16 %v32
    %s35 = scalar_lea.vmem [#allocation1], 16
    %36 = vst [vmem:[%s35] sm:%s4] %v33
    %s37 = scalar_lea.vmem %s0, 2
    %s38 = sshrl.u32 %s4, 1
    %s39 = sor.u32 %s4, %s38
    %s40 = sand.u32 %s39, 85
    %s41 = sshrl.u32 %s40, 1
    %s42 = sor.u32 %s40, %s41
    %s43 = sand.u32 51, %s42
    %s44 = sshrl.u32 %s43, 2
    %s45 = sor.u32 %s43, %s44
    %s46 = sand.u32 15, %s45
    %v47 = vld [vmem:[%s37] sm:%s46]
    %v48 = vunpack.c.l.bf16 %v47
    %v49 = vunpack.c.h.bf16 %v47
    %s50 = scalar_lea.vmem [#allocation1], 8
    %51 = vst [vmem:[%s50] sm:%s4] %v48
    %s52 = sshrl.u32 %s4, 1
    %s53 = sor.u32 %s4, %s52
    %s54 = sand.u32 %s53, 85
    %s55 = sshrl.u32 %s54, 1
    %s56 = sor.u32 %s54, %s55
    %s57 = sand.u32 51, %s56
    %s58 = sshrl.u32 %s57, 2
    %s59 = sor.u32 %s57, %s58
    %s60 = sand.u32 15, %s59
    %v61 = vld [vmem:[%s0] sm:%s60]
    %v62 = vunpack.c.l.bf16 %v61
    %v63 = vunpack.c.h.bf16 %v61
    %64 = vst [vmem:[#allocation1] sm:%s4] %v62
    %v65 = vld [vmem:[#allocation1] sm:$0x7]
    %vm66 = vcmask 130048
    %67 = vst.msk [vmem:[#allocation0] ss:$16 sm:$0x3] %vm66, %v65
    %s68 = scalar_lea.vmem [#allocation0], 30
    %69 = vst.msk [vmem:[%s68] sm:$0x4] %vm66, %v65
    %s70 = scalar_lea.vmem [#allocation1], 8
    %v71 = vld [vmem:[%s70] sm:$0x7]
    %vm72 = vcmask 130048
    %s73 = scalar_lea.vmem [#allocation0], 8
    %74 = vst.msk [vmem:[%s73] ss:$16 sm:$0x3] %vm72, %v71
    %s75 = scalar_lea.vmem [#allocation0], 38
    %76 = vst.msk [vmem:[%s75] sm:$0x4] %vm72, %v71
    %s77 = scalar_lea.vmem [#allocation1], 16
    %v78 = vld [vmem:[%s77] sm:$0x7]
    %vm79 = vcmask 130048
    %s80 = scalar_lea.vmem [#allocation0], 48
    %81 = vst.msk [vmem:[%s80] ss:$16 sm:$0x3] %vm79, %v78
    %s82 = scalar_lea.vmem [#allocation0], 78
    %83 = vst.msk [vmem:[%s82] sm:$0x4] %vm79, %v78
    %s84 = scalar_lea.vmem [#allocation1], 24
    %v85 = vld [vmem:[%s84] sm:$0x7]
    %vm86 = vcmask 130048
    %s87 = scalar_lea.vmem [#allocation0], 56
    %88 = vst.msk [vmem:[%s87] ss:$16 sm:$0x3] %vm86, %v85
    %s89 = scalar_lea.vmem [#allocation0], 86
    %90 = vst.msk [vmem:[%s89] sm:$0x4] %vm86, %v85
    %v91 = vld.sshfl [vmem:[#allocation1] sm:$0xff pattern:$0xaaa29180]
    %s92 = scalar_lea.vmem [#allocation1], 4294967264
    %s93 = smov 192
    %v94 = vld [vmem:[%s92] ss:$8 sm:%s93]
    %vm95 = vcmask 1047558
    %v96 = vsel %vm95, %v94, %v91
    %97 = vrot.lane.b32.xlu0 %v96, 112
    %v98 = vpop.permute.xlu0 %97
    %vm99 = vcmask 130048
    %s100 = scalar_lea.vmem [#allocation0], 1
    %101 = vst.msk [vmem:[%s100] ss:$8 sm:$0xf] %vm99, %v98
    %s102 = scalar_lea.vmem [#allocation0], 1
    %103 = vst.msk [vmem:[%s102] ss:$8 sm:$0xf0] %vm99, %v98
    %s104 = scalar_lea.vmem [#allocation1], 17
    %v105 = vld.sshfl [vmem:[%s104] sm:$0xff pattern:$0x99999180]
    %106 = vrot.lane.b32.xlu0 %v105, 112
    %v107 = vpop.permute.xlu0 %106
    %vm108 = vcmask 130048
    %s109 = scalar_lea.vmem [#allocation0], 65
    %110 = vst.msk [vmem:[%s109] ss:$8 sm:$0xf] %vm108, %v107
    %v111 = vld.sshfl [vmem:[#allocation1] sm:$0xff pattern:$0xaaa29180]
    %s112 = scalar_lea.vmem [#allocation1], 4294967264
    %s113 = smov 192
    %v114 = vld [vmem:[%s112] ss:$8 sm:%s113]
    %vm115 = vcmask 1047558
    %v116 = vsel %vm115, %v114, %v111
    %117 = vrot.lane.b32.xlu0 %v116, 96
    %v118 = vpop.permute.xlu0 %117
    %vm119 = vcmask 130048
    %s120 = scalar_lea.vmem [#allocation0], 2
    %121 = vst.msk [vmem:[%s120] ss:$8 sm:$0xf] %vm119, %v118
    %s122 = scalar_lea.vmem [#allocation0], 2
    %123 = vst.msk [vmem:[%s122] ss:$8 sm:$0xf0] %vm119, %v118
    %s124 = scalar_lea.vmem [#allocation1], 17
    %v125 = vld.sshfl [vmem:[%s124] sm:$0xff pattern:$0x99999180]
    %126 = vrot.lane.b32.xlu0 %v125, 96
    %v127 = vpop.permute.xlu0 %126
    %vm128 = vcmask 130048
    %s129 = scalar_lea.vmem [#allocation0], 66
    %130 = vst.msk [vmem:[%s129] ss:$8 sm:$0xf] %vm128, %v127
    %v131 = vld.sshfl [vmem:[#allocation1] sm:$0xff pattern:$0xaaa29180]
    %s132 = scalar_lea.vmem [#allocation1], 4294967264
    %s133 = smov 192
    %v134 = vld [vmem:[%s132] ss:$8 sm:%s133]
    %vm135 = vcmask 1047558
    %v136 = vsel %vm135, %v134, %v131
    %137 = vrot.lane.b32.xlu0 %v136, 80
    %v138 = vpop.permute.xlu0 %137
    %vm139 = vcmask 130048
    %s140 = scalar_lea.vmem [#allocation0], 3
    %141 = vst.msk [vmem:[%s140] ss:$8 sm:$0xf] %vm139, %v138
    %s142 = scalar_lea.vmem [#allocation0], 3
    %143 = vst.msk [vmem:[%s142] ss:$8 sm:$0xf0] %vm139, %v138
    %s144 = scalar_lea.vmem [#allocation1], 17
    %v145 = vld.sshfl [vmem:[%s144] sm:$0xff pattern:$0x99999180]
    %146 = vrot.lane.b32.xlu0 %v145, 80
    %v147 = vpop.permute.xlu0 %146
    %vm148 = vcmask 130048
    %s149 = scalar_lea.vmem [#allocation0], 67
    %150 = vst.msk [vmem:[%s149] ss:$8 sm:$0xf] %vm148, %v147
    %v151 = vld.sshfl [vmem:[#allocation1] sm:$0xff pattern:$0xaaa29180]
    %s152 = scalar_lea.vmem [#allocation1], 4294967264
    %s153 = smov 192
    %v154 = vld [vmem:[%s152] ss:$8 sm:%s153]
    %vm155 = vcmask 1047558
    %v156 = vsel %vm155, %v154, %v151
    %157 = vrot.lane.b32.xlu0 %v156, 64
    %v158 = vpop.permute.xlu0 %157
    %vm159 = vcmask 130048
    %s160 = scalar_lea.vmem [#allocation0], 4
    %161 = vst.msk [vmem:[%s160] ss:$8 sm:$0xf] %vm159, %v158
    %s162 = scalar_lea.vmem [#allocation0], 4
    %163 = vst.msk [vmem:[%s162] ss:$8 sm:$0xf0] %vm159, %v158
    %s164 = scalar_lea.vmem [#allocation1], 17
    %v165 = vld.sshfl [vmem:[%s164] sm:$0xff pattern:$0x99999180]
    %166 = vrot.lane.b32.xlu0 %v165, 64
    %v167 = vpop.permute.xlu0 %166
    %vm168 = vcmask 130048
    %s169 = scalar_lea.vmem [#allocation0], 68
    %170 = vst.msk [vmem:[%s169] ss:$8 sm:$0xf] %vm168, %v167
    %v171 = vld.sshfl [vmem:[#allocation1] sm:$0xff pattern:$0xaaa29180]
    %s172 = scalar_lea.vmem [#allocation1], 4294967264
    %s173 = smov 192
    %v174 = vld [vmem:[%s172] ss:$8 sm:%s173]
    %vm175 = vcmask 1047558
    %v176 = vsel %vm175, %v174, %v171
    %177 = vrot.lane.b32.xlu0 %v176, 48
    %v178 = vpop.permute.xlu0 %177
    %vm179 = vcmask 130048
    %s180 = scalar_lea.vmem [#allocation0], 5
    %181 = vst.msk [vmem:[%s180] ss:$8 sm:$0xf] %vm179, %v178
    %s182 = scalar_lea.vmem [#allocation0], 5
    %183 = vst.msk [vmem:[%s182] ss:$8 sm:$0xf0] %vm179, %v178
    %s184 = scalar_lea.vmem [#allocation1], 17
    %v185 = vld.sshfl [vmem:[%s184] sm:$0xff pattern:$0x99999180]
    %186 = vrot.lane.b32.xlu0 %v185, 48
    %v187 = vpop.permute.xlu0 %186
    %vm188 = vcmask 130048
    %s189 = scalar_lea.vmem [#allocation0], 69
    %190 = vst.msk [vmem:[%s189] ss:$8 sm:$0xf] %vm188, %v187
    %v191 = vld.sshfl [vmem:[#allocation1] sm:$0xff pattern:$0xaaa29180]
    %s192 = scalar_lea.vmem [#allocation1], 4294967264
    %s193 = smov 192
    %v194 = vld [vmem:[%s192] ss:$8 sm:%s193]
    %vm195 = vcmask 1047558
    %v196 = vsel %vm195, %v194, %v191
    %197 = vrot.lane.b32.xlu0 %v196, 32
    %v198 = vpop.permute.xlu0 %197
    %vm199 = vcmask 130048
    %s200 = scalar_lea.vmem [#allocation0], 6
    %201 = vst.msk [vmem:[%s200] ss:$8 sm:$0xf] %vm199, %v198
    %s202 = scalar_lea.vmem [#allocation0], 6
    %203 = vst.msk [vmem:[%s202] ss:$8 sm:$0xf0] %vm199, %v198
    %s204 = scalar_lea.vmem [#allocation1], 17
    %v205 = vld.sshfl [vmem:[%s204] sm:$0xff pattern:$0x99999180]
    %206 = vrot.lane.b32.xlu0 %v205, 32
    %v207 = vpop.permute.xlu0 %206
    %vm208 = vcmask 130048
    %s209 = scalar_lea.vmem [#allocation0], 70
    %210 = vst.msk [vmem:[%s209] ss:$8 sm:$0xf] %vm208, %v207
    %v211 = vld.sshfl [vmem:[#allocation1] sm:$0xff pattern:$0xaaa29180]
    %s212 = scalar_lea.vmem [#allocation1], 4294967264
    %s213 = smov 192
    %v214 = vld [vmem:[%s212] ss:$8 sm:%s213]
    %vm215 = vcmask 1047558
    %v216 = vsel %vm215, %v214, %v211
    %217 = vrot.lane.b32.xlu0 %v216, 16
    %v218 = vpop.permute.xlu0 %217
    %vm219 = vcmask 130048
    %s220 = scalar_lea.vmem [#allocation0], 7
    %221 = vst.msk [vmem:[%s220] ss:$8 sm:$0xf] %vm219, %v218
    %s222 = scalar_lea.vmem [#allocation0], 7
    %223 = vst.msk [vmem:[%s222] ss:$8 sm:$0xf0] %vm219, %v218
    %s224 = scalar_lea.vmem [#allocation1], 17
    %v225 = vld.sshfl [vmem:[%s224] sm:$0xff pattern:$0x99999180]
    %226 = vrot.lane.b32.xlu0 %v225, 16
    %v227 = vpop.permute.xlu0 %226
    %vm228 = vcmask 130048
    %s229 = scalar_lea.vmem [#allocation0], 71
    %230 = vst.msk [vmem:[%s229] ss:$8 sm:$0xf] %vm228, %v227
    %s232 = smul.u32 4, 2
    %s233 = sshllo.u32 0, %s232
    %s234 = sshrl.u32 %s232, 1
    %v235 = vld [vmem:[#allocation0] sm:%s233]
    %v236 = vpack.c.bf16 0.0, %v235
    %s237 = sshllo.u32 0, %s234
    %238 = vst [vmem:[%s1] sm:%s237] %v236
    %s239 = scalar_lea.vmem [#allocation0], 8
    %v240 = vld [vmem:[%s239] sm:%s233]
    %v241 = vpack.c.bf16 0.0, %v240
    %s242 = sshllo.u32 0, %s234
    %s243 = scalar_lea.vmem %s1, 4
    %244 = vst [vmem:[%s243] sm:%s242] %v241
    %s245 = scalar_lea.vmem [#allocation0], 16
    %v246 = vld [vmem:[%s245] sm:%s233]
    %v247 = vpack.c.bf16 0.0, %v246
    %s248 = sshllo.u32 0, %s234
    %s249 = smul.addr 4, 2
    %s250 = scalar_lea.vmem %s1, %s249
    %251 = vst [vmem:[%s250] sm:%s248] %v247
    %s252 = scalar_lea.vmem [#allocation0], 24
    %v253 = vld [vmem:[%s252] sm:%s233]
    %v254 = vpack.c.bf16 0.0, %v253
    %s255 = sshllo.u32 0, %s234
    %s256 = smul.addr 4, 3
    %s257 = scalar_lea.vmem %s1, %s256
    %258 = vst [vmem:[%s257] sm:%s255] %v254
    %s259 = scalar_lea.vmem [#allocation0], 32
    %v260 = vld [vmem:[%s259] sm:%s233]
    %v261 = vpack.c.bf16 0.0, %v260
    %s262 = sshllo.u32 0, %s234
    %s263 = smul.addr 4, 4
    %s264 = scalar_lea.vmem %s1, %s263
    %265 = vst [vmem:[%s264] sm:%s262] %v261
    %s266 = scalar_lea.vmem [#allocation0], 40
    %v267 = vld [vmem:[%s266] sm:%s233]
    %v268 = vpack.c.bf16 0.0, %v267
    %s269 = sshllo.u32 0, %s234
    %s270 = smul.addr 4, 5
    %s271 = scalar_lea.vmem %s1, %s270
    %272 = vst [vmem:[%s271] sm:%s269] %v268
    %s273 = scalar_lea.vmem [#allocation0], 48
    %v274 = vld [vmem:[%s273] sm:%s233]
    %v275 = vpack.c.bf16 0.0, %v274
    %s276 = sshllo.u32 0, %s234
    %s277 = smul.addr 4, 6
    %s278 = scalar_lea.vmem %s1, %s277
    %279 = vst [vmem:[%s278] sm:%s276] %v275
    %s280 = scalar_lea.vmem [#allocation0], 56
    %v281 = vld [vmem:[%s280] sm:%s233]
    %v282 = vpack.c.bf16 0.0, %v281
    %s283 = sshllo.u32 0, %s234
    %s284 = smul.addr 4, 7
    %s285 = scalar_lea.vmem %s1, %s284
    %286 = vst [vmem:[%s285] sm:%s283] %v282
    %s287 = scalar_lea.vmem [#allocation0], 64
    %v288 = vld [vmem:[%s287] sm:%s233]
    %v289 = vpack.c.bf16 0.0, %v288
    %s290 = sshllo.u32 0, %s234
    %s291 = smul.addr 4, 8
    %s292 = scalar_lea.vmem %s1, %s291
    %293 = vst [vmem:[%s292] sm:%s290] %v289
    %s294 = scalar_lea.vmem [#allocation0], 72
    %v295 = vld [vmem:[%s294] sm:%s233]
    %v296 = vpack.c.bf16 0.0, %v295
    %s297 = sshllo.u32 0, %s234
    %s298 = smul.addr 4, 9
    %s299 = scalar_lea.vmem %s1, %s298
    %300 = vst [vmem:[%s299] sm:%s297] %v296
    %s301 = scalar_lea.vmem [#allocation0], 80
    %v302 = vld [vmem:[%s301] sm:%s233]
    %v303 = vpack.c.bf16 0.0, %v302
    %s304 = sshllo.u32 0, %s234
    %s305 = smul.addr 4, 10
    %s306 = scalar_lea.vmem %s1, %s305
    %307 = vst [vmem:[%s306] sm:%s304] %v303
    %s308 = scalar_lea.vmem [#allocation0], 88
    %v309 = vld [vmem:[%s308] sm:%s233]
    %v310 = vpack.c.bf16 0.0, %v309
    %s311 = sshllo.u32 0, %s234
    %s312 = smul.addr 4, 11
    %s313 = scalar_lea.vmem %s1, %s312
    %314 = vst [vmem:[%s313] sm:%s311] %v310

// kernel: deep4net_forward.1
$region0: #{deep4net_forward.1}
  #allocation0 [shape = 'u32[]', space=smem, size = 0x4, offset = 0x4, fixed_abs, tag = 'smem constant byte address 0x4 - core index']
  #allocation1 [shape = 'u32[144,128]{1,0:T(1,128)}', space=vmem, size = 0x12000, scoped, tag = 'internal scratch']
  #allocation2 [shape = 'f32[1,1]{1,0:T(1,128)S(1)}', space=vmem, size = 0x200, scoped, tag = 'scoped memory for deep4net_forward.1']
  %s0 = inlined_call_operand.vmem [shape: bf16[2,48,128], index: 0, kind: input, shape index: {}]
  %s1 = inlined_call_operand.vmem [shape: bf16[75,39], index: 1, kind: input, shape index: {}]
  %s2 = inlined_call_operand.vmem [shape: f32[75,1], index: 2, kind: input, shape index: {}]
  %s3 = inlined_call_operand.vmem [shape: bf16[25,75], index: 3, kind: input, shape index: {}]
  %s4 = inlined_call_operand.vmem [shape: f32[25,1], index: 4, kind: input, shape index: {}]
  %s5 = inlined_call_operand.vmem [shape: bf16[50,325], index: 5, kind: input, shape index: {}]
  %s6 = inlined_call_operand.vmem [shape: f32[50,1], index: 6, kind: input, shape index: {}]
  %s7 = inlined_call_operand.vmem [shape: bf16[100,650], index: 7, kind: input, shape index: {}]
  %s8 = inlined_call_operand.vmem [shape: f32[100,1], index: 8, kind: input, shape index: {}]
  %s9 = inlined_call_operand.vmem [shape: bf16[200,1300], index: 9, kind: input, shape index: {}]
  %s10 = inlined_call_operand.vmem [shape: f32[200,1], index: 10, kind: input, shape index: {}]
  %s11 = inlined_call_operand.vmem [shape: f32[200,128], index: 11, kind: input, shape index: {}]
  %s12 = inlined_call_operand.<no memory space> [shape: f32[1,1], index: 12, kind: input, shape index: {}]
  %s13 = inlined_call_operand.vmem [shape: f32[2,200,128], index: 13, kind: output, shape index: {}]
  %s14 = sld [smem:[#allocation0]]
  $region85: #{deep4net_forward.1} parent=0
    _
  %s16 = ssub.s32 1, %s14
  %s17 = scalar_select 0, %s16, %s14
  %v18 = vstv %s12
  %19 = vst [vmem:[#allocation2] sm:$0x1] %v18
  loop: start=0, step=1, limit=4
  $region2: #{deep4net_forward.1} parent=0 // loop_pre_header
    _
  $region3: #{deep4net_forward.1} parent=0 // loop_header
    %s21 = sphi 0, %s25
    %p22 = scmp.ge.s32.totalorder %s21, 4
    %s31 = sphi 0, %s33
    %s34 = sphi 0, %s31
    %s35 = sphi 0, %s34
    %s51 = sphi 0, %s35
    %s55 = sphi 0, %s55
    %s57 = sphi 0, %s55
    %s58 = sphi 0, %s57
    %s72 = sphi 0, %s58
    %s76 = sphi 0, %s76
    %s78 = sphi 0, %s76
    %s79 = sphi 0, %s78
    %s93 = sphi 0, %s79
    %s97 = sphi 0, %s97
    %s99 = sphi 0, %s97
    %s100 = sphi 0, %s99
    %s114 = sphi 0, %s100
    %s118 = sphi 0, %s118
    %s120 = sphi 0, %s118
    %s121 = sphi 0, %s120
    %s135 = sphi 0, %s121
    %s139 = sphi 0, %s139
    %s141 = sphi 0, %s139
    %s142 = sphi 0, %s141
    %s156 = sphi 0, %s142
    %s160 = sphi 0, %s160
    %s162 = sphi 0, %s160
    %s163 = sphi 0, %s162
    %s177 = sphi 0, %s163
    %s181 = sphi 0, %s181
    %s183 = sphi 0, %s181
    %s184 = sphi 0, %s183
    %s198 = sphi 0, %s184
    %s202 = sphi 0, %s202
    %s204 = sphi 0, %s202
    %s205 = sphi 0, %s204
    %s219 = sphi 0, %s205
    %s223 = sphi 0, %s223
    %s225 = sphi 0, %s223
    %s226 = sphi 0, %s225
    %s240 = sphi 0, %s226
    %s244 = sphi 0, %s244
    %s246 = sphi 0, %s244
    %s247 = sphi 0, %s246
    %s261 = sphi 0, %s247
    %s265 = sphi 0, %s265
    %s267 = sphi 0, %s265
    %s268 = sphi 0, %s267
    %s282 = sphi 0, %s268
    %s286 = sphi 0, %s286
    %s288 = sphi 0, %s286
    %s289 = sphi 0, %s288
    %s303 = sphi 0, %s289
    %s309 = sphi 0, %s311
    %s312 = sphi 0, %s309
    %s313 = sphi 0, %s312
    %s329 = sphi 0, %s313
  $region4: #{deep4net_forward.1} parent=0 // loop_header_branch
    %24 = sbr.rel (%p22) target = $region8
  $region5: #{deep4net_forward.1} parent=0 // loop_body
    %s26 = ssub.s32 %s21, 1
    %s27 = ssub.s32 %s21, 2
    %s28 = sadd.s32 %s21, 1
    %s29 = ssub.s32 %s21, %s28
    %p30 = scmp.eq.s32.totalorder %s29, 0
    %s32 = sadd.s32 %s31, 1
    %s33 = scalar_select %p30, %s31, %s32
    %p36 = pneg %p30
    %p37 = scmp.eq.s32.totalorder %s21, 1
    %p38 = por %p36, %p37
    %p39 = scmp.ne.s32.totalorder %s31, %s34
    %p40 = scmp.eq.s32.totalorder %s21, 0
    %p41 = por %p39, %p40
    %p42 = scmp.ne.s32.totalorder %s31, %s34
    %p43 = scmp.eq.s32.totalorder %s26, 1
    %p44 = por %p42, %p43
    %p45 = scmp.ne.s32.totalorder %s34, %s35
    %p46 = scmp.eq.s32.totalorder %s26, 0
    %p47 = por %p45, %p46
    %p48 = scmp.ne.s32.totalorder %s34, %s35
    %p49 = scmp.eq.s32.totalorder %s27, 1
    %p50 = por %p48, %p49
    %p52 = scmp.ne.s32.totalorder %s35, %s51
    %p53 = scmp.eq.s32.totalorder %s27, 0
    %p54 = por %p52, %p53
    %s56 = sadd.s32 %s55, 1
    %p59 = scmp.eq.s32.totalorder %s21, 1
    %p60 = scmp.ne.s32.totalorder %s55, %s57
    %p61 = scmp.eq.s32.totalorder %s21, 0
    %p62 = por %p60, %p61
    %p63 = scmp.ne.s32.totalorder %s55, %s57
    %p64 = scmp.eq.s32.totalorder %s26, 1
    %p65 = por %p63, %p64
    %p66 = scmp.ne.s32.totalorder %s57, %s58
    %p67 = scmp.eq.s32.totalorder %s26, 0
    %p68 = por %p66, %p67
    %p69 = scmp.ne.s32.totalorder %s57, %s58
    %p70 = scmp.eq.s32.totalorder %s27, 1
    %p71 = por %p69, %p70
    %p73 = scmp.ne.s32.totalorder %s58, %s72
    %p74 = scmp.eq.s32.totalorder %s27, 0
    %p75 = por %p73, %p74
    %s77 = sadd.s32 %s76, 1
    %p80 = scmp.eq.s32.totalorder %s21, 1
    %p81 = scmp.ne.s32.totalorder %s76, %s78
    %p82 = scmp.eq.s32.totalorder %s21, 0
    %p83 = por %p81, %p82
    %p84 = scmp.ne.s32.totalorder %s76, %s78
    %p85 = scmp.eq.s32.totalorder %s26, 1
    %p86 = por %p84, %p85
    %p87 = scmp.ne.s32.totalorder %s78, %s79
    %p88 = scmp.eq.s32.totalorder %s26, 0
    %p89 = por %p87, %p88
    %p90 = scmp.ne.s32.totalorder %s78, %s79
    %p91 = scmp.eq.s32.totalorder %s27, 1
    %p92 = por %p90, %p91
    %p94 = scmp.ne.s32.totalorder %s79, %s93
    %p95 = scmp.eq.s32.totalorder %s27, 0
    %p96 = por %p94, %p95
    %s98 = sadd.s32 %s97, 1
    %p101 = scmp.eq.s32.totalorder %s21, 1
    %p102 = scmp.ne.s32.totalorder %s97, %s99
    %p103 = scmp.eq.s32.totalorder %s21, 0
    %p104 = por %p102, %p103
    %p105 = scmp.ne.s32.totalorder %s97, %s99
    %p106 = scmp.eq.s32.totalorder %s26, 1
    %p107 = por %p105, %p106
    %p108 = scmp.ne.s32.totalorder %s99, %s100
    %p109 = scmp.eq.s32.totalorder %s26, 0
    %p110 = por %p108, %p109
    %p111 = scmp.ne.s32.totalorder %s99, %s100
    %p112 = scmp.eq.s32.totalorder %s27, 1
    %p113 = por %p111, %p112
    %p115 = scmp.ne.s32.totalorder %s100, %s114
    %p116 = scmp.eq.s32.totalorder %s27, 0
    %p117 = por %p115, %p116
    %s119 = sadd.s32 %s118, 1
    %p122 = scmp.eq.s32.totalorder %s21, 1
    %p123 = scmp.ne.s32.totalorder %s118, %s120
    %p124 = scmp.eq.s32.totalorder %s21, 0
    %p125 = por %p123, %p124
    %p126 = scmp.ne.s32.totalorder %s118, %s120
    %p127 = scmp.eq.s32.totalorder %s26, 1
    %p128 = por %p126, %p127
    %p129 = scmp.ne.s32.totalorder %s120, %s121
    %p130 = scmp.eq.s32.totalorder %s26, 0
    %p131 = por %p129, %p130
    %p132 = scmp.ne.s32.totalorder %s120, %s121
    %p133 = scmp.eq.s32.totalorder %s27, 1
    %p134 = por %p132, %p133
    %p136 = scmp.ne.s32.totalorder %s121, %s135
    %p137 = scmp.eq.s32.totalorder %s27, 0
    %p138 = por %p136, %p137
    %s140 = sadd.s32 %s139, 1
    %p143 = scmp.eq.s32.totalorder %s21, 1
    %p144 = scmp.ne.s32.totalorder %s139, %s141
    %p145 = scmp.eq.s32.totalorder %s21, 0
    %p146 = por %p144, %p145
    %p147 = scmp.ne.s32.totalorder %s139, %s141
    %p148 = scmp.eq.s32.totalorder %s26, 1
    %p149 = por %p147, %p148
    %p150 = scmp.ne.s32.totalorder %s141, %s142
    %p151 = scmp.eq.s32.totalorder %s26, 0
    %p152 = por %p150, %p151
    %p153 = scmp.ne.s32.totalorder %s141, %s142
    %p154 = scmp.eq.s32.totalorder %s27, 1
    %p155 = por %p153, %p154
    %p157 = scmp.ne.s32.totalorder %s142, %s156
    %p158 = scmp.eq.s32.totalorder %s27, 0
    %p159 = por %p157, %p158
    %s161 = sadd.s32 %s160, 1
    %p164 = scmp.eq.s32.totalorder %s21, 1
    %p165 = scmp.ne.s32.totalorder %s160, %s162
    %p166 = scmp.eq.s32.totalorder %s21, 0
    %p167 = por %p165, %p166
    %p168 = scmp.ne.s32.totalorder %s160, %s162
    %p169 = scmp.eq.s32.totalorder %s26, 1
    %p170 = por %p168, %p169
    %p171 = scmp.ne.s32.totalorder %s162, %s163
    %p172 = scmp.eq.s32.totalorder %s26, 0
    %p173 = por %p171, %p172
    %p174 = scmp.ne.s32.totalorder %s162, %s163
    %p175 = scmp.eq.s32.totalorder %s27, 1
    %p176 = por %p174, %p175
    %p178 = scmp.ne.s32.totalorder %s163, %s177
    %p179 = scmp.eq.s32.totalorder %s27, 0
    %p180 = por %p178, %p179
    %s182 = sadd.s32 %s181, 1
    %p185 = scmp.eq.s32.totalorder %s21, 1
    %p186 = scmp.ne.s32.totalorder %s181, %s183
    %p187 = scmp.eq.s32.totalorder %s21, 0
    %p188 = por %p186, %p187
    %p189 = scmp.ne.s32.totalorder %s181, %s183
    %p190 = scmp.eq.s32.totalorder %s26, 1
    %p191 = por %p189, %p190
    %p192 = scmp.ne.s32.totalorder %s183, %s184
    %p193 = scmp.eq.s32.totalorder %s26, 0
    %p194 = por %p192, %p193
    %p195 = scmp.ne.s32.totalorder %s183, %s184
    %p196 = scmp.eq.s32.totalorder %s27, 1
    %p197 = por %p195, %p196
    %p199 = scmp.ne.s32.totalorder %s184, %s198
    %p200 = scmp.eq.s32.totalorder %s27, 0
    %p201 = por %p199, %p200
    %s203 = sadd.s32 %s202, 1
    %p206 = scmp.eq.s32.totalorder %s21, 1
    %p207 = scmp.ne.s32.totalorder %s202, %s204
    %p208 = scmp.eq.s32.totalorder %s21, 0
    %p209 = por %p207, %p208
    %p210 = scmp.ne.s32.totalorder %s202, %s204
    %p211 = scmp.eq.s32.totalorder %s26, 1
    %p212 = por %p210, %p211
    %p213 = scmp.ne.s32.totalorder %s204, %s205
    %p214 = scmp.eq.s32.totalorder %s26, 0
    %p215 = por %p213, %p214
    %p216 = scmp.ne.s32.totalorder %s204, %s205
    %p217 = scmp.eq.s32.totalorder %s27, 1
    %p218 = por %p216, %p217
    %p220 = scmp.ne.s32.totalorder %s205, %s219
    %p221 = scmp.eq.s32.totalorder %s27, 0
    %p222 = por %p220, %p221
    %s224 = sadd.s32 %s223, 1
    %p227 = scmp.eq.s32.totalorder %s21, 1
    %p228 = scmp.ne.s32.totalorder %s223, %s225
    %p229 = scmp.eq.s32.totalorder %s21, 0
    %p230 = por %p228, %p229
    %p231 = scmp.ne.s32.totalorder %s223, %s225
    %p232 = scmp.eq.s32.totalorder %s26, 1
    %p233 = por %p231, %p232
    %p234 = scmp.ne.s32.totalorder %s225, %s226
    %p235 = scmp.eq.s32.totalorder %s26, 0
    %p236 = por %p234, %p235
    %p237 = scmp.ne.s32.totalorder %s225, %s226
    %p238 = scmp.eq.s32.totalorder %s27, 1
    %p239 = por %p237, %p238
    %p241 = scmp.ne.s32.totalorder %s226, %s240
    %p242 = scmp.eq.s32.totalorder %s27, 0
    %p243 = por %p241, %p242
    %s245 = sadd.s32 %s244, 1
    %p248 = scmp.eq.s32.totalorder %s21, 1
    %p249 = scmp.ne.s32.totalorder %s244, %s246
    %p250 = scmp.eq.s32.totalorder %s21, 0
    %p251 = por %p249, %p250
    %p252 = scmp.ne.s32.totalorder %s244, %s246
    %p253 = scmp.eq.s32.totalorder %s26, 1
    %p254 = por %p252, %p253
    %p255 = scmp.ne.s32.totalorder %s246, %s247
    %p256 = scmp.eq.s32.totalorder %s26, 0
    %p257 = por %p255, %p256
    %p258 = scmp.ne.s32.totalorder %s246, %s247
    %p259 = scmp.eq.s32.totalorder %s27, 1
    %p260 = por %p258, %p259
    %p262 = scmp.ne.s32.totalorder %s247, %s261
    %p263 = scmp.eq.s32.totalorder %s27, 0
    %p264 = por %p262, %p263
    %s266 = sadd.s32 %s265, 1
    %p269 = scmp.eq.s32.totalorder %s21, 1
    %p270 = scmp.ne.s32.totalorder %s265, %s267
    %p271 = scmp.eq.s32.totalorder %s21, 0
    %p272 = por %p270, %p271
    %p273 = scmp.ne.s32.totalorder %s265, %s267
    %p274 = scmp.eq.s32.totalorder %s26, 1
    %p275 = por %p273, %p274
    %p276 = scmp.ne.s32.totalorder %s267, %s268
    %p277 = scmp.eq.s32.totalorder %s26, 0
    %p278 = por %p276, %p277
    %p279 = scmp.ne.s32.totalorder %s267, %s268
    %p280 = scmp.eq.s32.totalorder %s27, 1
    %p281 = por %p279, %p280
    %p283 = scmp.ne.s32.totalorder %s268, %s282
    %p284 = scmp.eq.s32.totalorder %s27, 0
    %p285 = por %p283, %p284
    %s287 = sadd.s32 %s286, 1
    %p290 = scmp.eq.s32.totalorder %s21, 1
    %p291 = scmp.ne.s32.totalorder %s286, %s288
    %p292 = scmp.eq.s32.totalorder %s21, 0
    %p293 = por %p291, %p292
    %p294 = scmp.ne.s32.totalorder %s286, %s288
    %p295 = scmp.eq.s32.totalorder %s26, 1
    %p296 = por %p294, %p295
    %p297 = scmp.ne.s32.totalorder %s288, %s289
    %p298 = scmp.eq.s32.totalorder %s26, 0
    %p299 = por %p297, %p298
    %p300 = scmp.ne.s32.totalorder %s288, %s289
    %p301 = scmp.eq.s32.totalorder %s27, 1
    %p302 = por %p300, %p301
    %p304 = scmp.ne.s32.totalorder %s289, %s303
    %p305 = scmp.eq.s32.totalorder %s27, 0
    %p306 = por %p304, %p305
    %s307 = ssub.s32 %s21, %s28
    %p308 = scmp.eq.s32.totalorder %s307, 0
    %s310 = sadd.s32 %s309, 1
    %s311 = scalar_select %p308, %s309, %s310
    %p314 = pneg %p308
    %p315 = scmp.eq.s32.totalorder %s21, 1
    %p316 = por %p314, %p315
    %p317 = scmp.ne.s32.totalorder %s309, %s312
    %p318 = scmp.eq.s32.totalorder %s21, 0
    %p319 = por %p317, %p318
    %p320 = scmp.ne.s32.totalorder %s309, %s312
    %p321 = scmp.eq.s32.totalorder %s26, 1
    %p322 = por %p320, %p321
    %p323 = scmp.ne.s32.totalorder %s312, %s313
    %p324 = scmp.eq.s32.totalorder %s26, 0
    %p325 = por %p323, %p324
    %p326 = scmp.ne.s32.totalorder %s312, %s313
    %p327 = scmp.eq.s32.totalorder %s27, 1
    %p328 = por %p326, %p327
    %p330 = scmp.ne.s32.totalorder %s313, %s329
    %p331 = scmp.eq.s32.totalorder %s27, 0
    %p332 = por %p330, %p331
    %p333 = scmp.le.s32.totalorder 1, %s21
    %p334 = scmp.lt.s32.totalorder %s21, 3
    %p335 = pnand %p333, %p334
    %p336 = pneg %p335
    // Predicated region
    $region9: #{deep4net_forward.1} parent=5 // pred_check
      _
    $region10: #{deep4net_forward.1} parent=5 // pred_check_branch
      %338 = sbr.rel (%p335) target = $region12
    $region11: #{deep4net_forward.1} parent=5 // pred_region
      %s339 = ssub.s32 %s21, 1
      // Predicated region
      $region13: #{deep4net_forward.1} parent=11 // pred_check
        %p340 = pneg %p68
      $region14: #{deep4net_forward.1} parent=11 // pred_check_branch
        %342 = sbr.rel (%p340) target = $region16
      $region15: #{deep4net_forward.1} parent=11 // pred_region
        _
      $region16: #{deep4net_forward.1} parent=11 // pred_fallthru
        _
      // Predicated region
      $region17: #{deep4net_forward.1} parent=11 // pred_check
        %p343 = pneg %p89
      $region18: #{deep4net_forward.1} parent=11 // pred_check_branch
        %345 = sbr.rel (%p343) target = $region20
      $region19: #{deep4net_forward.1} parent=11 // pred_region
        _
      $region20: #{deep4net_forward.1} parent=11 // pred_fallthru
        _
      // Predicated region
      $region21: #{deep4net_forward.1} parent=11 // pred_check
        %p346 = pneg %p110
      $region22: #{deep4net_forward.1} parent=11 // pred_check_branch
        %348 = sbr.rel (%p346) target = $region24
      $region23: #{deep4net_forward.1} parent=11 // pred_region
        _
      $region24: #{deep4net_forward.1} parent=11 // pred_fallthru
        _
      // Predicated region
      $region25: #{deep4net_forward.1} parent=11 // pred_check
        %p349 = pneg %p131
      $region26: #{deep4net_forward.1} parent=11 // pred_check_branch
        %351 = sbr.rel (%p349) target = $region28
      $region27: #{deep4net_forward.1} parent=11 // pred_region
        _
      $region28: #{deep4net_forward.1} parent=11 // pred_fallthru
        _
      // Predicated region
      $region29: #{deep4net_forward.1} parent=11 // pred_check
        %p352 = pneg %p152
      $region30: #{deep4net_forward.1} parent=11 // pred_check_branch
        %354 = sbr.rel (%p352) target = $region32
      $region31: #{deep4net_forward.1} parent=11 // pred_region
        _
      $region32: #{deep4net_forward.1} parent=11 // pred_fallthru
        _
      // Predicated region
      $region33: #{deep4net_forward.1} parent=11 // pred_check
        %p355 = pneg %p173
      $region34: #{deep4net_forward.1} parent=11 // pred_check_branch
        %357 = sbr.rel (%p355) target = $region36
      $region35: #{deep4net_forward.1} parent=11 // pred_region
        _
      $region36: #{deep4net_forward.1} parent=11 // pred_fallthru
        _
      // Predicated region
      $region37: #{deep4net_forward.1} parent=11 // pred_check
        %p358 = pneg %p194
      $region38: #{deep4net_forward.1} parent=11 // pred_check_branch
        %360 = sbr.rel (%p358) target = $region40
      $region39: #{deep4net_forward.1} parent=11 // pred_region
        _
      $region40: #{deep4net_forward.1} parent=11 // pred_fallthru
        _
      // Predicated region
      $region41: #{deep4net_forward.1} parent=11 // pred_check
        %p361 = pneg %p215
      $region42: #{deep4net_forward.1} parent=11 // pred_check_branch
        %363 = sbr.rel (%p361) target = $region44
      $region43: #{deep4net_forward.1} parent=11 // pred_region
        _
      $region44: #{deep4net_forward.1} parent=11 // pred_fallthru
        _
      // Predicated region
      $region45: #{deep4net_forward.1} parent=11 // pred_check
        %p364 = pneg %p236
      $region46: #{deep4net_forward.1} parent=11 // pred_check_branch
        %366 = sbr.rel (%p364) target = $region48
      $region47: #{deep4net_forward.1} parent=11 // pred_region
        _
      $region48: #{deep4net_forward.1} parent=11 // pred_fallthru
        _
      // Predicated region
      $region49: #{deep4net_forward.1} parent=11 // pred_check
        %p367 = pneg %p257
      $region50: #{deep4net_forward.1} parent=11 // pred_check_branch
        %369 = sbr.rel (%p367) target = $region52
      $region51: #{deep4net_forward.1} parent=11 // pred_region
        _
      $region52: #{deep4net_forward.1} parent=11 // pred_fallthru
        _
      // Predicated region
      $region53: #{deep4net_forward.1} parent=11 // pred_check
        %p370 = pneg %p278
      $region54: #{deep4net_forward.1} parent=11 // pred_check_branch
        %372 = sbr.rel (%p370) target = $region56
      $region55: #{deep4net_forward.1} parent=11 // pred_region
        _
      $region56: #{deep4net_forward.1} parent=11 // pred_fallthru
        _
      // Predicated region
      $region57: #{deep4net_forward.1} parent=11 // pred_check
        %p373 = pneg %p299
      $region58: #{deep4net_forward.1} parent=11 // pred_check_branch
        %375 = sbr.rel (%p373) target = $region60
      $region59: #{deep4net_forward.1} parent=11 // pred_region
        _
      $region60: #{deep4net_forward.1} parent=11 // pred_fallthru
        _
    $region12: #{deep4net_forward.1} parent=5 // pred_fallthru
      _
    %p376 = scmp.lt.s32.totalorder %s21, 2
    // Predicated region
    $region61: #{deep4net_forward.1} parent=5 // pred_check
      %p377 = pneg %p376
    $region62: #{deep4net_forward.1} parent=5 // pred_check_branch
      %379 = sbr.rel (%p377) target = $region64
    $region63: #{deep4net_forward.1} parent=5 // pred_region
      // Predicated region
      $region65: #{deep4net_forward.1} parent=63 // pred_check
        %p380 = pneg %p41
      $region66: #{deep4net_forward.1} parent=63 // pred_check_branch
        %382 = sbr.rel (%p380) target = $region68
      $region67: #{deep4net_forward.1} parent=63 // pred_region
        %p383 = scmp.lt.s32.totalorder %s21, 1
        %s384 = scalar_select %p383, %s21, 1
        %s385 = smul.addr %s384, 6
        %s386 = smul.addr %s385, 4
        %s387 = scalar_lea.vmem %s0, %s386
      $region68: #{deep4net_forward.1} parent=63 // pred_fallthru
        _
    $region64: #{deep4net_forward.1} parent=5 // pred_fallthru
      _
    %p388 = scmp.le.s32.totalorder 1, %s21
    %p389 = scmp.lt.s32.totalorder %s21, 3
    %p390 = pnand %p388, %p389
    %p391 = pneg %p390
    // Predicated region
    $region69: #{deep4net_forward.1} parent=5 // pred_check
      _
    $region70: #{deep4net_forward.1} parent=5 // pred_check_branch
      %393 = sbr.rel (%p390) target = $region72
    $region71: #{deep4net_forward.1} parent=5 // pred_region
      %s394 = ssub.s32 %s21, 1
      %p395 = scmp.lt.s32.totalorder %s26, 1
      %s396 = scalar_select %p395, %s26, 1
      %s397 = smul.addr %s396, 6
      %s398 = smul.addr %s397, 4
      %s399 = scalar_lea.vmem %s0, %s398
      %p400 = pneg %p47
      %p401 = pneg %p44
      %p402 = pneg %p68
      %p403 = pneg %p65
      %p404 = pneg %p89
      %p405 = pneg %p86
      %p406 = pneg %p110
      %p407 = pneg %p107
      %p408 = pneg %p131
      %p409 = pneg %p128
      %p410 = pneg %p152
      %p411 = pneg %p149
      %p412 = pneg %p173
      %p413 = pneg %p170
      %p414 = pneg %p194
      %p415 = pneg %p191
      %p416 = pneg %p215
      %p417 = pneg %p212
      %p418 = pneg %p236
      %p419 = pneg %p233
      %p420 = pneg %p257
      %p421 = pneg %p254
      %p422 = pneg %p278
      %p423 = pneg %p275
      %p424 = pneg %p299
      %p425 = pneg %p296
      %p426 = pneg %p325
      %p427 = pneg %p322
      %p428 = scmp.lt.s32.totalorder %s26, 1
      %s429 = scalar_select %p428, %s26, 1
      %s430 = smul.addr %s429, 25
      %s431 = smul.addr %s430, 8
      %s432 = scalar_lea.vmem %s13, %s431
      %p433 = scmp.lt.s32.totalorder %s26, 1
      %s434 = scalar_select %p433, %s26, 1
      %s435 = smul.addr %s434, 6
      %s436 = smul.addr %s435, 4
      %s437 = scalar_lea.vmem %s0, %s436
      %p438 = scmp.lt.s32.totalorder %s26, 1
      %s439 = scalar_select %p438, %s26, 1
      %s440 = smul.addr %s439, 25
      %s441 = smul.addr %s440, 8
      %s442 = scalar_lea.vmem %s13, %s441
      %v444 = vlaneseq
      %v445 = vand.u32 %v444, 127
      %vm446 = vcmp.lt.s32.totalorder %v445, 16
      %v447 = vsel %vm446, 0.5, 0.0
      %v448 = vld [vmem:[%s437] sm:$0xf]
      %v449 = vld [vmem:[%s437 + $0x4] sm:$0xf]
      %v450 = vld [vmem:[%s437 + $0x8] sm:$0xf]
      %v451 = vld [vmem:[%s437 + $0xc] sm:$0xf]
      %v452 = vld [vmem:[%s437 + $0x10] sm:$0xf]
      %v453 = vld [vmem:[%s437 + $0x14] sm:$0xf]
      %v456 = vunpack.c.l.b16 %v451
      %v457 = vunpack.c.l.b16 %v452
      %v458 = vpack.c.b16 %v457, %v456
      %459 = vrot.lane.b32.xlu0 %v458, 1
      %v460 = vpop.permute.xlu0 %459
      %v462 = vpack.c.b16 %v457, %v457
      %463 = vrot.lane.b32.xlu0 %v462, 1
      %v464 = vpop.permute.xlu0 %463
      %v467 = vunpack.c.l.b16 %v453
      %v468 = vpack.c.b16 %v467, %v457
      %469 = vrot.lane.b32.xlu0 %v468, 1
      %v470 = vpop.permute.xlu0 %469
      %v472 = vpack.c.b16 %v467, %v467
      %473 = vrot.lane.b32.xlu0 %v472, 1
      %v474 = vpop.permute.xlu0 %473
      %v477 = vunpack.c.l.b16 %v448
      %v478 = vpack.c.b16 %v477, %v477
      %479 = vrot.lane.b32.xlu0 %v478, 127
      %v480 = vpop.permute.xlu0 %479
      %v483 = vunpack.c.l.b16 %v449
      %v484 = vpack.c.b16 %v483, %v477
      %485 = vrot.lane.b32.xlu0 %v484, 127
      %v486 = vpop.permute.xlu0 %485
      %v488 = vpack.c.b16 %v483, %v483
      %489 = vrot.lane.b32.xlu0 %v488, 127
      %v490 = vpop.permute.xlu0 %489
      %v493 = vunpack.c.l.b16 %v450
      %v494 = vpack.c.b16 %v493, %v483
      %495 = vrot.lane.b32.xlu0 %v494, 127
      %v496 = vpop.permute.xlu0 %495
      %v498 = vshrl.u32 %v464, 16
      %v500 = vrot.slane %v498, 5
      %v501 = vshll.u32 %v464, 16
      %v503 = vrot.slane %v501, 6
      %v504 = vor.u32 %v500, %v503
      %v506 = vrot.slane %v464, 7
      %v507 = vshrl.u32 %v470, 16
      %v509 = vshll.u32 %v470, 16
      %v511 = vrot.slane %v509, 1
      %v512 = vor.u32 %v507, %v511
      %v514 = vrot.slane %v474, 6
      %v515 = vshrl.u32 %v474, 16
      %v517 = vrot.slane %v515, 7
      %v518 = vshll.u32 %v474, 16
      %v520 = vor.u32 %v517, %v518
      %v521 = vrot.slane %v478, 5
      %v523 = vshrl.u32 %v478, 16
      %v525 = vrot.slane %v523, 6
      %v526 = vshll.u32 %v478, 16
      %v528 = vrot.slane %v526, 7
      %v529 = vor.u32 %v525, %v528
      %v531 = vshrl.u32 %v488, 16
      %v533 = vrot.slane %v531, 5
      %v534 = vshll.u32 %v488, 16
      %v536 = vrot.slane %v534, 6
      %v537 = vor.u32 %v533, %v536
      %v538 = vrot.slane %v488, 7
      %v540 = vshrl.u32 %v494, 16
      %v542 = vshll.u32 %v494, 16
      %v544 = vrot.slane %v542, 1
      %v545 = vor.u32 %v540, %v544
      %v546 = vpack.c.b16 %v493, %v493
      %v547 = vrot.slane %v546, 6
      %v549 = vshrl.u32 %v546, 16
      %v551 = vrot.slane %v549, 7
      %v552 = vshll.u32 %v546, 16
      %v554 = vor.u32 %v551, %v552
      %v555 = vpack.c.b16 %v456, %v456
      %v556 = vrot.slane %v555, 5
      %v558 = vshrl.u32 %v555, 16
      %v560 = vrot.slane %v558, 6
      %v561 = vshll.u32 %v555, 16
      %v563 = vrot.slane %v561, 7
      %v564 = vor.u32 %v560, %v563
      %v565 = vrot.slane %v498, 1
      %v566 = vrot.slane %v501, 2
      %v567 = vor.u32 %v565, %v566
      %v569 = vrot.slane %v470, 3
      %v570 = vrot.slane %v518, 1
      %v571 = vor.u32 %v515, %v570
      %v572 = vrot.slane %v474, 2
      %v573 = vrot.slane %v523, 7
      %v574 = vor.u32 %v573, %v526
      %v575 = vrot.slane %v478, 1
      %v577 = vshrl.u32 %v484, 16
      %v579 = vrot.slane %v577, 2
      %v580 = vshll.u32 %v484, 16
      %v582 = vrot.slane %v580, 3
      %v583 = vor.u32 %v579, %v582
      %v584 = vrot.slane %v531, 1
      %v585 = vrot.slane %v534, 2
      %v586 = vor.u32 %v584, %v585
      %v587 = vrot.slane %v494, 3
      %v588 = vrot.slane %v552, 1
      %v589 = vor.u32 %v549, %v588
      %v590 = vrot.slane %v546, 2
      %v591 = vrot.slane %v558, 7
      %v592 = vor.u32 %v591, %v561
      %v593 = vrot.slane %v555, 1
      %v595 = vshrl.u32 %v458, 16
      %v597 = vrot.slane %v595, 2
      %v598 = vshll.u32 %v458, 16
      %v600 = vrot.slane %v598, 3
      %v601 = vor.u32 %v597, %v600
      %v602 = vrot.slane %v507, 1
      %v603 = vrot.slane %v509, 2
      %v604 = vor.u32 %v602, %v603
      %v605 = vrot.slane %v474, 7
      %v606 = vrot.slane %v478, 6
      %v607 = vrot.slane %v484, 1
      %v608 = vrot.slane %v531, 6
      %v609 = vrot.slane %v534, 7
      %v610 = vor.u32 %v608, %v609
      %v611 = vrot.slane %v540, 1
      %v612 = vrot.slane %v542, 2
      %v613 = vor.u32 %v611, %v612
      %v614 = vrot.slane %v546, 7
      %v615 = vrot.slane %v555, 6
      %v616 = vrot.slane %v458, 1
      %v618 = vshrl.u32 %v462, 16
      %v620 = vrot.slane %v618, 6
      %v621 = vshll.u32 %v462, 16
      %v623 = vrot.slane %v621, 7
      %v624 = vor.u32 %v620, %v623
      %v625 = vrot.slane %v515, 5
      %v626 = vrot.slane %v518, 6
      %v627 = vor.u32 %v625, %v626
      %v628 = vrot.slane %v523, 4
      %v629 = vrot.slane %v526, 5
      %v630 = vor.u32 %v628, %v629
      %v631 = vrot.slane %v577, 7
      %v632 = vor.u32 %v631, %v580
      %v633 = vrot.slane %v488, 5
      %v634 = vrot.slane %v549, 5
      %v635 = vrot.slane %v552, 6
      %v636 = vor.u32 %v634, %v635
      %v637 = vrot.slane %v558, 4
      %v638 = vrot.slane %v561, 5
      %v639 = vor.u32 %v637, %v638
      %v640 = vrot.slane %v595, 7
      %v641 = vor.u32 %v640, %v598
      %v642 = vrot.slane %v462, 5
      %v643 = vrot.slane %v515, 1
      %v644 = vrot.slane %v518, 2
      %v645 = vor.u32 %v643, %v644
      %v646 = vrot.slane %v478, 7
      %v647 = vrot.slane %v526, 1
      %v648 = vor.u32 %v523, %v647
      %v649 = vrot.slane %v484, 2
      %v650 = vrot.slane %v531, 7
      %v651 = vor.u32 %v650, %v534
      %v652 = vrot.slane %v488, 1
      %v653 = vrot.slane %v540, 2
      %v654 = vrot.slane %v542, 3
      %v655 = vor.u32 %v653, %v654
      %v656 = vrot.slane %v549, 1
      %v657 = vrot.slane %v552, 2
      %v658 = vor.u32 %v656, %v657
      %v659 = vrot.slane %v555, 7
      %v660 = vrot.slane %v561, 1
      %v661 = vor.u32 %v558, %v660
      %v662 = vrot.slane %v458, 2
      %v663 = vrot.slane %v618, 7
      %v664 = vor.u32 %v663, %v621
      %v665 = vrot.slane %v462, 1
      %v667 = vshrl.u32 %v468, 16
      %v669 = vrot.slane %v667, 2
      %v670 = vshll.u32 %v468, 16
      %v672 = vrot.slane %v670, 3
      %v673 = vor.u32 %v669, %v672
      %v674 = vrot.slane %v523, 5
      %v675 = vrot.slane %v526, 6
      %v676 = vor.u32 %v674, %v675
      %v677 = vrot.slane %v580, 1
      %v678 = vor.u32 %v577, %v677
      %v679 = vrot.slane %v488, 6
      %v680 = vrot.slane %v494, 1
      %v681 = vrot.slane %v549, 6
      %v682 = vrot.slane %v552, 7
      %v683 = vor.u32 %v681, %v682
      %v684 = vrot.slane %v558, 5
      %v685 = vrot.slane %v561, 6
      %v686 = vor.u32 %v684, %v685
      %v687 = vrot.slane %v598, 1
      %v688 = vor.u32 %v595, %v687
      %v689 = vrot.slane %v462, 6
      %v690 = vrot.slane %v468, 1
      %v692 = vshrl.u32 %v472, 16
      %v694 = vrot.slane %v692, 6
      %v695 = vshll.u32 %v472, 16
      %v697 = vrot.slane %v695, 7
      %v698 = vor.u32 %v694, %v697
      %v699 = vrot.slane %v523, 1
      %v700 = vrot.slane %v526, 2
      %v701 = vor.u32 %v699, %v700
      %v702 = vrot.slane %v484, 3
      %v703 = vrot.slane %v534, 1
      %v704 = vor.u32 %v531, %v703
      %v705 = vrot.slane %v488, 2
      %v706 = vrot.slane %v540, 3
      %v707 = vrot.slane %v542, 4
      %v708 = vor.u32 %v706, %v707
      %v709 = vrot.slane %v546, 1
      %v710 = vrot.slane %v549, 2
      %v711 = vrot.slane %v552, 3
      %v712 = vor.u32 %v710, %v711
      %v713 = vrot.slane %v558, 1
      %v714 = vrot.slane %v561, 2
      %v715 = vor.u32 %v713, %v714
      %v716 = vrot.slane %v458, 3
      %v717 = vrot.slane %v621, 1
      %v718 = vor.u32 %v618, %v717
      %v719 = vrot.slane %v462, 2
      %v720 = vrot.slane %v667, 3
      %v721 = vrot.slane %v670, 4
      %v722 = vor.u32 %v720, %v721
      %v723 = vrot.slane %v472, 1
      %v724 = vrot.slane %v692, 2
      %v725 = vrot.slane %v695, 3
      %v726 = vor.u32 %v724, %v725
      %v727 = vrot.slane %v577, 1
      %v728 = vrot.slane %v580, 2
      %v729 = vor.u32 %v727, %v728
      %v730 = vrot.slane %v494, 2
      %v731 = vrot.slane %v595, 1
      %v732 = vrot.slane %v598, 2
      %v733 = vor.u32 %v731, %v732
      %v734 = vrot.slane %v462, 7
      %v735 = vrot.slane %v468, 2
      %v736 = vrot.slane %v692, 7
      %v737 = vor.u32 %v736, %v695
      %v738 = vshrl.u32 %v480, 16
      %v740 = vrot.slane %v738, 6
      %v741 = vshll.u32 %v480, 16
      %v743 = vrot.slane %v741, 7
      %v744 = vor.u32 %v740, %v743
      %v745 = vrot.slane %v618, 5
      %v746 = vrot.slane %v621, 6
      %v747 = vor.u32 %v745, %v746
      %v748 = vrot.slane %v670, 1
      %v749 = vor.u32 %v667, %v748
      %v750 = vrot.slane %v472, 6
      %v752 = vrot.slane %v480, 5
      %v753 = vrot.slane %v618, 1
      %v754 = vrot.slane %v621, 2
      %v755 = vor.u32 %v753, %v754
      %v756 = vrot.slane %v468, 3
      %v757 = vrot.slane %v695, 1
      %v758 = vor.u32 %v692, %v757
      %v759 = vrot.slane %v472, 2
      %v760 = vrot.slane %v738, 7
      %v761 = vor.u32 %v760, %v741
      %v762 = vrot.slane %v480, 1
      %v763 = vshrl.u32 %v486, 16
      %v765 = vrot.slane %v763, 2
      %v766 = vshll.u32 %v486, 16
      %v768 = vrot.slane %v766, 3
      %v769 = vor.u32 %v765, %v768
      %v770 = vrot.slane %v667, 1
      %v771 = vrot.slane %v670, 2
      %v772 = vor.u32 %v770, %v771
      %v773 = vrot.slane %v472, 7
      %v774 = vrot.slane %v480, 6
      %v776 = vrot.slane %v486, 1
      %v777 = vshrl.u32 %v490, 16
      %v779 = vrot.slane %v777, 6
      %v780 = vshll.u32 %v490, 16
      %v782 = vrot.slane %v780, 7
      %v783 = vor.u32 %v779, %v782
      %v784 = vrot.slane %v692, 5
      %v785 = vrot.slane %v695, 6
      %v786 = vor.u32 %v784, %v785
      %v787 = vrot.slane %v738, 4
      %v788 = vrot.slane %v741, 5
      %v789 = vor.u32 %v787, %v788
      %v790 = vrot.slane %v763, 7
      %v791 = vor.u32 %v790, %v766
      %v793 = vrot.slane %v490, 5
      %v794 = vrot.slane %v692, 1
      %v795 = vrot.slane %v695, 2
      %v796 = vor.u32 %v794, %v795
      %v797 = vrot.slane %v480, 7
      %v798 = vrot.slane %v741, 1
      %v799 = vor.u32 %v738, %v798
      %v800 = vrot.slane %v486, 2
      %v801 = vrot.slane %v777, 7
      %v802 = vor.u32 %v801, %v780
      %v803 = vrot.slane %v490, 1
      %v804 = vshrl.u32 %v496, 16
      %v806 = vrot.slane %v804, 2
      %v807 = vshll.u32 %v496, 16
      %v809 = vrot.slane %v807, 3
      %v810 = vor.u32 %v806, %v809
      %v812 = vrot.slane %v460, 3
      %v813 = vrot.slane %v504, 3
      %v814 = vrot.slane %v506, 3
      %v815 = vrot.slane %v512, 3
      %v816 = vrot.slane %v514, 3
      %v817 = vrot.slane %v520, 3
      %v818 = vrot.slane %v521, 3
      %v819 = vrot.slane %v529, 3
      %v820 = vrot.slane %v537, 3
      %v821 = vrot.slane %v538, 3
      %v822 = vrot.slane %v545, 3
      %v823 = vrot.slane %v547, 3
      %v824 = vrot.slane %v554, 3
      %v825 = vrot.slane %v556, 3
      %v826 = vrot.slane %v564, 3
      %v843 = vrot.slane %v567, 7
      %v844 = vrot.slane %v569, 7
      %v845 = vrot.slane %v571, 7
      %v846 = vrot.slane %v572, 7
      %v847 = vrot.slane %v574, 7
      %v848 = vrot.slane %v575, 7
      %v849 = vrot.slane %v583, 7
      %v850 = vrot.slane %v449, 7
      %v851 = vrot.slane %v586, 7
      %v852 = vrot.slane %v587, 7
      %v853 = vrot.slane %v589, 7
      %v854 = vrot.slane %v590, 7
      %v855 = vrot.slane %v592, 7
      %v856 = vrot.slane %v593, 7
      %v857 = vrot.slane %v601, 7
      %v874 = vrot.slane %v604, 7
      %v875 = vrot.slane %v605, 7
      %v876 = vrot.slane %v606, 7
      %v877 = vrot.slane %v607, 7
      %v878 = vrot.slane %v610, 7
      %v879 = vrot.slane %v613, 7
      %v880 = vrot.slane %v614, 7
      %v881 = vrot.slane %v615, 7
      %v882 = vrot.slane %v616, 7
      %v883 = vrot.slane %v624, 7
      %v884 = vrot.slane %v470, 7
      %v885 = vrot.slane %v627, 7
      %v886 = vrot.slane %v630, 7
      %v887 = vrot.slane %v632, 7
      %v888 = vrot.slane %v633, 7
      %v889 = vrot.slane %v494, 7
      %v890 = vrot.slane %v636, 7
      %v891 = vrot.slane %v639, 7
      %v892 = vrot.slane %v641, 7
      %v893 = vrot.slane %v642, 7
      %v910 = vrot.slane %v474, 3
      %v911 = vrot.slane %v645, 3
      %v912 = vrot.slane %v646, 3
      %v913 = vrot.slane %v648, 3
      %v914 = vrot.slane %v649, 3
      %v915 = vrot.slane %v651, 3
      %v916 = vrot.slane %v652, 3
      %v917 = vrot.slane %v655, 3
      %v918 = vrot.slane %v450, 3
      %v919 = vrot.slane %v658, 3
      %v920 = vrot.slane %v659, 3
      %v921 = vrot.slane %v661, 3
      %v922 = vrot.slane %v662, 3
      %v923 = vrot.slane %v664, 3
      %v924 = vrot.slane %v665, 3
      %v925 = vrot.slane %v673, 3
      %v926 = vrot.slane %v676, 3
      %v927 = vrot.slane %v678, 3
      %v928 = vrot.slane %v679, 3
      %v929 = vrot.slane %v680, 3
      %v930 = vrot.slane %v683, 3
      %v931 = vrot.slane %v686, 3
      %v932 = vrot.slane %v688, 3
      %v933 = vrot.slane %v689, 3
      %v934 = vrot.slane %v690, 3
      %v935 = vrot.slane %v698, 3
      %v952 = vrot.slane %v448, 7
      %v953 = vrot.slane %v701, 7
      %v954 = vrot.slane %v702, 7
      %v955 = vrot.slane %v704, 7
      %v956 = vrot.slane %v705, 7
      %v957 = vrot.slane %v708, 7
      %v958 = vrot.slane %v709, 7
      %v959 = vrot.slane %v712, 7
      %v960 = vrot.slane %v451, 7
      %v961 = vrot.slane %v715, 7
      %v962 = vrot.slane %v716, 7
      %v963 = vrot.slane %v718, 7
      %v964 = vrot.slane %v719, 7
      %v965 = vrot.slane %v722, 7
      %v966 = vrot.slane %v723, 7
      %v967 = vrot.slane %v726, 7
      %v968 = vrot.slane %v729, 7
      %v969 = vrot.slane %v538, 7
      %v970 = vrot.slane %v730, 7
      %v971 = vrot.slane %v554, 7
      %v972 = vrot.slane %v564, 7
      %v973 = vrot.slane %v733, 7
      %v974 = vrot.slane %v734, 7
      %v975 = vrot.slane %v735, 7
      %v976 = vrot.slane %v737, 7
      %v977 = vrot.slane %v744, 7
      %v994 = vrot.slane %v484, 7
      %v995 = vrot.slane %v537, 7
      %v996 = vrot.slane %v545, 7
      %v997 = vrot.slane %v547, 7
      %v998 = vrot.slane %v556, 7
      %v999 = vrot.slane %v458, 7
      %v1000 = vrot.slane %v747, 7
      %v1001 = vrot.slane %v749, 7
      %v1002 = vrot.slane %v750, 7
      %v1003 = vrot.slane %v752, 7
      %v1004 = vrot.slane %v449, 3
      %v1005 = vrot.slane %v586, 3
      %v1006 = vrot.slane %v587, 3
      %v1007 = vrot.slane %v589, 3
      %v1008 = vrot.slane %v590, 3
      %v1009 = vrot.slane %v592, 3
      %v1010 = vrot.slane %v593, 3
      %v1011 = vrot.slane %v601, 3
      %v1012 = vrot.slane %v452, 3
      %v1013 = vrot.slane %v755, 3
      %v1014 = vrot.slane %v756, 3
      %v1015 = vrot.slane %v758, 3
      %v1016 = vrot.slane %v759, 3
      %v1017 = vrot.slane %v761, 3
      %v1018 = vrot.slane %v762, 3
      %v1019 = vrot.slane %v769, 3
      %v1036 = vrot.slane %v613, 3
      %v1037 = vrot.slane %v614, 3
      %v1038 = vrot.slane %v615, 3
      %v1039 = vrot.slane %v616, 3
      %v1040 = vrot.slane %v624, 3
      %v1041 = vrot.slane %v772, 3
      %v1042 = vrot.slane %v773, 3
      %v1043 = vrot.slane %v774, 3
      %v1044 = vrot.slane %v776, 3
      %v1045 = vrot.slane %v783, 3
      %v1056 = vrot.slane %v636, 3
      %v1057 = vrot.slane %v639, 3
      %v1058 = vrot.slane %v641, 3
      %v1059 = vrot.slane %v642, 3
      %v1060 = vrot.slane %v786, 3
      %v1061 = vrot.slane %v789, 3
      %v1062 = vrot.slane %v791, 3
      %v1063 = vrot.slane %v793, 3
      %v1074 = vrot.slane %v450, 7
      %v1075 = vrot.slane %v658, 7
      %v1076 = vrot.slane %v659, 7
      %v1077 = vrot.slane %v661, 7
      %v1078 = vrot.slane %v662, 7
      %v1079 = vrot.slane %v664, 7
      %v1080 = vrot.slane %v665, 7
      %v1081 = vrot.slane %v673, 7
      %v1082 = vrot.slane %v453, 7
      %v1083 = vrot.slane %v796, 7
      %v1084 = vrot.slane %v797, 7
      %v1085 = vrot.slane %v799, 7
      %v1086 = vrot.slane %v800, 7
      %v1087 = vrot.slane %v802, 7
      %v1088 = vrot.slane %v803, 7
      %v1089 = vrot.slane %v810, 7
      %vm1090 = vcmask 1041408
      %vm1091 = vsmask.f32 1280
      %vm1092 = vmand %vm1090, %vm1091
      %v1093 = vsel %vm1092, %v812, %v506
      %v1094 = vsel %vm1092, %v813, %v843
      %v1095 = vsel %vm1092, %v814, %v844
      %v1096 = vsel %vm1092, %v815, %v845
      %v1097 = vsel %vm1092, %v816, %v846
      %v1098 = vsel %vm1092, %v817, %v847
      %v1099 = vsel %vm1092, %v818, %v848
      %v1100 = vsel %vm1092, %v819, %v849
      %v1101 = vsel %vm1092, %v702, %v850
      %v1102 = vsel %vm1092, %v820, %v851
      %v1103 = vsel %vm1092, %v821, %v852
      %v1104 = vsel %vm1092, %v822, %v853
      %v1105 = vsel %vm1092, %v823, %v854
      %v1106 = vsel %vm1092, %v824, %v855
      %v1107 = vsel %vm1092, %v825, %v856
      %v1108 = vsel %vm1092, %v826, %v857
      %vm1109 = vcmask 1042432
      %v1112 = vsel %vm1109, %v1093, %v506
      %v1116 = vsel %vm1109, %v1094, %v874
      %v1120 = vsel %vm1109, %v1095, %v875
      %v1124 = vsel %vm1109, %v1096, %v845
      %v1128 = vsel %vm1109, %v1097, %v876
      %v1132 = vsel %vm1109, %v1098, %v847
      %v1136 = vsel %vm1109, %v1099, %v877
      %v1140 = vsel %vm1109, %v1100, %v878
      %v1144 = vsel %vm1109, %v1101, %v850
      %v1148 = vsel %vm1109, %v1102, %v879
      %v1152 = vsel %vm1109, %v1103, %v880
      %v1156 = vsel %vm1109, %v1104, %v853
      %v1160 = vsel %vm1109, %v1105, %v881
      %v1164 = vsel %vm1109, %v1106, %v855
      %v1168 = vsel %vm1109, %v1107, %v882
      %v1172 = vsel %vm1109, %v1108, %v883
      %vm1174 = vcmask 1044480
      %vm1175 = vsmask.f32 4352
      %vm1176 = vmand %vm1174, %vm1175
      %v1177 = vsel %vm1176, %v1112, %v884
      %v1178 = vsel %vm1176, %v1116, %v885
      %v1179 = vsel %vm1176, %v1120, %v875
      %v1180 = vsel %vm1176, %v1124, %v886
      %v1181 = vsel %vm1176, %v1128, %v876
      %v1182 = vsel %vm1176, %v1132, %v887
      %v1183 = vsel %vm1176, %v1136, %v888
      %v1184 = vsel %vm1176, %v1140, %v878
      %v1185 = vsel %vm1176, %v1144, %v889
      %v1186 = vsel %vm1176, %v1148, %v890
      %v1187 = vsel %vm1176, %v1152, %v880
      %v1188 = vsel %vm1176, %v1156, %v891
      %v1189 = vsel %vm1176, %v1160, %v881
      %v1190 = vsel %vm1176, %v1164, %v892
      %v1191 = vsel %vm1176, %v1168, %v893
      %v1192 = vsel %vm1176, %v1172, %v883
      %vm1193 = vcmask 1045504
      %v1196 = vsel %vm1193, %v1177, %v910
      %v1200 = vsel %vm1193, %v1178, %v911
      %v1204 = vsel %vm1193, %v1179, %v912
      %v1208 = vsel %vm1193, %v1180, %v913
      %v1212 = vsel %vm1193, %v1181, %v914
      %v1216 = vsel %vm1193, %v1182, %v915
      %v1220 = vsel %vm1193, %v1183, %v916
      %v1224 = vsel %vm1193, %v1184, %v917
      %v1228 = vsel %vm1193, %v1185, %v918
      %v1232 = vsel %vm1193, %v1186, %v919
      %v1236 = vsel %vm1193, %v1187, %v920
      %v1240 = vsel %vm1193, %v1188, %v921
      %v1244 = vsel %vm1193, %v1189, %v922
      %v1248 = vsel %vm1193, %v1190, %v923
      %v1252 = vsel %vm1193, %v1191, %v924
      %v1256 = vsel %vm1193, %v1192, %v925
      %vm1258 = vcmask 1047552
      %vm1259 = vsmask.f32 7424
      %vm1260 = vmand %vm1258, %vm1259
      %v1261 = vsel %vm1260, %v1196, %v910
      %v1262 = vsel %vm1260, %v1200, %v926
      %v1263 = vsel %vm1260, %v1204, %v912
      %v1264 = vsel %vm1260, %v1208, %v927
      %v1265 = vsel %vm1260, %v1212, %v928
      %v1266 = vsel %vm1260, %v1216, %v915
      %v1267 = vsel %vm1260, %v1220, %v929
      %v1268 = vsel %vm1260, %v1224, %v930
      %v1269 = vsel %vm1260, %v1228, %v918
      %v1270 = vsel %vm1260, %v1232, %v931
      %v1271 = vsel %vm1260, %v1236, %v920
      %v1272 = vsel %vm1260, %v1240, %v932
      %v1273 = vsel %vm1260, %v1244, %v933
      %v1274 = vsel %vm1260, %v1248, %v923
      %v1275 = vsel %vm1260, %v1252, %v934
      %v1276 = vsel %vm1260, %v1256, %v935
      %vm1277 = vcmask 1040384
      %v1279 = vsel %vm1277, %v910, %v952
      %v1283 = vsel %vm1277, %v926, %v953
      %v1286 = vsel %vm1277, %v912, %v954
      %v1290 = vsel %vm1277, %v927, %v955
      %v1294 = vsel %vm1277, %v928, %v956
      %v1297 = vsel %vm1277, %v915, %v957
      %v1301 = vsel %vm1277, %v929, %v958
      %v1305 = vsel %vm1277, %v930, %v959
      %v1308 = vsel %vm1277, %v918, %v960
      %v1312 = vsel %vm1277, %v931, %v961
      %v1315 = vsel %vm1277, %v920, %v962
      %v1319 = vsel %vm1277, %v932, %v963
      %v1323 = vsel %vm1277, %v933, %v964
      %v1326 = vsel %vm1277, %v923, %v965
      %v1330 = vsel %vm1277, %v934, %v966
      %v1334 = vsel %vm1277, %v935, %v967
      %vm1336 = vcmask 1042432
      %vm1337 = vsmask.f32 2304
      %vm1338 = vmand %vm1336, %vm1337
      %v1339 = vsel %vm1338, %v1279, %v952
      %v1340 = vsel %vm1338, %v1283, %v968
      %v1341 = vsel %vm1338, %v1286, %v969
      %v1342 = vsel %vm1338, %v1290, %v955
      %v1343 = vsel %vm1338, %v1294, %v970
      %v1344 = vsel %vm1338, %v1297, %v971
      %v1345 = vsel %vm1338, %v1301, %v958
      %v1346 = vsel %vm1338, %v1305, %v972
      %v1347 = vsel %vm1338, %v1308, %v960
      %v1348 = vsel %vm1338, %v1312, %v973
      %v1349 = vsel %vm1338, %v1315, %v974
      %v1350 = vsel %vm1338, %v1319, %v963
      %v1351 = vsel %vm1338, %v1323, %v975
      %v1352 = vsel %vm1338, %v1326, %v976
      %v1353 = vsel %vm1338, %v1330, %v966
      %v1354 = vsel %vm1338, %v1334, %v977
      %vm1355 = vcmask 1043456
      %v1358 = vsel %vm1355, %v1339, %v994
      %v1362 = vsel %vm1355, %v1340, %v995
      %v1366 = vsel %vm1355, %v1341, %v969
      %v1370 = vsel %vm1355, %v1342, %v996
      %v1374 = vsel %vm1355, %v1343, %v997
      %v1378 = vsel %vm1355, %v1344, %v971
      %v1382 = vsel %vm1355, %v1345, %v998
      %v1386 = vsel %vm1355, %v1346, %v972
      %v1390 = vsel %vm1355, %v1347, %v999
      %v1394 = vsel %vm1355, %v1348, %v1000
      %v1398 = vsel %vm1355, %v1349, %v974
      %v1402 = vsel %vm1355, %v1350, %v1001
      %v1406 = vsel %vm1355, %v1351, %v1002
      %v1410 = vsel %vm1355, %v1352, %v976
      %v1414 = vsel %vm1355, %v1353, %v1003
      %v1418 = vsel %vm1355, %v1354, %v977
      %vm1420 = vcmask 1045504
      %vm1421 = vsmask.f32 5376
      %vm1422 = vmand %vm1420, %vm1421
      %v1423 = vsel %vm1422, %v1358, %v1004
      %v1424 = vsel %vm1422, %v1362, %v1005
      %v1425 = vsel %vm1422, %v1366, %v1006
      %v1426 = vsel %vm1422, %v1370, %v1007
      %v1427 = vsel %vm1422, %v1374, %v1008
      %v1428 = vsel %vm1422, %v1378, %v1009
      %v1429 = vsel %vm1422, %v1382, %v1010
      %v1430 = vsel %vm1422, %v1386, %v1011
      %v1431 = vsel %vm1422, %v1390, %v1012
      %v1432 = vsel %vm1422, %v1394, %v1013
      %v1433 = vsel %vm1422, %v1398, %v1014
      %v1434 = vsel %vm1422, %v1402, %v1015
      %v1435 = vsel %vm1422, %v1406, %v1016
      %v1436 = vsel %vm1422, %v1410, %v1017
      %v1437 = vsel %vm1422, %v1414, %v1018
      %v1438 = vsel %vm1422, %v1418, %v1019
      %vm1439 = vcmask 1046528
      %v1442 = vsel %vm1439, %v1423, %v1004
      %v1446 = vsel %vm1439, %v1424, %v1036
      %v1450 = vsel %vm1439, %v1425, %v1037
      %v1454 = vsel %vm1439, %v1426, %v1007
      %v1458 = vsel %vm1439, %v1427, %v1038
      %v1462 = vsel %vm1439, %v1428, %v1009
      %v1466 = vsel %vm1439, %v1429, %v1039
      %v1470 = vsel %vm1439, %v1430, %v1040
      %v1474 = vsel %vm1439, %v1431, %v1012
      %v1478 = vsel %vm1439, %v1432, %v1041
      %v1482 = vsel %vm1439, %v1433, %v1042
      %v1486 = vsel %vm1439, %v1434, %v1015
      %v1490 = vsel %vm1439, %v1435, %v1043
      %v1494 = vsel %vm1439, %v1436, %v1017
      %v1498 = vsel %vm1439, %v1437, %v1044
      %v1502 = vsel %vm1439, %v1438, %v1045
      %vm1504 = vcmask 1040384
      %vm1505 = vsmask.f32 256
      %vm1506 = vmand %vm1504, %vm1505
      %v1507 = vsel %vm1506, %v1004, %v587
      %v1508 = vsel %vm1506, %v1036, %v1056
      %v1509 = vsel %vm1506, %v1007, %v1057
      %v1510 = vsel %vm1506, %v1009, %v1058
      %v1511 = vsel %vm1506, %v1039, %v1059
      %v1512 = vsel %vm1506, %v1012, %v756
      %v1513 = vsel %vm1506, %v1041, %v1060
      %v1514 = vsel %vm1506, %v1015, %v1061
      %v1515 = vsel %vm1506, %v1017, %v1062
      %v1516 = vsel %vm1506, %v1044, %v1063
      %vm1517 = vcmask 1041408
      %v1520 = vsel %vm1517, %v1507, %v1074
      %v1523 = vsel %vm1517, %v1508, %v1075
      %v1526 = vsel %vm1517, %v1037, %v1076
      %v1529 = vsel %vm1517, %v1509, %v1077
      %v1532 = vsel %vm1517, %v1038, %v1078
      %v1535 = vsel %vm1517, %v1510, %v1079
      %v1538 = vsel %vm1517, %v1511, %v1080
      %v1541 = vsel %vm1517, %v1040, %v1081
      %v1544 = vsel %vm1517, %v1512, %v1082
      %v1547 = vsel %vm1517, %v1513, %v1083
      %v1550 = vsel %vm1517, %v1042, %v1084
      %v1553 = vsel %vm1517, %v1514, %v1085
      %v1556 = vsel %vm1517, %v1043, %v1086
      %v1559 = vsel %vm1517, %v1515, %v1087
      %v1562 = vsel %vm1517, %v1516, %v1088
      %v1565 = vsel %vm1517, %v1045, %v1089
      %v1566 = vld [vmem:[%s1] sm:$0xf]
      %v1567 = vld [vmem:[%s1 + $0x4] sm:$0xf]
      %v1568 = vld [vmem:[%s1 + $0x8] sm:$0xf]
      %v1569 = vld [vmem:[%s1 + $0xc] sm:$0xf]
      %v1570 = vld [vmem:[%s1 + $0x10] sm:$0xf]
      %v1571 = vld [vmem:[%s1 + $0x14] sm:$0xf]
      %v1572 = vld [vmem:[%s1 + $0x18] sm:$0xf]
      %v1573 = vld [vmem:[%s1 + $0x1c] sm:$0xf]
      %v1574 = vld [vmem:[%s1 + $0x20] sm:$0xf]
      %v1575 = vld [vmem:[%s1 + $0x24] sm:$0x3]
      %v1576 = vld [vmem:[%s2] sm:$0xff]
      %v1577 = vld [vmem:[%s2 + $0x8] sm:$0xff]
      %v1578 = vld [vmem:[%s2 + $0x10] sm:$0xff]
      %v1579 = vld [vmem:[%s2 + $0x18] sm:$0xff]
      %v1580 = vld [vmem:[%s2 + $0x20] sm:$0xff]
      %v1581 = vld [vmem:[%s2 + $0x28] sm:$0xff]
      %v1582 = vld [vmem:[%s2 + $0x30] sm:$0xff]
      %v1583 = vld [vmem:[%s2 + $0x38] sm:$0xff]
      %v1584 = vld [vmem:[%s2 + $0x40] sm:$0xff]
      %v1585 = vld [vmem:[%s2 + $0x48] sm:$0x7]
      %1587 = vset.pattern.permute.xlu0 0
      %1588 = vperm.xlu0 %1587, %v1576
      %v1589 = vpop.permute.xlu0 %1588
      %1592 = vset.pattern.permute.xlu0 0
      %1593 = vperm.xlu0 %1592, %v1577
      %v1594 = vpop.permute.xlu0 %1593
      %1597 = vset.pattern.permute.xlu0 0
      %1598 = vperm.xlu0 %1597, %v1578
      %v1599 = vpop.permute.xlu0 %1598
      %1602 = vset.pattern.permute.xlu0 0
      %1603 = vperm.xlu0 %1602, %v1579
      %v1604 = vpop.permute.xlu0 %1603
      %1607 = vset.pattern.permute.xlu0 0
      %1608 = vperm.xlu0 %1607, %v1580
      %v1609 = vpop.permute.xlu0 %1608
      %1612 = vset.pattern.permute.xlu0 0
      %1613 = vperm.xlu0 %1612, %v1581
      %v1614 = vpop.permute.xlu0 %1613
      %1617 = vset.pattern.permute.xlu0 0
      %1618 = vperm.xlu0 %1617, %v1582
      %v1619 = vpop.permute.xlu0 %1618
      %1622 = vset.pattern.permute.xlu0 0
      %1623 = vperm.xlu0 %1622, %v1583
      %v1624 = vpop.permute.xlu0 %1623
      %1627 = vset.pattern.permute.xlu0 0
      %1628 = vperm.xlu0 %1627, %v1584
      %v1629 = vpop.permute.xlu0 %1628
      %1632 = vset.pattern.permute.xlu0 0
      %1633 = vperm.xlu0 %1632, %v1585
      %v1634 = vpop.permute.xlu0 %1633
      %v1646 = vunpack.c.l.b16 %v1566
      %v1647 = vunpack.c.l.b16 %v1567
      %v1648 = vunpack.c.l.b16 %v1568
      %v1649 = vunpack.c.l.b16 %v1569
      %v1650 = vunpack.c.l.b16 %v1570
      %v1651 = vunpack.c.l.b16 %v1571
      %v1652 = vunpack.c.l.b16 %v1572
      %v1653 = vunpack.c.l.b16 %v1573
      %v1654 = vunpack.c.l.b16 %v1574
      %v1655 = vunpack.c.l.b16 %v1575
      %v1656 = vpack.c.b16 %v1647, %v1646
      %v1657 = vpack.c.b16 %v1649, %v1648
      %v1658 = vpack.c.b16 %v1651, %v1650
      %v1659 = vpack.c.b16 %v1653, %v1652
      %v1660 = vpack.c.b16 %v1655, %v1654
      %vm1661 = vcmask 318464
      %v1663 = vsel %vm1661, %v1656, 0
      %v1666 = vsel %vm1661, %v1657, 0
      %v1669 = vsel %vm1661, %v1658, 0
      %v1672 = vsel %vm1661, %v1659, 0
      %v1675 = vsel %vm1661, %v1660, 0
      %v1677 = vsel %vm1109, 4294967295, 65535
      %v1678 = vsel %vm1355, %v1677, 0
      %v1679 = vand.u32 %v1520, %v1678
      %v1681 = vand.u32 %v1523, %v1678
      %v1683 = vand.u32 %v1526, %v1678
      %v1685 = vand.u32 %v1529, %v1678
      %v1687 = vand.u32 %v1532, %v1678
      %v1689 = vand.u32 %v1535, %v1678
      %v1691 = vand.u32 %v1538, %v1678
      %v1693 = vand.u32 %v1541, %v1678
      %v1695 = vand.u32 %v1544, %v1678
      %v1697 = vand.u32 %v1547, %v1678
      %v1699 = vand.u32 %v1550, %v1678
      %v1701 = vand.u32 %v1553, %v1678
      %v1703 = vand.u32 %v1556, %v1678
      %v1705 = vand.u32 %v1559, %v1678
      %v1707 = vand.u32 %v1562, %v1678
      %v1709 = vand.u32 %v1565, %v1678
      %1711 = vmatprep.subr.bf16.mxu0 %v1262
      %1712 = vmatpush1.bf16.msra.mxu0 %v1261
      %1713 = vmatprep.subr.bf16.mxu0 %v1446
      %1714 = vmatpush1.bf16.msra.mxu0 %v1442
      %1715 = vmatprep.subr.bf16.mxu0 %v1681
      %1716 = vmatpush1.bf16.msra.mxu0 %v1679
      %1717 = vmatprep.subr.bf16.mxu0 0
      %1718 = vmatpush1.bf16.msra.mxu0 0
      %1719 = vmatprep.subr.bf16.mxu0 0
      %1720 = vmatpush1.bf16.msra.mxu0 0
      %1721 = vmatprep.subr.bf16.mxu0 0
      %1722 = vmatpush1.bf16.msra.mxu0 0
      %1723 = vmatprep.subr.bf16.mxu0 0
      %1724 = vmatpush1.bf16.msra.mxu0 0
      %1725 = vmatprep.subr.bf16.mxu0 0
      %1726 = vmatpush1.bf16.msra.mxu0 0
      %1727 = vmatprep.subr.bf16.mxu0 0
      %1728 = vmatpush1.bf16.msra.mxu0 0
      %1729 = vmatprep.subr.bf16.mxu0 0
      %1730 = vmatpush1.bf16.msra.mxu0 0
      %1731 = vmatprep.subr.bf16.mxu0 0
      %1732 = vmatpush1.bf16.msra.mxu0 0
      %1733 = vmatprep.subr.bf16.mxu0 0
      %1734 = vmatpush1.bf16.msra.mxu0 0
      %1735 = vmatprep.subr.bf16.mxu0 0
      %1736 = vmatpush1.bf16.msra.mxu0 0
      %1737 = vmatprep.subr.bf16.mxu0 0
      %1738 = vmatpush1.bf16.msra.mxu0 0
      %1739 = vmatprep.subr.bf16.mxu0 0
      %1740 = vmatpush1.bf16.msra.mxu0 0
      %1741 = vmatprep.subr.bf16.mxu0 0
      %1742 = vmatpush1.bf16.msra.mxu0 0
      %1743 = vmatprep.mubr.bf16.mxu0 0
      %1744 = vmatmul.mubr.bf16.gmra.mrb[0].mxu0 %v1663
      %v1745 = vpop.f32.mrb[0].mxu0
      %v1746 = vadd.f32 %v1589, %v1745
      %v1747 = vpop.f32.mrb[0].mxu0
      %v1748 = vadd.f32 %v1589, %v1747
      %v1749 = vpop.f32.mrb[0].mxu0
      %v1750 = vadd.f32 %v1594, %v1749
      %v1751 = vpop.f32.mrb[0].mxu0
      %v1752 = vadd.f32 %v1594, %v1751
      %1753 = vmatprep.mubr.bf16.mxu0 0
      %1754 = vmatmul.mubr.bf16.gmra.mrb[0].mxu0 %v1666
      %v1755 = vpop.f32.mrb[0].mxu0
      %v1756 = vadd.f32 %v1599, %v1755
      %v1757 = vpop.f32.mrb[0].mxu0
      %v1758 = vadd.f32 %v1599, %v1757
      %v1759 = vpop.f32.mrb[0].mxu0
      %v1760 = vadd.f32 %v1604, %v1759
      %v1761 = vpop.f32.mrb[0].mxu0
      %v1762 = vadd.f32 %v1604, %v1761
      %1763 = vmatprep.mubr.bf16.mxu0 0
      %1764 = vmatmul.mubr.bf16.gmra.mrb[0].mxu0 %v1669
      %v1765 = vpop.f32.mrb[0].mxu0
      %v1766 = vadd.f32 %v1609, %v1765
      %v1767 = vpop.f32.mrb[0].mxu0
      %v1768 = vadd.f32 %v1609, %v1767
      %v1769 = vpop.f32.mrb[0].mxu0
      %v1770 = vadd.f32 %v1614, %v1769
      %v1771 = vpop.f32.mrb[0].mxu0
      %v1772 = vadd.f32 %v1614, %v1771
      %1773 = vmatprep.mubr.bf16.mxu0 0
      %1774 = vmatmul.mubr.bf16.gmra.mrb[0].mxu0 %v1672
      %v1775 = vpop.f32.mrb[0].mxu0
      %v1776 = vadd.f32 %v1619, %v1775
      %v1777 = vpop.f32.mrb[0].mxu0
      %v1778 = vadd.f32 %v1619, %v1777
      %v1779 = vpop.f32.mrb[0].mxu0
      %v1780 = vadd.f32 %v1624, %v1779
      %v1781 = vpop.f32.mrb[0].mxu0
      %v1782 = vadd.f32 %v1624, %v1781
      %1783 = vmatprep.mubr.bf16.mxu0 0
      %1784 = vmatmul.mubr.bf16.gmra.mrb[0].mxu0 %v1675
      %v1785 = vpop.f32.mrb[0].mxu0
      %v1786 = vadd.f32 %v1629, %v1785
      %v1787 = vpop.f32.mrb[0].mxu0
      %v1788 = vadd.f32 %v1629, %v1787
      %v1789 = vpop.f32.mrb[0].mxu0
      %v1790 = vadd.f32 %v1634, %v1789
      %v1791 = vpop.f32.mrb[0].mxu0
      %v1792 = vadd.f32 %v1634, %v1791
      %1793 = vdwg.mxu0
      %1794 = vmatprep.subr.bf16.mxu0 %v1264
      %1795 = vmatpush1.bf16.msra.mxu0 %v1263
      %1796 = vmatprep.subr.bf16.mxu0 %v1454
      %1797 = vmatpush1.bf16.msra.mxu0 %v1450
      %1798 = vmatprep.subr.bf16.mxu0 %v1685
      %1799 = vmatpush1.bf16.msra.mxu0 %v1683
      %1800 = vmatprep.subr.bf16.mxu0 0
      %1801 = vmatpush1.bf16.msra.mxu0 0
      %1802 = vmatprep.subr.bf16.mxu0 0
      %1803 = vmatpush1.bf16.msra.mxu0 0
      %1804 = vmatprep.subr.bf16.mxu0 0
      %1805 = vmatpush1.bf16.msra.mxu0 0
      %1806 = vmatprep.subr.bf16.mxu0 0
      %1807 = vmatpush1.bf16.msra.mxu0 0
      %1808 = vmatprep.subr.bf16.mxu0 0
      %1809 = vmatpush1.bf16.msra.mxu0 0
      %1810 = vmatprep.subr.bf16.mxu0 0
      %1811 = vmatpush1.bf16.msra.mxu0 0
      %1812 = vmatprep.subr.bf16.mxu0 0
      %1813 = vmatpush1.bf16.msra.mxu0 0
      %1814 = vmatprep.subr.bf16.mxu0 0
      %1815 = vmatpush1.bf16.msra.mxu0 0
      %1816 = vmatprep.subr.bf16.mxu0 0
      %1817 = vmatpush1.bf16.msra.mxu0 0
      %1818 = vmatprep.subr.bf16.mxu0 0
      %1819 = vmatpush1.bf16.msra.mxu0 0
      %1820 = vmatprep.subr.bf16.mxu0 0
      %1821 = vmatpush1.bf16.msra.mxu0 0
      %1822 = vmatprep.subr.bf16.mxu0 0
      %1823 = vmatpush1.bf16.msra.mxu0 0
      %1824 = vmatprep.subr.bf16.mxu0 0
      %1825 = vmatpush1.bf16.msra.mxu0 0
      %1826 = vmatprep.mubr.bf16.mxu0 0
      %1827 = vmatmul.mubr.bf16.gmra.mrb[0].mxu0 %v1663
      %v1828 = vpop.f32.mrb[0].mxu0
      %v1829 = vadd.f32 %v1589, %v1828
      %v1830 = vpop.f32.mrb[0].mxu0
      %v1831 = vadd.f32 %v1589, %v1830
      %v1832 = vpop.f32.mrb[0].mxu0
      %v1833 = vadd.f32 %v1594, %v1832
      %v1834 = vpop.f32.mrb[0].mxu0
      %v1835 = vadd.f32 %v1594, %v1834
      %1836 = vmatprep.mubr.bf16.mxu0 0
      %1837 = vmatmul.mubr.bf16.gmra.mrb[0].mxu0 %v1666
      %v1838 = vpop.f32.mrb[0].mxu0
      %v1839 = vadd.f32 %v1599, %v1838
      %v1840 = vpop.f32.mrb[0].mxu0
      %v1841 = vadd.f32 %v1599, %v1840
      %v1842 = vpop.f32.mrb[0].mxu0
      %v1843 = vadd.f32 %v1604, %v1842
      %v1844 = vpop.f32.mrb[0].mxu0
      %v1845 = vadd.f32 %v1604, %v1844
      %1846 = vmatprep.mubr.bf16.mxu0 0
      %1847 = vmatmul.mubr.bf16.gmra.mrb[0].mxu0 %v1669
      %v1848 = vpop.f32.mrb[0].mxu0
      %v1849 = vadd.f32 %v1609, %v1848
      %v1850 = vpop.f32.mrb[0].mxu0
      %v1851 = vadd.f32 %v1609, %v1850
      %v1852 = vpop.f32.mrb[0].mxu0
      %v1853 = vadd.f32 %v1614, %v1852
      %v1854 = vpop.f32.mrb[0].mxu0
      %v1855 = vadd.f32 %v1614, %v1854
      %1856 = vmatprep.mubr.bf16.mxu0 0
      %1857 = vmatmul.mubr.bf16.gmra.mrb[0].mxu0 %v1672
      %v1858 = vpop.f32.mrb[0].mxu0
      %v1859 = vadd.f32 %v1619, %v1858
      %v1860 = vpop.f32.mrb[0].mxu0
      %v1861 = vadd.f32 %v1619, %v1860
      %v1862 = vpop.f32.mrb[0].mxu0
      %v1863 = vadd.f32 %v1624, %v1862
      %v1864 = vpop.f32.mrb[0].mxu0
      %v1865 = vadd.f32 %v1624, %v1864
      %1866 = vmatprep.mubr.bf16.mxu0 0
      %1867 = vmatmul.mubr.bf16.gmra.mrb[0].mxu0 %v1675
      %v1868 = vpop.f32.mrb[0].mxu0
      %v1869 = vadd.f32 %v1629, %v1868
      %v1870 = vpop.f32.mrb[0].mxu0
      %v1871 = vadd.f32 %v1629, %v1870
      %v1872 = vpop.f32.mrb[0].mxu0
      %v1873 = vadd.f32 %v1634, %v1872
      %v1874 = vpop.f32.mrb[0].mxu0
      %v1875 = vadd.f32 %v1634, %v1874
      %1876 = vdwg.mxu0
      %1877 = vmatprep.subr.bf16.mxu0 %v1266
      %1878 = vmatpush1.bf16.msra.mxu0 %v1265
      %1879 = vmatprep.subr.bf16.mxu0 %v1462
      %1880 = vmatpush1.bf16.msra.mxu0 %v1458
      %1881 = vmatprep.subr.bf16.mxu0 %v1689
      %1882 = vmatpush1.bf16.msra.mxu0 %v1687
      %1883 = vmatprep.subr.bf16.mxu0 0
      %1884 = vmatpush1.bf16.msra.mxu0 0
      %1885 = vmatprep.subr.bf16.mxu0 0
      %1886 = vmatpush1.bf16.msra.mxu0 0
      %1887 = vmatprep.subr.bf16.mxu0 0
      %1888 = vmatpush1.bf16.msra.mxu0 0
      %1889 = vmatprep.subr.bf16.mxu0 0
      %1890 = vmatpush1.bf16.msra.mxu0 0
      %1891 = vmatprep.subr.bf16.mxu0 0
      %1892 = vmatpush1.bf16.msra.mxu0 0
      %1893 = vmatprep.subr.bf16.mxu0 0
      %1894 = vmatpush1.bf16.msra.mxu0 0
      %1895 = vmatprep.subr.bf16.mxu0 0
      %1896 = vmatpush1.bf16.msra.mxu0 0
      %1897 = vmatprep.subr.bf16.mxu0 0
      %1898 = vmatpush1.bf16.msra.mxu0 0
      %1899 = vmatprep.subr.bf16.mxu0 0
      %1900 = vmatpush1.bf16.msra.mxu0 0
      %1901 = vmatprep.subr.bf16.mxu0 0
      %1902 = vmatpush1.bf16.msra.mxu0 0
      %1903 = vmatprep.subr.bf16.mxu0 0
      %1904 = vmatpush1.bf16.msra.mxu0 0
      %1905 = vmatprep.subr.bf16.mxu0 0
      %1906 = vmatpush1.bf16.msra.mxu0 0
      %1907 = vmatprep.subr.bf16.mxu0 0
      %1908 = vmatpush1.bf16.msra.mxu0 0
      %1909 = vmatprep.mubr.bf16.mxu0 0
      %1910 = vmatmul.mubr.bf16.gmra.mrb[0].mxu0 %v1663
      %v1911 = vpop.f32.mrb[0].mxu0
      %v1912 = vadd.f32 %v1589, %v1911
      %v1913 = vpop.f32.mrb[0].mxu0
      %v1914 = vadd.f32 %v1589, %v1913
      %v1915 = vpop.f32.mrb[0].mxu0
      %v1916 = vadd.f32 %v1594, %v1915
      %v1917 = vpop.f32.mrb[0].mxu0
      %v1918 = vadd.f32 %v1594, %v1917
      %1919 = vmatprep.mubr.bf16.mxu0 0
      %1920 = vmatmul.mubr.bf16.gmra.mrb[0].mxu0 %v1666
      %v1921 = vpop.f32.mrb[0].mxu0
      %v1922 = vadd.f32 %v1599, %v1921
      %v1923 = vpop.f32.mrb[0].mxu0
      %v1924 = vadd.f32 %v1599, %v1923
      %v1925 = vpop.f32.mrb[0].mxu0
      %v1926 = vadd.f32 %v1604, %v1925
      %v1927 = vpop.f32.mrb[0].mxu0
      %v1928 = vadd.f32 %v1604, %v1927
      %1929 = vmatprep.mubr.bf16.mxu0 0
      %1930 = vmatmul.mubr.bf16.gmra.mrb[0].mxu0 %v1669
      %v1931 = vpop.f32.mrb[0].mxu0
      %v1932 = vadd.f32 %v1609, %v1931
      %v1933 = vpop.f32.mrb[0].mxu0
      %v1934 = vadd.f32 %v1609, %v1933
      %v1935 = vpop.f32.mrb[0].mxu0
      %v1936 = vadd.f32 %v1614, %v1935
      %v1937 = vpop.f32.mrb[0].mxu0
      %v1938 = vadd.f32 %v1614, %v1937
      %1939 = vmatprep.mubr.bf16.mxu0 0
      %1940 = vmatmul.mubr.bf16.gmra.mrb[0].mxu0 %v1672
      %v1941 = vpop.f32.mrb[0].mxu0
      %v1942 = vadd.f32 %v1619, %v1941
      %v1943 = vpop.f32.mrb[0].mxu0
      %v1944 = vadd.f32 %v1619, %v1943
      %v1945 = vpop.f32.mrb[0].mxu0
      %v1946 = vadd.f32 %v1624, %v1945
      %v1947 = vpop.f32.mrb[0].mxu0
      %v1948 = vadd.f32 %v1624, %v1947
      %1949 = vmatprep.mubr.bf16.mxu0 0
      %1950 = vmatmul.mubr.bf16.gmra.mrb[0].mxu0 %v1675
      %v1951 = vpop.f32.mrb[0].mxu0
      %v1952 = vadd.f32 %v1629, %v1951
      %v1953 = vpop.f32.mrb[0].mxu0
      %v1954 = vadd.f32 %v1629, %v1953
      %v1955 = vpop.f32.mrb[0].mxu0
      %v1956 = vadd.f32 %v1634, %v1955
      %v1957 = vpop.f32.mrb[0].mxu0
      %v1958 = vadd.f32 %v1634, %v1957
      %1959 = vdwg.mxu0
      %1960 = vmatprep.subr.bf16.mxu0 %v1268
      %1961 = vmatpush1.bf16.msra.mxu0 %v1267
      %1962 = vmatprep.subr.bf16.mxu0 %v1470
      %1963 = vmatpush1.bf16.msra.mxu0 %v1466
      %1964 = vmatprep.subr.bf16.mxu0 %v1693
      %1965 = vmatpush1.bf16.msra.mxu0 %v1691
      %1966 = vmatprep.subr.bf16.mxu0 0
      %1967 = vmatpush1.bf16.msra.mxu0 0
      %1968 = vmatprep.subr.bf16.mxu0 0
      %1969 = vmatpush1.bf16.msra.mxu0 0
      %1970 = vmatprep.subr.bf16.mxu0 0
      %1971 = vmatpush1.bf16.msra.mxu0 0
      %1972 = vmatprep.subr.bf16.mxu0 0
      %1973 = vmatpush1.bf16.msra.mxu0 0
      %1974 = vmatprep.subr.bf16.mxu0 0
      %1975 = vmatpush1.bf16.msra.mxu0 0
      %1976 = vmatprep.subr.bf16.mxu0 0
      %1977 = vmatpush1.bf16.msra.mxu0 0
      %1978 = vmatprep.subr.bf16.mxu0 0
      %1979 = vmatpush1.bf16.msra.mxu0 0
      %1980 = vmatprep.subr.bf16.mxu0 0
      %1981 = vmatpush1.bf16.msra.mxu0 0
      %1982 = vmatprep.subr.bf16.mxu0 0
      %1983 = vmatpush1.bf16.msra.mxu0 0
      %1984 = vmatprep.subr.bf16.mxu0 0
      %1985 = vmatpush1.bf16.msra.mxu0 0
      %1986 = vmatprep.subr.bf16.mxu0 0
      %1987 = vmatpush1.bf16.msra.mxu0 0
      %1988 = vmatprep.subr.bf16.mxu0 0
      %1989 = vmatpush1.bf16.msra.mxu0 0
      %1990 = vmatprep.subr.bf16.mxu0 0
      %1991 = vmatpush1.bf16.msra.mxu0 0
      %1992 = vmatprep.mubr.bf16.mxu0 0
      %1993 = vmatmul.mubr.bf16.gmra.mrb[0].mxu0 %v1663
      %v1994 = vpop.f32.mrb[0].mxu0
      %v1995 = vadd.f32 %v1589, %v1994
      %v1996 = vpop.f32.mrb[0].mxu0
      %v1997 = vadd.f32 %v1589, %v1996
      %v1998 = vpop.f32.mrb[0].mxu0
      %v1999 = vadd.f32 %v1594, %v1998
      %v2000 = vpop.f32.mrb[0].mxu0
      %v2001 = vadd.f32 %v1594, %v2000
      %2002 = vmatprep.mubr.bf16.mxu0 0
      %2003 = vmatmul.mubr.bf16.gmra.mrb[0].mxu0 %v1666
      %v2004 = vpop.f32.mrb[0].mxu0
      %v2005 = vadd.f32 %v1599, %v2004
      %v2006 = vpop.f32.mrb[0].mxu0
      %v2007 = vadd.f32 %v1599, %v2006
      %v2008 = vpop.f32.mrb[0].mxu0
      %v2009 = vadd.f32 %v1604, %v2008
      %v2010 = vpop.f32.mrb[0].mxu0
      %v2011 = vadd.f32 %v1604, %v2010
      %2012 = vmatprep.mubr.bf16.mxu0 0
      %2013 = vmatmul.mubr.bf16.gmra.mrb[0].mxu0 %v1669
      %v2014 = vpop.f32.mrb[0].mxu0
      %v2015 = vadd.f32 %v1609, %v2014
      %v2016 = vpop.f32.mrb[0].mxu0
      %v2017 = vadd.f32 %v1609, %v2016
      %v2018 = vpop.f32.mrb[0].mxu0
      %v2019 = vadd.f32 %v1614, %v2018
      %v2020 = vpop.f32.mrb[0].mxu0
      %v2021 = vadd.f32 %v1614, %v2020
      %2022 = vmatprep.mubr.bf16.mxu0 0
      %2023 = vmatmul.mubr.bf16.gmra.mrb[0].mxu0 %v1672
      %v2024 = vpop.f32.mrb[0].mxu0
      %v2025 = vadd.f32 %v1619, %v2024
      %v2026 = vpop.f32.mrb[0].mxu0
      %v2027 = vadd.f32 %v1619, %v2026
      %v2028 = vpop.f32.mrb[0].mxu0
      %v2029 = vadd.f32 %v1624, %v2028
      %v2030 = vpop.f32.mrb[0].mxu0
      %v2031 = vadd.f32 %v1624, %v2030
      %2032 = vmatprep.mubr.bf16.mxu0 0
      %2033 = vmatmul.mubr.bf16.gmra.mrb[0].mxu0 %v1675
      %v2034 = vpop.f32.mrb[0].mxu0
      %v2035 = vadd.f32 %v1629, %v2034
      %v2036 = vpop.f32.mrb[0].mxu0
      %v2037 = vadd.f32 %v1629, %v2036
      %v2038 = vpop.f32.mrb[0].mxu0
      %v2039 = vadd.f32 %v1634, %v2038
      %v2040 = vpop.f32.mrb[0].mxu0
      %v2041 = vadd.f32 %v1634, %v2040
      %2042 = vdwg.mxu0
      %2043 = vmatprep.subr.bf16.mxu0 %v1270
      %2044 = vmatpush1.bf16.msra.mxu0 %v1269
      %2045 = vmatprep.subr.bf16.mxu0 %v1478
      %2046 = vmatpush1.bf16.msra.mxu0 %v1474
      %2047 = vmatprep.subr.bf16.mxu0 %v1697
      %2048 = vmatpush1.bf16.msra.mxu0 %v1695
      %2049 = vmatprep.subr.bf16.mxu0 0
      %2050 = vmatpush1.bf16.msra.mxu0 0
      %2051 = vmatprep.subr.bf16.mxu0 0
      %2052 = vmatpush1.bf16.msra.mxu0 0
      %2053 = vmatprep.subr.bf16.mxu0 0
      %2054 = vmatpush1.bf16.msra.mxu0 0
      %2055 = vmatprep.subr.bf16.mxu0 0
      %2056 = vmatpush1.bf16.msra.mxu0 0
      %2057 = vmatprep.subr.bf16.mxu0 0
      %2058 = vmatpush1.bf16.msra.mxu0 0
      %2059 = vmatprep.subr.bf16.mxu0 0
      %2060 = vmatpush1.bf16.msra.mxu0 0
      %2061 = vmatprep.subr.bf16.mxu0 0
      %2062 = vmatpush1.bf16.msra.mxu0 0
      %2063 = vmatprep.subr.bf16.mxu0 0
      %2064 = vmatpush1.bf16.msra.mxu0 0
      %2065 = vmatprep.subr.bf16.mxu0 0
      %2066 = vmatpush1.bf16.msra.mxu0 0
      %2067 = vmatprep.subr.bf16.mxu0 0
      %2068 = vmatpush1.bf16.msra.mxu0 0
      %2069 = vmatprep.subr.bf16.mxu0 0
      %2070 = vmatpush1.bf16.msra.mxu0 0
      %2071 = vmatprep.subr.bf16.mxu0 0
      %2072 = vmatpush1.bf16.msra.mxu0 0
      %2073 = vmatprep.subr.bf16.mxu0 0
      %2074 = vmatpush1.bf16.msra.mxu0 0
      %2075 = vmatprep.mubr.bf16.mxu0 0
      %2076 = vmatmul.mubr.bf16.gmra.mrb[0].mxu0 %v1663
      %v2077 = vpop.f32.mrb[0].mxu0
      %v2078 = vadd.f32 %v1589, %v2077
      %v2079 = vpop.f32.mrb[0].mxu0
      %v2080 = vadd.f32 %v1589, %v2079
      %v2081 = vpop.f32.mrb[0].mxu0
      %v2082 = vadd.f32 %v1594, %v2081
      %v2083 = vpop.f32.mrb[0].mxu0
      %v2084 = vadd.f32 %v1594, %v2083
      %2085 = vmatprep.mubr.bf16.mxu0 0
      %2086 = vmatmul.mubr.bf16.gmra.mrb[0].mxu0 %v1666
      %v2087 = vpop.f32.mrb[0].mxu0
      %v2088 = vadd.f32 %v1599, %v2087
      %v2089 = vpop.f32.mrb[0].mxu0
      %v2090 = vadd.f32 %v1599, %v2089
      %v2091 = vpop.f32.mrb[0].mxu0
      %v2092 = vadd.f32 %v1604, %v2091
      %v2093 = vpop.f32.mrb[0].mxu0
      %v2094 = vadd.f32 %v1604, %v2093
      %2095 = vmatprep.mubr.bf16.mxu0 0
      %2096 = vmatmul.mubr.bf16.gmra.mrb[0].mxu0 %v1669
      %v2097 = vpop.f32.mrb[0].mxu0
      %v2098 = vadd.f32 %v1609, %v2097
      %v2099 = vpop.f32.mrb[0].mxu0
      %v2100 = vadd.f32 %v1609, %v2099
      %v2101 = vpop.f32.mrb[0].mxu0
      %v2102 = vadd.f32 %v1614, %v2101
      %v2103 = vpop.f32.mrb[0].mxu0
      %v2104 = vadd.f32 %v1614, %v2103
      %2105 = vmatprep.mubr.bf16.mxu0 0
      %2106 = vmatmul.mubr.bf16.gmra.mrb[0].mxu0 %v1672
      %v2107 = vpop.f32.mrb[0].mxu0
      %v2108 = vadd.f32 %v1619, %v2107
      %v2109 = vpop.f32.mrb[0].mxu0
      %v2110 = vadd.f32 %v1619, %v2109
      %v2111 = vpop.f32.mrb[0].mxu0
      %v2112 = vadd.f32 %v1624, %v2111
      %v2113 = vpop.f32.mrb[0].mxu0
      %v2114 = vadd.f32 %v1624, %v2113
      %2115 = vmatprep.mubr.bf16.mxu0 0
      %2116 = vmatmul.mubr.bf16.gmra.mrb[0].mxu0 %v1675
      %v2117 = vpop.f32.mrb[0].mxu0
      %v2118 = vadd.f32 %v1629, %v2117
      %v2119 = vpop.f32.mrb[0].mxu0
      %v2120 = vadd.f32 %v1629, %v2119
      %v2121 = vpop.f32.mrb[0].mxu0
      %v2122 = vadd.f32 %v1634, %v2121
      %v2123 = vpop.f32.mrb[0].mxu0
      %v2124 = vadd.f32 %v1634, %v2123
      %2125 = vdwg.mxu0
      %2126 = vmatprep.subr.bf16.mxu0 %v1272
      %2127 = vmatpush1.bf16.msra.mxu0 %v1271
      %2128 = vmatprep.subr.bf16.mxu0 %v1486
      %2129 = vmatpush1.bf16.msra.mxu0 %v1482
      %2130 = vmatprep.subr.bf16.mxu0 %v1701
      %2131 = vmatpush1.bf16.msra.mxu0 %v1699
      %2132 = vmatprep.subr.bf16.mxu0 0
      %2133 = vmatpush1.bf16.msra.mxu0 0
      %2134 = vmatprep.subr.bf16.mxu0 0
      %2135 = vmatpush1.bf16.msra.mxu0 0
      %2136 = vmatprep.subr.bf16.mxu0 0
      %2137 = vmatpush1.bf16.msra.mxu0 0
      %2138 = vmatprep.subr.bf16.mxu0 0
      %2139 = vmatpush1.bf16.msra.mxu0 0
      %2140 = vmatprep.subr.bf16.mxu0 0
      %2141 = vmatpush1.bf16.msra.mxu0 0
      %2142 = vmatprep.subr.bf16.mxu0 0
      %2143 = vmatpush1.bf16.msra.mxu0 0
      %2144 = vmatprep.subr.bf16.mxu0 0
      %2145 = vmatpush1.bf16.msra.mxu0 0
      %2146 = vmatprep.subr.bf16.mxu0 0
      %2147 = vmatpush1.bf16.msra.mxu0 0
      %2148 = vmatprep.subr.bf16.mxu0 0
      %2149 = vmatpush1.bf16.msra.mxu0 0
      %2150 = vmatprep.subr.bf16.mxu0 0
      %2151 = vmatpush1.bf16.msra.mxu0 0
      %2152 = vmatprep.subr.bf16.mxu0 0
      %2153 = vmatpush1.bf16.msra.mxu0 0
      %2154 = vmatprep.subr.bf16.mxu0 0
      %2155 = vmatpush1.bf16.msra.mxu0 0
      %2156 = vmatprep.subr.bf16.mxu0 0
      %2157 = vmatpush1.bf16.msra.mxu0 0
      %2158 = vmatprep.mubr.bf16.mxu0 0
      %2159 = vmatmul.mubr.bf16.gmra.mrb[0].mxu0 %v1663
      %v2160 = vpop.f32.mrb[0].mxu0
      %v2161 = vadd.f32 %v1589, %v2160
      %v2162 = vpop.f32.mrb[0].mxu0
      %v2163 = vadd.f32 %v1589, %v2162
      %v2164 = vpop.f32.mrb[0].mxu0
      %v2165 = vadd.f32 %v1594, %v2164
      %v2166 = vpop.f32.mrb[0].mxu0
      %v2167 = vadd.f32 %v1594, %v2166
      %2168 = vmatprep.mubr.bf16.mxu0 0
      %2169 = vmatmul.mubr.bf16.gmra.mrb[0].mxu0 %v1666
      %v2170 = vpop.f32.mrb[0].mxu0
      %v2171 = vadd.f32 %v1599, %v2170
      %v2172 = vpop.f32.mrb[0].mxu0
      %v2173 = vadd.f32 %v1599, %v2172
      %v2174 = vpop.f32.mrb[0].mxu0
      %v2175 = vadd.f32 %v1604, %v2174
      %v2176 = vpop.f32.mrb[0].mxu0
      %v2177 = vadd.f32 %v1604, %v2176
      %2178 = vmatprep.mubr.bf16.mxu0 0
      %2179 = vmatmul.mubr.bf16.gmra.mrb[0].mxu0 %v1669
      %v2180 = vpop.f32.mrb[0].mxu0
      %v2181 = vadd.f32 %v1609, %v2180
      %v2182 = vpop.f32.mrb[0].mxu0
      %v2183 = vadd.f32 %v1609, %v2182
      %v2184 = vpop.f32.mrb[0].mxu0
      %v2185 = vadd.f32 %v1614, %v2184
      %v2186 = vpop.f32.mrb[0].mxu0
      %v2187 = vadd.f32 %v1614, %v2186
      %2188 = vmatprep.mubr.bf16.mxu0 0
      %2189 = vmatmul.mubr.bf16.gmra.mrb[0].mxu0 %v1672
      %v2190 = vpop.f32.mrb[0].mxu0
      %v2191 = vadd.f32 %v1619, %v2190
      %v2192 = vpop.f32.mrb[0].mxu0
      %v2193 = vadd.f32 %v1619, %v2192
      %v2194 = vpop.f32.mrb[0].mxu0
      %v2195 = vadd.f32 %v1624, %v2194
      %v2196 = vpop.f32.mrb[0].mxu0
      %v2197 = vadd.f32 %v1624, %v2196
      %2198 = vmatprep.mubr.bf16.mxu0 0
      %2199 = vmatmul.mubr.bf16.gmra.mrb[0].mxu0 %v1675
      %v2200 = vpop.f32.mrb[0].mxu0
      %v2201 = vadd.f32 %v1629, %v2200
      %v2202 = vpop.f32.mrb[0].mxu0
      %v2203 = vadd.f32 %v1629, %v2202
      %v2204 = vpop.f32.mrb[0].mxu0
      %v2205 = vadd.f32 %v1634, %v2204
      %v2206 = vpop.f32.mrb[0].mxu0
      %v2207 = vadd.f32 %v1634, %v2206
      %2208 = vdwg.mxu0
      %2209 = vmatprep.subr.bf16.mxu0 %v1274
      %2210 = vmatpush1.bf16.msra.mxu0 %v1273
      %2211 = vmatprep.subr.bf16.mxu0 %v1494
      %2212 = vmatpush1.bf16.msra.mxu0 %v1490
      %2213 = vmatprep.subr.bf16.mxu0 %v1705
      %2214 = vmatpush1.bf16.msra.mxu0 %v1703
      %2215 = vmatprep.subr.bf16.mxu0 0
      %2216 = vmatpush1.bf16.msra.mxu0 0
      %2217 = vmatprep.subr.bf16.mxu0 0
      %2218 = vmatpush1.bf16.msra.mxu0 0
      %2219 = vmatprep.subr.bf16.mxu0 0
      %2220 = vmatpush1.bf16.msra.mxu0 0
      %2221 = vmatprep.subr.bf16.mxu0 0
      %2222 = vmatpush1.bf16.msra.mxu0 0
      %2223 = vmatprep.subr.bf16.mxu0 0
      %2224 = vmatpush1.bf16.msra.mxu0 0
      %2225 = vmatprep.subr.bf16.mxu0 0
      %2226 = vmatpush1.bf16.msra.mxu0 0
      %2227 = vmatprep.subr.bf16.mxu0 0
      %2228 = vmatpush1.bf16.msra.mxu0 0
      %2229 = vmatprep.subr.bf16.mxu0 0
      %2230 = vmatpush1.bf16.msra.mxu0 0
      %2231 = vmatprep.subr.bf16.mxu0 0
      %2232 = vmatpush1.bf16.msra.mxu0 0
      %2233 = vmatprep.subr.bf16.mxu0 0
      %2234 = vmatpush1.bf16.msra.mxu0 0
      %2235 = vmatprep.subr.bf16.mxu0 0
      %2236 = vmatpush1.bf16.msra.mxu0 0
      %2237 = vmatprep.subr.bf16.mxu0 0
      %2238 = vmatpush1.bf16.msra.mxu0 0
      %2239 = vmatprep.subr.bf16.mxu0 0
      %2240 = vmatpush1.bf16.msra.mxu0 0
      %2241 = vmatprep.mubr.bf16.mxu0 0
      %2242 = vmatmul.mubr.bf16.gmra.mrb[0].mxu0 %v1663
      %v2243 = vpop.f32.mrb[0].mxu0
      %v2244 = vadd.f32 %v1589, %v2243
      %v2245 = vpop.f32.mrb[0].mxu0
      %v2246 = vadd.f32 %v1589, %v2245
      %v2247 = vpop.f32.mrb[0].mxu0
      %v2248 = vadd.f32 %v1594, %v2247
      %v2249 = vpop.f32.mrb[0].mxu0
      %v2250 = vadd.f32 %v1594, %v2249
      %2251 = vmatprep.mubr.bf16.mxu0 0
      %2252 = vmatmul.mubr.bf16.gmra.mrb[0].mxu0 %v1666
      %v2253 = vpop.f32.mrb[0].mxu0
      %v2254 = vadd.f32 %v1599, %v2253
      %v2255 = vpop.f32.mrb[0].mxu0
      %v2256 = vadd.f32 %v1599, %v2255
      %v2257 = vpop.f32.mrb[0].mxu0
      %v2258 = vadd.f32 %v1604, %v2257
      %v2259 = vpop.f32.mrb[0].mxu0
      %v2260 = vadd.f32 %v1604, %v2259
      %2261 = vmatprep.mubr.bf16.mxu0 0
      %2262 = vmatmul.mubr.bf16.gmra.mrb[0].mxu0 %v1669
      %v2263 = vpop.f32.mrb[0].mxu0
      %v2264 = vadd.f32 %v1609, %v2263
      %v2265 = vpop.f32.mrb[0].mxu0
      %v2266 = vadd.f32 %v1609, %v2265
      %v2267 = vpop.f32.mrb[0].mxu0
      %v2268 = vadd.f32 %v1614, %v2267
      %v2269 = vpop.f32.mrb[0].mxu0
      %v2270 = vadd.f32 %v1614, %v2269
      %2271 = vmatprep.mubr.bf16.mxu0 0
      %2272 = vmatmul.mubr.bf16.gmra.mrb[0].mxu0 %v1672
      %v2273 = vpop.f32.mrb[0].mxu0
      %v2274 = vadd.f32 %v1619, %v2273
      %v2275 = vpop.f32.mrb[0].mxu0
      %v2276 = vadd.f32 %v1619, %v2275
      %v2277 = vpop.f32.mrb[0].mxu0
      %v2278 = vadd.f32 %v1624, %v2277
      %v2279 = vpop.f32.mrb[0].mxu0
      %v2280 = vadd.f32 %v1624, %v2279
      %2281 = vmatprep.mubr.bf16.mxu0 0
      %2282 = vmatmul.mubr.bf16.gmra.mrb[0].mxu0 %v1675
      %v2283 = vpop.f32.mrb[0].mxu0
      %v2284 = vadd.f32 %v1629, %v2283
      %v2285 = vpop.f32.mrb[0].mxu0
      %v2286 = vadd.f32 %v1629, %v2285
      %v2287 = vpop.f32.mrb[0].mxu0
      %v2288 = vadd.f32 %v1634, %v2287
      %v2289 = vpop.f32.mrb[0].mxu0
      %v2290 = vadd.f32 %v1634, %v2289
      %2291 = vdwg.mxu0
      %2292 = vmatprep.subr.bf16.mxu0 %v1276
      %2293 = vmatpush1.bf16.msra.mxu0 %v1275
      %2294 = vmatprep.subr.bf16.mxu0 %v1502
      %2295 = vmatpush1.bf16.msra.mxu0 %v1498
      %2296 = vmatprep.subr.bf16.mxu0 %v1709
      %2297 = vmatpush1.bf16.msra.mxu0 %v1707
      %2298 = vmatprep.subr.bf16.mxu0 0
      %2299 = vmatpush1.bf16.msra.mxu0 0
      %2300 = vmatprep.subr.bf16.mxu0 0
      %2301 = vmatpush1.bf16.msra.mxu0 0
      %2302 = vmatprep.subr.bf16.mxu0 0
      %2303 = vmatpush1.bf16.msra.mxu0 0
      %2304 = vmatprep.subr.bf16.mxu0 0
      %2305 = vmatpush1.bf16.msra.mxu0 0
      %2306 = vmatprep.subr.bf16.mxu0 0
      %2307 = vmatpush1.bf16.msra.mxu0 0
      %2308 = vmatprep.subr.bf16.mxu0 0
      %2309 = vmatpush1.bf16.msra.mxu0 0
      %2310 = vmatprep.subr.bf16.mxu0 0
      %2311 = vmatpush1.bf16.msra.mxu0 0
      %2312 = vmatprep.subr.bf16.mxu0 0
      %2313 = vmatpush1.bf16.msra.mxu0 0
      %2314 = vmatprep.subr.bf16.mxu0 0
      %2315 = vmatpush1.bf16.msra.mxu0 0
      %2316 = vmatprep.subr.bf16.mxu0 0
      %2317 = vmatpush1.bf16.msra.mxu0 0
      %2318 = vmatprep.subr.bf16.mxu0 0
      %2319 = vmatpush1.bf16.msra.mxu0 0
      %2320 = vmatprep.subr.bf16.mxu0 0
      %2321 = vmatpush1.bf16.msra.mxu0 0
      %2322 = vmatprep.subr.bf16.mxu0 0
      %2323 = vmatpush1.bf16.msra.mxu0 0
      %2324 = vmatprep.mubr.bf16.mxu0 0
      %2325 = vmatmul.mubr.bf16.gmra.mrb[0].mxu0 %v1663
      %v2326 = vpop.f32.mrb[0].mxu0
      %v2327 = vadd.f32 %v1589, %v2326
      %v2328 = vpop.f32.mrb[0].mxu0
      %v2329 = vadd.f32 %v1589, %v2328
      %v2330 = vpop.f32.mrb[0].mxu0
      %v2331 = vadd.f32 %v1594, %v2330
      %v2332 = vpop.f32.mrb[0].mxu0
      %v2333 = vadd.f32 %v1594, %v2332
      %2334 = vmatprep.mubr.bf16.mxu0 0
      %2335 = vmatmul.mubr.bf16.gmra.mrb[0].mxu0 %v1666
      %v2336 = vpop.f32.mrb[0].mxu0
      %v2337 = vadd.f32 %v1599, %v2336
      %v2338 = vpop.f32.mrb[0].mxu0
      %v2339 = vadd.f32 %v1599, %v2338
      %v2340 = vpop.f32.mrb[0].mxu0
      %v2341 = vadd.f32 %v1604, %v2340
      %v2342 = vpop.f32.mrb[0].mxu0
      %v2343 = vadd.f32 %v1604, %v2342
      %2344 = vmatprep.mubr.bf16.mxu0 0
      %2345 = vmatmul.mubr.bf16.gmra.mrb[0].mxu0 %v1669
      %v2346 = vpop.f32.mrb[0].mxu0
      %v2347 = vadd.f32 %v1609, %v2346
      %v2348 = vpop.f32.mrb[0].mxu0
      %v2349 = vadd.f32 %v1609, %v2348
      %v2350 = vpop.f32.mrb[0].mxu0
      %v2351 = vadd.f32 %v1614, %v2350
      %v2352 = vpop.f32.mrb[0].mxu0
      %v2353 = vadd.f32 %v1614, %v2352
      %2354 = vmatprep.mubr.bf16.mxu0 0
      %2355 = vmatmul.mubr.bf16.gmra.mrb[0].mxu0 %v1672
      %v2356 = vpop.f32.mrb[0].mxu0
      %v2357 = vadd.f32 %v1619, %v2356
      %v2358 = vpop.f32.mrb[0].mxu0
      %v2359 = vadd.f32 %v1619, %v2358
      %v2360 = vpop.f32.mrb[0].mxu0
      %v2361 = vadd.f32 %v1624, %v2360
      %v2362 = vpop.f32.mrb[0].mxu0
      %v2363 = vadd.f32 %v1624, %v2362
      %2364 = vmatprep.mubr.bf16.mxu0 0
      %2365 = vmatmul.mubr.bf16.gmra.mrb[0].mxu0 %v1675
      %v2366 = vpop.f32.mrb[0].mxu0
      %v2367 = vadd.f32 %v1629, %v2366
      %v2368 = vpop.f32.mrb[0].mxu0
      %v2369 = vadd.f32 %v1629, %v2368
      %v2370 = vpop.f32.mrb[0].mxu0
      %v2371 = vadd.f32 %v1634, %v2370
      %v2372 = vpop.f32.mrb[0].mxu0
      %v2373 = vadd.f32 %v1634, %v2372
      %2374 = vdwg.mxu0
      %vm2375 = vcmp.gt.f32.partialorder %v1746, 0.0
      %vm2376 = vcmp.gt.f32.partialorder %v1748, 0.0
      %vm2377 = vcmp.gt.f32.partialorder %v1829, 0.0
      %vm2378 = vcmp.gt.f32.partialorder %v1831, 0.0
      %vm2379 = vcmp.gt.f32.partialorder %v1912, 0.0
      %vm2380 = vcmp.gt.f32.partialorder %v1914, 0.0
      %vm2381 = vcmp.gt.f32.partialorder %v1995, 0.0
      %vm2382 = vcmp.gt.f32.partialorder %v1997, 0.0
      %vm2383 = vcmp.gt.f32.partialorder %v2078, 0.0
      %vm2384 = vcmp.gt.f32.partialorder %v2080, 0.0
      %vm2385 = vcmp.gt.f32.partialorder %v2161, 0.0
      %vm2386 = vcmp.gt.f32.partialorder %v2163, 0.0
      %vm2387 = vcmp.gt.f32.partialorder %v2244, 0.0
      %vm2388 = vcmp.gt.f32.partialorder %v2246, 0.0
      %vm2389 = vcmp.gt.f32.partialorder %v2327, 0.0
      %vm2390 = vcmp.gt.f32.partialorder %v2329, 0.0
      %vm2391 = vcmp.gt.f32.partialorder %v1750, 0.0
      %vm2392 = vcmp.gt.f32.partialorder %v1752, 0.0
      %vm2393 = vcmp.gt.f32.partialorder %v1833, 0.0
      %vm2394 = vcmp.gt.f32.partialorder %v1835, 0.0
      %vm2395 = vcmp.gt.f32.partialorder %v1916, 0.0
      %vm2396 = vcmp.gt.f32.partialorder %v1918, 0.0
      %vm2397 = vcmp.gt.f32.partialorder %v1999, 0.0
      %vm2398 = vcmp.gt.f32.partialorder %v2001, 0.0
      %vm2399 = vcmp.gt.f32.partialorder %v2082, 0.0
      %vm2400 = vcmp.gt.f32.partialorder %v2084, 0.0
      %vm2401 = vcmp.gt.f32.partialorder %v2165, 0.0
      %vm2402 = vcmp.gt.f32.partialorder %v2167, 0.0
      %vm2403 = vcmp.gt.f32.partialorder %v2248, 0.0
      %vm2404 = vcmp.gt.f32.partialorder %v2250, 0.0
      %vm2405 = vcmp.gt.f32.partialorder %v2331, 0.0
      %vm2406 = vcmp.gt.f32.partialorder %v2333, 0.0
      %vm2407 = vcmp.gt.f32.partialorder %v1756, 0.0
      %vm2408 = vcmp.gt.f32.partialorder %v1758, 0.0
      %vm2409 = vcmp.gt.f32.partialorder %v1839, 0.0
      %vm2410 = vcmp.gt.f32.partialorder %v1841, 0.0
      %vm2411 = vcmp.gt.f32.partialorder %v1922, 0.0
      %vm2412 = vcmp.gt.f32.partialorder %v1924, 0.0
      %vm2413 = vcmp.gt.f32.partialorder %v2005, 0.0
      %vm2414 = vcmp.gt.f32.partialorder %v2007, 0.0
      %vm2415 = vcmp.gt.f32.partialorder %v2088, 0.0
      %vm2416 = vcmp.gt.f32.partialorder %v2090, 0.0
      %vm2417 = vcmp.gt.f32.partialorder %v2171, 0.0
      %vm2418 = vcmp.gt.f32.partialorder %v2173, 0.0
      %vm2419 = vcmp.gt.f32.partialorder %v2254, 0.0
      %vm2420 = vcmp.gt.f32.partialorder %v2256, 0.0
      %vm2421 = vcmp.gt.f32.partialorder %v2337, 0.0
      %vm2422 = vcmp.gt.f32.partialorder %v2339, 0.0
      %vm2423 = vcmp.gt.f32.partialorder %v1760, 0.0
      %vm2424 = vcmp.gt.f32.partialorder %v1762, 0.0
      %vm2425 = vcmp.gt.f32.partialorder %v1843, 0.0
      %vm2426 = vcmp.gt.f32.partialorder %v1845, 0.0
      %vm2427 = vcmp.gt.f32.partialorder %v1926, 0.0
      %vm2428 = vcmp.gt.f32.partialorder %v1928, 0.0
      %vm2429 = vcmp.gt.f32.partialorder %v2009, 0.0
      %vm2430 = vcmp.gt.f32.partialorder %v2011, 0.0
      %vm2431 = vcmp.gt.f32.partialorder %v2092, 0.0
      %vm2432 = vcmp.gt.f32.partialorder %v2094, 0.0
      %vm2433 = vcmp.gt.f32.partialorder %v2175, 0.0
      %vm2434 = vcmp.gt.f32.partialorder %v2177, 0.0
      %vm2435 = vcmp.gt.f32.partialorder %v2258, 0.0
      %vm2436 = vcmp.gt.f32.partialorder %v2260, 0.0
      %vm2437 = vcmp.gt.f32.partialorder %v2341, 0.0
      %vm2438 = vcmp.gt.f32.partialorder %v2343, 0.0
      %vm2439 = vcmp.gt.f32.partialorder %v1766, 0.0
      %vm2440 = vcmp.gt.f32.partialorder %v1768, 0.0
      %vm2441 = vcmp.gt.f32.partialorder %v1849, 0.0
      %vm2442 = vcmp.gt.f32.partialorder %v1851, 0.0
      %vm2443 = vcmp.gt.f32.partialorder %v1932, 0.0
      %vm2444 = vcmp.gt.f32.partialorder %v1934, 0.0
      %vm2445 = vcmp.gt.f32.partialorder %v2015, 0.0
      %vm2446 = vcmp.gt.f32.partialorder %v2017, 0.0
      %vm2447 = vcmp.gt.f32.partialorder %v2098, 0.0
      %vm2448 = vcmp.gt.f32.partialorder %v2100, 0.0
      %vm2449 = vcmp.gt.f32.partialorder %v2181, 0.0
      %vm2450 = vcmp.gt.f32.partialorder %v2183, 0.0
      %vm2451 = vcmp.gt.f32.partialorder %v2264, 0.0
      %vm2452 = vcmp.gt.f32.partialorder %v2266, 0.0
      %vm2453 = vcmp.gt.f32.partialorder %v2347, 0.0
      %vm2454 = vcmp.gt.f32.partialorder %v2349, 0.0
      %vm2455 = vcmp.gt.f32.partialorder %v1770, 0.0
      %vm2456 = vcmp.gt.f32.partialorder %v1772, 0.0
      %vm2457 = vcmp.gt.f32.partialorder %v1853, 0.0
      %vm2458 = vcmp.gt.f32.partialorder %v1855, 0.0
      %vm2459 = vcmp.gt.f32.partialorder %v1936, 0.0
      %vm2460 = vcmp.gt.f32.partialorder %v1938, 0.0
      %vm2461 = vcmp.gt.f32.partialorder %v2019, 0.0
      %vm2462 = vcmp.gt.f32.partialorder %v2021, 0.0
      %vm2463 = vcmp.gt.f32.partialorder %v2102, 0.0
      %vm2464 = vcmp.gt.f32.partialorder %v2104, 0.0
      %vm2465 = vcmp.gt.f32.partialorder %v2185, 0.0
      %vm2466 = vcmp.gt.f32.partialorder %v2187, 0.0
      %vm2467 = vcmp.gt.f32.partialorder %v2268, 0.0
      %vm2468 = vcmp.gt.f32.partialorder %v2270, 0.0
      %vm2469 = vcmp.gt.f32.partialorder %v2351, 0.0
      %vm2470 = vcmp.gt.f32.partialorder %v2353, 0.0
      %vm2471 = vcmp.gt.f32.partialorder %v1776, 0.0
      %vm2472 = vcmp.gt.f32.partialorder %v1778, 0.0
      %vm2473 = vcmp.gt.f32.partialorder %v1859, 0.0
      %vm2474 = vcmp.gt.f32.partialorder %v1861, 0.0
      %vm2475 = vcmp.gt.f32.partialorder %v1942, 0.0
      %vm2476 = vcmp.gt.f32.partialorder %v1944, 0.0
      %vm2477 = vcmp.gt.f32.partialorder %v2025, 0.0
      %vm2478 = vcmp.gt.f32.partialorder %v2027, 0.0
      %vm2479 = vcmp.gt.f32.partialorder %v2108, 0.0
      %vm2480 = vcmp.gt.f32.partialorder %v2110, 0.0
      %vm2481 = vcmp.gt.f32.partialorder %v2191, 0.0
      %vm2482 = vcmp.gt.f32.partialorder %v2193, 0.0
      %vm2483 = vcmp.gt.f32.partialorder %v2274, 0.0
      %vm2484 = vcmp.gt.f32.partialorder %v2276, 0.0
      %vm2485 = vcmp.gt.f32.partialorder %v2357, 0.0
      %vm2486 = vcmp.gt.f32.partialorder %v2359, 0.0
      %vm2487 = vcmp.gt.f32.partialorder %v1780, 0.0
      %vm2488 = vcmp.gt.f32.partialorder %v1782, 0.0
      %vm2489 = vcmp.gt.f32.partialorder %v1863, 0.0
      %vm2490 = vcmp.gt.f32.partialorder %v1865, 0.0
      %vm2491 = vcmp.gt.f32.partialorder %v1946, 0.0
      %vm2492 = vcmp.gt.f32.partialorder %v1948, 0.0
      %vm2493 = vcmp.gt.f32.partialorder %v2029, 0.0
      %vm2494 = vcmp.gt.f32.partialorder %v2031, 0.0
      %vm2495 = vcmp.gt.f32.partialorder %v2112, 0.0
      %vm2496 = vcmp.gt.f32.partialorder %v2114, 0.0
      %vm2497 = vcmp.gt.f32.partialorder %v2195, 0.0
      %vm2498 = vcmp.gt.f32.partialorder %v2197, 0.0
      %vm2499 = vcmp.gt.f32.partialorder %v2278, 0.0
      %vm2500 = vcmp.gt.f32.partialorder %v2280, 0.0
      %vm2501 = vcmp.gt.f32.partialorder %v2361, 0.0
      %vm2502 = vcmp.gt.f32.partialorder %v2363, 0.0
      %vm2503 = vcmp.gt.f32.partialorder %v1786, 0.0
      %vm2504 = vcmp.gt.f32.partialorder %v1788, 0.0
      %vm2505 = vcmp.gt.f32.partialorder %v1869, 0.0
      %vm2506 = vcmp.gt.f32.partialorder %v1871, 0.0
      %vm2507 = vcmp.gt.f32.partialorder %v1952, 0.0
      %vm2508 = vcmp.gt.f32.partialorder %v1954, 0.0
      %vm2509 = vcmp.gt.f32.partialorder %v2035, 0.0
      %vm2510 = vcmp.gt.f32.partialorder %v2037, 0.0
      %vm2511 = vcmp.gt.f32.partialorder %v2118, 0.0
      %vm2512 = vcmp.gt.f32.partialorder %v2120, 0.0
      %vm2513 = vcmp.gt.f32.partialorder %v2201, 0.0
      %vm2514 = vcmp.gt.f32.partialorder %v2203, 0.0
      %vm2515 = vcmp.gt.f32.partialorder %v2284, 0.0
      %vm2516 = vcmp.gt.f32.partialorder %v2286, 0.0
      %vm2517 = vcmp.gt.f32.partialorder %v2367, 0.0
      %vm2518 = vcmp.gt.f32.partialorder %v2369, 0.0
      %vm2519 = vcmp.gt.f32.partialorder %v1790, 0.0
      %vm2520 = vcmp.gt.f32.partialorder %v1792, 0.0
      %vm2521 = vcmp.gt.f32.partialorder %v1873, 0.0
      %vm2522 = vcmp.gt.f32.partialorder %v1875, 0.0
      %vm2523 = vcmp.gt.f32.partialorder %v1956, 0.0
      %vm2524 = vcmp.gt.f32.partialorder %v1958, 0.0
      %vm2525 = vcmp.gt.f32.partialorder %v2039, 0.0
      %vm2526 = vcmp.gt.f32.partialorder %v2041, 0.0
      %vm2527 = vcmp.gt.f32.partialorder %v2122, 0.0
      %vm2528 = vcmp.gt.f32.partialorder %v2124, 0.0
      %vm2529 = vcmp.gt.f32.partialorder %v2205, 0.0
      %vm2530 = vcmp.gt.f32.partialorder %v2207, 0.0
      %vm2531 = vcmp.gt.f32.partialorder %v2288, 0.0
      %vm2532 = vcmp.gt.f32.partialorder %v2290, 0.0
      %vm2533 = vcmp.gt.f32.partialorder %v2371, 0.0
      %vm2534 = vcmp.gt.f32.partialorder %v2373, 0.0
      %v2535 = vmin.f32 %v1746, 0.0
      %v2536 = vmin.f32 %v1748, 0.0
      %v2537 = vmin.f32 %v1829, 0.0
      %v2538 = vmin.f32 %v1831, 0.0
      %v2539 = vmin.f32 %v1912, 0.0
      %v2540 = vmin.f32 %v1914, 0.0
      %v2541 = vmin.f32 %v1995, 0.0
      %v2542 = vmin.f32 %v1997, 0.0
      %v2543 = vmin.f32 %v2078, 0.0
      %v2544 = vmin.f32 %v2080, 0.0
      %v2545 = vmin.f32 %v2161, 0.0
      %v2546 = vmin.f32 %v2163, 0.0
      %v2547 = vmin.f32 %v2244, 0.0
      %v2548 = vmin.f32 %v2246, 0.0
      %v2549 = vmin.f32 %v2327, 0.0
      %v2550 = vmin.f32 %v2329, 0.0
      %v2551 = vmin.f32 %v1750, 0.0
      %v2552 = vmin.f32 %v1752, 0.0
      %v2553 = vmin.f32 %v1833, 0.0
      %v2554 = vmin.f32 %v1835, 0.0
      %v2555 = vmin.f32 %v1916, 0.0
      %v2556 = vmin.f32 %v1918, 0.0
      %v2557 = vmin.f32 %v1999, 0.0
      %v2558 = vmin.f32 %v2001, 0.0
      %v2559 = vmin.f32 %v2082, 0.0
      %v2560 = vmin.f32 %v2084, 0.0
      %v2561 = vmin.f32 %v2165, 0.0
      %v2562 = vmin.f32 %v2167, 0.0
      %v2563 = vmin.f32 %v2248, 0.0
      %v2564 = vmin.f32 %v2250, 0.0
      %v2565 = vmin.f32 %v2331, 0.0
      %v2566 = vmin.f32 %v2333, 0.0
      %v2567 = vmin.f32 %v1756, 0.0
      %v2568 = vmin.f32 %v1758, 0.0
      %v2569 = vmin.f32 %v1839, 0.0
      %v2570 = vmin.f32 %v1841, 0.0
      %v2571 = vmin.f32 %v1922, 0.0
      %v2572 = vmin.f32 %v1924, 0.0
      %v2573 = vmin.f32 %v2005, 0.0
      %v2574 = vmin.f32 %v2007, 0.0
      %v2575 = vmin.f32 %v2088, 0.0
      %v2576 = vmin.f32 %v2090, 0.0
      %v2577 = vmin.f32 %v2171, 0.0
      %v2578 = vmin.f32 %v2173, 0.0
      %v2579 = vmin.f32 %v2254, 0.0
      %v2580 = vmin.f32 %v2256, 0.0
      %v2581 = vmin.f32 %v2337, 0.0
      %v2582 = vmin.f32 %v2339, 0.0
      %v2583 = vmin.f32 %v1760, 0.0
      %v2584 = vmin.f32 %v1762, 0.0
      %v2585 = vmin.f32 %v1843, 0.0
      %v2586 = vmin.f32 %v1845, 0.0
      %v2587 = vmin.f32 %v1926, 0.0
      %v2588 = vmin.f32 %v1928, 0.0
      %v2589 = vmin.f32 %v2009, 0.0
      %v2590 = vmin.f32 %v2011, 0.0
      %v2591 = vmin.f32 %v2092, 0.0
      %v2592 = vmin.f32 %v2094, 0.0
      %v2593 = vmin.f32 %v2175, 0.0
      %v2594 = vmin.f32 %v2177, 0.0
      %v2595 = vmin.f32 %v2258, 0.0
      %v2596 = vmin.f32 %v2260, 0.0
      %v2597 = vmin.f32 %v2341, 0.0
      %v2598 = vmin.f32 %v2343, 0.0
      %v2599 = vmin.f32 %v1766, 0.0
      %v2600 = vmin.f32 %v1768, 0.0
      %v2601 = vmin.f32 %v1849, 0.0
      %v2602 = vmin.f32 %v1851, 0.0
      %v2603 = vmin.f32 %v1932, 0.0
      %v2604 = vmin.f32 %v1934, 0.0
      %v2605 = vmin.f32 %v2015, 0.0
      %v2606 = vmin.f32 %v2017, 0.0
      %v2607 = vmin.f32 %v2098, 0.0
      %v2608 = vmin.f32 %v2100, 0.0
      %v2609 = vmin.f32 %v2181, 0.0
      %v2610 = vmin.f32 %v2183, 0.0
      %v2611 = vmin.f32 %v2264, 0.0
      %v2612 = vmin.f32 %v2266, 0.0
      %v2613 = vmin.f32 %v2347, 0.0
      %v2614 = vmin.f32 %v2349, 0.0
      %v2615 = vmin.f32 %v1770, 0.0
      %v2616 = vmin.f32 %v1772, 0.0
      %v2617 = vmin.f32 %v1853, 0.0
      %v2618 = vmin.f32 %v1855, 0.0
      %v2619 = vmin.f32 %v1936, 0.0
      %v2620 = vmin.f32 %v1938, 0.0
      %v2621 = vmin.f32 %v2019, 0.0
      %v2622 = vmin.f32 %v2021, 0.0
      %v2623 = vmin.f32 %v2102, 0.0
      %v2624 = vmin.f32 %v2104, 0.0
      %v2625 = vmin.f32 %v2185, 0.0
      %v2626 = vmin.f32 %v2187, 0.0
      %v2627 = vmin.f32 %v2268, 0.0
      %v2628 = vmin.f32 %v2270, 0.0
      %v2629 = vmin.f32 %v2351, 0.0
      %v2630 = vmin.f32 %v2353, 0.0
      %v2631 = vmin.f32 %v1776, 0.0
      %v2632 = vmin.f32 %v1778, 0.0
      %v2633 = vmin.f32 %v1859, 0.0
      %v2634 = vmin.f32 %v1861, 0.0
      %v2635 = vmin.f32 %v1942, 0.0
      %v2636 = vmin.f32 %v1944, 0.0
      %v2637 = vmin.f32 %v2025, 0.0
      %v2638 = vmin.f32 %v2027, 0.0
      %v2639 = vmin.f32 %v2108, 0.0
      %v2640 = vmin.f32 %v2110, 0.0
      %v2641 = vmin.f32 %v2191, 0.0
      %v2642 = vmin.f32 %v2193, 0.0
      %v2643 = vmin.f32 %v2274, 0.0
      %v2644 = vmin.f32 %v2276, 0.0
      %v2645 = vmin.f32 %v2357, 0.0
      %v2646 = vmin.f32 %v2359, 0.0
      %v2647 = vmin.f32 %v1780, 0.0
      %v2648 = vmin.f32 %v1782, 0.0
      %v2649 = vmin.f32 %v1863, 0.0
      %v2650 = vmin.f32 %v1865, 0.0
      %v2651 = vmin.f32 %v1946, 0.0
      %v2652 = vmin.f32 %v1948, 0.0
      %v2653 = vmin.f32 %v2029, 0.0
      %v2654 = vmin.f32 %v2031, 0.0
      %v2655 = vmin.f32 %v2112, 0.0
      %v2656 = vmin.f32 %v2114, 0.0
      %v2657 = vmin.f32 %v2195, 0.0
      %v2658 = vmin.f32 %v2197, 0.0
      %v2659 = vmin.f32 %v2278, 0.0
      %v2660 = vmin.f32 %v2280, 0.0
      %v2661 = vmin.f32 %v2361, 0.0
      %v2662 = vmin.f32 %v2363, 0.0
      %v2663 = vmin.f32 %v1786, 0.0
      %v2664 = vmin.f32 %v1788, 0.0
      %v2665 = vmin.f32 %v1869, 0.0
      %v2666 = vmin.f32 %v1871, 0.0
      %v2667 = vmin.f32 %v1952, 0.0
      %v2668 = vmin.f32 %v1954, 0.0
      %v2669 = vmin.f32 %v2035, 0.0
      %v2670 = vmin.f32 %v2037, 0.0
      %v2671 = vmin.f32 %v2118, 0.0
      %v2672 = vmin.f32 %v2120, 0.0
      %v2673 = vmin.f32 %v2201, 0.0
      %v2674 = vmin.f32 %v2203, 0.0
      %v2675 = vmin.f32 %v2284, 0.0
      %v2676 = vmin.f32 %v2286, 0.0
      %v2677 = vmin.f32 %v2367, 0.0
      %v2678 = vmin.f32 %v2369, 0.0
      %v2679 = vmin.f32 %v1790, 0.0
      %v2680 = vmin.f32 %v1792, 0.0
      %v2681 = vmin.f32 %v1873, 0.0
      %v2682 = vmin.f32 %v1875, 0.0
      %v2683 = vmin.f32 %v1956, 0.0
      %v2684 = vmin.f32 %v1958, 0.0
      %v2685 = vmin.f32 %v2039, 0.0
      %v2686 = vmin.f32 %v2041, 0.0
      %v2687 = vmin.f32 %v2122, 0.0
      %v2688 = vmin.f32 %v2124, 0.0
      %v2689 = vmin.f32 %v2205, 0.0
      %v2690 = vmin.f32 %v2207, 0.0
      %v2691 = vmin.f32 %v2288, 0.0
      %v2692 = vmin.f32 %v2290, 0.0
      %v2693 = vmin.f32 %v2371, 0.0
      %v2694 = vmin.f32 %v2373, 0.0
      %v2695 = vmul.f32 %v2535, 1.442695
      %v2696 = vpow.pop %v2695
      %v2697 = vmul.f32 %v2536, 1.442695
      %v2698 = vpow.pop %v2697
      %v2699 = vmul.f32 %v2537, 1.442695
      %v2700 = vpow.pop %v2699
      %v2701 = vmul.f32 %v2538, 1.442695
      %v2702 = vpow.pop %v2701
      %v2703 = vmul.f32 %v2539, 1.442695
      %v2704 = vpow.pop %v2703
      %v2705 = vmul.f32 %v2540, 1.442695
      %v2706 = vpow.pop %v2705
      %v2707 = vmul.f32 %v2541, 1.442695
      %v2708 = vpow.pop %v2707
      %v2709 = vmul.f32 %v2542, 1.442695
      %v2710 = vpow.pop %v2709
      %v2711 = vmul.f32 %v2543, 1.442695
      %v2712 = vpow.pop %v2711
      %v2713 = vmul.f32 %v2544, 1.442695
      %v2714 = vpow.pop %v2713
      %v2715 = vmul.f32 %v2545, 1.442695
      %v2716 = vpow.pop %v2715
      %v2717 = vmul.f32 %v2546, 1.442695
      %v2718 = vpow.pop %v2717
      %v2719 = vmul.f32 %v2547, 1.442695
      %v2720 = vpow.pop %v2719
      %v2721 = vmul.f32 %v2548, 1.442695
      %v2722 = vpow.pop %v2721
      %v2723 = vmul.f32 %v2549, 1.442695
      %v2724 = vpow.pop %v2723
      %v2725 = vmul.f32 %v2550, 1.442695
      %v2726 = vpow.pop %v2725
      %v2727 = vmul.f32 %v2551, 1.442695
      %v2728 = vpow.pop %v2727
      %v2729 = vmul.f32 %v2552, 1.442695
      %v2730 = vpow.pop %v2729
      %v2731 = vmul.f32 %v2553, 1.442695
      %v2732 = vpow.pop %v2731
      %v2733 = vmul.f32 %v2554, 1.442695
      %v2734 = vpow.pop %v2733
      %v2735 = vmul.f32 %v2555, 1.442695
      %v2736 = vpow.pop %v2735
      %v2737 = vmul.f32 %v2556, 1.442695
      %v2738 = vpow.pop %v2737
      %v2739 = vmul.f32 %v2557, 1.442695
      %v2740 = vpow.pop %v2739
      %v2741 = vmul.f32 %v2558, 1.442695
      %v2742 = vpow.pop %v2741
      %v2743 = vmul.f32 %v2559, 1.442695
      %v2744 = vpow.pop %v2743
      %v2745 = vmul.f32 %v2560, 1.442695
      %v2746 = vpow.pop %v2745
      %v2747 = vmul.f32 %v2561, 1.442695
      %v2748 = vpow.pop %v2747
      %v2749 = vmul.f32 %v2562, 1.442695
      %v2750 = vpow.pop %v2749
      %v2751 = vmul.f32 %v2563, 1.442695
      %v2752 = vpow.pop %v2751
      %v2753 = vmul.f32 %v2564, 1.442695
      %v2754 = vpow.pop %v2753
      %v2755 = vmul.f32 %v2565, 1.442695
      %v2756 = vpow.pop %v2755
      %v2757 = vmul.f32 %v2566, 1.442695
      %v2758 = vpow.pop %v2757
      %v2759 = vmul.f32 %v2567, 1.442695
      %v2760 = vpow.pop %v2759
      %v2761 = vmul.f32 %v2568, 1.442695
      %v2762 = vpow.pop %v2761
      %v2763 = vmul.f32 %v2569, 1.442695
      %v2764 = vpow.pop %v2763
      %v2765 = vmul.f32 %v2570, 1.442695
      %v2766 = vpow.pop %v2765
      %v2767 = vmul.f32 %v2571, 1.442695
      %v2768 = vpow.pop %v2767
      %v2769 = vmul.f32 %v2572, 1.442695
      %v2770 = vpow.pop %v2769
      %v2771 = vmul.f32 %v2573, 1.442695
      %v2772 = vpow.pop %v2771
      %v2773 = vmul.f32 %v2574, 1.442695
      %v2774 = vpow.pop %v2773
      %v2775 = vmul.f32 %v2575, 1.442695
      %v2776 = vpow.pop %v2775
      %v2777 = vmul.f32 %v2576, 1.442695
      %v2778 = vpow.pop %v2777
      %v2779 = vmul.f32 %v2577, 1.442695
      %v2780 = vpow.pop %v2779
      %v2781 = vmul.f32 %v2578, 1.442695
      %v2782 = vpow.pop %v2781
      %v2783 = vmul.f32 %v2579, 1.442695
      %v2784 = vpow.pop %v2783
      %v2785 = vmul.f32 %v2580, 1.442695
      %v2786 = vpow.pop %v2785
      %v2787 = vmul.f32 %v2581, 1.442695
      %v2788 = vpow.pop %v2787
      %v2789 = vmul.f32 %v2582, 1.442695
      %v2790 = vpow.pop %v2789
      %v2791 = vmul.f32 %v2583, 1.442695
      %v2792 = vpow.pop %v2791
      %v2793 = vmul.f32 %v2584, 1.442695
      %v2794 = vpow.pop %v2793
      %v2795 = vmul.f32 %v2585, 1.442695
      %v2796 = vpow.pop %v2795
      %v2797 = vmul.f32 %v2586, 1.442695
      %v2798 = vpow.pop %v2797
      %v2799 = vmul.f32 %v2587, 1.442695
      %v2800 = vpow.pop %v2799
      %v2801 = vmul.f32 %v2588, 1.442695
      %v2802 = vpow.pop %v2801
      %v2803 = vmul.f32 %v2589, 1.442695
      %v2804 = vpow.pop %v2803
      %v2805 = vmul.f32 %v2590, 1.442695
      %v2806 = vpow.pop %v2805
      %v2807 = vmul.f32 %v2591, 1.442695
      %v2808 = vpow.pop %v2807
      %v2809 = vmul.f32 %v2592, 1.442695
      %v2810 = vpow.pop %v2809
      %v2811 = vmul.f32 %v2593, 1.442695
      %v2812 = vpow.pop %v2811
      %v2813 = vmul.f32 %v2594, 1.442695
      %v2814 = vpow.pop %v2813
      %v2815 = vmul.f32 %v2595, 1.442695
      %v2816 = vpow.pop %v2815
      %v2817 = vmul.f32 %v2596, 1.442695
      %v2818 = vpow.pop %v2817
      %v2819 = vmul.f32 %v2597, 1.442695
      %v2820 = vpow.pop %v2819
      %v2821 = vmul.f32 %v2598, 1.442695
      %v2822 = vpow.pop %v2821
      %v2823 = vmul.f32 %v2599, 1.442695
      %v2824 = vpow.pop %v2823
      %v2825 = vmul.f32 %v2600, 1.442695
      %v2826 = vpow.pop %v2825
      %v2827 = vmul.f32 %v2601, 1.442695
      %v2828 = vpow.pop %v2827
      %v2829 = vmul.f32 %v2602, 1.442695
      %v2830 = vpow.pop %v2829
      %v2831 = vmul.f32 %v2603, 1.442695
      %v2832 = vpow.pop %v2831
      %v2833 = vmul.f32 %v2604, 1.442695
      %v2834 = vpow.pop %v2833
      %v2835 = vmul.f32 %v2605, 1.442695
      %v2836 = vpow.pop %v2835
      %v2837 = vmul.f32 %v2606, 1.442695
      %v2838 = vpow.pop %v2837
      %v2839 = vmul.f32 %v2607, 1.442695
      %v2840 = vpow.pop %v2839
      %v2841 = vmul.f32 %v2608, 1.442695
      %v2842 = vpow.pop %v2841
      %v2843 = vmul.f32 %v2609, 1.442695
      %v2844 = vpow.pop %v2843
      %v2845 = vmul.f32 %v2610, 1.442695
      %v2846 = vpow.pop %v2845
      %v2847 = vmul.f32 %v2611, 1.442695
      %v2848 = vpow.pop %v2847
      %v2849 = vmul.f32 %v2612, 1.442695
      %v2850 = vpow.pop %v2849
      %v2851 = vmul.f32 %v2613, 1.442695
      %v2852 = vpow.pop %v2851
      %v2853 = vmul.f32 %v2614, 1.442695
      %v2854 = vpow.pop %v2853
      %v2855 = vmul.f32 %v2615, 1.442695
      %v2856 = vpow.pop %v2855
      %v2857 = vmul.f32 %v2616, 1.442695
      %v2858 = vpow.pop %v2857
      %v2859 = vmul.f32 %v2617, 1.442695
      %v2860 = vpow.pop %v2859
      %v2861 = vmul.f32 %v2618, 1.442695
      %v2862 = vpow.pop %v2861
      %v2863 = vmul.f32 %v2619, 1.442695
      %v2864 = vpow.pop %v2863
      %v2865 = vmul.f32 %v2620, 1.442695
      %v2866 = vpow.pop %v2865
      %v2867 = vmul.f32 %v2621, 1.442695
      %v2868 = vpow.pop %v2867
      %v2869 = vmul.f32 %v2622, 1.442695
      %v2870 = vpow.pop %v2869
      %v2871 = vmul.f32 %v2623, 1.442695
      %v2872 = vpow.pop %v2871
      %v2873 = vmul.f32 %v2624, 1.442695
      %v2874 = vpow.pop %v2873
      %v2875 = vmul.f32 %v2625, 1.442695
      %v2876 = vpow.pop %v2875
      %v2877 = vmul.f32 %v2626, 1.442695
      %v2878 = vpow.pop %v2877
      %v2879 = vmul.f32 %v2627, 1.442695
      %v2880 = vpow.pop %v2879
      %v2881 = vmul.f32 %v2628, 1.442695
      %v2882 = vpow.pop %v2881
      %v2883 = vmul.f32 %v2629, 1.442695
      %v2884 = vpow.pop %v2883
      %v2885 = vmul.f32 %v2630, 1.442695
      %v2886 = vpow.pop %v2885
      %v2887 = vmul.f32 %v2631, 1.442695
      %v2888 = vpow.pop %v2887
      %v2889 = vmul.f32 %v2632, 1.442695
      %v2890 = vpow.pop %v2889
      %v2891 = vmul.f32 %v2633, 1.442695
      %v2892 = vpow.pop %v2891
      %v2893 = vmul.f32 %v2634, 1.442695
      %v2894 = vpow.pop %v2893
      %v2895 = vmul.f32 %v2635, 1.442695
      %v2896 = vpow.pop %v2895
      %v2897 = vmul.f32 %v2636, 1.442695
      %v2898 = vpow.pop %v2897
      %v2899 = vmul.f32 %v2637, 1.442695
      %v2900 = vpow.pop %v2899
      %v2901 = vmul.f32 %v2638, 1.442695
      %v2902 = vpow.pop %v2901
      %v2903 = vmul.f32 %v2639, 1.442695
      %v2904 = vpow.pop %v2903
      %v2905 = vmul.f32 %v2640, 1.442695
      %v2906 = vpow.pop %v2905
      %v2907 = vmul.f32 %v2641, 1.442695
      %v2908 = vpow.pop %v2907
      %v2909 = vmul.f32 %v2642, 1.442695
      %v2910 = vpow.pop %v2909
      %v2911 = vmul.f32 %v2643, 1.442695
      %v2912 = vpow.pop %v2911
      %v2913 = vmul.f32 %v2644, 1.442695
      %v2914 = vpow.pop %v2913
      %v2915 = vmul.f32 %v2645, 1.442695
      %v2916 = vpow.pop %v2915
      %v2917 = vmul.f32 %v2646, 1.442695
      %v2918 = vpow.pop %v2917
      %v2919 = vmul.f32 %v2647, 1.442695
      %v2920 = vpow.pop %v2919
      %v2921 = vmul.f32 %v2648, 1.442695
      %v2922 = vpow.pop %v2921
      %v2923 = vmul.f32 %v2649, 1.442695
      %v2924 = vpow.pop %v2923
      %v2925 = vmul.f32 %v2650, 1.442695
      %v2926 = vpow.pop %v2925
      %v2927 = vmul.f32 %v2651, 1.442695
      %v2928 = vpow.pop %v2927
      %v2929 = vmul.f32 %v2652, 1.442695
      %v2930 = vpow.pop %v2929
      %v2931 = vmul.f32 %v2653, 1.442695
      %v2932 = vpow.pop %v2931
      %v2933 = vmul.f32 %v2654, 1.442695
      %v2934 = vpow.pop %v2933
      %v2935 = vmul.f32 %v2655, 1.442695
      %v2936 = vpow.pop %v2935
      %v2937 = vmul.f32 %v2656, 1.442695
      %v2938 = vpow.pop %v2937
      %v2939 = vmul.f32 %v2657, 1.442695
      %v2940 = vpow.pop %v2939
      %v2941 = vmul.f32 %v2658, 1.442695
      %v2942 = vpow.pop %v2941
      %v2943 = vmul.f32 %v2659, 1.442695
      %v2944 = vpow.pop %v2943
      %v2945 = vmul.f32 %v2660, 1.442695
      %v2946 = vpow.pop %v2945
      %v2947 = vmul.f32 %v2661, 1.442695
      %v2948 = vpow.pop %v2947
      %v2949 = vmul.f32 %v2662, 1.442695
      %v2950 = vpow.pop %v2949
      %v2951 = vmul.f32 %v2663, 1.442695
      %v2952 = vpow.pop %v2951
      %v2953 = vmul.f32 %v2664, 1.442695
      %v2954 = vpow.pop %v2953
      %v2955 = vmul.f32 %v2665, 1.442695
      %v2956 = vpow.pop %v2955
      %v2957 = vmul.f32 %v2666, 1.442695
      %v2958 = vpow.pop %v2957
      %v2959 = vmul.f32 %v2667, 1.442695
      %v2960 = vpow.pop %v2959
      %v2961 = vmul.f32 %v2668, 1.442695
      %v2962 = vpow.pop %v2961
      %v2963 = vmul.f32 %v2669, 1.442695
      %v2964 = vpow.pop %v2963
      %v2965 = vmul.f32 %v2670, 1.442695
      %v2966 = vpow.pop %v2965
      %v2967 = vmul.f32 %v2671, 1.442695
      %v2968 = vpow.pop %v2967
      %v2969 = vmul.f32 %v2672, 1.442695
      %v2970 = vpow.pop %v2969
      %v2971 = vmul.f32 %v2673, 1.442695
      %v2972 = vpow.pop %v2971
      %v2973 = vmul.f32 %v2674, 1.442695
      %v2974 = vpow.pop %v2973
      %v2975 = vmul.f32 %v2675, 1.442695
      %v2976 = vpow.pop %v2975
      %v2977 = vmul.f32 %v2676, 1.442695
      %v2978 = vpow.pop %v2977
      %v2979 = vmul.f32 %v2677, 1.442695
      %v2980 = vpow.pop %v2979
      %v2981 = vmul.f32 %v2678, 1.442695
      %v2982 = vpow.pop %v2981
      %v2983 = vmul.f32 %v2679, 1.442695
      %v2984 = vpow.pop %v2983
      %v2985 = vmul.f32 %v2680, 1.442695
      %v2986 = vpow.pop %v2985
      %v2987 = vmul.f32 %v2681, 1.442695
      %v2988 = vpow.pop %v2987
      %v2989 = vmul.f32 %v2682, 1.442695
      %v2990 = vpow.pop %v2989
      %v2991 = vmul.f32 %v2683, 1.442695
      %v2992 = vpow.pop %v2991
      %v2993 = vmul.f32 %v2684, 1.442695
      %v2994 = vpow.pop %v2993
      %v2995 = vmul.f32 %v2685, 1.442695
      %v2996 = vpow.pop %v2995
      %v2997 = vmul.f32 %v2686, 1.442695
      %v2998 = vpow.pop %v2997
      %v2999 = vmul.f32 %v2687, 1.442695
      %v3000 = vpow.pop %v2999
      %v3001 = vmul.f32 %v2688, 1.442695
      %v3002 = vpow.pop %v3001
      %v3003 = vmul.f32 %v2689, 1.442695
      %v3004 = vpow.pop %v3003
      %v3005 = vmul.f32 %v2690, 1.442695
      %v3006 = vpow.pop %v3005
      %v3007 = vmul.f32 %v2691, 1.442695
      %v3008 = vpow.pop %v3007
      %v3009 = vmul.f32 %v2692, 1.442695
      %v3010 = vpow.pop %v3009
      %v3011 = vmul.f32 %v2693, 1.442695
      %v3012 = vpow.pop %v3011
      %v3013 = vmul.f32 %v2694, 1.442695
      %v3014 = vpow.pop %v3013
      %v3015 = vsub.f32 %v2696, 1.0
      %v3016 = vsub.f32 %v2698, 1.0
      %v3017 = vsub.f32 %v2700, 1.0
      %v3018 = vsub.f32 %v2702, 1.0
      %v3019 = vsub.f32 %v2704, 1.0
      %v3020 = vsub.f32 %v2706, 1.0
      %v3021 = vsub.f32 %v2708, 1.0
      %v3022 = vsub.f32 %v2710, 1.0
      %v3023 = vsub.f32 %v2712, 1.0
      %v3024 = vsub.f32 %v2714, 1.0
      %v3025 = vsub.f32 %v2716, 1.0
      %v3026 = vsub.f32 %v2718, 1.0
      %v3027 = vsub.f32 %v2720, 1.0
      %v3028 = vsub.f32 %v2722, 1.0
      %v3029 = vsub.f32 %v2724, 1.0
      %v3030 = vsub.f32 %v2726, 1.0
      %v3031 = vsub.f32 %v2728, 1.0
      %v3032 = vsub.f32 %v2730, 1.0
      %v3033 = vsub.f32 %v2732, 1.0
      %v3034 = vsub.f32 %v2734, 1.0
      %v3035 = vsub.f32 %v2736, 1.0
      %v3036 = vsub.f32 %v2738, 1.0
      %v3037 = vsub.f32 %v2740, 1.0
      %v3038 = vsub.f32 %v2742, 1.0
      %v3039 = vsub.f32 %v2744, 1.0
      %v3040 = vsub.f32 %v2746, 1.0
      %v3041 = vsub.f32 %v2748, 1.0
      %v3042 = vsub.f32 %v2750, 1.0
      %v3043 = vsub.f32 %v2752, 1.0
      %v3044 = vsub.f32 %v2754, 1.0
      %v3045 = vsub.f32 %v2756, 1.0
      %v3046 = vsub.f32 %v2758, 1.0
      %v3047 = vsub.f32 %v2760, 1.0
      %v3048 = vsub.f32 %v2762, 1.0
      %v3049 = vsub.f32 %v2764, 1.0
      %v3050 = vsub.f32 %v2766, 1.0
      %v3051 = vsub.f32 %v2768, 1.0
      %v3052 = vsub.f32 %v2770, 1.0
      %v3053 = vsub.f32 %v2772, 1.0
      %v3054 = vsub.f32 %v2774, 1.0
      %v3055 = vsub.f32 %v2776, 1.0
      %v3056 = vsub.f32 %v2778, 1.0
      %v3057 = vsub.f32 %v2780, 1.0
      %v3058 = vsub.f32 %v2782, 1.0
      %v3059 = vsub.f32 %v2784, 1.0
      %v3060 = vsub.f32 %v2786, 1.0
      %v3061 = vsub.f32 %v2788, 1.0
      %v3062 = vsub.f32 %v2790, 1.0
      %v3063 = vsub.f32 %v2792, 1.0
      %v3064 = vsub.f32 %v2794, 1.0
      %v3065 = vsub.f32 %v2796, 1.0
      %v3066 = vsub.f32 %v2798, 1.0
      %v3067 = vsub.f32 %v2800, 1.0
      %v3068 = vsub.f32 %v2802, 1.0
      %v3069 = vsub.f32 %v2804, 1.0
      %v3070 = vsub.f32 %v2806, 1.0
      %v3071 = vsub.f32 %v2808, 1.0
      %v3072 = vsub.f32 %v2810, 1.0
      %v3073 = vsub.f32 %v2812, 1.0
      %v3074 = vsub.f32 %v2814, 1.0
      %v3075 = vsub.f32 %v2816, 1.0
      %v3076 = vsub.f32 %v2818, 1.0
      %v3077 = vsub.f32 %v2820, 1.0
      %v3078 = vsub.f32 %v2822, 1.0
      %v3079 = vsub.f32 %v2824, 1.0
      %v3080 = vsub.f32 %v2826, 1.0
      %v3081 = vsub.f32 %v2828, 1.0
      %v3082 = vsub.f32 %v2830, 1.0
      %v3083 = vsub.f32 %v2832, 1.0
      %v3084 = vsub.f32 %v2834, 1.0
      %v3085 = vsub.f32 %v2836, 1.0
      %v3086 = vsub.f32 %v2838, 1.0
      %v3087 = vsub.f32 %v2840, 1.0
      %v3088 = vsub.f32 %v2842, 1.0
      %v3089 = vsub.f32 %v2844, 1.0
      %v3090 = vsub.f32 %v2846, 1.0
      %v3091 = vsub.f32 %v2848, 1.0
      %v3092 = vsub.f32 %v2850, 1.0
      %v3093 = vsub.f32 %v2852, 1.0
      %v3094 = vsub.f32 %v2854, 1.0
      %v3095 = vsub.f32 %v2856, 1.0
      %v3096 = vsub.f32 %v2858, 1.0
      %v3097 = vsub.f32 %v2860, 1.0
      %v3098 = vsub.f32 %v2862, 1.0
      %v3099 = vsub.f32 %v2864, 1.0
      %v3100 = vsub.f32 %v2866, 1.0
      %v3101 = vsub.f32 %v2868, 1.0
      %v3102 = vsub.f32 %v2870, 1.0
      %v3103 = vsub.f32 %v2872, 1.0
      %v3104 = vsub.f32 %v2874, 1.0
      %v3105 = vsub.f32 %v2876, 1.0
      %v3106 = vsub.f32 %v2878, 1.0
      %v3107 = vsub.f32 %v2880, 1.0
      %v3108 = vsub.f32 %v2882, 1.0
      %v3109 = vsub.f32 %v2884, 1.0
      %v3110 = vsub.f32 %v2886, 1.0
      %v3111 = vsub.f32 %v2888, 1.0
      %v3112 = vsub.f32 %v2890, 1.0
      %v3113 = vsub.f32 %v2892, 1.0
      %v3114 = vsub.f32 %v2894, 1.0
      %v3115 = vsub.f32 %v2896, 1.0
      %v3116 = vsub.f32 %v2898, 1.0
      %v3117 = vsub.f32 %v2900, 1.0
      %v3118 = vsub.f32 %v2902, 1.0
      %v3119 = vsub.f32 %v2904, 1.0
      %v3120 = vsub.f32 %v2906, 1.0
      %v3121 = vsub.f32 %v2908, 1.0
      %v3122 = vsub.f32 %v2910, 1.0
      %v3123 = vsub.f32 %v2912, 1.0
      %v3124 = vsub.f32 %v2914, 1.0
      %v3125 = vsub.f32 %v2916, 1.0
      %v3126 = vsub.f32 %v2918, 1.0
      %v3127 = vsub.f32 %v2920, 1.0
      %v3128 = vsub.f32 %v2922, 1.0
      %v3129 = vsub.f32 %v2924, 1.0
      %v3130 = vsub.f32 %v2926, 1.0
      %v3131 = vsub.f32 %v2928, 1.0
      %v3132 = vsub.f32 %v2930, 1.0
      %v3133 = vsub.f32 %v2932, 1.0
      %v3134 = vsub.f32 %v2934, 1.0
      %v3135 = vsub.f32 %v2936, 1.0
      %v3136 = vsub.f32 %v2938, 1.0
      %v3137 = vsub.f32 %v2940, 1.0
      %v3138 = vsub.f32 %v2942, 1.0
      %v3139 = vsub.f32 %v2944, 1.0
      %v3140 = vsub.f32 %v2946, 1.0
      %v3141 = vsub.f32 %v2948, 1.0
      %v3142 = vsub.f32 %v2950, 1.0
      %v3143 = vsub.f32 %v2952, 1.0
      %v3144 = vsub.f32 %v2954, 1.0
      %v3145 = vsub.f32 %v2956, 1.0
      %v3146 = vsub.f32 %v2958, 1.0
      %v3147 = vsub.f32 %v2960, 1.0
      %v3148 = vsub.f32 %v2962, 1.0
      %v3149 = vsub.f32 %v2964, 1.0
      %v3150 = vsub.f32 %v2966, 1.0
      %v3151 = vsub.f32 %v2968, 1.0
      %v3152 = vsub.f32 %v2970, 1.0
      %v3153 = vsub.f32 %v2972, 1.0
      %v3154 = vsub.f32 %v2974, 1.0
      %v3155 = vsub.f32 %v2976, 1.0
      %v3156 = vsub.f32 %v2978, 1.0
      %v3157 = vsub.f32 %v2980, 1.0
      %v3158 = vsub.f32 %v2982, 1.0
      %v3159 = vsub.f32 %v2984, 1.0
      %v3160 = vsub.f32 %v2986, 1.0
      %v3161 = vsub.f32 %v2988, 1.0
      %v3162 = vsub.f32 %v2990, 1.0
      %v3163 = vsub.f32 %v2992, 1.0
      %v3164 = vsub.f32 %v2994, 1.0
      %v3165 = vsub.f32 %v2996, 1.0
      %v3166 = vsub.f32 %v2998, 1.0
      %v3167 = vsub.f32 %v3000, 1.0
      %v3168 = vsub.f32 %v3002, 1.0
      %v3169 = vsub.f32 %v3004, 1.0
      %v3170 = vsub.f32 %v3006, 1.0
      %v3171 = vsub.f32 %v3008, 1.0
      %v3172 = vsub.f32 %v3010, 1.0
      %v3173 = vsub.f32 %v3012, 1.0
      %v3174 = vsub.f32 %v3014, 1.0
      %v3175 = vsel %vm2375, %v1746, %v3015
      %v3176 = vsel %vm2376, %v1748, %v3016
      %v3177 = vsel %vm2377, %v1829, %v3017
      %v3178 = vsel %vm2378, %v1831, %v3018
      %v3179 = vsel %vm2379, %v1912, %v3019
      %v3180 = vsel %vm2380, %v1914, %v3020
      %v3181 = vsel %vm2381, %v1995, %v3021
      %v3182 = vsel %vm2382, %v1997, %v3022
      %v3183 = vsel %vm2383, %v2078, %v3023
      %v3184 = vsel %vm2384, %v2080, %v3024
      %v3185 = vsel %vm2385, %v2161, %v3025
      %v3186 = vsel %vm2386, %v2163, %v3026
      %v3187 = vsel %vm2387, %v2244, %v3027
      %v3188 = vsel %vm2388, %v2246, %v3028
      %v3189 = vsel %vm2389, %v2327, %v3029
      %v3190 = vsel %vm2390, %v2329, %v3030
      %v3191 = vsel %vm2391, %v1750, %v3031
      %v3192 = vsel %vm2392, %v1752, %v3032
      %v3193 = vsel %vm2393, %v1833, %v3033
      %v3194 = vsel %vm2394, %v1835, %v3034
      %v3195 = vsel %vm2395, %v1916, %v3035
      %v3196 = vsel %vm2396, %v1918, %v3036
      %v3197 = vsel %vm2397, %v1999, %v3037
      %v3198 = vsel %vm2398, %v2001, %v3038
      %v3199 = vsel %vm2399, %v2082, %v3039
      %v3200 = vsel %vm2400, %v2084, %v3040
      %v3201 = vsel %vm2401, %v2165, %v3041
      %v3202 = vsel %vm2402, %v2167, %v3042
      %v3203 = vsel %vm2403, %v2248, %v3043
      %v3204 = vsel %vm2404, %v2250, %v3044
      %v3205 = vsel %vm2405, %v2331, %v3045
      %v3206 = vsel %vm2406, %v2333, %v3046
      %v3207 = vsel %vm2407, %v1756, %v3047
      %v3208 = vsel %vm2408, %v1758, %v3048
      %v3209 = vsel %vm2409, %v1839, %v3049
      %v3210 = vsel %vm2410, %v1841, %v3050
      %v3211 = vsel %vm2411, %v1922, %v3051
      %v3212 = vsel %vm2412, %v1924, %v3052
      %v3213 = vsel %vm2413, %v2005, %v3053
      %v3214 = vsel %vm2414, %v2007, %v3054
      %v3215 = vsel %vm2415, %v2088, %v3055
      %v3216 = vsel %vm2416, %v2090, %v3056
      %v3217 = vsel %vm2417, %v2171, %v3057
      %v3218 = vsel %vm2418, %v2173, %v3058
      %v3219 = vsel %vm2419, %v2254, %v3059
      %v3220 = vsel %vm2420, %v2256, %v3060
      %v3221 = vsel %vm2421, %v2337, %v3061
      %v3222 = vsel %vm2422, %v2339, %v3062
      %v3223 = vsel %vm2423, %v1760, %v3063
      %v3224 = vsel %vm2424, %v1762, %v3064
      %v3225 = vsel %vm2425, %v1843, %v3065
      %v3226 = vsel %vm2426, %v1845, %v3066
      %v3227 = vsel %vm2427, %v1926, %v3067
      %v3228 = vsel %vm2428, %v1928, %v3068
      %v3229 = vsel %vm2429, %v2009, %v3069
      %v3230 = vsel %vm2430, %v2011, %v3070
      %v3231 = vsel %vm2431, %v2092, %v3071
      %v3232 = vsel %vm2432, %v2094, %v3072
      %v3233 = vsel %vm2433, %v2175, %v3073
      %v3234 = vsel %vm2434, %v2177, %v3074
      %v3235 = vsel %vm2435, %v2258, %v3075
      %v3236 = vsel %vm2436, %v2260, %v3076
      %v3237 = vsel %vm2437, %v2341, %v3077
      %v3238 = vsel %vm2438, %v2343, %v3078
      %v3239 = vsel %vm2439, %v1766, %v3079
      %v3240 = vsel %vm2440, %v1768, %v3080
      %v3241 = vsel %vm2441, %v1849, %v3081
      %v3242 = vsel %vm2442, %v1851, %v3082
      %v3243 = vsel %vm2443, %v1932, %v3083
      %v3244 = vsel %vm2444, %v1934, %v3084
      %v3245 = vsel %vm2445, %v2015, %v3085
      %v3246 = vsel %vm2446, %v2017, %v3086
      %v3247 = vsel %vm2447, %v2098, %v3087
      %v3248 = vsel %vm2448, %v2100, %v3088
      %v3249 = vsel %vm2449, %v2181, %v3089
      %v3250 = vsel %vm2450, %v2183, %v3090
      %v3251 = vsel %vm2451, %v2264, %v3091
      %v3252 = vsel %vm2452, %v2266, %v3092
      %v3253 = vsel %vm2453, %v2347, %v3093
      %v3254 = vsel %vm2454, %v2349, %v3094
      %v3255 = vsel %vm2455, %v1770, %v3095
      %v3256 = vsel %vm2456, %v1772, %v3096
      %v3257 = vsel %vm2457, %v1853, %v3097
      %v3258 = vsel %vm2458, %v1855, %v3098
      %v3259 = vsel %vm2459, %v1936, %v3099
      %v3260 = vsel %vm2460, %v1938, %v3100
      %v3261 = vsel %vm2461, %v2019, %v3101
      %v3262 = vsel %vm2462, %v2021, %v3102
      %v3263 = vsel %vm2463, %v2102, %v3103
      %v3264 = vsel %vm2464, %v2104, %v3104
      %v3265 = vsel %vm2465, %v2185, %v3105
      %v3266 = vsel %vm2466, %v2187, %v3106
      %v3267 = vsel %vm2467, %v2268, %v3107
      %v3268 = vsel %vm2468, %v2270, %v3108
      %v3269 = vsel %vm2469, %v2351, %v3109
      %v3270 = vsel %vm2470, %v2353, %v3110
      %v3271 = vsel %vm2471, %v1776, %v3111
      %v3272 = vsel %vm2472, %v1778, %v3112
      %v3273 = vsel %vm2473, %v1859, %v3113
      %v3274 = vsel %vm2474, %v1861, %v3114
      %v3275 = vsel %vm2475, %v1942, %v3115
      %v3276 = vsel %vm2476, %v1944, %v3116
      %v3277 = vsel %vm2477, %v2025, %v3117
      %v3278 = vsel %vm2478, %v2027, %v3118
      %v3279 = vsel %vm2479, %v2108, %v3119
      %v3280 = vsel %vm2480, %v2110, %v3120
      %v3281 = vsel %vm2481, %v2191, %v3121
      %v3282 = vsel %vm2482, %v2193, %v3122
      %v3283 = vsel %vm2483, %v2274, %v3123
      %v3284 = vsel %vm2484, %v2276, %v3124
      %v3285 = vsel %vm2485, %v2357, %v3125
      %v3286 = vsel %vm2486, %v2359, %v3126
      %v3287 = vsel %vm2487, %v1780, %v3127
      %v3288 = vsel %vm2488, %v1782, %v3128
      %v3289 = vsel %vm2489, %v1863, %v3129
      %v3290 = vsel %vm2490, %v1865, %v3130
      %v3291 = vsel %vm2491, %v1946, %v3131
      %v3292 = vsel %vm2492, %v1948, %v3132
      %v3293 = vsel %vm2493, %v2029, %v3133
      %v3294 = vsel %vm2494, %v2031, %v3134
      %v3295 = vsel %vm2495, %v2112, %v3135
      %v3296 = vsel %vm2496, %v2114, %v3136
      %v3297 = vsel %vm2497, %v2195, %v3137
      %v3298 = vsel %vm2498, %v2197, %v3138
      %v3299 = vsel %vm2499, %v2278, %v3139
      %v3300 = vsel %vm2500, %v2280, %v3140
      %v3301 = vsel %vm2501, %v2361, %v3141
      %v3302 = vsel %vm2502, %v2363, %v3142
      %v3303 = vsel %vm2503, %v1786, %v3143
      %v3304 = vsel %vm2504, %v1788, %v3144
      %v3305 = vsel %vm2505, %v1869, %v3145
      %v3306 = vsel %vm2506, %v1871, %v3146
      %v3307 = vsel %vm2507, %v1952, %v3147
      %v3308 = vsel %vm2508, %v1954, %v3148
      %v3309 = vsel %vm2509, %v2035, %v3149
      %v3310 = vsel %vm2510, %v2037, %v3150
      %v3311 = vsel %vm2511, %v2118, %v3151
      %v3312 = vsel %vm2512, %v2120, %v3152
      %v3313 = vsel %vm2513, %v2201, %v3153
      %v3314 = vsel %vm2514, %v2203, %v3154
      %v3315 = vsel %vm2515, %v2284, %v3155
      %v3316 = vsel %vm2516, %v2286, %v3156
      %v3317 = vsel %vm2517, %v2367, %v3157
      %v3318 = vsel %vm2518, %v2369, %v3158
      %v3319 = vsel %vm2519, %v1790, %v3159
      %v3320 = vsel %vm2520, %v1792, %v3160
      %v3321 = vsel %vm2521, %v1873, %v3161
      %v3322 = vsel %vm2522, %v1875, %v3162
      %v3323 = vsel %vm2523, %v1956, %v3163
      %v3324 = vsel %vm2524, %v1958, %v3164
      %v3325 = vsel %vm2525, %v2039, %v3165
      %v3326 = vsel %vm2526, %v2041, %v3166
      %v3327 = vsel %vm2527, %v2122, %v3167
      %v3328 = vsel %vm2528, %v2124, %v3168
      %v3329 = vsel %vm2529, %v2205, %v3169
      %v3330 = vsel %vm2530, %v2207, %v3170
      %v3331 = vsel %vm2531, %v2288, %v3171
      %v3332 = vsel %vm2532, %v2290, %v3172
      %v3333 = vsel %vm2533, %v2371, %v3173
      %v3334 = vsel %vm2534, %v2373, %v3174
      %v3335 = vpack.c.bf16 %v3191, %v3175
      %v3336 = vpack.c.bf16 %v3192, %v3176
      %v3337 = vpack.c.bf16 %v3193, %v3177
      %v3338 = vpack.c.bf16 %v3194, %v3178
      %v3339 = vpack.c.bf16 %v3195, %v3179
      %v3340 = vpack.c.bf16 %v3196, %v3180
      %v3341 = vpack.c.bf16 %v3197, %v3181
      %v3342 = vpack.c.bf16 %v3198, %v3182
      %v3343 = vpack.c.bf16 %v3199, %v3183
      %v3344 = vpack.c.bf16 %v3200, %v3184
      %v3345 = vpack.c.bf16 %v3201, %v3185
      %v3346 = vpack.c.bf16 %v3202, %v3186
      %v3347 = vpack.c.bf16 %v3203, %v3187
      %v3348 = vpack.c.bf16 %v3204, %v3188
      %v3349 = vpack.c.bf16 %v3205, %v3189
      %v3350 = vpack.c.bf16 %v3206, %v3190
      %v3351 = vpack.c.bf16 %v3223, %v3207
      %v3352 = vpack.c.bf16 %v3224, %v3208
      %v3353 = vpack.c.bf16 %v3225, %v3209
      %v3354 = vpack.c.bf16 %v3226, %v3210
      %v3355 = vpack.c.bf16 %v3227, %v3211
      %v3356 = vpack.c.bf16 %v3228, %v3212
      %v3357 = vpack.c.bf16 %v3229, %v3213
      %v3358 = vpack.c.bf16 %v3230, %v3214
      %v3359 = vpack.c.bf16 %v3231, %v3215
      %v3360 = vpack.c.bf16 %v3232, %v3216
      %v3361 = vpack.c.bf16 %v3233, %v3217
      %v3362 = vpack.c.bf16 %v3234, %v3218
      %v3363 = vpack.c.bf16 %v3235, %v3219
      %v3364 = vpack.c.bf16 %v3236, %v3220
      %v3365 = vpack.c.bf16 %v3237, %v3221
      %v3366 = vpack.c.bf16 %v3238, %v3222
      %v3367 = vpack.c.bf16 %v3255, %v3239
      %v3368 = vpack.c.bf16 %v3256, %v3240
      %v3369 = vpack.c.bf16 %v3257, %v3241
      %v3370 = vpack.c.bf16 %v3258, %v3242
      %v3371 = vpack.c.bf16 %v3259, %v3243
      %v3372 = vpack.c.bf16 %v3260, %v3244
      %v3373 = vpack.c.bf16 %v3261, %v3245
      %v3374 = vpack.c.bf16 %v3262, %v3246
      %v3375 = vpack.c.bf16 %v3263, %v3247
      %v3376 = vpack.c.bf16 %v3264, %v3248
      %v3377 = vpack.c.bf16 %v3265, %v3249
      %v3378 = vpack.c.bf16 %v3266, %v3250
      %v3379 = vpack.c.bf16 %v3267, %v3251
      %v3380 = vpack.c.bf16 %v3268, %v3252
      %v3381 = vpack.c.bf16 %v3269, %v3253
      %v3382 = vpack.c.bf16 %v3270, %v3254
      %v3383 = vpack.c.bf16 %v3287, %v3271
      %v3384 = vpack.c.bf16 %v3288, %v3272
      %v3385 = vpack.c.bf16 %v3289, %v3273
      %v3386 = vpack.c.bf16 %v3290, %v3274
      %v3387 = vpack.c.bf16 %v3291, %v3275
      %v3388 = vpack.c.bf16 %v3292, %v3276
      %v3389 = vpack.c.bf16 %v3293, %v3277
      %v3390 = vpack.c.bf16 %v3294, %v3278
      %v3391 = vpack.c.bf16 %v3295, %v3279
      %v3392 = vpack.c.bf16 %v3296, %v3280
      %v3393 = vpack.c.bf16 %v3297, %v3281
      %v3394 = vpack.c.bf16 %v3298, %v3282
      %v3395 = vpack.c.bf16 %v3299, %v3283
      %v3396 = vpack.c.bf16 %v3300, %v3284
      %v3397 = vpack.c.bf16 %v3301, %v3285
      %v3398 = vpack.c.bf16 %v3302, %v3286
      %v3399 = vpack.c.bf16 %v3319, %v3303
      %v3400 = vpack.c.bf16 %v3320, %v3304
      %v3401 = vpack.c.bf16 %v3321, %v3305
      %v3402 = vpack.c.bf16 %v3322, %v3306
      %v3403 = vpack.c.bf16 %v3323, %v3307
      %v3404 = vpack.c.bf16 %v3324, %v3308
      %v3405 = vpack.c.bf16 %v3325, %v3309
      %v3406 = vpack.c.bf16 %v3326, %v3310
      %v3407 = vpack.c.bf16 %v3327, %v3311
      %v3408 = vpack.c.bf16 %v3328, %v3312
      %v3409 = vpack.c.bf16 %v3329, %v3313
      %v3410 = vpack.c.bf16 %v3330, %v3314
      %v3411 = vpack.c.bf16 %v3331, %v3315
      %v3412 = vpack.c.bf16 %v3332, %v3316
      %v3413 = vpack.c.bf16 %v3333, %v3317
      %v3414 = vpack.c.bf16 %v3334, %v3318
      %v3415 = vld [vmem:[%s3] sm:$0xf]
      %v3416 = vld [vmem:[%s3 + $0x4] sm:$0xf]
      %v3417 = vld [vmem:[%s3 + $0x8] sm:$0xf]
      %v3418 = vld [vmem:[%s3 + $0xc] sm:$0x1]
      %v3419 = vld [vmem:[%s4] sm:$0xff]
      %v3420 = vld [vmem:[%s4 + $0x8] sm:$0xff]
      %v3421 = vld [vmem:[%s4 + $0x10] sm:$0xff]
      %v3422 = vld [vmem:[%s4 + $0x18] sm:$0x1]
      %3424 = vset.pattern.permute.xlu0 0
      %3425 = vperm.xlu0 %3424, %v3419
      %v3426 = vpop.permute.xlu0 %3425
      %3429 = vset.pattern.permute.xlu0 0
      %3430 = vperm.xlu0 %3429, %v3420
      %v3431 = vpop.permute.xlu0 %3430
      %3434 = vset.pattern.permute.xlu0 0
      %3435 = vperm.xlu0 %3434, %v3421
      %v3436 = vpop.permute.xlu0 %3435
      %3439 = vset.pattern.permute.xlu0 0
      %3440 = vperm.xlu0 %3439, %v3422
      %v3441 = vpop.permute.xlu0 %3440
      %v3447 = vunpack.c.l.b16 %v3415
      %v3448 = vunpack.c.l.b16 %v3416
      %v3449 = vunpack.c.l.b16 %v3417
      %v3450 = vunpack.c.l.b16 %v3418
      %v3451 = vpack.c.b16 %v3448, %v3447
      %v3452 = vpack.c.b16 %v3450, %v3449
      %vm3453 = vcmask 613376
      %v3455 = vsel %vm3453, %v3451, 0
      %v3458 = vsel %vm3453, %v3452, 0
      %vm3460 = vcmask 1044480
      %v3461 = vsel %vm3460, 4294967295, 65535
      %v3462 = vsel %vm1193, %v3461, 0
      %v3464 = vand.u32 %v3399, %v3462
      %v3467 = vand.u32 %v3400, %v3462
      %v3470 = vand.u32 %v3401, %v3462
      %v3473 = vand.u32 %v3402, %v3462
      %v3476 = vand.u32 %v3403, %v3462
      %v3479 = vand.u32 %v3404, %v3462
      %v3482 = vand.u32 %v3405, %v3462
      %v3485 = vand.u32 %v3406, %v3462
      %v3488 = vand.u32 %v3407, %v3462
      %v3491 = vand.u32 %v3408, %v3462
      %v3494 = vand.u32 %v3409, %v3462
      %v3497 = vand.u32 %v3410, %v3462
      %v3500 = vand.u32 %v3411, %v3462
      %v3503 = vand.u32 %v3412, %v3462
      %v3506 = vand.u32 %v3413, %v3462
      %v3509 = vand.u32 %v3414, %v3462
      %3511 = vmatprep.subr.bf16.mxu0 %v3336
      %3512 = vmatpush1.bf16.msra.mxu0 %v3335
      %3513 = vmatprep.subr.bf16.mxu0 %v3352
      %3514 = vmatpush1.bf16.msra.mxu0 %v3351
      %3515 = vmatprep.subr.bf16.mxu0 %v3368
      %3516 = vmatpush1.bf16.msra.mxu0 %v3367
      %3517 = vmatprep.subr.bf16.mxu0 %v3384
      %3518 = vmatpush1.bf16.msra.mxu0 %v3383
      %3519 = vmatprep.subr.bf16.mxu0 %v3467
      %3520 = vmatpush1.bf16.msra.mxu0 %v3464
      %3521 = vmatprep.subr.bf16.mxu0 0
      %3522 = vmatpush1.bf16.msra.mxu0 0
      %3523 = vmatprep.subr.bf16.mxu0 0
      %3524 = vmatpush1.bf16.msra.mxu0 0
      %3525 = vmatprep.subr.bf16.mxu0 0
      %3526 = vmatpush1.bf16.msra.mxu0 0
      %3527 = vmatprep.subr.bf16.mxu0 0
      %3528 = vmatpush1.bf16.msra.mxu0 0
      %3529 = vmatprep.subr.bf16.mxu0 0
      %3530 = vmatpush1.bf16.msra.mxu0 0
      %3531 = vmatprep.subr.bf16.mxu0 0
      %3532 = vmatpush1.bf16.msra.mxu0 0
      %3533 = vmatprep.subr.bf16.mxu0 0
      %3534 = vmatpush1.bf16.msra.mxu0 0
      %3535 = vmatprep.subr.bf16.mxu0 0
      %3536 = vmatpush1.bf16.msra.mxu0 0
      %3537 = vmatprep.subr.bf16.mxu0 0
      %3538 = vmatpush1.bf16.msra.mxu0 0
      %3539 = vmatprep.subr.bf16.mxu0 0
      %3540 = vmatpush1.bf16.msra.mxu0 0
      %3541 = vmatprep.subr.bf16.mxu0 0
      %3542 = vmatpush1.bf16.msra.mxu0 0
      %3543 = vmatprep.mubr.bf16.mxu0 0
      %3544 = vmatmul.mubr.bf16.gmra.mrb[0].mxu0 %v3455
      %v3545 = vpop.f32.mrb[0].mxu0
      %v3546 = vadd.f32 %v3426, %v3545
      %v3547 = vpop.f32.mrb[0].mxu0
      %v3548 = vadd.f32 %v3426, %v3547
      %v3549 = vpop.f32.mrb[0].mxu0
      %v3550 = vadd.f32 %v3431, %v3549
      %v3551 = vpop.f32.mrb[0].mxu0
      %v3552 = vadd.f32 %v3431, %v3551
      %3553 = vmatprep.mubr.bf16.mxu0 0
      %3554 = vmatmul.mubr.bf16.gmra.mrb[0].mxu0 %v3458
      %v3555 = vpop.f32.mrb[0].mxu0
      %v3556 = vadd.f32 %v3436, %v3555
      %v3557 = vpop.f32.mrb[0].mxu0
      %v3558 = vadd.f32 %v3436, %v3557
      %v3559 = vpop.f32.mrb[0].mxu0
      %v3560 = vadd.f32 %v3441, %v3559
      %v3561 = vpop.f32.mrb[0].mxu0
      %v3562 = vadd.f32 %v3441, %v3561
      %3563 = vdwg.mxu0
      %3564 = vmatprep.subr.bf16.mxu0 %v3338
      %3565 = vmatpush1.bf16.msra.mxu0 %v3337
      %3566 = vmatprep.subr.bf16.mxu0 %v3354
      %3567 = vmatpush1.bf16.msra.mxu0 %v3353
      %3568 = vmatprep.subr.bf16.mxu0 %v3370
      %3569 = vmatpush1.bf16.msra.mxu0 %v3369
      %3570 = vmatprep.subr.bf16.mxu0 %v3386
      %3571 = vmatpush1.bf16.msra.mxu0 %v3385
      %3572 = vmatprep.subr.bf16.mxu0 %v3473
      %3573 = vmatpush1.bf16.msra.mxu0 %v3470
      %3574 = vmatprep.subr.bf16.mxu0 0
      %3575 = vmatpush1.bf16.msra.mxu0 0
      %3576 = vmatprep.subr.bf16.mxu0 0
      %3577 = vmatpush1.bf16.msra.mxu0 0
      %3578 = vmatprep.subr.bf16.mxu0 0
      %3579 = vmatpush1.bf16.msra.mxu0 0
      %3580 = vmatprep.subr.bf16.mxu0 0
      %3581 = vmatpush1.bf16.msra.mxu0 0
      %3582 = vmatprep.subr.bf16.mxu0 0
      %3583 = vmatpush1.bf16.msra.mxu0 0
      %3584 = vmatprep.subr.bf16.mxu0 0
      %3585 = vmatpush1.bf16.msra.mxu0 0
      %3586 = vmatprep.subr.bf16.mxu0 0
      %3587 = vmatpush1.bf16.msra.mxu0 0
      %3588 = vmatprep.subr.bf16.mxu0 0
      %3589 = vmatpush1.bf16.msra.mxu0 0
      %3590 = vmatprep.subr.bf16.mxu0 0
      %3591 = vmatpush1.bf16.msra.mxu0 0
      %3592 = vmatprep.subr.bf16.mxu0 0
      %3593 = vmatpush1.bf16.msra.mxu0 0
      %3594 = vmatprep.subr.bf16.mxu0 0
      %3595 = vmatpush1.bf16.msra.mxu0 0
      %3596 = vmatprep.mubr.bf16.mxu0 0
      %3597 = vmatmul.mubr.bf16.gmra.mrb[0].mxu0 %v3455
      %v3598 = vpop.f32.mrb[0].mxu0
      %v3599 = vadd.f32 %v3426, %v3598
      %v3600 = vpop.f32.mrb[0].mxu0
      %v3601 = vadd.f32 %v3426, %v3600
      %v3602 = vpop.f32.mrb[0].mxu0
      %v3603 = vadd.f32 %v3431, %v3602
      %v3604 = vpop.f32.mrb[0].mxu0
      %v3605 = vadd.f32 %v3431, %v3604
      %3606 = vmatprep.mubr.bf16.mxu0 0
      %3607 = vmatmul.mubr.bf16.gmra.mrb[0].mxu0 %v3458
      %v3608 = vpop.f32.mrb[0].mxu0
      %v3609 = vadd.f32 %v3436, %v3608
      %v3610 = vpop.f32.mrb[0].mxu0
      %v3611 = vadd.f32 %v3436, %v3610
      %v3612 = vpop.f32.mrb[0].mxu0
      %v3613 = vadd.f32 %v3441, %v3612
      %v3614 = vpop.f32.mrb[0].mxu0
      %v3615 = vadd.f32 %v3441, %v3614
      %3616 = vdwg.mxu0
      %3617 = vmatprep.subr.bf16.mxu0 %v3340
      %3618 = vmatpush1.bf16.msra.mxu0 %v3339
      %3619 = vmatprep.subr.bf16.mxu0 %v3356
      %3620 = vmatpush1.bf16.msra.mxu0 %v3355
      %3621 = vmatprep.subr.bf16.mxu0 %v3372
      %3622 = vmatpush1.bf16.msra.mxu0 %v3371
      %3623 = vmatprep.subr.bf16.mxu0 %v3388
      %3624 = vmatpush1.bf16.msra.mxu0 %v3387
      %3625 = vmatprep.subr.bf16.mxu0 %v3479
      %3626 = vmatpush1.bf16.msra.mxu0 %v3476
      %3627 = vmatprep.subr.bf16.mxu0 0
      %3628 = vmatpush1.bf16.msra.mxu0 0
      %3629 = vmatprep.subr.bf16.mxu0 0
      %3630 = vmatpush1.bf16.msra.mxu0 0
      %3631 = vmatprep.subr.bf16.mxu0 0
      %3632 = vmatpush1.bf16.msra.mxu0 0
      %3633 = vmatprep.subr.bf16.mxu0 0
      %3634 = vmatpush1.bf16.msra.mxu0 0
      %3635 = vmatprep.subr.bf16.mxu0 0
      %3636 = vmatpush1.bf16.msra.mxu0 0
      %3637 = vmatprep.subr.bf16.mxu0 0
      %3638 = vmatpush1.bf16.msra.mxu0 0
      %3639 = vmatprep.subr.bf16.mxu0 0
      %3640 = vmatpush1.bf16.msra.mxu0 0
      %3641 = vmatprep.subr.bf16.mxu0 0
      %3642 = vmatpush1.bf16.msra.mxu0 0
      %3643 = vmatprep.subr.bf16.mxu0 0
      %3644 = vmatpush1.bf16.msra.mxu0 0
      %3645 = vmatprep.subr.bf16.mxu0 0
      %3646 = vmatpush1.bf16.msra.mxu0 0
      %3647 = vmatprep.subr.bf16.mxu0 0
      %3648 = vmatpush1.bf16.msra.mxu0 0
      %3649 = vmatprep.mubr.bf16.mxu0 0
      %3650 = vmatmul.mubr.bf16.gmra.mrb[0].mxu0 %v3455
      %v3651 = vpop.f32.mrb[0].mxu0
      %v3652 = vadd.f32 %v3426, %v3651
      %v3653 = vpop.f32.mrb[0].mxu0
      %v3654 = vadd.f32 %v3426, %v3653
      %v3655 = vpop.f32.mrb[0].mxu0
      %v3656 = vadd.f32 %v3431, %v3655
      %v3657 = vpop.f32.mrb[0].mxu0
      %v3658 = vadd.f32 %v3431, %v3657
      %3659 = vmatprep.mubr.bf16.mxu0 0
      %3660 = vmatmul.mubr.bf16.gmra.mrb[0].mxu0 %v3458
      %v3661 = vpop.f32.mrb[0].mxu0
      %v3662 = vadd.f32 %v3436, %v3661
      %v3663 = vpop.f32.mrb[0].mxu0
      %v3664 = vadd.f32 %v3436, %v3663
      %v3665 = vpop.f32.mrb[0].mxu0
      %v3666 = vadd.f32 %v3441, %v3665
      %v3667 = vpop.f32.mrb[0].mxu0
      %v3668 = vadd.f32 %v3441, %v3667
      %3669 = vdwg.mxu0
      %3670 = vmatprep.subr.bf16.mxu0 %v3342
      %3671 = vmatpush1.bf16.msra.mxu0 %v3341
      %3672 = vmatprep.subr.bf16.mxu0 %v3358
      %3673 = vmatpush1.bf16.msra.mxu0 %v3357
      %3674 = vmatprep.subr.bf16.mxu0 %v3374
      %3675 = vmatpush1.bf16.msra.mxu0 %v3373
      %3676 = vmatprep.subr.bf16.mxu0 %v3390
      %3677 = vmatpush1.bf16.msra.mxu0 %v3389
      %3678 = vmatprep.subr.bf16.mxu0 %v3485
      %3679 = vmatpush1.bf16.msra.mxu0 %v3482
      %3680 = vmatprep.subr.bf16.mxu0 0
      %3681 = vmatpush1.bf16.msra.mxu0 0
      %3682 = vmatprep.subr.bf16.mxu0 0
      %3683 = vmatpush1.bf16.msra.mxu0 0
      %3684 = vmatprep.subr.bf16.mxu0 0
      %3685 = vmatpush1.bf16.msra.mxu0 0
      %3686 = vmatprep.subr.bf16.mxu0 0
      %3687 = vmatpush1.bf16.msra.mxu0 0
      %3688 = vmatprep.subr.bf16.mxu0 0
      %3689 = vmatpush1.bf16.msra.mxu0 0
      %3690 = vmatprep.subr.bf16.mxu0 0
      %3691 = vmatpush1.bf16.msra.mxu0 0
      %3692 = vmatprep.subr.bf16.mxu0 0
      %3693 = vmatpush1.bf16.msra.mxu0 0
      %3694 = vmatprep.subr.bf16.mxu0 0
      %3695 = vmatpush1.bf16.msra.mxu0 0
      %3696 = vmatprep.subr.bf16.mxu0 0
      %3697 = vmatpush1.bf16.msra.mxu0 0
      %3698 = vmatprep.subr.bf16.mxu0 0
      %3699 = vmatpush1.bf16.msra.mxu0 0
      %3700 = vmatprep.subr.bf16.mxu0 0
      %3701 = vmatpush1.bf16.msra.mxu0 0
      %3702 = vmatprep.mubr.bf16.mxu0 0
      %3703 = vmatmul.mubr.bf16.gmra.mrb[0].mxu0 %v3455
      %v3704 = vpop.f32.mrb[0].mxu0
      %v3705 = vadd.f32 %v3426, %v3704
      %v3706 = vpop.f32.mrb[0].mxu0
      %v3707 = vadd.f32 %v3426, %v3706
      %v3708 = vpop.f32.mrb[0].mxu0
      %v3709 = vadd.f32 %v3431, %v3708
      %v3710 = vpop.f32.mrb[0].mxu0
      %v3711 = vadd.f32 %v3431, %v3710
      %3712 = vmatprep.mubr.bf16.mxu0 0
      %3713 = vmatmul.mubr.bf16.gmra.mrb[0].mxu0 %v3458
      %v3714 = vpop.f32.mrb[0].mxu0
      %v3715 = vadd.f32 %v3436, %v3714
      %v3716 = vpop.f32.mrb[0].mxu0
      %v3717 = vadd.f32 %v3436, %v3716
      %v3718 = vpop.f32.mrb[0].mxu0
      %v3719 = vadd.f32 %v3441, %v3718
      %v3720 = vpop.f32.mrb[0].mxu0
      %v3721 = vadd.f32 %v3441, %v3720
      %3722 = vdwg.mxu0
      %3723 = vmatprep.subr.bf16.mxu0 %v3344
      %3724 = vmatpush1.bf16.msra.mxu0 %v3343
      %3725 = vmatprep.subr.bf16.mxu0 %v3360
      %3726 = vmatpush1.bf16.msra.mxu0 %v3359
      %3727 = vmatprep.subr.bf16.mxu0 %v3376
      %3728 = vmatpush1.bf16.msra.mxu0 %v3375
      %3729 = vmatprep.subr.bf16.mxu0 %v3392
      %3730 = vmatpush1.bf16.msra.mxu0 %v3391
      %3731 = vmatprep.subr.bf16.mxu0 %v3491
      %3732 = vmatpush1.bf16.msra.mxu0 %v3488
      %3733 = vmatprep.subr.bf16.mxu0 0
      %3734 = vmatpush1.bf16.msra.mxu0 0
      %3735 = vmatprep.subr.bf16.mxu0 0
      %3736 = vmatpush1.bf16.msra.mxu0 0
      %3737 = vmatprep.subr.bf16.mxu0 0
      %3738 = vmatpush1.bf16.msra.mxu0 0
      %3739 = vmatprep.subr.bf16.mxu0 0
      %3740 = vmatpush1.bf16.msra.mxu0 0
      %3741 = vmatprep.subr.bf16.mxu0 0
      %3742 = vmatpush1.bf16.msra.mxu0 0
      %3743 = vmatprep.subr.bf16.mxu0 0
      %3744 = vmatpush1.bf16.msra.mxu0 0
      %3745 = vmatprep.subr.bf16.mxu0 0
      %3746 = vmatpush1.bf16.msra.mxu0 0
      %3747 = vmatprep.subr.bf16.mxu0 0
      %3748 = vmatpush1.bf16.msra.mxu0 0
      %3749 = vmatprep.subr.bf16.mxu0 0
      %3750 = vmatpush1.bf16.msra.mxu0 0
      %3751 = vmatprep.subr.bf16.mxu0 0
      %3752 = vmatpush1.bf16.msra.mxu0 0
      %3753 = vmatprep.subr.bf16.mxu0 0
      %3754 = vmatpush1.bf16.msra.mxu0 0
      %3755 = vmatprep.mubr.bf16.mxu0 0
      %3756 = vmatmul.mubr.bf16.gmra.mrb[0].mxu0 %v3455
      %v3757 = vpop.f32.mrb[0].mxu0
      %v3758 = vadd.f32 %v3426, %v3757
      %v3759 = vpop.f32.mrb[0].mxu0
      %v3760 = vadd.f32 %v3426, %v3759
      %v3761 = vpop.f32.mrb[0].mxu0
      %v3762 = vadd.f32 %v3431, %v3761
      %v3763 = vpop.f32.mrb[0].mxu0
      %v3764 = vadd.f32 %v3431, %v3763
      %3765 = vmatprep.mubr.bf16.mxu0 0
      %3766 = vmatmul.mubr.bf16.gmra.mrb[0].mxu0 %v3458
      %v3767 = vpop.f32.mrb[0].mxu0
      %v3768 = vadd.f32 %v3436, %v3767
      %v3769 = vpop.f32.mrb[0].mxu0
      %v3770 = vadd.f32 %v3436, %v3769
      %v3771 = vpop.f32.mrb[0].mxu0
      %v3772 = vadd.f32 %v3441, %v3771
      %v3773 = vpop.f32.mrb[0].mxu0
      %v3774 = vadd.f32 %v3441, %v3773
      %3775 = vdwg.mxu0
      %3776 = vmatprep.subr.bf16.mxu0 %v3346
      %3777 = vmatpush1.bf16.msra.mxu0 %v3345
      %3778 = vmatprep.subr.bf16.mxu0 %v3362
      %3779 = vmatpush1.bf16.msra.mxu0 %v3361
      %3780 = vmatprep.subr.bf16.mxu0 %v3378
      %3781 = vmatpush1.bf16.msra.mxu0 %v3377
      %3782 = vmatprep.subr.bf16.mxu0 %v3394
      %3783 = vmatpush1.bf16.msra.mxu0 %v3393
      %3784 = vmatprep.subr.bf16.mxu0 %v3497
      %3785 = vmatpush1.bf16.msra.mxu0 %v3494
      %3786 = vmatprep.subr.bf16.mxu0 0
      %3787 = vmatpush1.bf16.msra.mxu0 0
      %3788 = vmatprep.subr.bf16.mxu0 0
      %3789 = vmatpush1.bf16.msra.mxu0 0
      %3790 = vmatprep.subr.bf16.mxu0 0
      %3791 = vmatpush1.bf16.msra.mxu0 0
      %3792 = vmatprep.subr.bf16.mxu0 0
      %3793 = vmatpush1.bf16.msra.mxu0 0
      %3794 = vmatprep.subr.bf16.mxu0 0
      %3795 = vmatpush1.bf16.msra.mxu0 0
      %3796 = vmatprep.subr.bf16.mxu0 0
      %3797 = vmatpush1.bf16.msra.mxu0 0
      %3798 = vmatprep.subr.bf16.mxu0 0
      %3799 = vmatpush1.bf16.msra.mxu0 0
      %3800 = vmatprep.subr.bf16.mxu0 0
      %3801 = vmatpush1.bf16.msra.mxu0 0
      %3802 = vmatprep.subr.bf16.mxu0 0
      %3803 = vmatpush1.bf16.msra.mxu0 0
      %3804 = vmatprep.subr.bf16.mxu0 0
      %3805 = vmatpush1.bf16.msra.mxu0 0
      %3806 = vmatprep.subr.bf16.mxu0 0
      %3807 = vmatpush1.bf16.msra.mxu0 0
      %3808 = vmatprep.mubr.bf16.mxu0 0
      %3809 = vmatmul.mubr.bf16.gmra.mrb[0].mxu0 %v3455
      %v3810 = vpop.f32.mrb[0].mxu0
      %v3811 = vadd.f32 %v3426, %v3810
      %v3812 = vpop.f32.mrb[0].mxu0
      %v3813 = vadd.f32 %v3426, %v3812
      %v3814 = vpop.f32.mrb[0].mxu0
      %v3815 = vadd.f32 %v3431, %v3814
      %v3816 = vpop.f32.mrb[0].mxu0
      %v3817 = vadd.f32 %v3431, %v3816
      %3818 = vmatprep.mubr.bf16.mxu0 0
      %3819 = vmatmul.mubr.bf16.gmra.mrb[0].mxu0 %v3458
      %v3820 = vpop.f32.mrb[0].mxu0
      %v3821 = vadd.f32 %v3436, %v3820
      %v3822 = vpop.f32.mrb[0].mxu0
      %v3823 = vadd.f32 %v3436, %v3822
      %v3824 = vpop.f32.mrb[0].mxu0
      %v3825 = vadd.f32 %v3441, %v3824
      %v3826 = vpop.f32.mrb[0].mxu0
      %v3827 = vadd.f32 %v3441, %v3826
      %3828 = vdwg.mxu0
      %3829 = vmatprep.subr.bf16.mxu0 %v3348
      %3830 = vmatpush1.bf16.msra.mxu0 %v3347
      %3831 = vmatprep.subr.bf16.mxu0 %v3364
      %3832 = vmatpush1.bf16.msra.mxu0 %v3363
      %3833 = vmatprep.subr.bf16.mxu0 %v3380
      %3834 = vmatpush1.bf16.msra.mxu0 %v3379
      %3835 = vmatprep.subr.bf16.mxu0 %v3396
      %3836 = vmatpush1.bf16.msra.mxu0 %v3395
      %3837 = vmatprep.subr.bf16.mxu0 %v3503
      %3838 = vmatpush1.bf16.msra.mxu0 %v3500
      %3839 = vmatprep.subr.bf16.mxu0 0
      %3840 = vmatpush1.bf16.msra.mxu0 0
      %3841 = vmatprep.subr.bf16.mxu0 0
      %3842 = vmatpush1.bf16.msra.mxu0 0
      %3843 = vmatprep.subr.bf16.mxu0 0
      %3844 = vmatpush1.bf16.msra.mxu0 0
      %3845 = vmatprep.subr.bf16.mxu0 0
      %3846 = vmatpush1.bf16.msra.mxu0 0
      %3847 = vmatprep.subr.bf16.mxu0 0
      %3848 = vmatpush1.bf16.msra.mxu0 0
      %3849 = vmatprep.subr.bf16.mxu0 0
      %3850 = vmatpush1.bf16.msra.mxu0 0
      %3851 = vmatprep.subr.bf16.mxu0 0
      %3852 = vmatpush1.bf16.msra.mxu0 0
      %3853 = vmatprep.subr.bf16.mxu0 0
      %3854 = vmatpush1.bf16.msra.mxu0 0
      %3855 = vmatprep.subr.bf16.mxu0 0
      %3856 = vmatpush1.bf16.msra.mxu0 0
      %3857 = vmatprep.subr.bf16.mxu0 0
      %3858 = vmatpush1.bf16.msra.mxu0 0
      %3859 = vmatprep.subr.bf16.mxu0 0
      %3860 = vmatpush1.bf16.msra.mxu0 0
      %3861 = vmatprep.mubr.bf16.mxu0 0
      %3862 = vmatmul.mubr.bf16.gmra.mrb[0].mxu0 %v3455
      %v3863 = vpop.f32.mrb[0].mxu0
      %v3864 = vadd.f32 %v3426, %v3863
      %v3865 = vpop.f32.mrb[0].mxu0
      %v3866 = vadd.f32 %v3426, %v3865
      %v3867 = vpop.f32.mrb[0].mxu0
      %v3868 = vadd.f32 %v3431, %v3867
      %v3869 = vpop.f32.mrb[0].mxu0
      %v3870 = vadd.f32 %v3431, %v3869
      %3871 = vmatprep.mubr.bf16.mxu0 0
      %3872 = vmatmul.mubr.bf16.gmra.mrb[0].mxu0 %v3458
      %v3873 = vpop.f32.mrb[0].mxu0
      %v3874 = vadd.f32 %v3436, %v3873
      %v3875 = vpop.f32.mrb[0].mxu0
      %v3876 = vadd.f32 %v3436, %v3875
      %v3877 = vpop.f32.mrb[0].mxu0
      %v3878 = vadd.f32 %v3441, %v3877
      %v3879 = vpop.f32.mrb[0].mxu0
      %v3880 = vadd.f32 %v3441, %v3879
      %3881 = vdwg.mxu0
      %3882 = vmatprep.subr.bf16.mxu0 %v3350
      %3883 = vmatpush1.bf16.msra.mxu0 %v3349
      %3884 = vmatprep.subr.bf16.mxu0 %v3366
      %3885 = vmatpush1.bf16.msra.mxu0 %v3365
      %3886 = vmatprep.subr.bf16.mxu0 %v3382
      %3887 = vmatpush1.bf16.msra.mxu0 %v3381
      %3888 = vmatprep.subr.bf16.mxu0 %v3398
      %3889 = vmatpush1.bf16.msra.mxu0 %v3397
      %3890 = vmatprep.subr.bf16.mxu0 %v3509
      %3891 = vmatpush1.bf16.msra.mxu0 %v3506
      %3892 = vmatprep.subr.bf16.mxu0 0
      %3893 = vmatpush1.bf16.msra.mxu0 0
      %3894 = vmatprep.subr.bf16.mxu0 0
      %3895 = vmatpush1.bf16.msra.mxu0 0
      %3896 = vmatprep.subr.bf16.mxu0 0
      %3897 = vmatpush1.bf16.msra.mxu0 0
      %3898 = vmatprep.subr.bf16.mxu0 0
      %3899 = vmatpush1.bf16.msra.mxu0 0
      %3900 = vmatprep.subr.bf16.mxu0 0
      %3901 = vmatpush1.bf16.msra.mxu0 0
      %3902 = vmatprep.subr.bf16.mxu0 0
      %3903 = vmatpush1.bf16.msra.mxu0 0
      %3904 = vmatprep.subr.bf16.mxu0 0
      %3905 = vmatpush1.bf16.msra.mxu0 0
      %3906 = vmatprep.subr.bf16.mxu0 0
      %3907 = vmatpush1.bf16.msra.mxu0 0
      %3908 = vmatprep.subr.bf16.mxu0 0
      %3909 = vmatpush1.bf16.msra.mxu0 0
      %3910 = vmatprep.subr.bf16.mxu0 0
      %3911 = vmatpush1.bf16.msra.mxu0 0
      %3912 = vmatprep.subr.bf16.mxu0 0
      %3913 = vmatpush1.bf16.msra.mxu0 0
      %3914 = vmatprep.mubr.bf16.mxu0 0
      %3915 = vmatmul.mubr.bf16.gmra.mrb[0].mxu0 %v3455
      %v3916 = vpop.f32.mrb[0].mxu0
      %v3917 = vadd.f32 %v3426, %v3916
      %v3918 = vpop.f32.mrb[0].mxu0
      %v3919 = vadd.f32 %v3426, %v3918
      %v3920 = vpop.f32.mrb[0].mxu0
      %v3921 = vadd.f32 %v3431, %v3920
      %v3922 = vpop.f32.mrb[0].mxu0
      %v3923 = vadd.f32 %v3431, %v3922
      %3924 = vmatprep.mubr.bf16.mxu0 0
      %3925 = vmatmul.mubr.bf16.gmra.mrb[0].mxu0 %v3458
      %v3926 = vpop.f32.mrb[0].mxu0
      %v3927 = vadd.f32 %v3436, %v3926
      %v3928 = vpop.f32.mrb[0].mxu0
      %v3929 = vadd.f32 %v3436, %v3928
      %v3930 = vpop.f32.mrb[0].mxu0
      %v3931 = vadd.f32 %v3441, %v3930
      %v3932 = vpop.f32.mrb[0].mxu0
      %v3933 = vadd.f32 %v3441, %v3932
      %3934 = vdwg.mxu0
      %vm3935 = vcmp.gt.f32.partialorder %v3546, 0.0
      %vm3936 = vcmp.gt.f32.partialorder %v3548, 0.0
      %vm3937 = vcmp.gt.f32.partialorder %v3599, 0.0
      %vm3938 = vcmp.gt.f32.partialorder %v3601, 0.0
      %vm3939 = vcmp.gt.f32.partialorder %v3652, 0.0
      %vm3940 = vcmp.gt.f32.partialorder %v3654, 0.0
      %vm3941 = vcmp.gt.f32.partialorder %v3705, 0.0
      %vm3942 = vcmp.gt.f32.partialorder %v3707, 0.0
      %vm3943 = vcmp.gt.f32.partialorder %v3758, 0.0
      %vm3944 = vcmp.gt.f32.partialorder %v3760, 0.0
      %vm3945 = vcmp.gt.f32.partialorder %v3811, 0.0
      %vm3946 = vcmp.gt.f32.partialorder %v3813, 0.0
      %vm3947 = vcmp.gt.f32.partialorder %v3864, 0.0
      %vm3948 = vcmp.gt.f32.partialorder %v3866, 0.0
      %vm3949 = vcmp.gt.f32.partialorder %v3917, 0.0
      %vm3950 = vcmp.gt.f32.partialorder %v3919, 0.0
      %vm3951 = vcmp.gt.f32.partialorder %v3550, 0.0
      %vm3952 = vcmp.gt.f32.partialorder %v3552, 0.0
      %vm3953 = vcmp.gt.f32.partialorder %v3603, 0.0
      %vm3954 = vcmp.gt.f32.partialorder %v3605, 0.0
      %vm3955 = vcmp.gt.f32.partialorder %v3656, 0.0
      %vm3956 = vcmp.gt.f32.partialorder %v3658, 0.0
      %vm3957 = vcmp.gt.f32.partialorder %v3709, 0.0
      %vm3958 = vcmp.gt.f32.partialorder %v3711, 0.0
      %vm3959 = vcmp.gt.f32.partialorder %v3762, 0.0
      %vm3960 = vcmp.gt.f32.partialorder %v3764, 0.0
      %vm3961 = vcmp.gt.f32.partialorder %v3815, 0.0
      %vm3962 = vcmp.gt.f32.partialorder %v3817, 0.0
      %vm3963 = vcmp.gt.f32.partialorder %v3868, 0.0
      %vm3964 = vcmp.gt.f32.partialorder %v3870, 0.0
      %vm3965 = vcmp.gt.f32.partialorder %v3921, 0.0
      %vm3966 = vcmp.gt.f32.partialorder %v3923, 0.0
      %vm3967 = vcmp.gt.f32.partialorder %v3556, 0.0
      %vm3968 = vcmp.gt.f32.partialorder %v3558, 0.0
      %vm3969 = vcmp.gt.f32.partialorder %v3609, 0.0
      %vm3970 = vcmp.gt.f32.partialorder %v3611, 0.0
      %vm3971 = vcmp.gt.f32.partialorder %v3662, 0.0
      %vm3972 = vcmp.gt.f32.partialorder %v3664, 0.0
      %vm3973 = vcmp.gt.f32.partialorder %v3715, 0.0
      %vm3974 = vcmp.gt.f32.partialorder %v3717, 0.0
      %vm3975 = vcmp.gt.f32.partialorder %v3768, 0.0
      %vm3976 = vcmp.gt.f32.partialorder %v3770, 0.0
      %vm3977 = vcmp.gt.f32.partialorder %v3821, 0.0
      %vm3978 = vcmp.gt.f32.partialorder %v3823, 0.0
      %vm3979 = vcmp.gt.f32.partialorder %v3874, 0.0
      %vm3980 = vcmp.gt.f32.partialorder %v3876, 0.0
      %vm3981 = vcmp.gt.f32.partialorder %v3927, 0.0
      %vm3982 = vcmp.gt.f32.partialorder %v3929, 0.0
      %vm3983 = vcmp.gt.f32.partialorder %v3560, 0.0
      %vm3984 = vcmp.gt.f32.partialorder %v3562, 0.0
      %vm3985 = vcmp.gt.f32.partialorder %v3613, 0.0
      %vm3986 = vcmp.gt.f32.partialorder %v3615, 0.0
      %vm3987 = vcmp.gt.f32.partialorder %v3666, 0.0
      %vm3988 = vcmp.gt.f32.partialorder %v3668, 0.0
      %vm3989 = vcmp.gt.f32.partialorder %v3719, 0.0
      %vm3990 = vcmp.gt.f32.partialorder %v3721, 0.0
      %vm3991 = vcmp.gt.f32.partialorder %v3772, 0.0
      %vm3992 = vcmp.gt.f32.partialorder %v3774, 0.0
      %vm3993 = vcmp.gt.f32.partialorder %v3825, 0.0
      %vm3994 = vcmp.gt.f32.partialorder %v3827, 0.0
      %vm3995 = vcmp.gt.f32.partialorder %v3878, 0.0
      %vm3996 = vcmp.gt.f32.partialorder %v3880, 0.0
      %vm3997 = vcmp.gt.f32.partialorder %v3931, 0.0
      %vm3998 = vcmp.gt.f32.partialorder %v3933, 0.0
      %v3999 = vmin.f32 %v3546, 0.0
      %v4000 = vmin.f32 %v3548, 0.0
      %v4001 = vmin.f32 %v3599, 0.0
      %v4002 = vmin.f32 %v3601, 0.0
      %v4003 = vmin.f32 %v3652, 0.0
      %v4004 = vmin.f32 %v3654, 0.0
      %v4005 = vmin.f32 %v3705, 0.0
      %v4006 = vmin.f32 %v3707, 0.0
      %v4007 = vmin.f32 %v3758, 0.0
      %v4008 = vmin.f32 %v3760, 0.0
      %v4009 = vmin.f32 %v3811, 0.0
      %v4010 = vmin.f32 %v3813, 0.0
      %v4011 = vmin.f32 %v3864, 0.0
      %v4012 = vmin.f32 %v3866, 0.0
      %v4013 = vmin.f32 %v3917, 0.0
      %v4014 = vmin.f32 %v3919, 0.0
      %v4015 = vmin.f32 %v3550, 0.0
      %v4016 = vmin.f32 %v3552, 0.0
      %v4017 = vmin.f32 %v3603, 0.0
      %v4018 = vmin.f32 %v3605, 0.0
      %v4019 = vmin.f32 %v3656, 0.0
      %v4020 = vmin.f32 %v3658, 0.0
      %v4021 = vmin.f32 %v3709, 0.0
      %v4022 = vmin.f32 %v3711, 0.0
      %v4023 = vmin.f32 %v3762, 0.0
      %v4024 = vmin.f32 %v3764, 0.0
      %v4025 = vmin.f32 %v3815, 0.0
      %v4026 = vmin.f32 %v3817, 0.0
      %v4027 = vmin.f32 %v3868, 0.0
      %v4028 = vmin.f32 %v3870, 0.0
      %v4029 = vmin.f32 %v3921, 0.0
      %v4030 = vmin.f32 %v3923, 0.0
      %v4031 = vmin.f32 %v3556, 0.0
      %v4032 = vmin.f32 %v3558, 0.0
      %v4033 = vmin.f32 %v3609, 0.0
      %v4034 = vmin.f32 %v3611, 0.0
      %v4035 = vmin.f32 %v3662, 0.0
      %v4036 = vmin.f32 %v3664, 0.0
      %v4037 = vmin.f32 %v3715, 0.0
      %v4038 = vmin.f32 %v3717, 0.0
      %v4039 = vmin.f32 %v3768, 0.0
      %v4040 = vmin.f32 %v3770, 0.0
      %v4041 = vmin.f32 %v3821, 0.0
      %v4042 = vmin.f32 %v3823, 0.0
      %v4043 = vmin.f32 %v3874, 0.0
      %v4044 = vmin.f32 %v3876, 0.0
      %v4045 = vmin.f32 %v3927, 0.0
      %v4046 = vmin.f32 %v3929, 0.0
      %v4047 = vmin.f32 %v3560, 0.0
      %v4048 = vmin.f32 %v3562, 0.0
      %v4049 = vmin.f32 %v3613, 0.0
      %v4050 = vmin.f32 %v3615, 0.0
      %v4051 = vmin.f32 %v3666, 0.0
      %v4052 = vmin.f32 %v3668, 0.0
      %v4053 = vmin.f32 %v3719, 0.0
      %v4054 = vmin.f32 %v3721, 0.0
      %v4055 = vmin.f32 %v3772, 0.0
      %v4056 = vmin.f32 %v3774, 0.0
      %v4057 = vmin.f32 %v3825, 0.0
      %v4058 = vmin.f32 %v3827, 0.0
      %v4059 = vmin.f32 %v3878, 0.0
      %v4060 = vmin.f32 %v3880, 0.0
      %v4061 = vmin.f32 %v3931, 0.0
      %v4062 = vmin.f32 %v3933, 0.0
      %v4063 = vmul.f32 %v3999, 1.442695
      %v4064 = vpow.pop %v4063
      %v4065 = vmul.f32 %v4000, 1.442695
      %v4066 = vpow.pop %v4065
      %v4067 = vmul.f32 %v4001, 1.442695
      %v4068 = vpow.pop %v4067
      %v4069 = vmul.f32 %v4002, 1.442695
      %v4070 = vpow.pop %v4069
      %v4071 = vmul.f32 %v4003, 1.442695
      %v4072 = vpow.pop %v4071
      %v4073 = vmul.f32 %v4004, 1.442695
      %v4074 = vpow.pop %v4073
      %v4075 = vmul.f32 %v4005, 1.442695
      %v4076 = vpow.pop %v4075
      %v4077 = vmul.f32 %v4006, 1.442695
      %v4078 = vpow.pop %v4077
      %v4079 = vmul.f32 %v4007, 1.442695
      %v4080 = vpow.pop %v4079
      %v4081 = vmul.f32 %v4008, 1.442695
      %v4082 = vpow.pop %v4081
      %v4083 = vmul.f32 %v4009, 1.442695
      %v4084 = vpow.pop %v4083
      %v4085 = vmul.f32 %v4010, 1.442695
      %v4086 = vpow.pop %v4085
      %v4087 = vmul.f32 %v4011, 1.442695
      %v4088 = vpow.pop %v4087
      %v4089 = vmul.f32 %v4012, 1.442695
      %v4090 = vpow.pop %v4089
      %v4091 = vmul.f32 %v4013, 1.442695
      %v4092 = vpow.pop %v4091
      %v4093 = vmul.f32 %v4014, 1.442695
      %v4094 = vpow.pop %v4093
      %v4095 = vmul.f32 %v4015, 1.442695
      %v4096 = vpow.pop %v4095
      %v4097 = vmul.f32 %v4016, 1.442695
      %v4098 = vpow.pop %v4097
      %v4099 = vmul.f32 %v4017, 1.442695
      %v4100 = vpow.pop %v4099
      %v4101 = vmul.f32 %v4018, 1.442695
      %v4102 = vpow.pop %v4101
      %v4103 = vmul.f32 %v4019, 1.442695
      %v4104 = vpow.pop %v4103
      %v4105 = vmul.f32 %v4020, 1.442695
      %v4106 = vpow.pop %v4105
      %v4107 = vmul.f32 %v4021, 1.442695
      %v4108 = vpow.pop %v4107
      %v4109 = vmul.f32 %v4022, 1.442695
      %v4110 = vpow.pop %v4109
      %v4111 = vmul.f32 %v4023, 1.442695
      %v4112 = vpow.pop %v4111
      %v4113 = vmul.f32 %v4024, 1.442695
      %v4114 = vpow.pop %v4113
      %v4115 = vmul.f32 %v4025, 1.442695
      %v4116 = vpow.pop %v4115
      %v4117 = vmul.f32 %v4026, 1.442695
      %v4118 = vpow.pop %v4117
      %v4119 = vmul.f32 %v4027, 1.442695
      %v4120 = vpow.pop %v4119
      %v4121 = vmul.f32 %v4028, 1.442695
      %v4122 = vpow.pop %v4121
      %v4123 = vmul.f32 %v4029, 1.442695
      %v4124 = vpow.pop %v4123
      %v4125 = vmul.f32 %v4030, 1.442695
      %v4126 = vpow.pop %v4125
      %v4127 = vmul.f32 %v4031, 1.442695
      %v4128 = vpow.pop %v4127
      %v4129 = vmul.f32 %v4032, 1.442695
      %v4130 = vpow.pop %v4129
      %v4131 = vmul.f32 %v4033, 1.442695
      %v4132 = vpow.pop %v4131
      %v4133 = vmul.f32 %v4034, 1.442695
      %v4134 = vpow.pop %v4133
      %v4135 = vmul.f32 %v4035, 1.442695
      %v4136 = vpow.pop %v4135
      %v4137 = vmul.f32 %v4036, 1.442695
      %v4138 = vpow.pop %v4137
      %v4139 = vmul.f32 %v4037, 1.442695
      %v4140 = vpow.pop %v4139
      %v4141 = vmul.f32 %v4038, 1.442695
      %v4142 = vpow.pop %v4141
      %v4143 = vmul.f32 %v4039, 1.442695
      %v4144 = vpow.pop %v4143
      %v4145 = vmul.f32 %v4040, 1.442695
      %v4146 = vpow.pop %v4145
      %v4147 = vmul.f32 %v4041, 1.442695
      %v4148 = vpow.pop %v4147
      %v4149 = vmul.f32 %v4042, 1.442695
      %v4150 = vpow.pop %v4149
      %v4151 = vmul.f32 %v4043, 1.442695
      %v4152 = vpow.pop %v4151
      %v4153 = vmul.f32 %v4044, 1.442695
      %v4154 = vpow.pop %v4153
      %v4155 = vmul.f32 %v4045, 1.442695
      %v4156 = vpow.pop %v4155
      %v4157 = vmul.f32 %v4046, 1.442695
      %v4158 = vpow.pop %v4157
      %v4159 = vmul.f32 %v4047, 1.442695
      %v4160 = vpow.pop %v4159
      %v4161 = vmul.f32 %v4048, 1.442695
      %v4162 = vpow.pop %v4161
      %v4163 = vmul.f32 %v4049, 1.442695
      %v4164 = vpow.pop %v4163
      %v4165 = vmul.f32 %v4050, 1.442695
      %v4166 = vpow.pop %v4165
      %v4167 = vmul.f32 %v4051, 1.442695
      %v4168 = vpow.pop %v4167
      %v4169 = vmul.f32 %v4052, 1.442695
      %v4170 = vpow.pop %v4169
      %v4171 = vmul.f32 %v4053, 1.442695
      %v4172 = vpow.pop %v4171
      %v4173 = vmul.f32 %v4054, 1.442695
      %v4174 = vpow.pop %v4173
      %v4175 = vmul.f32 %v4055, 1.442695
      %v4176 = vpow.pop %v4175
      %v4177 = vmul.f32 %v4056, 1.442695
      %v4178 = vpow.pop %v4177
      %v4179 = vmul.f32 %v4057, 1.442695
      %v4180 = vpow.pop %v4179
      %v4181 = vmul.f32 %v4058, 1.442695
      %v4182 = vpow.pop %v4181
      %v4183 = vmul.f32 %v4059, 1.442695
      %v4184 = vpow.pop %v4183
      %v4185 = vmul.f32 %v4060, 1.442695
      %v4186 = vpow.pop %v4185
      %v4187 = vmul.f32 %v4061, 1.442695
      %v4188 = vpow.pop %v4187
      %v4189 = vmul.f32 %v4062, 1.442695
      %v4190 = vpow.pop %v4189
      %v4191 = vsub.f32 %v4064, 1.0
      %v4192 = vsub.f32 %v4066, 1.0
      %v4193 = vsub.f32 %v4068, 1.0
      %v4194 = vsub.f32 %v4070, 1.0
      %v4195 = vsub.f32 %v4072, 1.0
      %v4196 = vsub.f32 %v4074, 1.0
      %v4197 = vsub.f32 %v4076, 1.0
      %v4198 = vsub.f32 %v4078, 1.0
      %v4199 = vsub.f32 %v4080, 1.0
      %v4200 = vsub.f32 %v4082, 1.0
      %v4201 = vsub.f32 %v4084, 1.0
      %v4202 = vsub.f32 %v4086, 1.0
      %v4203 = vsub.f32 %v4088, 1.0
      %v4204 = vsub.f32 %v4090, 1.0
      %v4205 = vsub.f32 %v4092, 1.0
      %v4206 = vsub.f32 %v4094, 1.0
      %v4207 = vsub.f32 %v4096, 1.0
      %v4208 = vsub.f32 %v4098, 1.0
      %v4209 = vsub.f32 %v4100, 1.0
      %v4210 = vsub.f32 %v4102, 1.0
      %v4211 = vsub.f32 %v4104, 1.0
      %v4212 = vsub.f32 %v4106, 1.0
      %v4213 = vsub.f32 %v4108, 1.0
      %v4214 = vsub.f32 %v4110, 1.0
      %v4215 = vsub.f32 %v4112, 1.0
      %v4216 = vsub.f32 %v4114, 1.0
      %v4217 = vsub.f32 %v4116, 1.0
      %v4218 = vsub.f32 %v4118, 1.0
      %v4219 = vsub.f32 %v4120, 1.0
      %v4220 = vsub.f32 %v4122, 1.0
      %v4221 = vsub.f32 %v4124, 1.0
      %v4222 = vsub.f32 %v4126, 1.0
      %v4223 = vsub.f32 %v4128, 1.0
      %v4224 = vsub.f32 %v4130, 1.0
      %v4225 = vsub.f32 %v4132, 1.0
      %v4226 = vsub.f32 %v4134, 1.0
      %v4227 = vsub.f32 %v4136, 1.0
      %v4228 = vsub.f32 %v4138, 1.0
      %v4229 = vsub.f32 %v4140, 1.0
      %v4230 = vsub.f32 %v4142, 1.0
      %v4231 = vsub.f32 %v4144, 1.0
      %v4232 = vsub.f32 %v4146, 1.0
      %v4233 = vsub.f32 %v4148, 1.0
      %v4234 = vsub.f32 %v4150, 1.0
      %v4235 = vsub.f32 %v4152, 1.0
      %v4236 = vsub.f32 %v4154, 1.0
      %v4237 = vsub.f32 %v4156, 1.0
      %v4238 = vsub.f32 %v4158, 1.0
      %v4239 = vsub.f32 %v4160, 1.0
      %v4240 = vsub.f32 %v4162, 1.0
      %v4241 = vsub.f32 %v4164, 1.0
      %v4242 = vsub.f32 %v4166, 1.0
      %v4243 = vsub.f32 %v4168, 1.0
      %v4244 = vsub.f32 %v4170, 1.0
      %v4245 = vsub.f32 %v4172, 1.0
      %v4246 = vsub.f32 %v4174, 1.0
      %v4247 = vsub.f32 %v4176, 1.0
      %v4248 = vsub.f32 %v4178, 1.0
      %v4249 = vsub.f32 %v4180, 1.0
      %v4250 = vsub.f32 %v4182, 1.0
      %v4251 = vsub.f32 %v4184, 1.0
      %v4252 = vsub.f32 %v4186, 1.0
      %v4253 = vsub.f32 %v4188, 1.0
      %v4254 = vsub.f32 %v4190, 1.0
      %v4255 = vsel %vm3935, %v3546, %v4191
      %v4256 = vsel %vm3936, %v3548, %v4192
      %v4257 = vsel %vm3937, %v3599, %v4193
      %v4258 = vsel %vm3938, %v3601, %v4194
      %v4259 = vsel %vm3939, %v3652, %v4195
      %v4260 = vsel %vm3940, %v3654, %v4196
      %v4261 = vsel %vm3941, %v3705, %v4197
      %v4262 = vsel %vm3942, %v3707, %v4198
      %v4263 = vsel %vm3943, %v3758, %v4199
      %v4264 = vsel %vm3944, %v3760, %v4200
      %v4265 = vsel %vm3945, %v3811, %v4201
      %v4266 = vsel %vm3946, %v3813, %v4202
      %v4267 = vsel %vm3947, %v3864, %v4203
      %v4268 = vsel %vm3948, %v3866, %v4204
      %v4269 = vsel %vm3949, %v3917, %v4205
      %v4270 = vsel %vm3950, %v3919, %v4206
      %v4271 = vsel %vm3951, %v3550, %v4207
      %v4272 = vsel %vm3952, %v3552, %v4208
      %v4273 = vsel %vm3953, %v3603, %v4209
      %v4274 = vsel %vm3954, %v3605, %v4210
      %v4275 = vsel %vm3955, %v3656, %v4211
      %v4276 = vsel %vm3956, %v3658, %v4212
      %v4277 = vsel %vm3957, %v3709, %v4213
      %v4278 = vsel %vm3958, %v3711, %v4214
      %v4279 = vsel %vm3959, %v3762, %v4215
      %v4280 = vsel %vm3960, %v3764, %v4216
      %v4281 = vsel %vm3961, %v3815, %v4217
      %v4282 = vsel %vm3962, %v3817, %v4218
      %v4283 = vsel %vm3963, %v3868, %v4219
      %v4284 = vsel %vm3964, %v3870, %v4220
      %v4285 = vsel %vm3965, %v3921, %v4221
      %v4286 = vsel %vm3966, %v3923, %v4222
      %v4287 = vsel %vm3967, %v3556, %v4223
      %v4288 = vsel %vm3968, %v3558, %v4224
      %v4289 = vsel %vm3969, %v3609, %v4225
      %v4290 = vsel %vm3970, %v3611, %v4226
      %v4291 = vsel %vm3971, %v3662, %v4227
      %v4292 = vsel %vm3972, %v3664, %v4228
      %v4293 = vsel %vm3973, %v3715, %v4229
      %v4294 = vsel %vm3974, %v3717, %v4230
      %v4295 = vsel %vm3975, %v3768, %v4231
      %v4296 = vsel %vm3976, %v3770, %v4232
      %v4297 = vsel %vm3977, %v3821, %v4233
      %v4298 = vsel %vm3978, %v3823, %v4234
      %v4299 = vsel %vm3979, %v3874, %v4235
      %v4300 = vsel %vm3980, %v3876, %v4236
      %v4301 = vsel %vm3981, %v3927, %v4237
      %v4302 = vsel %vm3982, %v3929, %v4238
      %v4303 = vsel %vm3983, %v3560, %v4239
      %v4304 = vsel %vm3984, %v3562, %v4240
      %v4305 = vsel %vm3985, %v3613, %v4241
      %v4306 = vsel %vm3986, %v3615, %v4242
      %v4307 = vsel %vm3987, %v3666, %v4243
      %v4308 = vsel %vm3988, %v3668, %v4244
      %v4309 = vsel %vm3989, %v3719, %v4245
      %v4310 = vsel %vm3990, %v3721, %v4246
      %v4311 = vsel %vm3991, %v3772, %v4247
      %v4312 = vsel %vm3992, %v3774, %v4248
      %v4313 = vsel %vm3993, %v3825, %v4249
      %v4314 = vsel %vm3994, %v3827, %v4250
      %v4315 = vsel %vm3995, %v3878, %v4251
      %v4316 = vsel %vm3996, %v3880, %v4252
      %v4317 = vsel %vm3997, %v3931, %v4253
      %v4318 = vsel %vm3998, %v3933, %v4254
      %v4319 = vadd.f32 %v4255, %v4256
      %v4320 = vadd.f32 %v4271, %v4272
      %v4321 = vadd.f32 %v4287, %v4288
      %v4322 = vadd.f32 %v4303, %v4304
      %v4323 = vmul.f32 %v4319, %v447
      %v4324 = vmul.f32 %v4320, %v447
      %v4325 = vmul.f32 %v4321, %v447
      %v4326 = vmul.f32 %v4322, %v447
      %v4327 = vpack.c.bf16 %v4324, %v4323
      %v4328 = vpack.c.bf16 %v4326, %v4325
      %v4329 = vadd.f32 %v4257, %v4258
      %v4330 = vadd.f32 %v4273, %v4274
      %v4331 = vadd.f32 %v4289, %v4290
      %v4332 = vadd.f32 %v4305, %v4306
      %v4333 = vmul.f32 %v4329, %v447
      %v4334 = vmul.f32 %v4330, %v447
      %v4335 = vmul.f32 %v4331, %v447
      %v4336 = vmul.f32 %v4332, %v447
      %v4337 = vpack.c.bf16 %v4334, %v4333
      %v4338 = vpack.c.bf16 %v4336, %v4335
      %v4339 = vadd.f32 %v4259, %v4260
      %v4340 = vadd.f32 %v4275, %v4276
      %v4341 = vadd.f32 %v4291, %v4292
      %v4342 = vadd.f32 %v4307, %v4308
      %v4343 = vmul.f32 %v4339, %v447
      %v4344 = vmul.f32 %v4340, %v447
      %v4345 = vmul.f32 %v4341, %v447
      %v4346 = vmul.f32 %v4342, %v447
      %v4347 = vpack.c.bf16 %v4344, %v4343
      %v4348 = vpack.c.bf16 %v4346, %v4345
      %v4349 = vadd.f32 %v4261, %v4262
      %v4350 = vadd.f32 %v4277, %v4278
      %v4351 = vadd.f32 %v4293, %v4294
      %v4352 = vadd.f32 %v4309, %v4310
      %v4353 = vmul.f32 %v4349, %v447
      %v4354 = vmul.f32 %v4350, %v447
      %v4355 = vmul.f32 %v4351, %v447
      %v4356 = vmul.f32 %v4352, %v447
      %v4357 = vpack.c.bf16 %v4354, %v4353
      %v4358 = vpack.c.bf16 %v4356, %v4355
      %v4359 = vadd.f32 %v4263, %v4264
      %v4360 = vadd.f32 %v4279, %v4280
      %v4361 = vadd.f32 %v4295, %v4296
      %v4362 = vadd.f32 %v4311, %v4312
      %v4363 = vmul.f32 %v4359, %v447
      %v4364 = vmul.f32 %v4360, %v447
      %v4365 = vmul.f32 %v4361, %v447
      %v4366 = vmul.f32 %v4362, %v447
      %v4367 = vpack.c.bf16 %v4364, %v4363
      %v4368 = vpack.c.bf16 %v4366, %v4365
      %v4369 = vadd.f32 %v4265, %v4266
      %v4370 = vadd.f32 %v4281, %v4282
      %v4371 = vadd.f32 %v4297, %v4298
      %v4372 = vadd.f32 %v4313, %v4314
      %v4373 = vmul.f32 %v4369, %v447
      %v4374 = vmul.f32 %v4370, %v447
      %v4375 = vmul.f32 %v4371, %v447
      %v4376 = vmul.f32 %v4372, %v447
      %v4377 = vpack.c.bf16 %v4374, %v4373
      %v4378 = vpack.c.bf16 %v4376, %v4375
      %v4379 = vadd.f32 %v4267, %v4268
      %v4380 = vadd.f32 %v4283, %v4284
      %v4381 = vadd.f32 %v4299, %v4300
      %v4382 = vadd.f32 %v4315, %v4316
      %v4383 = vmul.f32 %v4379, %v447
      %v4384 = vmul.f32 %v4380, %v447
      %v4385 = vmul.f32 %v4381, %v447
      %v4386 = vmul.f32 %v4382, %v447
      %v4387 = vpack.c.bf16 %v4384, %v4383
      %v4388 = vpack.c.bf16 %v4386, %v4385
      %v4389 = vadd.f32 %v4269, %v4270
      %v4390 = vadd.f32 %v4285, %v4286
      %v4391 = vadd.f32 %v4301, %v4302
      %v4392 = vadd.f32 %v4317, %v4318
      %v4393 = vmul.f32 %v4389, %v447
      %v4394 = vmul.f32 %v4390, %v447
      %v4395 = vmul.f32 %v4391, %v447
      %v4396 = vmul.f32 %v4392, %v447
      %v4397 = vpack.c.bf16 %v4394, %v4393
      %v4398 = vpack.c.bf16 %v4396, %v4395
      %4401 = vrot.lane.b32.xlu0 %v4347, 1
      %v4402 = vpop.permute.xlu0 %4401
      %4403 = vrot.lane.b32.xlu0 %v4348, 1
      %v4404 = vpop.permute.xlu0 %4403
      %4411 = vrot.lane.b32.xlu0 %v4357, 1
      %v4412 = vpop.permute.xlu0 %4411
      %4413 = vrot.lane.b32.xlu0 %v4358, 1
      %v4414 = vpop.permute.xlu0 %4413
      %4421 = vrot.lane.b32.xlu0 %v4367, 1
      %v4422 = vpop.permute.xlu0 %4421
      %4423 = vrot.lane.b32.xlu0 %v4368, 1
      %v4424 = vpop.permute.xlu0 %4423
      %4431 = vrot.lane.b32.xlu0 %v4377, 1
      %v4432 = vpop.permute.xlu0 %4431
      %4433 = vrot.lane.b32.xlu0 %v4378, 1
      %v4434 = vpop.permute.xlu0 %4433
      %4441 = vrot.lane.b32.xlu0 %v4387, 1
      %v4442 = vpop.permute.xlu0 %4441
      %4443 = vrot.lane.b32.xlu0 %v4388, 1
      %v4444 = vpop.permute.xlu0 %4443
      %4451 = vrot.lane.b32.xlu0 %v4397, 1
      %v4452 = vpop.permute.xlu0 %4451
      %4453 = vrot.lane.b32.xlu0 %v4398, 1
      %v4454 = vpop.permute.xlu0 %4453
      %4461 = vrot.lane.b32.xlu0 %v4327, 127
      %v4462 = vpop.permute.xlu0 %4461
      %4463 = vrot.lane.b32.xlu0 %v4328, 127
      %v4464 = vpop.permute.xlu0 %4463
      %4469 = vrot.lane.b32.xlu0 %v4337, 127
      %v4470 = vpop.permute.xlu0 %4469
      %4471 = vrot.lane.b32.xlu0 %v4338, 127
      %v4472 = vpop.permute.xlu0 %4471
      %4475 = vrot.lane.b32.xlu0 %v4347, 127
      %v4476 = vpop.permute.xlu0 %4475
      %4477 = vrot.lane.b32.xlu0 %v4348, 127
      %v4478 = vpop.permute.xlu0 %4477
      %4481 = vrot.lane.b32.xlu0 %v4357, 127
      %v4482 = vpop.permute.xlu0 %4481
      %4483 = vrot.lane.b32.xlu0 %v4358, 127
      %v4484 = vpop.permute.xlu0 %4483
      %4487 = vrot.lane.b32.xlu0 %v4367, 127
      %v4488 = vpop.permute.xlu0 %4487
      %4489 = vrot.lane.b32.xlu0 %v4368, 127
      %v4490 = vpop.permute.xlu0 %4489
      %4493 = vrot.lane.b32.xlu0 %v4377, 127
      %v4494 = vpop.permute.xlu0 %4493
      %4495 = vrot.lane.b32.xlu0 %v4378, 127
      %v4496 = vpop.permute.xlu0 %4495
      %v4499 = vshrl.u32 %v4412, 16
      %v4501 = vrot.slane %v4499, 3
      %v4502 = vshll.u32 %v4412, 16
      %v4504 = vrot.slane %v4502, 4
      %v4505 = vor.u32 %v4501, %v4504
      %v4506 = vshrl.u32 %v4422, 16
      %v4508 = vrot.slane %v4506, 3
      %v4509 = vshll.u32 %v4422, 16
      %v4511 = vrot.slane %v4509, 4
      %v4512 = vor.u32 %v4508, %v4511
      %v4513 = vshrl.u32 %v4432, 16
      %v4515 = vrot.slane %v4513, 3
      %v4516 = vshll.u32 %v4432, 16
      %v4518 = vrot.slane %v4516, 4
      %v4519 = vor.u32 %v4515, %v4518
      %v4520 = vshrl.u32 %v4442, 16
      %v4522 = vrot.slane %v4520, 3
      %v4523 = vshll.u32 %v4442, 16
      %v4525 = vrot.slane %v4523, 4
      %v4526 = vor.u32 %v4522, %v4525
      %v4527 = vshrl.u32 %v4452, 16
      %v4529 = vrot.slane %v4527, 3
      %v4530 = vshll.u32 %v4452, 16
      %v4532 = vrot.slane %v4530, 4
      %v4533 = vor.u32 %v4529, %v4532
      %v4535 = vshrl.u32 %v4327, 16
      %v4537 = vrot.slane %v4535, 3
      %v4538 = vshll.u32 %v4327, 16
      %v4540 = vrot.slane %v4538, 4
      %v4541 = vor.u32 %v4537, %v4540
      %v4543 = vshrl.u32 %v4337, 16
      %v4545 = vrot.slane %v4543, 3
      %v4546 = vshll.u32 %v4337, 16
      %v4548 = vrot.slane %v4546, 4
      %v4549 = vor.u32 %v4545, %v4548
      %v4551 = vshrl.u32 %v4347, 16
      %v4553 = vrot.slane %v4551, 3
      %v4554 = vshll.u32 %v4347, 16
      %v4556 = vrot.slane %v4554, 4
      %v4557 = vor.u32 %v4553, %v4556
      %v4558 = vshrl.u32 %v4414, 16
      %v4560 = vrot.slane %v4558, 3
      %v4561 = vshll.u32 %v4414, 16
      %v4563 = vrot.slane %v4561, 4
      %v4564 = vor.u32 %v4560, %v4563
      %v4565 = vsel %vm1175, %v4505, %v4564
      %v4566 = vshrl.u32 %v4424, 16
      %v4568 = vrot.slane %v4566, 3
      %v4569 = vshll.u32 %v4424, 16
      %v4571 = vrot.slane %v4569, 4
      %v4572 = vor.u32 %v4568, %v4571
      %v4573 = vsel %vm1175, %v4512, %v4572
      %v4574 = vshrl.u32 %v4434, 16
      %v4576 = vrot.slane %v4574, 3
      %v4577 = vshll.u32 %v4434, 16
      %v4579 = vrot.slane %v4577, 4
      %v4580 = vor.u32 %v4576, %v4579
      %v4581 = vsel %vm1175, %v4519, %v4580
      %v4582 = vshrl.u32 %v4444, 16
      %v4584 = vrot.slane %v4582, 3
      %v4585 = vshll.u32 %v4444, 16
      %v4587 = vrot.slane %v4585, 4
      %v4588 = vor.u32 %v4584, %v4587
      %v4589 = vsel %vm1175, %v4526, %v4588
      %v4590 = vshrl.u32 %v4454, 16
      %v4592 = vrot.slane %v4590, 3
      %v4593 = vshll.u32 %v4454, 16
      %v4595 = vrot.slane %v4593, 4
      %v4596 = vor.u32 %v4592, %v4595
      %v4597 = vsel %vm1175, %v4533, %v4596
      %v4599 = vshrl.u32 %v4328, 16
      %v4601 = vrot.slane %v4599, 3
      %v4602 = vshll.u32 %v4328, 16
      %v4604 = vrot.slane %v4602, 4
      %v4605 = vor.u32 %v4601, %v4604
      %v4606 = vsel %vm1175, %v4541, %v4605
      %v4608 = vshrl.u32 %v4338, 16
      %v4610 = vrot.slane %v4608, 3
      %v4611 = vshll.u32 %v4338, 16
      %v4613 = vrot.slane %v4611, 4
      %v4614 = vor.u32 %v4610, %v4613
      %v4615 = vsel %vm1175, %v4549, %v4614
      %v4617 = vshrl.u32 %v4348, 16
      %v4619 = vrot.slane %v4617, 3
      %v4620 = vshll.u32 %v4348, 16
      %v4622 = vrot.slane %v4620, 4
      %v4623 = vor.u32 %v4619, %v4622
      %v4624 = vsel %vm1175, %v4557, %v4623
      %v4649 = vrot.slane %v4422, 7
      %v4650 = vrot.slane %v4432, 7
      %v4651 = vrot.slane %v4442, 7
      %v4652 = vrot.slane %v4452, 7
      %v4653 = vrot.slane %v4327, 7
      %v4654 = vrot.slane %v4337, 7
      %v4655 = vrot.slane %v4347, 7
      %v4656 = vrot.slane %v4357, 7
      %v4657 = vrot.slane %v4424, 7
      %v4658 = vsel %vm1504, %v4649, %v4657
      %v4659 = vrot.slane %v4434, 7
      %v4660 = vsel %vm1504, %v4650, %v4659
      %v4661 = vrot.slane %v4444, 7
      %v4662 = vsel %vm1504, %v4651, %v4661
      %v4663 = vrot.slane %v4454, 7
      %v4664 = vsel %vm1504, %v4652, %v4663
      %v4665 = vrot.slane %v4328, 7
      %v4666 = vsel %vm1504, %v4653, %v4665
      %v4667 = vrot.slane %v4338, 7
      %v4668 = vsel %vm1504, %v4654, %v4667
      %v4669 = vrot.slane %v4348, 7
      %v4670 = vsel %vm1504, %v4655, %v4669
      %v4671 = vrot.slane %v4358, 7
      %v4672 = vsel %vm1504, %v4656, %v4671
      %v4681 = vrot.slane %v4513, 2
      %v4682 = vrot.slane %v4516, 3
      %v4683 = vor.u32 %v4681, %v4682
      %v4684 = vrot.slane %v4520, 2
      %v4685 = vrot.slane %v4523, 3
      %v4686 = vor.u32 %v4684, %v4685
      %v4687 = vrot.slane %v4527, 2
      %v4688 = vrot.slane %v4530, 3
      %v4689 = vor.u32 %v4687, %v4688
      %v4690 = vrot.slane %v4535, 2
      %v4691 = vrot.slane %v4538, 3
      %v4692 = vor.u32 %v4690, %v4691
      %v4693 = vrot.slane %v4543, 2
      %v4694 = vrot.slane %v4546, 3
      %v4695 = vor.u32 %v4693, %v4694
      %v4696 = vrot.slane %v4551, 2
      %v4697 = vrot.slane %v4554, 3
      %v4698 = vor.u32 %v4696, %v4697
      %v4700 = vshrl.u32 %v4357, 16
      %v4702 = vrot.slane %v4700, 2
      %v4703 = vshll.u32 %v4357, 16
      %v4705 = vrot.slane %v4703, 3
      %v4706 = vor.u32 %v4702, %v4705
      %v4708 = vshrl.u32 %v4367, 16
      %v4710 = vrot.slane %v4708, 2
      %v4711 = vshll.u32 %v4367, 16
      %v4713 = vrot.slane %v4711, 3
      %v4714 = vor.u32 %v4710, %v4713
      %v4715 = vrot.slane %v4574, 2
      %v4716 = vrot.slane %v4577, 3
      %v4717 = vor.u32 %v4715, %v4716
      %v4718 = vsel %vm1421, %v4683, %v4717
      %v4719 = vrot.slane %v4582, 2
      %v4720 = vrot.slane %v4585, 3
      %v4721 = vor.u32 %v4719, %v4720
      %v4722 = vsel %vm1421, %v4686, %v4721
      %v4723 = vrot.slane %v4590, 2
      %v4724 = vrot.slane %v4593, 3
      %v4725 = vor.u32 %v4723, %v4724
      %v4726 = vsel %vm1421, %v4689, %v4725
      %v4727 = vrot.slane %v4599, 2
      %v4728 = vrot.slane %v4602, 3
      %v4729 = vor.u32 %v4727, %v4728
      %v4730 = vsel %vm1421, %v4692, %v4729
      %v4731 = vrot.slane %v4608, 2
      %v4732 = vrot.slane %v4611, 3
      %v4733 = vor.u32 %v4731, %v4732
      %v4734 = vsel %vm1421, %v4695, %v4733
      %v4735 = vrot.slane %v4617, 2
      %v4736 = vrot.slane %v4620, 3
      %v4737 = vor.u32 %v4735, %v4736
      %v4738 = vsel %vm1421, %v4698, %v4737
      %v4740 = vshrl.u32 %v4358, 16
      %v4742 = vrot.slane %v4740, 2
      %v4743 = vshll.u32 %v4358, 16
      %v4745 = vrot.slane %v4743, 3
      %v4746 = vor.u32 %v4742, %v4745
      %v4747 = vsel %vm1421, %v4706, %v4746
      %v4749 = vshrl.u32 %v4368, 16
      %v4751 = vrot.slane %v4749, 2
      %v4752 = vshll.u32 %v4368, 16
      %v4754 = vrot.slane %v4752, 3
      %v4755 = vor.u32 %v4751, %v4754
      %v4756 = vsel %vm1421, %v4714, %v4755
      %v4773 = vrot.slane %v4442, 6
      %v4774 = vrot.slane %v4452, 6
      %v4775 = vrot.slane %v4327, 6
      %v4776 = vrot.slane %v4337, 6
      %v4777 = vrot.slane %v4347, 6
      %v4778 = vrot.slane %v4357, 6
      %v4779 = vrot.slane %v4367, 6
      %v4780 = vrot.slane %v4377, 6
      %v4781 = vrot.slane %v4444, 6
      %v4782 = vsel %vm1090, %v4773, %v4781
      %v4783 = vrot.slane %v4454, 6
      %v4784 = vsel %vm1090, %v4774, %v4783
      %v4785 = vrot.slane %v4328, 6
      %v4786 = vsel %vm1090, %v4775, %v4785
      %v4787 = vrot.slane %v4338, 6
      %v4788 = vsel %vm1090, %v4776, %v4787
      %v4789 = vrot.slane %v4348, 6
      %v4790 = vsel %vm1090, %v4777, %v4789
      %v4791 = vrot.slane %v4358, 6
      %v4792 = vsel %vm1090, %v4778, %v4791
      %v4793 = vrot.slane %v4368, 6
      %v4794 = vsel %vm1090, %v4779, %v4793
      %v4795 = vrot.slane %v4378, 6
      %v4796 = vsel %vm1090, %v4780, %v4795
      %vm4805 = vsmask.f32 6400
      %v4806 = vrot.slane %v4527, 1
      %v4807 = vrot.slane %v4530, 2
      %v4808 = vor.u32 %v4806, %v4807
      %v4809 = vrot.slane %v4535, 1
      %v4810 = vrot.slane %v4538, 2
      %v4811 = vor.u32 %v4809, %v4810
      %v4812 = vrot.slane %v4543, 1
      %v4813 = vrot.slane %v4546, 2
      %v4814 = vor.u32 %v4812, %v4813
      %v4815 = vrot.slane %v4551, 1
      %v4816 = vrot.slane %v4554, 2
      %v4817 = vor.u32 %v4815, %v4816
      %v4818 = vrot.slane %v4700, 1
      %v4819 = vrot.slane %v4703, 2
      %v4820 = vor.u32 %v4818, %v4819
      %v4821 = vrot.slane %v4708, 1
      %v4822 = vrot.slane %v4711, 2
      %v4823 = vor.u32 %v4821, %v4822
      %v4825 = vshrl.u32 %v4377, 16
      %v4827 = vrot.slane %v4825, 1
      %v4828 = vshll.u32 %v4377, 16
      %v4830 = vrot.slane %v4828, 2
      %v4831 = vor.u32 %v4827, %v4830
      %v4833 = vshrl.u32 %v4387, 16
      %v4835 = vrot.slane %v4833, 1
      %v4836 = vshll.u32 %v4387, 16
      %v4838 = vrot.slane %v4836, 2
      %v4839 = vor.u32 %v4835, %v4838
      %v4840 = vrot.slane %v4590, 1
      %v4841 = vrot.slane %v4593, 2
      %v4842 = vor.u32 %v4840, %v4841
      %v4843 = vsel %vm4805, %v4808, %v4842
      %v4844 = vrot.slane %v4599, 1
      %v4845 = vrot.slane %v4602, 2
      %v4846 = vor.u32 %v4844, %v4845
      %v4847 = vsel %vm4805, %v4811, %v4846
      %v4848 = vrot.slane %v4608, 1
      %v4849 = vrot.slane %v4611, 2
      %v4850 = vor.u32 %v4848, %v4849
      %v4851 = vsel %vm4805, %v4814, %v4850
      %v4852 = vrot.slane %v4617, 1
      %v4853 = vrot.slane %v4620, 2
      %v4854 = vor.u32 %v4852, %v4853
      %v4855 = vsel %vm4805, %v4817, %v4854
      %v4856 = vrot.slane %v4740, 1
      %v4857 = vrot.slane %v4743, 2
      %v4858 = vor.u32 %v4856, %v4857
      %v4859 = vsel %vm4805, %v4820, %v4858
      %v4860 = vrot.slane %v4749, 1
      %v4861 = vrot.slane %v4752, 2
      %v4862 = vor.u32 %v4860, %v4861
      %v4863 = vsel %vm4805, %v4823, %v4862
      %v4865 = vshrl.u32 %v4378, 16
      %v4867 = vrot.slane %v4865, 1
      %v4868 = vshll.u32 %v4378, 16
      %v4870 = vrot.slane %v4868, 2
      %v4871 = vor.u32 %v4867, %v4870
      %v4872 = vsel %vm4805, %v4831, %v4871
      %v4874 = vshrl.u32 %v4388, 16
      %v4876 = vrot.slane %v4874, 1
      %v4877 = vshll.u32 %v4388, 16
      %v4879 = vrot.slane %v4877, 2
      %v4880 = vor.u32 %v4876, %v4879
      %v4881 = vsel %vm4805, %v4839, %v4880
      %v4898 = vrot.slane %v4327, 5
      %v4899 = vrot.slane %v4337, 5
      %v4900 = vrot.slane %v4347, 5
      %v4901 = vrot.slane %v4357, 5
      %v4902 = vrot.slane %v4367, 5
      %v4903 = vrot.slane %v4377, 5
      %v4904 = vrot.slane %v4387, 5
      %v4905 = vrot.slane %v4397, 5
      %v4906 = vrot.slane %v4328, 5
      %v4907 = vsel %vm1336, %v4898, %v4906
      %v4908 = vrot.slane %v4338, 5
      %v4909 = vsel %vm1336, %v4899, %v4908
      %v4910 = vrot.slane %v4348, 5
      %v4911 = vsel %vm1336, %v4900, %v4910
      %v4912 = vrot.slane %v4358, 5
      %v4913 = vsel %vm1336, %v4901, %v4912
      %v4914 = vrot.slane %v4368, 5
      %v4915 = vsel %vm1336, %v4902, %v4914
      %v4916 = vrot.slane %v4378, 5
      %v4917 = vsel %vm1336, %v4903, %v4916
      %v4918 = vrot.slane %v4388, 5
      %v4919 = vsel %vm1336, %v4904, %v4918
      %v4920 = vrot.slane %v4398, 5
      %v4921 = vsel %vm1336, %v4905, %v4920
      %v4930 = vrot.slane %v4546, 1
      %v4931 = vrot.slane %v4554, 1
      %v4932 = vrot.slane %v4703, 1
      %v4933 = vrot.slane %v4711, 1
      %v4934 = vrot.slane %v4828, 1
      %v4935 = vrot.slane %v4836, 1
      %v4937 = vshll.u32 %v4397, 16
      %v4939 = vrot.slane %v4937, 1
      %v4940 = vshll.u32 %v4462, 16
      %v4942 = vrot.slane %v4940, 1
      %v4943 = vor.u32 %v4543, %v4930
      %v4944 = vrot.slane %v4611, 1
      %v4945 = vsel %vm1259, %v4943, %v4944
      %v4946 = vor.u32 %v4551, %v4931
      %v4947 = vrot.slane %v4620, 1
      %v4948 = vsel %vm1259, %v4946, %v4947
      %v4949 = vor.u32 %v4700, %v4932
      %v4950 = vrot.slane %v4743, 1
      %v4951 = vsel %vm1259, %v4949, %v4950
      %v4952 = vor.u32 %v4708, %v4933
      %v4953 = vrot.slane %v4752, 1
      %v4954 = vsel %vm1259, %v4952, %v4953
      %v4955 = vor.u32 %v4825, %v4934
      %v4956 = vrot.slane %v4868, 1
      %v4957 = vsel %vm1259, %v4955, %v4956
      %v4958 = vor.u32 %v4833, %v4935
      %v4959 = vrot.slane %v4877, 1
      %v4960 = vsel %vm1259, %v4958, %v4959
      %v4961 = vshrl.u32 %v4397, 16
      %v4963 = vor.u32 %v4961, %v4939
      %v4965 = vshll.u32 %v4398, 16
      %v4967 = vrot.slane %v4965, 1
      %v4968 = vsel %vm1259, %v4963, %v4967
      %v4969 = vshrl.u32 %v4462, 16
      %v4971 = vor.u32 %v4969, %v4942
      %v4972 = vshll.u32 %v4464, 16
      %v4974 = vrot.slane %v4972, 1
      %v4975 = vsel %vm1259, %v4971, %v4974
      %v4976 = vor.u32 %v4608, %v4944
      %v4977 = vor.u32 %v4617, %v4947
      %v4978 = vor.u32 %v4740, %v4950
      %v4979 = vor.u32 %v4749, %v4953
      %v4980 = vor.u32 %v4865, %v4956
      %v4981 = vor.u32 %v4874, %v4959
      %v4982 = vshrl.u32 %v4398, 16
      %v4984 = vor.u32 %v4982, %v4967
      %v4985 = vshrl.u32 %v4464, 16
      %v4987 = vor.u32 %v4985, %v4974
      %vm5008 = vcmask 1043456
      %v5009 = vrot.slane %v4347, 4
      %v5010 = vrot.slane %v4357, 4
      %v5011 = vrot.slane %v4367, 4
      %v5012 = vrot.slane %v4377, 4
      %v5013 = vrot.slane %v4387, 4
      %v5014 = vrot.slane %v4397, 4
      %v5015 = vrot.slane %v4462, 4
      %v5016 = vrot.slane %v4470, 4
      %v5017 = vrot.slane %v4348, 4
      %v5018 = vsel %vm5008, %v5009, %v5017
      %v5019 = vrot.slane %v4358, 4
      %v5020 = vsel %vm5008, %v5010, %v5019
      %v5021 = vrot.slane %v4368, 4
      %v5022 = vsel %vm5008, %v5011, %v5021
      %v5023 = vrot.slane %v4378, 4
      %v5024 = vsel %vm5008, %v5012, %v5023
      %v5025 = vrot.slane %v4388, 4
      %v5026 = vsel %vm5008, %v5013, %v5025
      %v5027 = vrot.slane %v4398, 4
      %v5028 = vsel %vm5008, %v5014, %v5027
      %v5029 = vrot.slane %v4464, 4
      %v5030 = vsel %vm5008, %v5015, %v5029
      %v5031 = vrot.slane %v4472, 4
      %v5032 = vsel %vm5008, %v5016, %v5031
      %v5049 = vrot.slane %v4700, 7
      %v5050 = vor.u32 %v5049, %v4703
      %v5051 = vrot.slane %v4708, 7
      %v5052 = vor.u32 %v5051, %v4711
      %v5053 = vrot.slane %v4825, 7
      %v5054 = vor.u32 %v5053, %v4828
      %v5055 = vrot.slane %v4833, 7
      %v5056 = vor.u32 %v5055, %v4836
      %v5057 = vrot.slane %v4961, 7
      %v5058 = vor.u32 %v5057, %v4937
      %v5059 = vrot.slane %v4969, 7
      %v5060 = vor.u32 %v5059, %v4940
      %v5061 = vshrl.u32 %v4470, 16
      %v5063 = vrot.slane %v5061, 7
      %v5064 = vshll.u32 %v4470, 16
      %v5066 = vor.u32 %v5063, %v5064
      %v5067 = vshrl.u32 %v4476, 16
      %v5069 = vrot.slane %v5067, 7
      %v5070 = vshll.u32 %v4476, 16
      %v5072 = vor.u32 %v5069, %v5070
      %v5073 = vrot.slane %v4740, 7
      %v5074 = vor.u32 %v5073, %v4743
      %v5075 = vsel %vm1505, %v5049, %v5074
      %v5076 = vrot.slane %v4749, 7
      %v5077 = vor.u32 %v5076, %v4752
      %v5078 = vsel %vm1505, %v5051, %v5077
      %v5079 = vrot.slane %v4865, 7
      %v5080 = vor.u32 %v5079, %v4868
      %v5081 = vsel %vm1505, %v5053, %v5080
      %v5082 = vrot.slane %v4874, 7
      %v5083 = vor.u32 %v5082, %v4877
      %v5084 = vsel %vm1505, %v5055, %v5083
      %v5085 = vrot.slane %v4982, 7
      %v5086 = vor.u32 %v5085, %v4965
      %v5087 = vsel %vm1505, %v5057, %v5086
      %v5088 = vrot.slane %v4985, 7
      %v5089 = vor.u32 %v5088, %v4972
      %v5090 = vsel %vm1505, %v5059, %v5089
      %v5091 = vshrl.u32 %v4472, 16
      %v5093 = vrot.slane %v5091, 7
      %v5094 = vshll.u32 %v4472, 16
      %v5096 = vor.u32 %v5093, %v5094
      %v5097 = vsel %vm1505, %v5063, %v5096
      %v5098 = vshrl.u32 %v4478, 16
      %v5100 = vrot.slane %v5098, 7
      %v5101 = vshll.u32 %v4478, 16
      %v5103 = vor.u32 %v5100, %v5101
      %v5104 = vsel %vm1505, %v5069, %v5103
      %v5117 = vrot.slane %v4367, 3
      %v5118 = vrot.slane %v4377, 3
      %v5119 = vrot.slane %v4387, 3
      %v5120 = vrot.slane %v4397, 3
      %v5121 = vrot.slane %v4462, 3
      %v5122 = vrot.slane %v4470, 3
      %v5123 = vrot.slane %v4476, 3
      %v5124 = vrot.slane %v4482, 3
      %v5125 = vrot.slane %v4368, 3
      %v5126 = vsel %vm1174, %v5117, %v5125
      %v5127 = vrot.slane %v4378, 3
      %v5128 = vsel %vm1174, %v5118, %v5127
      %v5129 = vrot.slane %v4388, 3
      %v5130 = vsel %vm1174, %v5119, %v5129
      %v5131 = vrot.slane %v4398, 3
      %v5132 = vsel %vm1174, %v5120, %v5131
      %v5133 = vrot.slane %v4464, 3
      %v5134 = vsel %vm1174, %v5121, %v5133
      %v5135 = vrot.slane %v4472, 3
      %v5136 = vsel %vm1174, %v5122, %v5135
      %v5137 = vrot.slane %v4478, 3
      %v5138 = vsel %vm1174, %v5123, %v5137
      %v5139 = vrot.slane %v4484, 3
      %v5140 = vsel %vm1174, %v5124, %v5139
      %v5157 = vrot.slane %v4825, 6
      %v5158 = vrot.slane %v4828, 7
      %v5159 = vor.u32 %v5157, %v5158
      %v5160 = vrot.slane %v4833, 6
      %v5161 = vrot.slane %v4836, 7
      %v5162 = vor.u32 %v5160, %v5161
      %v5163 = vrot.slane %v4961, 6
      %v5164 = vrot.slane %v4937, 7
      %v5165 = vor.u32 %v5163, %v5164
      %v5166 = vrot.slane %v4969, 6
      %v5167 = vrot.slane %v4940, 7
      %v5168 = vor.u32 %v5166, %v5167
      %v5169 = vrot.slane %v5061, 6
      %v5170 = vrot.slane %v5064, 7
      %v5171 = vor.u32 %v5169, %v5170
      %v5172 = vrot.slane %v5067, 6
      %v5173 = vrot.slane %v5070, 7
      %v5174 = vor.u32 %v5172, %v5173
      %v5175 = vshrl.u32 %v4482, 16
      %v5177 = vrot.slane %v5175, 6
      %v5178 = vshll.u32 %v4482, 16
      %v5180 = vrot.slane %v5178, 7
      %v5181 = vor.u32 %v5177, %v5180
      %v5182 = vshrl.u32 %v4488, 16
      %v5184 = vrot.slane %v5182, 6
      %v5185 = vshll.u32 %v4488, 16
      %v5187 = vrot.slane %v5185, 7
      %v5188 = vor.u32 %v5184, %v5187
      %v5189 = vrot.slane %v4865, 6
      %v5190 = vrot.slane %v4868, 7
      %v5191 = vor.u32 %v5189, %v5190
      %v5192 = vsel %vm1091, %v5159, %v5191
      %v5193 = vrot.slane %v4874, 6
      %v5194 = vrot.slane %v4877, 7
      %v5195 = vor.u32 %v5193, %v5194
      %v5196 = vsel %vm1091, %v5162, %v5195
      %v5197 = vrot.slane %v4982, 6
      %v5198 = vrot.slane %v4965, 7
      %v5199 = vor.u32 %v5197, %v5198
      %v5200 = vsel %vm1091, %v5165, %v5199
      %v5201 = vrot.slane %v4985, 6
      %v5202 = vrot.slane %v4972, 7
      %v5203 = vor.u32 %v5201, %v5202
      %v5204 = vsel %vm1091, %v5168, %v5203
      %v5205 = vrot.slane %v5091, 6
      %v5206 = vrot.slane %v5094, 7
      %v5207 = vor.u32 %v5205, %v5206
      %v5208 = vsel %vm1091, %v5171, %v5207
      %v5209 = vrot.slane %v5098, 6
      %v5210 = vrot.slane %v5101, 7
      %v5211 = vor.u32 %v5209, %v5210
      %v5212 = vsel %vm1091, %v5174, %v5211
      %v5213 = vshrl.u32 %v4484, 16
      %v5215 = vrot.slane %v5213, 6
      %v5216 = vshll.u32 %v4484, 16
      %v5218 = vrot.slane %v5216, 7
      %v5219 = vor.u32 %v5215, %v5218
      %v5220 = vsel %vm1091, %v5181, %v5219
      %v5221 = vshrl.u32 %v4490, 16
      %v5223 = vrot.slane %v5221, 6
      %v5224 = vshll.u32 %v4490, 16
      %v5226 = vrot.slane %v5224, 7
      %v5227 = vor.u32 %v5223, %v5226
      %v5228 = vsel %vm1091, %v5188, %v5227
      %v5241 = vrot.slane %v4387, 2
      %v5242 = vrot.slane %v4397, 2
      %v5243 = vrot.slane %v4462, 2
      %v5244 = vrot.slane %v4470, 2
      %v5245 = vrot.slane %v4476, 2
      %v5246 = vrot.slane %v4482, 2
      %v5247 = vrot.slane %v4488, 2
      %v5248 = vrot.slane %v4494, 2
      %v5249 = vrot.slane %v4388, 2
      %v5250 = vsel %vm1420, %v5241, %v5249
      %v5251 = vrot.slane %v4398, 2
      %v5252 = vsel %vm1420, %v5242, %v5251
      %v5253 = vrot.slane %v4464, 2
      %v5254 = vsel %vm1420, %v5243, %v5253
      %v5255 = vrot.slane %v4472, 2
      %v5256 = vsel %vm1420, %v5244, %v5255
      %v5257 = vrot.slane %v4478, 2
      %v5258 = vsel %vm1420, %v5245, %v5257
      %v5259 = vrot.slane %v4484, 2
      %v5260 = vsel %vm1420, %v5246, %v5259
      %v5261 = vrot.slane %v4490, 2
      %v5262 = vsel %vm1420, %v5247, %v5261
      %v5263 = vrot.slane %v4496, 2
      %v5264 = vsel %vm1420, %v5248, %v5263
      %v5273 = vsel %vm1176, %v4404, %v4505
      %v5274 = vsel %vm1176, %v4414, %v4512
      %v5275 = vsel %vm1176, %v4424, %v4519
      %v5276 = vsel %vm1176, %v4434, %v4526
      %v5277 = vsel %vm1176, %v4444, %v4533
      %v5278 = vsel %vm1176, %v4454, %v4541
      %v5279 = vsel %vm1176, %v4328, %v4549
      %v5280 = vsel %vm1176, %v4338, %v4557
      %v5283 = vsel %vm1277, %v4564, %v4649
      %v5287 = vsel %vm1277, %v4572, %v4650
      %v5291 = vsel %vm1277, %v4580, %v4651
      %v5295 = vsel %vm1277, %v4588, %v4652
      %v5299 = vsel %vm1277, %v4596, %v4653
      %v5303 = vsel %vm1277, %v4605, %v4654
      %v5307 = vsel %vm1277, %v4614, %v4655
      %v5311 = vsel %vm1277, %v4623, %v4656
      %v5313 = vsel %vm1422, %v4658, %v4683
      %v5314 = vsel %vm1422, %v4660, %v4686
      %v5315 = vsel %vm1422, %v4662, %v4689
      %v5316 = vsel %vm1422, %v4664, %v4692
      %v5317 = vsel %vm1422, %v4666, %v4695
      %v5318 = vsel %vm1422, %v4668, %v4698
      %v5319 = vsel %vm1422, %v4670, %v4706
      %v5320 = vsel %vm1422, %v4672, %v4714
      %v5323 = vsel %vm1517, %v4717, %v4773
      %v5327 = vsel %vm1517, %v4721, %v4774
      %v5331 = vsel %vm1517, %v4725, %v4775
      %v5335 = vsel %vm1517, %v4729, %v4776
      %v5339 = vsel %vm1517, %v4733, %v4777
      %v5343 = vsel %vm1517, %v4737, %v4778
      %v5347 = vsel %vm1517, %v4746, %v4779
      %v5351 = vsel %vm1517, %v4755, %v4780
      %vm5353 = vcmask 1046528
      %vm5354 = vmand %vm5353, %vm4805
      %v5355 = vsel %vm5354, %v4782, %v4808
      %v5356 = vsel %vm5354, %v4784, %v4811
      %v5357 = vsel %vm5354, %v4786, %v4814
      %v5358 = vsel %vm5354, %v4788, %v4817
      %v5359 = vsel %vm5354, %v4790, %v4820
      %v5360 = vsel %vm5354, %v4792, %v4823
      %v5361 = vsel %vm5354, %v4794, %v4831
      %v5362 = vsel %vm5354, %v4796, %v4839
      %v5365 = vsel %vm1109, %v4842, %v4898
      %v5369 = vsel %vm1109, %v4846, %v4899
      %v5373 = vsel %vm1109, %v4850, %v4900
      %v5377 = vsel %vm1109, %v4854, %v4901
      %v5381 = vsel %vm1109, %v4858, %v4902
      %v5385 = vsel %vm1109, %v4862, %v4903
      %v5389 = vsel %vm1109, %v4871, %v4904
      %v5393 = vsel %vm1109, %v4880, %v4905
      %v5395 = vsel %vm1260, %v4907, %v4930
      %v5396 = vsel %vm1260, %v4909, %v4931
      %v5397 = vsel %vm1260, %v4911, %v4932
      %v5398 = vsel %vm1260, %v4913, %v4933
      %v5399 = vsel %vm1260, %v4915, %v4934
      %v5400 = vsel %vm1260, %v4917, %v4935
      %v5401 = vsel %vm1260, %v4919, %v4939
      %v5402 = vsel %vm1260, %v4921, %v4942
      %v5405 = vsel %vm1355, %v4976, %v5009
      %v5409 = vsel %vm1355, %v4977, %v5010
      %v5413 = vsel %vm1355, %v4978, %v5011
      %v5417 = vsel %vm1355, %v4979, %v5012
      %v5421 = vsel %vm1355, %v4980, %v5013
      %v5425 = vsel %vm1355, %v4981, %v5014
      %v5429 = vsel %vm1355, %v4984, %v5015
      %v5433 = vsel %vm1355, %v4987, %v5016
      %v5435 = vsel %vm1506, %v5017, %v5050
      %v5436 = vsel %vm1506, %v5019, %v5052
      %v5437 = vsel %vm1506, %v5021, %v5054
      %v5438 = vsel %vm1506, %v5023, %v5056
      %v5439 = vsel %vm1506, %v5025, %v5058
      %v5440 = vsel %vm1506, %v5027, %v5060
      %v5441 = vsel %vm1506, %v5029, %v5066
      %v5442 = vsel %vm1506, %v5031, %v5072
      %v5445 = vsel %vm3460, %v5075, %v5117
      %v5449 = vsel %vm3460, %v5078, %v5118
      %v5453 = vsel %vm3460, %v5081, %v5119
      %v5457 = vsel %vm3460, %v5084, %v5120
      %v5461 = vsel %vm3460, %v5087, %v5121
      %v5465 = vsel %vm3460, %v5090, %v5122
      %v5469 = vsel %vm3460, %v5097, %v5123
      %v5473 = vsel %vm3460, %v5104, %v5124
      %v5475 = vsel %vm1092, %v5125, %v5159
      %v5476 = vsel %vm1092, %v5127, %v5162
      %v5477 = vsel %vm1092, %v5129, %v5165
      %v5478 = vsel %vm1092, %v5131, %v5168
      %v5479 = vsel %vm1092, %v5133, %v5171
      %v5480 = vsel %vm1092, %v5135, %v5174
      %v5481 = vsel %vm1092, %v5137, %v5181
      %v5482 = vsel %vm1092, %v5139, %v5188
      %v5485 = vsel %vm1193, %v5192, %v5241
      %v5489 = vsel %vm1193, %v5196, %v5242
      %v5493 = vsel %vm1193, %v5200, %v5243
      %v5497 = vsel %vm1193, %v5204, %v5244
      %v5501 = vsel %vm1193, %v5208, %v5245
      %v5505 = vsel %vm1193, %v5212, %v5246
      %v5509 = vsel %vm1193, %v5220, %v5247
      %v5513 = vsel %vm1193, %v5228, %v5248
      %v5515 = vld [vmem:[%s5] sm:$0xff]
      %v5516 = vld [vmem:[%s5 + $0x8] sm:$0xf]
      %v5517 = vld [vmem:[%s5 + $0xc] sm:$0xff]
      %v5518 = vld [vmem:[%s5 + $0x14] sm:$0xf]
      %v5519 = vld [vmem:[%s5 + $0x18] sm:$0xff]
      %v5520 = vld [vmem:[%s5 + $0x20] sm:$0xf]
      %v5521 = vld [vmem:[%s5 + $0x24] sm:$0xff]
      %v5522 = vld [vmem:[%s5 + $0x2c] sm:$0xf]
      %v5523 = vld [vmem:[%s5 + $0x30] sm:$0xff]
      %v5524 = vld [vmem:[%s5 + $0x38] sm:$0xf]
      %v5525 = vld [vmem:[%s5 + $0x3c] sm:$0xff]
      %v5526 = vld [vmem:[%s5 + $0x44] sm:$0xf]
      %v5527 = vld [vmem:[%s5 + $0x48] sm:$0x11]
      %v5528 = vld [vmem:[%s5 + $0x50] sm:$0x1]
      %v5529 = vld [vmem:[%s6] sm:$0xff]
      %v5530 = vld [vmem:[%s6 + $0x8] sm:$0xff]
      %v5531 = vld [vmem:[%s6 + $0x10] sm:$0xff]
      %v5532 = vld [vmem:[%s6 + $0x18] sm:$0xff]
      %v5533 = vld [vmem:[%s6 + $0x20] sm:$0xff]
      %v5534 = vld [vmem:[%s6 + $0x28] sm:$0xff]
      %v5535 = vld [vmem:[%s6 + $0x30] sm:$0x3]
      %5537 = vset.pattern.permute.xlu0 0
      %5538 = vperm.xlu0 %5537, %v5529
      %v5539 = vpop.permute.xlu0 %5538
      %5542 = vset.pattern.permute.xlu0 0
      %5543 = vperm.xlu0 %5542, %v5530
      %v5544 = vpop.permute.xlu0 %5543
      %5547 = vset.pattern.permute.xlu0 0
      %5548 = vperm.xlu0 %5547, %v5531
      %v5549 = vpop.permute.xlu0 %5548
      %5552 = vset.pattern.permute.xlu0 0
      %5553 = vperm.xlu0 %5552, %v5532
      %v5554 = vpop.permute.xlu0 %5553
      %5557 = vset.pattern.permute.xlu0 0
      %5558 = vperm.xlu0 %5557, %v5533
      %v5559 = vpop.permute.xlu0 %5558
      %5562 = vset.pattern.permute.xlu0 0
      %5563 = vperm.xlu0 %5562, %v5534
      %v5564 = vpop.permute.xlu0 %5563
      %5567 = vset.pattern.permute.xlu0 0
      %5568 = vperm.xlu0 %5567, %v5535
      %v5569 = vpop.permute.xlu0 %5568
      %v5585 = vunpack.c.l.b16 %v5515
      %v5586 = vunpack.c.h.b16 %v5515
      %v5587 = vunpack.c.l.b16 %v5516
      %v5588 = vunpack.c.l.b16 %v5517
      %v5589 = vunpack.c.h.b16 %v5517
      %v5590 = vunpack.c.l.b16 %v5518
      %v5591 = vunpack.c.l.b16 %v5519
      %v5592 = vunpack.c.h.b16 %v5519
      %v5593 = vunpack.c.l.b16 %v5520
      %v5594 = vunpack.c.l.b16 %v5521
      %v5595 = vunpack.c.h.b16 %v5521
      %v5596 = vunpack.c.l.b16 %v5522
      %v5597 = vunpack.c.l.b16 %v5523
      %v5598 = vunpack.c.h.b16 %v5523
      %v5599 = vunpack.c.l.b16 %v5524
      %v5600 = vunpack.c.l.b16 %v5525
      %v5601 = vunpack.c.h.b16 %v5525
      %v5602 = vunpack.c.l.b16 %v5526
      %v5603 = vunpack.c.l.b16 %v5527
      %v5604 = vunpack.c.h.b16 %v5527
      %v5605 = vunpack.c.l.b16 %v5528
      %v5606 = vpack.c.b16 %v5588, %v5585
      %v5607 = vpack.c.b16 %v5589, %v5586
      %v5608 = vpack.c.b16 %v5590, %v5587
      %v5609 = vpack.c.b16 %v5594, %v5591
      %v5610 = vpack.c.b16 %v5595, %v5592
      %v5611 = vpack.c.b16 %v5596, %v5593
      %v5612 = vpack.c.b16 %v5600, %v5597
      %v5613 = vpack.c.b16 %v5601, %v5598
      %v5614 = vpack.c.b16 %v5602, %v5599
      %v5615 = vpack.c.b16 %v5603, %v5603
      %v5616 = vpack.c.b16 %v5604, %v5604
      %v5617 = vpack.c.b16 %v5605, %v5605
      %vm5626 = vcmask 564224
      %v5628 = vsel %vm5626, %v5608, 0
      %v5631 = vsel %vm5626, %v5611, 0
      %v5634 = vsel %vm5626, %v5614, 0
      %v5637 = vsel %vm5626, %v5617, 0
      %v5639 = vsel %vm1517, 4294967295, 65535
      %v5640 = vsel %vm1109, %v5639, 0
      %v5642 = vand.u32 %v5249, %v5640
      %v5645 = vand.u32 %v5251, %v5640
      %v5648 = vand.u32 %v5253, %v5640
      %v5651 = vand.u32 %v5255, %v5640
      %v5654 = vand.u32 %v5257, %v5640
      %v5657 = vand.u32 %v5259, %v5640
      %v5660 = vand.u32 %v5261, %v5640
      %v5663 = vand.u32 %v5263, %v5640
      %5665 = vmatprep.subr.bf16.mxu0 %v4412
      %5666 = vmatpush1.bf16.msra.mxu0 %v4402
      %5667 = vmatprep.subr.bf16.mxu0 %v5274
      %5668 = vmatpush1.bf16.msra.mxu0 %v5273
      %5669 = vmatprep.subr.bf16.mxu0 %v4573
      %5670 = vmatpush1.bf16.msra.mxu0 %v4565
      %5671 = vmatprep.subr.bf16.mxu0 %v5287
      %5672 = vmatpush1.bf16.msra.mxu0 %v5283
      %5673 = vmatprep.subr.bf16.mxu0 %v5314
      %5674 = vmatpush1.bf16.msra.mxu0 %v5313
      %5675 = vmatprep.subr.bf16.mxu0 %v4722
      %5676 = vmatpush1.bf16.msra.mxu0 %v4718
      %5677 = vmatprep.subr.bf16.mxu0 %v5327
      %5678 = vmatpush1.bf16.msra.mxu0 %v5323
      %5679 = vmatprep.subr.bf16.mxu0 %v5356
      %5680 = vmatpush1.bf16.msra.mxu0 %v5355
      %5681 = vmatprep.subr.bf16.mxu0 %v4847
      %5682 = vmatpush1.bf16.msra.mxu0 %v4843
      %5683 = vmatprep.subr.bf16.mxu0 %v5369
      %5684 = vmatpush1.bf16.msra.mxu0 %v5365
      %5685 = vmatprep.subr.bf16.mxu0 %v5396
      %5686 = vmatpush1.bf16.msra.mxu0 %v5395
      %5687 = vmatprep.subr.bf16.mxu0 %v4948
      %5688 = vmatpush1.bf16.msra.mxu0 %v4945
      %5689 = vmatprep.subr.bf16.mxu0 %v5409
      %5690 = vmatpush1.bf16.msra.mxu0 %v5405
      %5691 = vmatprep.subr.bf16.mxu0 %v5020
      %5692 = vmatpush1.bf16.msra.mxu0 %v5018
      %5693 = vmatprep.subr.bf16.mxu0 %v5436
      %5694 = vmatpush1.bf16.msra.mxu0 %v5435
      %5695 = vmatprep.subr.bf16.mxu0 %v5449
      %5696 = vmatpush1.bf16.msra.mxu0 %v5445
      %5697 = vmatprep.mubr.bf16.mxu0 %v5607
      %5698 = vmatmul.mubr.bf16.gmra.mrb[0].mxu0 %v5606
      %v5699 = vpop.f32.mrb[0].mxu0
      %v5700 = vadd.f32 %v5539, %v5699
      %v5701 = vpop.f32.mrb[0].mxu0
      %v5702 = vadd.f32 %v5539, %v5701
      %v5703 = vpop.f32.mrb[0].mxu0
      %v5704 = vadd.f32 %v5544, %v5703
      %v5705 = vpop.f32.mrb[0].mxu0
      %v5706 = vadd.f32 %v5544, %v5705
      %5707 = vmatprep.mubr.bf16.mxu0 %v5610
      %5708 = vmatmul.mubr.bf16.gmra.mrb[0].mxu0 %v5609
      %v5709 = vpop.f32.mrb[0].mxu0
      %v5710 = vadd.f32 %v5549, %v5709
      %v5711 = vpop.f32.mrb[0].mxu0
      %v5712 = vadd.f32 %v5549, %v5711
      %v5713 = vpop.f32.mrb[0].mxu0
      %v5714 = vadd.f32 %v5554, %v5713
      %v5715 = vpop.f32.mrb[0].mxu0
      %v5716 = vadd.f32 %v5554, %v5715
      %5717 = vmatprep.mubr.bf16.mxu0 %v5613
      %5718 = vmatmul.mubr.bf16.gmra.mrb[0].mxu0 %v5612
      %v5719 = vpop.f32.mrb[0].mxu0
      %v5720 = vadd.f32 %v5559, %v5719
      %v5721 = vpop.f32.mrb[0].mxu0
      %v5722 = vadd.f32 %v5559, %v5721
      %v5723 = vpop.f32.mrb[0].mxu0
      %v5724 = vadd.f32 %v5564, %v5723
      %v5725 = vpop.f32.mrb[0].mxu0
      %v5726 = vadd.f32 %v5564, %v5725
      %5727 = vmatprep.mubr.bf16.mxu0 %v5616
      %5728 = vmatmul.mubr.bf16.gmra.mrb[0].mxu0 %v5615
      %v5729 = vpop.f32.mrb[0].mxu0
      %v5730 = vadd.f32 %v5569, %v5729
      %v5731 = vpop.f32.mrb[0].mxu0
      %v5732 = vadd.f32 %v5569, %v5731
      %v5733 = vpop.f32.mrb[0].mxu0
      %v5734 = vpop.f32.mrb[0].mxu0
      %5735 = vdwg.mxu0
      %5736 = vmatprep.subr.bf16.mxu0 %v5128
      %5737 = vmatpush1.bf16.msra.mxu0 %v5126
      %5738 = vmatprep.subr.bf16.mxu0 %v5476
      %5739 = vmatpush1.bf16.msra.mxu0 %v5475
      %5740 = vmatprep.subr.bf16.mxu0 %v5489
      %5741 = vmatpush1.bf16.msra.mxu0 %v5485
      %5742 = vmatprep.subr.bf16.mxu0 %v5252
      %5743 = vmatpush1.bf16.msra.mxu0 %v5250
      %5744 = vmatprep.subr.bf16.mxu0 %v5645
      %5745 = vmatpush1.bf16.msra.mxu0 %v5642
      %5746 = vmatprep.subr.bf16.mxu0 0
      %5747 = vmatpush1.bf16.msra.mxu0 0
      %5748 = vmatprep.subr.bf16.mxu0 0
      %5749 = vmatpush1.bf16.msra.mxu0 0
      %5750 = vmatprep.subr.bf16.mxu0 0
      %5751 = vmatpush1.bf16.msra.mxu0 0
      %5752 = vmatprep.subr.bf16.mxu0 0
      %5753 = vmatpush1.bf16.msra.mxu0 0
      %5754 = vmatprep.subr.bf16.mxu0 0
      %5755 = vmatpush1.bf16.msra.mxu0 0
      %5756 = vmatprep.subr.bf16.mxu0 0
      %5757 = vmatpush1.bf16.msra.mxu0 0
      %5758 = vmatprep.subr.bf16.mxu0 0
      %5759 = vmatpush1.bf16.msra.mxu0 0
      %5760 = vmatprep.subr.bf16.mxu0 0
      %5761 = vmatpush1.bf16.msra.mxu0 0
      %5762 = vmatprep.subr.bf16.mxu0 0
      %5763 = vmatpush1.bf16.msra.mxu0 0
      %5764 = vmatprep.subr.bf16.mxu0 0
      %5765 = vmatpush1.bf16.msra.mxu0 0
      %5766 = vmatprep.subr.bf16.mxu0 0
      %5767 = vmatpush1.bf16.msra.mxu0 0
      %5768 = vmatprep.mubr.bf16.mxu0 0
      %5769 = vmatmul.mubr.bf16.gmra.mrb[0].mxu0 %v5628
      %v5770 = vpop.f32.mrb[0].mxu0
      %v5771 = vadd.f32 %v5700, %v5770
      %v5772 = vpop.f32.mrb[0].mxu0
      %v5773 = vadd.f32 %v5702, %v5772
      %v5774 = vpop.f32.mrb[0].mxu0
      %v5775 = vadd.f32 %v5704, %v5774
      %v5776 = vpop.f32.mrb[0].mxu0
      %v5777 = vadd.f32 %v5706, %v5776
      %5778 = vmatprep.mubr.bf16.mxu0 0
      %5779 = vmatmul.mubr.bf16.gmra.mrb[0].mxu0 %v5631
      %v5780 = vpop.f32.mrb[0].mxu0
      %v5781 = vadd.f32 %v5710, %v5780
      %v5782 = vpop.f32.mrb[0].mxu0
      %v5783 = vadd.f32 %v5712, %v5782
      %v5784 = vpop.f32.mrb[0].mxu0
      %v5785 = vadd.f32 %v5714, %v5784
      %v5786 = vpop.f32.mrb[0].mxu0
      %v5787 = vadd.f32 %v5716, %v5786
      %5788 = vmatprep.mubr.bf16.mxu0 0
      %5789 = vmatmul.mubr.bf16.gmra.mrb[0].mxu0 %v5634
      %v5790 = vpop.f32.mrb[0].mxu0
      %v5791 = vadd.f32 %v5720, %v5790
      %v5792 = vpop.f32.mrb[0].mxu0
      %v5793 = vadd.f32 %v5722, %v5792
      %v5794 = vpop.f32.mrb[0].mxu0
      %v5795 = vadd.f32 %v5724, %v5794
      %v5796 = vpop.f32.mrb[0].mxu0
      %v5797 = vadd.f32 %v5726, %v5796
      %5798 = vmatprep.mubr.bf16.mxu0 0
      %5799 = vmatmul.mubr.bf16.gmra.mrb[0].mxu0 %v5637
      %v5800 = vpop.f32.mrb[0].mxu0
      %v5801 = vadd.f32 %v5730, %v5800
      %v5802 = vpop.f32.mrb[0].mxu0
      %v5803 = vadd.f32 %v5732, %v5802
      %v5804 = vpop.f32.mrb[0].mxu0
      %v5805 = vpop.f32.mrb[0].mxu0
      %5806 = vdwg.mxu0
      %5807 = vmatprep.subr.bf16.mxu0 %v4432
      %5808 = vmatpush1.bf16.msra.mxu0 %v4422
      %5809 = vmatprep.subr.bf16.mxu0 %v5276
      %5810 = vmatpush1.bf16.msra.mxu0 %v5275
      %5811 = vmatprep.subr.bf16.mxu0 %v4589
      %5812 = vmatpush1.bf16.msra.mxu0 %v4581
      %5813 = vmatprep.subr.bf16.mxu0 %v5295
      %5814 = vmatpush1.bf16.msra.mxu0 %v5291
      %5815 = vmatprep.subr.bf16.mxu0 %v5316
      %5816 = vmatpush1.bf16.msra.mxu0 %v5315
      %5817 = vmatprep.subr.bf16.mxu0 %v4730
      %5818 = vmatpush1.bf16.msra.mxu0 %v4726
      %5819 = vmatprep.subr.bf16.mxu0 %v5335
      %5820 = vmatpush1.bf16.msra.mxu0 %v5331
      %5821 = vmatprep.subr.bf16.mxu0 %v5358
      %5822 = vmatpush1.bf16.msra.mxu0 %v5357
      %5823 = vmatprep.subr.bf16.mxu0 %v4855
      %5824 = vmatpush1.bf16.msra.mxu0 %v4851
      %5825 = vmatprep.subr.bf16.mxu0 %v5377
      %5826 = vmatpush1.bf16.msra.mxu0 %v5373
      %5827 = vmatprep.subr.bf16.mxu0 %v5398
      %5828 = vmatpush1.bf16.msra.mxu0 %v5397
      %5829 = vmatprep.subr.bf16.mxu0 %v4954
      %5830 = vmatpush1.bf16.msra.mxu0 %v4951
      %5831 = vmatprep.subr.bf16.mxu0 %v5417
      %5832 = vmatpush1.bf16.msra.mxu0 %v5413
      %5833 = vmatprep.subr.bf16.mxu0 %v5024
      %5834 = vmatpush1.bf16.msra.mxu0 %v5022
      %5835 = vmatprep.subr.bf16.mxu0 %v5438
      %5836 = vmatpush1.bf16.msra.mxu0 %v5437
      %5837 = vmatprep.subr.bf16.mxu0 %v5457
      %5838 = vmatpush1.bf16.msra.mxu0 %v5453
      %5839 = vmatprep.mubr.bf16.mxu0 %v5607
      %5840 = vmatmul.mubr.bf16.gmra.mrb[0].mxu0 %v5606
      %v5841 = vpop.f32.mrb[0].mxu0
      %v5842 = vadd.f32 %v5539, %v5841
      %v5843 = vpop.f32.mrb[0].mxu0
      %v5844 = vadd.f32 %v5539, %v5843
      %v5845 = vpop.f32.mrb[0].mxu0
      %v5846 = vadd.f32 %v5544, %v5845
      %v5847 = vpop.f32.mrb[0].mxu0
      %v5848 = vadd.f32 %v5544, %v5847
      %5849 = vmatprep.mubr.bf16.mxu0 %v5610
      %5850 = vmatmul.mubr.bf16.gmra.mrb[0].mxu0 %v5609
      %v5851 = vpop.f32.mrb[0].mxu0
      %v5852 = vadd.f32 %v5549, %v5851
      %v5853 = vpop.f32.mrb[0].mxu0
      %v5854 = vadd.f32 %v5549, %v5853
      %v5855 = vpop.f32.mrb[0].mxu0
      %v5856 = vadd.f32 %v5554, %v5855
      %v5857 = vpop.f32.mrb[0].mxu0
      %v5858 = vadd.f32 %v5554, %v5857
      %5859 = vmatprep.mubr.bf16.mxu0 %v5613
      %5860 = vmatmul.mubr.bf16.gmra.mrb[0].mxu0 %v5612
      %v5861 = vpop.f32.mrb[0].mxu0
      %v5862 = vadd.f32 %v5559, %v5861
      %v5863 = vpop.f32.mrb[0].mxu0
      %v5864 = vadd.f32 %v5559, %v5863
      %v5865 = vpop.f32.mrb[0].mxu0
      %v5866 = vadd.f32 %v5564, %v5865
      %v5867 = vpop.f32.mrb[0].mxu0
      %v5868 = vadd.f32 %v5564, %v5867
      %5869 = vmatprep.mubr.bf16.mxu0 %v5616
      %5870 = vmatmul.mubr.bf16.gmra.mrb[0].mxu0 %v5615
      %v5871 = vpop.f32.mrb[0].mxu0
      %v5872 = vadd.f32 %v5569, %v5871
      %v5873 = vpop.f32.mrb[0].mxu0
      %v5874 = vadd.f32 %v5569, %v5873
      %v5875 = vpop.f32.mrb[0].mxu0
      %v5876 = vpop.f32.mrb[0].mxu0
      %5877 = vdwg.mxu0
      %5878 = vmatprep.subr.bf16.mxu0 %v5132
      %5879 = vmatpush1.bf16.msra.mxu0 %v5130
      %5880 = vmatprep.subr.bf16.mxu0 %v5478
      %5881 = vmatpush1.bf16.msra.mxu0 %v5477
      %5882 = vmatprep.subr.bf16.mxu0 %v5497
      %5883 = vmatpush1.bf16.msra.mxu0 %v5493
      %5884 = vmatprep.subr.bf16.mxu0 %v5256
      %5885 = vmatpush1.bf16.msra.mxu0 %v5254
      %5886 = vmatprep.subr.bf16.mxu0 %v5651
      %5887 = vmatpush1.bf16.msra.mxu0 %v5648
      %5888 = vmatprep.subr.bf16.mxu0 0
      %5889 = vmatpush1.bf16.msra.mxu0 0
      %5890 = vmatprep.subr.bf16.mxu0 0
      %5891 = vmatpush1.bf16.msra.mxu0 0
      %5892 = vmatprep.subr.bf16.mxu0 0
      %5893 = vmatpush1.bf16.msra.mxu0 0
      %5894 = vmatprep.subr.bf16.mxu0 0
      %5895 = vmatpush1.bf16.msra.mxu0 0
      %5896 = vmatprep.subr.bf16.mxu0 0
      %5897 = vmatpush1.bf16.msra.mxu0 0
      %5898 = vmatprep.subr.bf16.mxu0 0
      %5899 = vmatpush1.bf16.msra.mxu0 0
      %5900 = vmatprep.subr.bf16.mxu0 0
      %5901 = vmatpush1.bf16.msra.mxu0 0
      %5902 = vmatprep.subr.bf16.mxu0 0
      %5903 = vmatpush1.bf16.msra.mxu0 0
      %5904 = vmatprep.subr.bf16.mxu0 0
      %5905 = vmatpush1.bf16.msra.mxu0 0
      %5906 = vmatprep.subr.bf16.mxu0 0
      %5907 = vmatpush1.bf16.msra.mxu0 0
      %5908 = vmatprep.subr.bf16.mxu0 0
      %5909 = vmatpush1.bf16.msra.mxu0 0
      %5910 = vmatprep.mubr.bf16.mxu0 0
      %5911 = vmatmul.mubr.bf16.gmra.mrb[0].mxu0 %v5628
      %v5912 = vpop.f32.mrb[0].mxu0
      %v5913 = vadd.f32 %v5842, %v5912
      %v5914 = vpop.f32.mrb[0].mxu0
      %v5915 = vadd.f32 %v5844, %v5914
      %v5916 = vpop.f32.mrb[0].mxu0
      %v5917 = vadd.f32 %v5846, %v5916
      %v5918 = vpop.f32.mrb[0].mxu0
      %v5919 = vadd.f32 %v5848, %v5918
      %5920 = vmatprep.mubr.bf16.mxu0 0
      %5921 = vmatmul.mubr.bf16.gmra.mrb[0].mxu0 %v5631
      %v5922 = vpop.f32.mrb[0].mxu0
      %v5923 = vadd.f32 %v5852, %v5922
      %v5924 = vpop.f32.mrb[0].mxu0
      %v5925 = vadd.f32 %v5854, %v5924
      %v5926 = vpop.f32.mrb[0].mxu0
      %v5927 = vadd.f32 %v5856, %v5926
      %v5928 = vpop.f32.mrb[0].mxu0
      %v5929 = vadd.f32 %v5858, %v5928
      %5930 = vmatprep.mubr.bf16.mxu0 0
      %5931 = vmatmul.mubr.bf16.gmra.mrb[0].mxu0 %v5634
      %v5932 = vpop.f32.mrb[0].mxu0
      %v5933 = vadd.f32 %v5862, %v5932
      %v5934 = vpop.f32.mrb[0].mxu0
      %v5935 = vadd.f32 %v5864, %v5934
      %v5936 = vpop.f32.mrb[0].mxu0
      %v5937 = vadd.f32 %v5866, %v5936
      %v5938 = vpop.f32.mrb[0].mxu0
      %v5939 = vadd.f32 %v5868, %v5938
      %5940 = vmatprep.mubr.bf16.mxu0 0
      %5941 = vmatmul.mubr.bf16.gmra.mrb[0].mxu0 %v5637
      %v5942 = vpop.f32.mrb[0].mxu0
      %v5943 = vadd.f32 %v5872, %v5942
      %v5944 = vpop.f32.mrb[0].mxu0
      %v5945 = vadd.f32 %v5874, %v5944
      %v5946 = vpop.f32.mrb[0].mxu0
      %v5947 = vpop.f32.mrb[0].mxu0
      %5948 = vdwg.mxu0
      %5949 = vmatprep.subr.bf16.mxu0 %v4452
      %5950 = vmatpush1.bf16.msra.mxu0 %v4442
      %5951 = vmatprep.subr.bf16.mxu0 %v5278
      %5952 = vmatpush1.bf16.msra.mxu0 %v5277
      %5953 = vmatprep.subr.bf16.mxu0 %v4606
      %5954 = vmatpush1.bf16.msra.mxu0 %v4597
      %5955 = vmatprep.subr.bf16.mxu0 %v5303
      %5956 = vmatpush1.bf16.msra.mxu0 %v5299
      %5957 = vmatprep.subr.bf16.mxu0 %v5318
      %5958 = vmatpush1.bf16.msra.mxu0 %v5317
      %5959 = vmatprep.subr.bf16.mxu0 %v4738
      %5960 = vmatpush1.bf16.msra.mxu0 %v4734
      %5961 = vmatprep.subr.bf16.mxu0 %v5343
      %5962 = vmatpush1.bf16.msra.mxu0 %v5339
      %5963 = vmatprep.subr.bf16.mxu0 %v5360
      %5964 = vmatpush1.bf16.msra.mxu0 %v5359
      %5965 = vmatprep.subr.bf16.mxu0 %v4863
      %5966 = vmatpush1.bf16.msra.mxu0 %v4859
      %5967 = vmatprep.subr.bf16.mxu0 %v5385
      %5968 = vmatpush1.bf16.msra.mxu0 %v5381
      %5969 = vmatprep.subr.bf16.mxu0 %v5400
      %5970 = vmatpush1.bf16.msra.mxu0 %v5399
      %5971 = vmatprep.subr.bf16.mxu0 %v4960
      %5972 = vmatpush1.bf16.msra.mxu0 %v4957
      %5973 = vmatprep.subr.bf16.mxu0 %v5425
      %5974 = vmatpush1.bf16.msra.mxu0 %v5421
      %5975 = vmatprep.subr.bf16.mxu0 %v5028
      %5976 = vmatpush1.bf16.msra.mxu0 %v5026
      %5977 = vmatprep.subr.bf16.mxu0 %v5440
      %5978 = vmatpush1.bf16.msra.mxu0 %v5439
      %5979 = vmatprep.subr.bf16.mxu0 %v5465
      %5980 = vmatpush1.bf16.msra.mxu0 %v5461
      %5981 = vmatprep.mubr.bf16.mxu0 %v5607
      %5982 = vmatmul.mubr.bf16.gmra.mrb[0].mxu0 %v5606
      %v5983 = vpop.f32.mrb[0].mxu0
      %v5984 = vadd.f32 %v5539, %v5983
      %v5985 = vpop.f32.mrb[0].mxu0
      %v5986 = vadd.f32 %v5539, %v5985
      %v5987 = vpop.f32.mrb[0].mxu0
      %v5988 = vadd.f32 %v5544, %v5987
      %v5989 = vpop.f32.mrb[0].mxu0
      %v5990 = vadd.f32 %v5544, %v5989
      %5991 = vmatprep.mubr.bf16.mxu0 %v5610
      %5992 = vmatmul.mubr.bf16.gmra.mrb[0].mxu0 %v5609
      %v5993 = vpop.f32.mrb[0].mxu0
      %v5994 = vadd.f32 %v5549, %v5993
      %v5995 = vpop.f32.mrb[0].mxu0
      %v5996 = vadd.f32 %v5549, %v5995
      %v5997 = vpop.f32.mrb[0].mxu0
      %v5998 = vadd.f32 %v5554, %v5997
      %v5999 = vpop.f32.mrb[0].mxu0
      %v6000 = vadd.f32 %v5554, %v5999
      %6001 = vmatprep.mubr.bf16.mxu0 %v5613
      %6002 = vmatmul.mubr.bf16.gmra.mrb[0].mxu0 %v5612
      %v6003 = vpop.f32.mrb[0].mxu0
      %v6004 = vadd.f32 %v5559, %v6003
      %v6005 = vpop.f32.mrb[0].mxu0
      %v6006 = vadd.f32 %v5559, %v6005
      %v6007 = vpop.f32.mrb[0].mxu0
      %v6008 = vadd.f32 %v5564, %v6007
      %v6009 = vpop.f32.mrb[0].mxu0
      %v6010 = vadd.f32 %v5564, %v6009
      %6011 = vmatprep.mubr.bf16.mxu0 %v5616
      %6012 = vmatmul.mubr.bf16.gmra.mrb[0].mxu0 %v5615
      %v6013 = vpop.f32.mrb[0].mxu0
      %v6014 = vadd.f32 %v5569, %v6013
      %v6015 = vpop.f32.mrb[0].mxu0
      %v6016 = vadd.f32 %v5569, %v6015
      %v6017 = vpop.f32.mrb[0].mxu0
      %v6018 = vpop.f32.mrb[0].mxu0
      %6019 = vdwg.mxu0
      %6020 = vmatprep.subr.bf16.mxu0 %v5136
      %6021 = vmatpush1.bf16.msra.mxu0 %v5134
      %6022 = vmatprep.subr.bf16.mxu0 %v5480
      %6023 = vmatpush1.bf16.msra.mxu0 %v5479
      %6024 = vmatprep.subr.bf16.mxu0 %v5505
      %6025 = vmatpush1.bf16.msra.mxu0 %v5501
      %6026 = vmatprep.subr.bf16.mxu0 %v5260
      %6027 = vmatpush1.bf16.msra.mxu0 %v5258
      %6028 = vmatprep.subr.bf16.mxu0 %v5657
      %6029 = vmatpush1.bf16.msra.mxu0 %v5654
      %6030 = vmatprep.subr.bf16.mxu0 0
      %6031 = vmatpush1.bf16.msra.mxu0 0
      %6032 = vmatprep.subr.bf16.mxu0 0
      %6033 = vmatpush1.bf16.msra.mxu0 0
      %6034 = vmatprep.subr.bf16.mxu0 0
      %6035 = vmatpush1.bf16.msra.mxu0 0
      %6036 = vmatprep.subr.bf16.mxu0 0
      %6037 = vmatpush1.bf16.msra.mxu0 0
      %6038 = vmatprep.subr.bf16.mxu0 0
      %6039 = vmatpush1.bf16.msra.mxu0 0
      %6040 = vmatprep.subr.bf16.mxu0 0
      %6041 = vmatpush1.bf16.msra.mxu0 0
      %6042 = vmatprep.subr.bf16.mxu0 0
      %6043 = vmatpush1.bf16.msra.mxu0 0
      %6044 = vmatprep.subr.bf16.mxu0 0
      %6045 = vmatpush1.bf16.msra.mxu0 0
      %6046 = vmatprep.subr.bf16.mxu0 0
      %6047 = vmatpush1.bf16.msra.mxu0 0
      %6048 = vmatprep.subr.bf16.mxu0 0
      %6049 = vmatpush1.bf16.msra.mxu0 0
      %6050 = vmatprep.subr.bf16.mxu0 0
      %6051 = vmatpush1.bf16.msra.mxu0 0
      %6052 = vmatprep.mubr.bf16.mxu0 0
      %6053 = vmatmul.mubr.bf16.gmra.mrb[0].mxu0 %v5628
      %v6054 = vpop.f32.mrb[0].mxu0
      %v6055 = vadd.f32 %v5984, %v6054
      %v6056 = vpop.f32.mrb[0].mxu0
      %v6057 = vadd.f32 %v5986, %v6056
      %v6058 = vpop.f32.mrb[0].mxu0
      %v6059 = vadd.f32 %v5988, %v6058
      %v6060 = vpop.f32.mrb[0].mxu0
      %v6061 = vadd.f32 %v5990, %v6060
      %6062 = vmatprep.mubr.bf16.mxu0 0
      %6063 = vmatmul.mubr.bf16.gmra.mrb[0].mxu0 %v5631
      %v6064 = vpop.f32.mrb[0].mxu0
      %v6065 = vadd.f32 %v5994, %v6064
      %v6066 = vpop.f32.mrb[0].mxu0
      %v6067 = vadd.f32 %v5996, %v6066
      %v6068 = vpop.f32.mrb[0].mxu0
      %v6069 = vadd.f32 %v5998, %v6068
      %v6070 = vpop.f32.mrb[0].mxu0
      %v6071 = vadd.f32 %v6000, %v6070
      %6072 = vmatprep.mubr.bf16.mxu0 0
      %6073 = vmatmul.mubr.bf16.gmra.mrb[0].mxu0 %v5634
      %v6074 = vpop.f32.mrb[0].mxu0
      %v6075 = vadd.f32 %v6004, %v6074
      %v6076 = vpop.f32.mrb[0].mxu0
      %v6077 = vadd.f32 %v6006, %v6076
      %v6078 = vpop.f32.mrb[0].mxu0
      %v6079 = vadd.f32 %v6008, %v6078
      %v6080 = vpop.f32.mrb[0].mxu0
      %v6081 = vadd.f32 %v6010, %v6080
      %6082 = vmatprep.mubr.bf16.mxu0 0
      %6083 = vmatmul.mubr.bf16.gmra.mrb[0].mxu0 %v5637
      %v6084 = vpop.f32.mrb[0].mxu0
      %v6085 = vadd.f32 %v6014, %v6084
      %v6086 = vpop.f32.mrb[0].mxu0
      %v6087 = vadd.f32 %v6016, %v6086
      %v6088 = vpop.f32.mrb[0].mxu0
      %v6089 = vpop.f32.mrb[0].mxu0
      %6090 = vdwg.mxu0
      %6091 = vmatprep.subr.bf16.mxu0 %v4337
      %6092 = vmatpush1.bf16.msra.mxu0 %v4327
      %6093 = vmatprep.subr.bf16.mxu0 %v5280
      %6094 = vmatpush1.bf16.msra.mxu0 %v5279
      %6095 = vmatprep.subr.bf16.mxu0 %v4624
      %6096 = vmatpush1.bf16.msra.mxu0 %v4615
      %6097 = vmatprep.subr.bf16.mxu0 %v5311
      %6098 = vmatpush1.bf16.msra.mxu0 %v5307
      %6099 = vmatprep.subr.bf16.mxu0 %v5320
      %6100 = vmatpush1.bf16.msra.mxu0 %v5319
      %6101 = vmatprep.subr.bf16.mxu0 %v4756
      %6102 = vmatpush1.bf16.msra.mxu0 %v4747
      %6103 = vmatprep.subr.bf16.mxu0 %v5351
      %6104 = vmatpush1.bf16.msra.mxu0 %v5347
      %6105 = vmatprep.subr.bf16.mxu0 %v5362
      %6106 = vmatpush1.bf16.msra.mxu0 %v5361
      %6107 = vmatprep.subr.bf16.mxu0 %v4881
      %6108 = vmatpush1.bf16.msra.mxu0 %v4872
      %6109 = vmatprep.subr.bf16.mxu0 %v5393
      %6110 = vmatpush1.bf16.msra.mxu0 %v5389
      %6111 = vmatprep.subr.bf16.mxu0 %v5402
      %6112 = vmatpush1.bf16.msra.mxu0 %v5401
      %6113 = vmatprep.subr.bf16.mxu0 %v4975
      %6114 = vmatpush1.bf16.msra.mxu0 %v4968
      %6115 = vmatprep.subr.bf16.mxu0 %v5433
      %6116 = vmatpush1.bf16.msra.mxu0 %v5429
      %6117 = vmatprep.subr.bf16.mxu0 %v5032
      %6118 = vmatpush1.bf16.msra.mxu0 %v5030
      %6119 = vmatprep.subr.bf16.mxu0 %v5442
      %6120 = vmatpush1.bf16.msra.mxu0 %v5441
      %6121 = vmatprep.subr.bf16.mxu0 %v5473
      %6122 = vmatpush1.bf16.msra.mxu0 %v5469
      %6123 = vmatprep.mubr.bf16.mxu0 %v5607
      %6124 = vmatmul.mubr.bf16.gmra.mrb[0].mxu0 %v5606
      %v6125 = vpop.f32.mrb[0].mxu0
      %v6126 = vadd.f32 %v5539, %v6125
      %v6127 = vpop.f32.mrb[0].mxu0
      %v6128 = vadd.f32 %v5539, %v6127
      %v6129 = vpop.f32.mrb[0].mxu0
      %v6130 = vadd.f32 %v5544, %v6129
      %v6131 = vpop.f32.mrb[0].mxu0
      %v6132 = vadd.f32 %v5544, %v6131
      %6133 = vmatprep.mubr.bf16.mxu0 %v5610
      %6134 = vmatmul.mubr.bf16.gmra.mrb[0].mxu0 %v5609
      %v6135 = vpop.f32.mrb[0].mxu0
      %v6136 = vadd.f32 %v5549, %v6135
      %v6137 = vpop.f32.mrb[0].mxu0
      %v6138 = vadd.f32 %v5549, %v6137
      %v6139 = vpop.f32.mrb[0].mxu0
      %v6140 = vadd.f32 %v5554, %v6139
      %v6141 = vpop.f32.mrb[0].mxu0
      %v6142 = vadd.f32 %v5554, %v6141
      %6143 = vmatprep.mubr.bf16.mxu0 %v5613
      %6144 = vmatmul.mubr.bf16.gmra.mrb[0].mxu0 %v5612
      %v6145 = vpop.f32.mrb[0].mxu0
      %v6146 = vadd.f32 %v5559, %v6145
      %v6147 = vpop.f32.mrb[0].mxu0
      %v6148 = vadd.f32 %v5559, %v6147
      %v6149 = vpop.f32.mrb[0].mxu0
      %v6150 = vadd.f32 %v5564, %v6149
      %v6151 = vpop.f32.mrb[0].mxu0
      %v6152 = vadd.f32 %v5564, %v6151
      %6153 = vmatprep.mubr.bf16.mxu0 %v5616
      %6154 = vmatmul.mubr.bf16.gmra.mrb[0].mxu0 %v5615
      %v6155 = vpop.f32.mrb[0].mxu0
      %v6156 = vadd.f32 %v5569, %v6155
      %v6157 = vpop.f32.mrb[0].mxu0
      %v6158 = vadd.f32 %v5569, %v6157
      %v6159 = vpop.f32.mrb[0].mxu0
      %v6160 = vpop.f32.mrb[0].mxu0
      %6161 = vdwg.mxu0
      %6162 = vmatprep.subr.bf16.mxu0 %v5140
      %6163 = vmatpush1.bf16.msra.mxu0 %v5138
      %6164 = vmatprep.subr.bf16.mxu0 %v5482
      %6165 = vmatpush1.bf16.msra.mxu0 %v5481
      %6166 = vmatprep.subr.bf16.mxu0 %v5513
      %6167 = vmatpush1.bf16.msra.mxu0 %v5509
      %6168 = vmatprep.subr.bf16.mxu0 %v5264
      %6169 = vmatpush1.bf16.msra.mxu0 %v5262
      %6170 = vmatprep.subr.bf16.mxu0 %v5663
      %6171 = vmatpush1.bf16.msra.mxu0 %v5660
      %6172 = vmatprep.subr.bf16.mxu0 0
      %6173 = vmatpush1.bf16.msra.mxu0 0
      %6174 = vmatprep.subr.bf16.mxu0 0
      %6175 = vmatpush1.bf16.msra.mxu0 0
      %6176 = vmatprep.subr.bf16.mxu0 0
      %6177 = vmatpush1.bf16.msra.mxu0 0
      %6178 = vmatprep.subr.bf16.mxu0 0
      %6179 = vmatpush1.bf16.msra.mxu0 0
      %6180 = vmatprep.subr.bf16.mxu0 0
      %6181 = vmatpush1.bf16.msra.mxu0 0
      %6182 = vmatprep.subr.bf16.mxu0 0
      %6183 = vmatpush1.bf16.msra.mxu0 0
      %6184 = vmatprep.subr.bf16.mxu0 0
      %6185 = vmatpush1.bf16.msra.mxu0 0
      %6186 = vmatprep.subr.bf16.mxu0 0
      %6187 = vmatpush1.bf16.msra.mxu0 0
      %6188 = vmatprep.subr.bf16.mxu0 0
      %6189 = vmatpush1.bf16.msra.mxu0 0
      %6190 = vmatprep.subr.bf16.mxu0 0
      %6191 = vmatpush1.bf16.msra.mxu0 0
      %6192 = vmatprep.subr.bf16.mxu0 0
      %6193 = vmatpush1.bf16.msra.mxu0 0
      %6194 = vmatprep.mubr.bf16.mxu0 0
      %6195 = vmatmul.mubr.bf16.gmra.mrb[0].mxu0 %v5628
      %v6196 = vpop.f32.mrb[0].mxu0
      %v6197 = vadd.f32 %v6126, %v6196
      %v6198 = vpop.f32.mrb[0].mxu0
      %v6199 = vadd.f32 %v6128, %v6198
      %v6200 = vpop.f32.mrb[0].mxu0
      %v6201 = vadd.f32 %v6130, %v6200
      %v6202 = vpop.f32.mrb[0].mxu0
      %v6203 = vadd.f32 %v6132, %v6202
      %6204 = vmatprep.mubr.bf16.mxu0 0
      %6205 = vmatmul.mubr.bf16.gmra.mrb[0].mxu0 %v5631
      %v6206 = vpop.f32.mrb[0].mxu0
      %v6207 = vadd.f32 %v6136, %v6206
      %v6208 = vpop.f32.mrb[0].mxu0
      %v6209 = vadd.f32 %v6138, %v6208
      %v6210 = vpop.f32.mrb[0].mxu0
      %v6211 = vadd.f32 %v6140, %v6210
      %v6212 = vpop.f32.mrb[0].mxu0
      %v6213 = vadd.f32 %v6142, %v6212
      %6214 = vmatprep.mubr.bf16.mxu0 0
      %6215 = vmatmul.mubr.bf16.gmra.mrb[0].mxu0 %v5634
      %v6216 = vpop.f32.mrb[0].mxu0
      %v6217 = vadd.f32 %v6146, %v6216
      %v6218 = vpop.f32.mrb[0].mxu0
      %v6219 = vadd.f32 %v6148, %v6218
      %v6220 = vpop.f32.mrb[0].mxu0
      %v6221 = vadd.f32 %v6150, %v6220
      %v6222 = vpop.f32.mrb[0].mxu0
      %v6223 = vadd.f32 %v6152, %v6222
      %6224 = vmatprep.mubr.bf16.mxu0 0
      %6225 = vmatmul.mubr.bf16.gmra.mrb[0].mxu0 %v5637
      %v6226 = vpop.f32.mrb[0].mxu0
      %v6227 = vadd.f32 %v6156, %v6226
      %v6228 = vpop.f32.mrb[0].mxu0
      %v6229 = vadd.f32 %v6158, %v6228
      %v6230 = vpop.f32.mrb[0].mxu0
      %v6231 = vpop.f32.mrb[0].mxu0
      %6232 = vdwg.mxu0
      %vm6233 = vcmp.gt.f32.partialorder %v5771, 0.0
      %vm6234 = vcmp.gt.f32.partialorder %v5773, 0.0
      %vm6235 = vcmp.gt.f32.partialorder %v5913, 0.0
      %vm6236 = vcmp.gt.f32.partialorder %v5915, 0.0
      %vm6237 = vcmp.gt.f32.partialorder %v6055, 0.0
      %vm6238 = vcmp.gt.f32.partialorder %v6057, 0.0
      %vm6239 = vcmp.gt.f32.partialorder %v6197, 0.0
      %vm6240 = vcmp.gt.f32.partialorder %v6199, 0.0
      %vm6241 = vcmp.gt.f32.partialorder %v5775, 0.0
      %vm6242 = vcmp.gt.f32.partialorder %v5777, 0.0
      %vm6243 = vcmp.gt.f32.partialorder %v5917, 0.0
      %vm6244 = vcmp.gt.f32.partialorder %v5919, 0.0
      %vm6245 = vcmp.gt.f32.partialorder %v6059, 0.0
      %vm6246 = vcmp.gt.f32.partialorder %v6061, 0.0
      %vm6247 = vcmp.gt.f32.partialorder %v6201, 0.0
      %vm6248 = vcmp.gt.f32.partialorder %v6203, 0.0
      %vm6249 = vcmp.gt.f32.partialorder %v5781, 0.0
      %vm6250 = vcmp.gt.f32.partialorder %v5783, 0.0
      %vm6251 = vcmp.gt.f32.partialorder %v5923, 0.0
      %vm6252 = vcmp.gt.f32.partialorder %v5925, 0.0
      %vm6253 = vcmp.gt.f32.partialorder %v6065, 0.0
      %vm6254 = vcmp.gt.f32.partialorder %v6067, 0.0
      %vm6255 = vcmp.gt.f32.partialorder %v6207, 0.0
      %vm6256 = vcmp.gt.f32.partialorder %v6209, 0.0
      %vm6257 = vcmp.gt.f32.partialorder %v5785, 0.0
      %vm6258 = vcmp.gt.f32.partialorder %v5787, 0.0
      %vm6259 = vcmp.gt.f32.partialorder %v5927, 0.0
      %vm6260 = vcmp.gt.f32.partialorder %v5929, 0.0
      %vm6261 = vcmp.gt.f32.partialorder %v6069, 0.0
      %vm6262 = vcmp.gt.f32.partialorder %v6071, 0.0
      %vm6263 = vcmp.gt.f32.partialorder %v6211, 0.0
      %vm6264 = vcmp.gt.f32.partialorder %v6213, 0.0
      %vm6265 = vcmp.gt.f32.partialorder %v5791, 0.0
      %vm6266 = vcmp.gt.f32.partialorder %v5793, 0.0
      %vm6267 = vcmp.gt.f32.partialorder %v5933, 0.0
      %vm6268 = vcmp.gt.f32.partialorder %v5935, 0.0
      %vm6269 = vcmp.gt.f32.partialorder %v6075, 0.0
      %vm6270 = vcmp.gt.f32.partialorder %v6077, 0.0
      %vm6271 = vcmp.gt.f32.partialorder %v6217, 0.0
      %vm6272 = vcmp.gt.f32.partialorder %v6219, 0.0
      %vm6273 = vcmp.gt.f32.partialorder %v5795, 0.0
      %vm6274 = vcmp.gt.f32.partialorder %v5797, 0.0
      %vm6275 = vcmp.gt.f32.partialorder %v5937, 0.0
      %vm6276 = vcmp.gt.f32.partialorder %v5939, 0.0
      %vm6277 = vcmp.gt.f32.partialorder %v6079, 0.0
      %vm6278 = vcmp.gt.f32.partialorder %v6081, 0.0
      %vm6279 = vcmp.gt.f32.partialorder %v6221, 0.0
      %vm6280 = vcmp.gt.f32.partialorder %v6223, 0.0
      %vm6281 = vcmp.gt.f32.partialorder %v5801, 0.0
      %vm6282 = vcmp.gt.f32.partialorder %v5803, 0.0
      %vm6283 = vcmp.gt.f32.partialorder %v5943, 0.0
      %vm6284 = vcmp.gt.f32.partialorder %v5945, 0.0
      %vm6285 = vcmp.gt.f32.partialorder %v6085, 0.0
      %vm6286 = vcmp.gt.f32.partialorder %v6087, 0.0
      %vm6287 = vcmp.gt.f32.partialorder %v6227, 0.0
      %vm6288 = vcmp.gt.f32.partialorder %v6229, 0.0
      %v6289 = vmin.f32 %v5771, 0.0
      %v6290 = vmin.f32 %v5773, 0.0
      %v6291 = vmin.f32 %v5913, 0.0
      %v6292 = vmin.f32 %v5915, 0.0
      %v6293 = vmin.f32 %v6055, 0.0
      %v6294 = vmin.f32 %v6057, 0.0
      %v6295 = vmin.f32 %v6197, 0.0
      %v6296 = vmin.f32 %v6199, 0.0
      %v6297 = vmin.f32 %v5775, 0.0
      %v6298 = vmin.f32 %v5777, 0.0
      %v6299 = vmin.f32 %v5917, 0.0
      %v6300 = vmin.f32 %v5919, 0.0
      %v6301 = vmin.f32 %v6059, 0.0
      %v6302 = vmin.f32 %v6061, 0.0
      %v6303 = vmin.f32 %v6201, 0.0
      %v6304 = vmin.f32 %v6203, 0.0
      %v6305 = vmin.f32 %v5781, 0.0
      %v6306 = vmin.f32 %v5783, 0.0
      %v6307 = vmin.f32 %v5923, 0.0
      %v6308 = vmin.f32 %v5925, 0.0
      %v6309 = vmin.f32 %v6065, 0.0
      %v6310 = vmin.f32 %v6067, 0.0
      %v6311 = vmin.f32 %v6207, 0.0
      %v6312 = vmin.f32 %v6209, 0.0
      %v6313 = vmin.f32 %v5785, 0.0
      %v6314 = vmin.f32 %v5787, 0.0
      %v6315 = vmin.f32 %v5927, 0.0
      %v6316 = vmin.f32 %v5929, 0.0
      %v6317 = vmin.f32 %v6069, 0.0
      %v6318 = vmin.f32 %v6071, 0.0
      %v6319 = vmin.f32 %v6211, 0.0
      %v6320 = vmin.f32 %v6213, 0.0
      %v6321 = vmin.f32 %v5791, 0.0
      %v6322 = vmin.f32 %v5793, 0.0
      %v6323 = vmin.f32 %v5933, 0.0
      %v6324 = vmin.f32 %v5935, 0.0
      %v6325 = vmin.f32 %v6075, 0.0
      %v6326 = vmin.f32 %v6077, 0.0
      %v6327 = vmin.f32 %v6217, 0.0
      %v6328 = vmin.f32 %v6219, 0.0
      %v6329 = vmin.f32 %v5795, 0.0
      %v6330 = vmin.f32 %v5797, 0.0
      %v6331 = vmin.f32 %v5937, 0.0
      %v6332 = vmin.f32 %v5939, 0.0
      %v6333 = vmin.f32 %v6079, 0.0
      %v6334 = vmin.f32 %v6081, 0.0
      %v6335 = vmin.f32 %v6221, 0.0
      %v6336 = vmin.f32 %v6223, 0.0
      %v6337 = vmin.f32 %v5801, 0.0
      %v6338 = vmin.f32 %v5803, 0.0
      %v6339 = vmin.f32 %v5943, 0.0
      %v6340 = vmin.f32 %v5945, 0.0
      %v6341 = vmin.f32 %v6085, 0.0
      %v6342 = vmin.f32 %v6087, 0.0
      %v6343 = vmin.f32 %v6227, 0.0
      %v6344 = vmin.f32 %v6229, 0.0
      %v6345 = vmul.f32 %v6289, 1.442695
      %v6346 = vpow.pop %v6345
      %v6347 = vmul.f32 %v6290, 1.442695
      %v6348 = vpow.pop %v6347
      %v6349 = vmul.f32 %v6291, 1.442695
      %v6350 = vpow.pop %v6349
      %v6351 = vmul.f32 %v6292, 1.442695
      %v6352 = vpow.pop %v6351
      %v6353 = vmul.f32 %v6293, 1.442695
      %v6354 = vpow.pop %v6353
      %v6355 = vmul.f32 %v6294, 1.442695
      %v6356 = vpow.pop %v6355
      %v6357 = vmul.f32 %v6295, 1.442695
      %v6358 = vpow.pop %v6357
      %v6359 = vmul.f32 %v6296, 1.442695
      %v6360 = vpow.pop %v6359
      %v6361 = vmul.f32 %v6297, 1.442695
      %v6362 = vpow.pop %v6361
      %v6363 = vmul.f32 %v6298, 1.442695
      %v6364 = vpow.pop %v6363
      %v6365 = vmul.f32 %v6299, 1.442695
      %v6366 = vpow.pop %v6365
      %v6367 = vmul.f32 %v6300, 1.442695
      %v6368 = vpow.pop %v6367
      %v6369 = vmul.f32 %v6301, 1.442695
      %v6370 = vpow.pop %v6369
      %v6371 = vmul.f32 %v6302, 1.442695
      %v6372 = vpow.pop %v6371
      %v6373 = vmul.f32 %v6303, 1.442695
      %v6374 = vpow.pop %v6373
      %v6375 = vmul.f32 %v6304, 1.442695
      %v6376 = vpow.pop %v6375
      %v6377 = vmul.f32 %v6305, 1.442695
      %v6378 = vpow.pop %v6377
      %v6379 = vmul.f32 %v6306, 1.442695
      %v6380 = vpow.pop %v6379
      %v6381 = vmul.f32 %v6307, 1.442695
      %v6382 = vpow.pop %v6381
      %v6383 = vmul.f32 %v6308, 1.442695
      %v6384 = vpow.pop %v6383
      %v6385 = vmul.f32 %v6309, 1.442695
      %v6386 = vpow.pop %v6385
      %v6387 = vmul.f32 %v6310, 1.442695
      %v6388 = vpow.pop %v6387
      %v6389 = vmul.f32 %v6311, 1.442695
      %v6390 = vpow.pop %v6389
      %v6391 = vmul.f32 %v6312, 1.442695
      %v6392 = vpow.pop %v6391
      %v6393 = vmul.f32 %v6313, 1.442695
      %v6394 = vpow.pop %v6393
      %v6395 = vmul.f32 %v6314, 1.442695
      %v6396 = vpow.pop %v6395
      %v6397 = vmul.f32 %v6315, 1.442695
      %v6398 = vpow.pop %v6397
      %v6399 = vmul.f32 %v6316, 1.442695
      %v6400 = vpow.pop %v6399
      %v6401 = vmul.f32 %v6317, 1.442695
      %v6402 = vpow.pop %v6401
      %v6403 = vmul.f32 %v6318, 1.442695
      %v6404 = vpow.pop %v6403
      %v6405 = vmul.f32 %v6319, 1.442695
      %v6406 = vpow.pop %v6405
      %v6407 = vmul.f32 %v6320, 1.442695
      %v6408 = vpow.pop %v6407
      %v6409 = vmul.f32 %v6321, 1.442695
      %v6410 = vpow.pop %v6409
      %v6411 = vmul.f32 %v6322, 1.442695
      %v6412 = vpow.pop %v6411
      %v6413 = vmul.f32 %v6323, 1.442695
      %v6414 = vpow.pop %v6413
      %v6415 = vmul.f32 %v6324, 1.442695
      %v6416 = vpow.pop %v6415
      %v6417 = vmul.f32 %v6325, 1.442695
      %v6418 = vpow.pop %v6417
      %v6419 = vmul.f32 %v6326, 1.442695
      %v6420 = vpow.pop %v6419
      %v6421 = vmul.f32 %v6327, 1.442695
      %v6422 = vpow.pop %v6421
      %v6423 = vmul.f32 %v6328, 1.442695
      %v6424 = vpow.pop %v6423
      %v6425 = vmul.f32 %v6329, 1.442695
      %v6426 = vpow.pop %v6425
      %v6427 = vmul.f32 %v6330, 1.442695
      %v6428 = vpow.pop %v6427
      %v6429 = vmul.f32 %v6331, 1.442695
      %v6430 = vpow.pop %v6429
      %v6431 = vmul.f32 %v6332, 1.442695
      %v6432 = vpow.pop %v6431
      %v6433 = vmul.f32 %v6333, 1.442695
      %v6434 = vpow.pop %v6433
      %v6435 = vmul.f32 %v6334, 1.442695
      %v6436 = vpow.pop %v6435
      %v6437 = vmul.f32 %v6335, 1.442695
      %v6438 = vpow.pop %v6437
      %v6439 = vmul.f32 %v6336, 1.442695
      %v6440 = vpow.pop %v6439
      %v6441 = vmul.f32 %v6337, 1.442695
      %v6442 = vpow.pop %v6441
      %v6443 = vmul.f32 %v6338, 1.442695
      %v6444 = vpow.pop %v6443
      %v6445 = vmul.f32 %v6339, 1.442695
      %v6446 = vpow.pop %v6445
      %v6447 = vmul.f32 %v6340, 1.442695
      %v6448 = vpow.pop %v6447
      %v6449 = vmul.f32 %v6341, 1.442695
      %v6450 = vpow.pop %v6449
      %v6451 = vmul.f32 %v6342, 1.442695
      %v6452 = vpow.pop %v6451
      %v6453 = vmul.f32 %v6343, 1.442695
      %v6454 = vpow.pop %v6453
      %v6455 = vmul.f32 %v6344, 1.442695
      %v6456 = vpow.pop %v6455
      %v6457 = vsub.f32 %v6346, 1.0
      %v6458 = vsub.f32 %v6348, 1.0
      %v6459 = vsub.f32 %v6350, 1.0
      %v6460 = vsub.f32 %v6352, 1.0
      %v6461 = vsub.f32 %v6354, 1.0
      %v6462 = vsub.f32 %v6356, 1.0
      %v6463 = vsub.f32 %v6358, 1.0
      %v6464 = vsub.f32 %v6360, 1.0
      %v6465 = vsub.f32 %v6362, 1.0
      %v6466 = vsub.f32 %v6364, 1.0
      %v6467 = vsub.f32 %v6366, 1.0
      %v6468 = vsub.f32 %v6368, 1.0
      %v6469 = vsub.f32 %v6370, 1.0
      %v6470 = vsub.f32 %v6372, 1.0
      %v6471 = vsub.f32 %v6374, 1.0
      %v6472 = vsub.f32 %v6376, 1.0
      %v6473 = vsub.f32 %v6378, 1.0
      %v6474 = vsub.f32 %v6380, 1.0
      %v6475 = vsub.f32 %v6382, 1.0
      %v6476 = vsub.f32 %v6384, 1.0
      %v6477 = vsub.f32 %v6386, 1.0
      %v6478 = vsub.f32 %v6388, 1.0
      %v6479 = vsub.f32 %v6390, 1.0
      %v6480 = vsub.f32 %v6392, 1.0
      %v6481 = vsub.f32 %v6394, 1.0
      %v6482 = vsub.f32 %v6396, 1.0
      %v6483 = vsub.f32 %v6398, 1.0
      %v6484 = vsub.f32 %v6400, 1.0
      %v6485 = vsub.f32 %v6402, 1.0
      %v6486 = vsub.f32 %v6404, 1.0
      %v6487 = vsub.f32 %v6406, 1.0
      %v6488 = vsub.f32 %v6408, 1.0
      %v6489 = vsub.f32 %v6410, 1.0
      %v6490 = vsub.f32 %v6412, 1.0
      %v6491 = vsub.f32 %v6414, 1.0
      %v6492 = vsub.f32 %v6416, 1.0
      %v6493 = vsub.f32 %v6418, 1.0
      %v6494 = vsub.f32 %v6420, 1.0
      %v6495 = vsub.f32 %v6422, 1.0
      %v6496 = vsub.f32 %v6424, 1.0
      %v6497 = vsub.f32 %v6426, 1.0
      %v6498 = vsub.f32 %v6428, 1.0
      %v6499 = vsub.f32 %v6430, 1.0
      %v6500 = vsub.f32 %v6432, 1.0
      %v6501 = vsub.f32 %v6434, 1.0
      %v6502 = vsub.f32 %v6436, 1.0
      %v6503 = vsub.f32 %v6438, 1.0
      %v6504 = vsub.f32 %v6440, 1.0
      %v6505 = vsub.f32 %v6442, 1.0
      %v6506 = vsub.f32 %v6444, 1.0
      %v6507 = vsub.f32 %v6446, 1.0
      %v6508 = vsub.f32 %v6448, 1.0
      %v6509 = vsub.f32 %v6450, 1.0
      %v6510 = vsub.f32 %v6452, 1.0
      %v6511 = vsub.f32 %v6454, 1.0
      %v6512 = vsub.f32 %v6456, 1.0
      %v6513 = vsel %vm6233, %v5771, %v6457
      %v6514 = vsel %vm6234, %v5773, %v6458
      %v6515 = vsel %vm6235, %v5913, %v6459
      %v6516 = vsel %vm6236, %v5915, %v6460
      %v6517 = vsel %vm6237, %v6055, %v6461
      %v6518 = vsel %vm6238, %v6057, %v6462
      %v6519 = vsel %vm6239, %v6197, %v6463
      %v6520 = vsel %vm6240, %v6199, %v6464
      %v6521 = vsel %vm6241, %v5775, %v6465
      %v6522 = vsel %vm6242, %v5777, %v6466
      %v6523 = vsel %vm6243, %v5917, %v6467
      %v6524 = vsel %vm6244, %v5919, %v6468
      %v6525 = vsel %vm6245, %v6059, %v6469
      %v6526 = vsel %vm6246, %v6061, %v6470
      %v6527 = vsel %vm6247, %v6201, %v6471
      %v6528 = vsel %vm6248, %v6203, %v6472
      %v6529 = vsel %vm6249, %v5781, %v6473
      %v6530 = vsel %vm6250, %v5783, %v6474
      %v6531 = vsel %vm6251, %v5923, %v6475
      %v6532 = vsel %vm6252, %v5925, %v6476
      %v6533 = vsel %vm6253, %v6065, %v6477
      %v6534 = vsel %vm6254, %v6067, %v6478
      %v6535 = vsel %vm6255, %v6207, %v6479
      %v6536 = vsel %vm6256, %v6209, %v6480
      %v6537 = vsel %vm6257, %v5785, %v6481
      %v6538 = vsel %vm6258, %v5787, %v6482
      %v6539 = vsel %vm6259, %v5927, %v6483
      %v6540 = vsel %vm6260, %v5929, %v6484
      %v6541 = vsel %vm6261, %v6069, %v6485
      %v6542 = vsel %vm6262, %v6071, %v6486
      %v6543 = vsel %vm6263, %v6211, %v6487
      %v6544 = vsel %vm6264, %v6213, %v6488
      %v6545 = vsel %vm6265, %v5791, %v6489
      %v6546 = vsel %vm6266, %v5793, %v6490
      %v6547 = vsel %vm6267, %v5933, %v6491
      %v6548 = vsel %vm6268, %v5935, %v6492
      %v6549 = vsel %vm6269, %v6075, %v6493
      %v6550 = vsel %vm6270, %v6077, %v6494
      %v6551 = vsel %vm6271, %v6217, %v6495
      %v6552 = vsel %vm6272, %v6219, %v6496
      %v6553 = vsel %vm6273, %v5795, %v6497
      %v6554 = vsel %vm6274, %v5797, %v6498
      %v6555 = vsel %vm6275, %v5937, %v6499
      %v6556 = vsel %vm6276, %v5939, %v6500
      %v6557 = vsel %vm6277, %v6079, %v6501
      %v6558 = vsel %vm6278, %v6081, %v6502
      %v6559 = vsel %vm6279, %v6221, %v6503
      %v6560 = vsel %vm6280, %v6223, %v6504
      %v6561 = vsel %vm6281, %v5801, %v6505
      %v6562 = vsel %vm6282, %v5803, %v6506
      %v6563 = vsel %vm6283, %v5943, %v6507
      %v6564 = vsel %vm6284, %v5945, %v6508
      %v6565 = vsel %vm6285, %v6085, %v6509
      %v6566 = vsel %vm6286, %v6087, %v6510
      %v6567 = vsel %vm6287, %v6227, %v6511
      %v6568 = vsel %vm6288, %v6229, %v6512
      %v6569 = vadd.f32 %v6513, %v6514
      %v6570 = vadd.f32 %v6521, %v6522
      %v6571 = vadd.f32 %v6529, %v6530
      %v6572 = vadd.f32 %v6537, %v6538
      %v6573 = vadd.f32 %v6545, %v6546
      %v6574 = vadd.f32 %v6553, %v6554
      %v6575 = vadd.f32 %v6561, %v6562
      %v6576 = vmul.f32 %v6569, %v447
      %v6577 = vmul.f32 %v6570, %v447
      %v6578 = vmul.f32 %v6571, %v447
      %v6579 = vmul.f32 %v6572, %v447
      %v6580 = vmul.f32 %v6573, %v447
      %v6581 = vmul.f32 %v6574, %v447
      %v6582 = vmul.f32 %v6575, %v447
      %v6583 = vpack.c.bf16 %v6577, %v6576
      %v6584 = vpack.c.bf16 %v6579, %v6578
      %v6585 = vpack.c.bf16 %v6581, %v6580
      %v6586 = vpack.c.bf16 %v6582, %v6582
      %v6587 = vadd.f32 %v6515, %v6516
      %v6588 = vadd.f32 %v6523, %v6524
      %v6589 = vadd.f32 %v6531, %v6532
      %v6590 = vadd.f32 %v6539, %v6540
      %v6591 = vadd.f32 %v6547, %v6548
      %v6592 = vadd.f32 %v6555, %v6556
      %v6593 = vadd.f32 %v6563, %v6564
      %v6594 = vmul.f32 %v6587, %v447
      %v6595 = vmul.f32 %v6588, %v447
      %v6596 = vmul.f32 %v6589, %v447
      %v6597 = vmul.f32 %v6590, %v447
      %v6598 = vmul.f32 %v6591, %v447
      %v6599 = vmul.f32 %v6592, %v447
      %v6600 = vmul.f32 %v6593, %v447
      %v6601 = vpack.c.bf16 %v6595, %v6594
      %v6602 = vpack.c.bf16 %v6597, %v6596
      %v6603 = vpack.c.bf16 %v6599, %v6598
      %v6604 = vpack.c.bf16 %v6600, %v6600
      %v6605 = vadd.f32 %v6517, %v6518
      %v6606 = vadd.f32 %v6525, %v6526
      %v6607 = vadd.f32 %v6533, %v6534
      %v6608 = vadd.f32 %v6541, %v6542
      %v6609 = vadd.f32 %v6549, %v6550
      %v6610 = vadd.f32 %v6557, %v6558
      %v6611 = vadd.f32 %v6565, %v6566
      %v6612 = vmul.f32 %v6605, %v447
      %v6613 = vmul.f32 %v6606, %v447
      %v6614 = vmul.f32 %v6607, %v447
      %v6615 = vmul.f32 %v6608, %v447
      %v6616 = vmul.f32 %v6609, %v447
      %v6617 = vmul.f32 %v6610, %v447
      %v6618 = vmul.f32 %v6611, %v447
      %v6619 = vpack.c.bf16 %v6613, %v6612
      %v6620 = vpack.c.bf16 %v6615, %v6614
      %v6621 = vpack.c.bf16 %v6617, %v6616
      %v6622 = vpack.c.bf16 %v6618, %v6618
      %v6623 = vadd.f32 %v6519, %v6520
      %v6624 = vadd.f32 %v6527, %v6528
      %v6625 = vadd.f32 %v6535, %v6536
      %v6626 = vadd.f32 %v6543, %v6544
      %v6627 = vadd.f32 %v6551, %v6552
      %v6628 = vadd.f32 %v6559, %v6560
      %v6629 = vadd.f32 %v6567, %v6568
      %v6630 = vmul.f32 %v6623, %v447
      %v6631 = vmul.f32 %v6624, %v447
      %v6632 = vmul.f32 %v6625, %v447
      %v6633 = vmul.f32 %v6626, %v447
      %v6634 = vmul.f32 %v6627, %v447
      %v6635 = vmul.f32 %v6628, %v447
      %v6636 = vmul.f32 %v6629, %v447
      %v6637 = vpack.c.bf16 %v6631, %v6630
      %v6638 = vpack.c.bf16 %v6633, %v6632
      %v6639 = vpack.c.bf16 %v6635, %v6634
      %v6640 = vpack.c.bf16 %v6636, %v6636
      %6645 = vrot.lane.b32.xlu0 %v6619, 2
      %v6646 = vpop.permute.xlu0 %6645
      %6647 = vrot.lane.b32.xlu0 %v6620, 2
      %v6648 = vpop.permute.xlu0 %6647
      %6649 = vrot.lane.b32.xlu0 %v6621, 2
      %v6650 = vpop.permute.xlu0 %6649
      %6651 = vrot.lane.b32.xlu0 %v6622, 2
      %v6652 = vpop.permute.xlu0 %6651
      %6664 = vrot.lane.b32.xlu0 %v6637, 2
      %v6665 = vpop.permute.xlu0 %6664
      %6666 = vrot.lane.b32.xlu0 %v6638, 2
      %v6667 = vpop.permute.xlu0 %6666
      %6668 = vrot.lane.b32.xlu0 %v6639, 2
      %v6669 = vpop.permute.xlu0 %6668
      %6670 = vrot.lane.b32.xlu0 %v6640, 2
      %v6671 = vpop.permute.xlu0 %6670
      %6683 = vrot.lane.b32.xlu0 %v6583, 1
      %v6684 = vpop.permute.xlu0 %6683
      %6685 = vrot.lane.b32.xlu0 %v6584, 1
      %v6686 = vpop.permute.xlu0 %6685
      %6687 = vrot.lane.b32.xlu0 %v6585, 1
      %v6688 = vpop.permute.xlu0 %6687
      %6689 = vrot.lane.b32.xlu0 %v6586, 1
      %v6690 = vpop.permute.xlu0 %6689
      %6702 = vrot.lane.b32.xlu0 %v6601, 1
      %v6703 = vpop.permute.xlu0 %6702
      %6704 = vrot.lane.b32.xlu0 %v6602, 1
      %v6705 = vpop.permute.xlu0 %6704
      %6706 = vrot.lane.b32.xlu0 %v6603, 1
      %v6707 = vpop.permute.xlu0 %6706
      %6708 = vrot.lane.b32.xlu0 %v6604, 1
      %v6709 = vpop.permute.xlu0 %6708
      %6717 = vrot.lane.b32.xlu0 %v6619, 1
      %v6718 = vpop.permute.xlu0 %6717
      %6719 = vrot.lane.b32.xlu0 %v6620, 1
      %v6720 = vpop.permute.xlu0 %6719
      %6721 = vrot.lane.b32.xlu0 %v6621, 1
      %v6722 = vpop.permute.xlu0 %6721
      %6723 = vrot.lane.b32.xlu0 %v6622, 1
      %v6724 = vpop.permute.xlu0 %6723
      %6729 = vrot.lane.b32.xlu0 %v6637, 1
      %v6730 = vpop.permute.xlu0 %6729
      %6731 = vrot.lane.b32.xlu0 %v6638, 1
      %v6732 = vpop.permute.xlu0 %6731
      %6733 = vrot.lane.b32.xlu0 %v6639, 1
      %v6734 = vpop.permute.xlu0 %6733
      %6735 = vrot.lane.b32.xlu0 %v6640, 1
      %v6736 = vpop.permute.xlu0 %6735
      %6741 = vrot.lane.b32.xlu0 %v6583, 127
      %v6742 = vpop.permute.xlu0 %6741
      %6743 = vrot.lane.b32.xlu0 %v6584, 127
      %v6744 = vpop.permute.xlu0 %6743
      %6745 = vrot.lane.b32.xlu0 %v6585, 127
      %v6746 = vpop.permute.xlu0 %6745
      %6747 = vrot.lane.b32.xlu0 %v6586, 127
      %v6748 = vpop.permute.xlu0 %6747
      %6756 = vrot.lane.b32.xlu0 %v6601, 127
      %v6757 = vpop.permute.xlu0 %6756
      %6758 = vrot.lane.b32.xlu0 %v6602, 127
      %v6759 = vpop.permute.xlu0 %6758
      %6760 = vrot.lane.b32.xlu0 %v6603, 127
      %v6761 = vpop.permute.xlu0 %6760
      %6762 = vrot.lane.b32.xlu0 %v6604, 127
      %v6763 = vpop.permute.xlu0 %6762
      %6771 = vrot.lane.b32.xlu0 %v6619, 127
      %v6772 = vpop.permute.xlu0 %6771
      %6773 = vrot.lane.b32.xlu0 %v6620, 127
      %v6774 = vpop.permute.xlu0 %6773
      %6775 = vrot.lane.b32.xlu0 %v6621, 127
      %v6776 = vpop.permute.xlu0 %6775
      %6777 = vrot.lane.b32.xlu0 %v6622, 127
      %v6778 = vpop.permute.xlu0 %6777
      %6783 = vrot.lane.b32.xlu0 %v6637, 127
      %v6784 = vpop.permute.xlu0 %6783
      %6785 = vrot.lane.b32.xlu0 %v6638, 127
      %v6786 = vpop.permute.xlu0 %6785
      %6787 = vrot.lane.b32.xlu0 %v6639, 127
      %v6788 = vpop.permute.xlu0 %6787
      %6789 = vrot.lane.b32.xlu0 %v6640, 127
      %v6790 = vpop.permute.xlu0 %6789
      %6795 = vrot.lane.b32.xlu0 %v6583, 126
      %v6796 = vpop.permute.xlu0 %6795
      %6797 = vrot.lane.b32.xlu0 %v6584, 126
      %v6798 = vpop.permute.xlu0 %6797
      %6799 = vrot.lane.b32.xlu0 %v6585, 126
      %v6800 = vpop.permute.xlu0 %6799
      %6801 = vrot.lane.b32.xlu0 %v6586, 126
      %v6802 = vpop.permute.xlu0 %6801
      %6807 = vrot.lane.b32.xlu0 %v6601, 126
      %v6808 = vpop.permute.xlu0 %6807
      %6809 = vrot.lane.b32.xlu0 %v6602, 126
      %v6810 = vpop.permute.xlu0 %6809
      %6811 = vrot.lane.b32.xlu0 %v6603, 126
      %v6812 = vpop.permute.xlu0 %6811
      %6813 = vrot.lane.b32.xlu0 %v6604, 126
      %v6814 = vpop.permute.xlu0 %6813
      %v6835 = vrot.slane %v6665, 7
      %v6836 = vrot.slane %v6684, 7
      %v6837 = vrot.slane %v6703, 7
      %v6838 = vrot.slane %v6718, 7
      %v6839 = vrot.slane %v6667, 7
      %v6840 = vsel %vm1504, %v6835, %v6839
      %v6841 = vrot.slane %v6686, 7
      %v6842 = vsel %vm1504, %v6836, %v6841
      %v6843 = vrot.slane %v6705, 7
      %v6844 = vsel %vm1504, %v6837, %v6843
      %v6845 = vrot.slane %v6720, 7
      %v6846 = vsel %vm1504, %v6838, %v6845
      %v6847 = vrot.slane %v6669, 7
      %v6848 = vsel %vm1504, %v6839, %v6847
      %v6849 = vrot.slane %v6688, 7
      %v6850 = vsel %vm1504, %v6841, %v6849
      %v6851 = vrot.slane %v6707, 7
      %v6852 = vsel %vm1504, %v6843, %v6851
      %v6853 = vrot.slane %v6722, 7
      %v6854 = vsel %vm1504, %v6845, %v6853
      %v6855 = vrot.slane %v6671, 7
      %v6856 = vsel %vm1504, %v6847, %v6855
      %v6857 = vrot.slane %v6690, 7
      %v6858 = vsel %vm1504, %v6849, %v6857
      %v6859 = vrot.slane %v6709, 7
      %v6860 = vsel %vm1504, %v6851, %v6859
      %v6861 = vrot.slane %v6724, 7
      %v6862 = vsel %vm1504, %v6853, %v6861
      %v6875 = vrot.slane %v6684, 6
      %v6876 = vrot.slane %v6703, 6
      %v6877 = vrot.slane %v6718, 6
      %v6878 = vrot.slane %v6730, 6
      %v6879 = vrot.slane %v6686, 6
      %v6880 = vsel %vm1090, %v6875, %v6879
      %v6881 = vrot.slane %v6705, 6
      %v6882 = vsel %vm1090, %v6876, %v6881
      %v6883 = vrot.slane %v6720, 6
      %v6884 = vsel %vm1090, %v6877, %v6883
      %v6885 = vrot.slane %v6732, 6
      %v6886 = vsel %vm1090, %v6878, %v6885
      %v6887 = vrot.slane %v6688, 6
      %v6888 = vsel %vm1090, %v6879, %v6887
      %v6889 = vrot.slane %v6707, 6
      %v6890 = vsel %vm1090, %v6881, %v6889
      %v6891 = vrot.slane %v6722, 6
      %v6892 = vsel %vm1090, %v6883, %v6891
      %v6893 = vrot.slane %v6734, 6
      %v6894 = vsel %vm1090, %v6885, %v6893
      %v6895 = vrot.slane %v6690, 6
      %v6896 = vsel %vm1090, %v6887, %v6895
      %v6897 = vrot.slane %v6709, 6
      %v6898 = vsel %vm1090, %v6889, %v6897
      %v6899 = vrot.slane %v6724, 6
      %v6900 = vsel %vm1090, %v6891, %v6899
      %v6901 = vrot.slane %v6736, 6
      %v6902 = vsel %vm1090, %v6893, %v6901
      %v6911 = vrot.slane %v6703, 5
      %v6912 = vrot.slane %v6718, 5
      %v6913 = vrot.slane %v6730, 5
      %v6914 = vrot.slane %v6583, 5
      %v6915 = vrot.slane %v6705, 5
      %v6916 = vsel %vm1336, %v6911, %v6915
      %v6917 = vrot.slane %v6720, 5
      %v6918 = vsel %vm1336, %v6912, %v6917
      %v6919 = vrot.slane %v6732, 5
      %v6920 = vsel %vm1336, %v6913, %v6919
      %v6921 = vrot.slane %v6584, 5
      %v6922 = vsel %vm1336, %v6914, %v6921
      %v6923 = vrot.slane %v6707, 5
      %v6924 = vsel %vm1336, %v6915, %v6923
      %v6925 = vrot.slane %v6722, 5
      %v6926 = vsel %vm1336, %v6917, %v6925
      %v6927 = vrot.slane %v6734, 5
      %v6928 = vsel %vm1336, %v6919, %v6927
      %v6929 = vrot.slane %v6585, 5
      %v6930 = vsel %vm1336, %v6921, %v6929
      %v6931 = vrot.slane %v6709, 5
      %v6932 = vsel %vm1336, %v6923, %v6931
      %v6933 = vrot.slane %v6724, 5
      %v6934 = vsel %vm1336, %v6925, %v6933
      %v6935 = vrot.slane %v6736, 5
      %v6936 = vsel %vm1336, %v6927, %v6935
      %v6937 = vrot.slane %v6586, 5
      %v6938 = vsel %vm1336, %v6929, %v6937
      %v6947 = vrot.slane %v6718, 4
      %v6948 = vrot.slane %v6730, 4
      %v6949 = vrot.slane %v6583, 4
      %v6950 = vrot.slane %v6601, 4
      %v6951 = vrot.slane %v6720, 4
      %v6952 = vsel %vm5008, %v6947, %v6951
      %v6953 = vrot.slane %v6732, 4
      %v6954 = vsel %vm5008, %v6948, %v6953
      %v6955 = vrot.slane %v6584, 4
      %v6956 = vsel %vm5008, %v6949, %v6955
      %v6957 = vrot.slane %v6602, 4
      %v6958 = vsel %vm5008, %v6950, %v6957
      %v6959 = vrot.slane %v6722, 4
      %v6960 = vsel %vm5008, %v6951, %v6959
      %v6961 = vrot.slane %v6734, 4
      %v6962 = vsel %vm5008, %v6953, %v6961
      %v6963 = vrot.slane %v6585, 4
      %v6964 = vsel %vm5008, %v6955, %v6963
      %v6965 = vrot.slane %v6603, 4
      %v6966 = vsel %vm5008, %v6957, %v6965
      %v6967 = vrot.slane %v6724, 4
      %v6968 = vsel %vm5008, %v6959, %v6967
      %v6969 = vrot.slane %v6736, 4
      %v6970 = vsel %vm5008, %v6961, %v6969
      %v6971 = vrot.slane %v6586, 4
      %v6972 = vsel %vm5008, %v6963, %v6971
      %v6973 = vrot.slane %v6604, 4
      %v6974 = vsel %vm5008, %v6965, %v6973
      %v6983 = vrot.slane %v6730, 3
      %v6984 = vrot.slane %v6583, 3
      %v6985 = vrot.slane %v6601, 3
      %v6986 = vrot.slane %v6619, 3
      %v6987 = vrot.slane %v6732, 3
      %v6988 = vsel %vm1174, %v6983, %v6987
      %v6989 = vrot.slane %v6584, 3
      %v6990 = vsel %vm1174, %v6984, %v6989
      %v6991 = vrot.slane %v6602, 3
      %v6992 = vsel %vm1174, %v6985, %v6991
      %v6993 = vrot.slane %v6620, 3
      %v6994 = vsel %vm1174, %v6986, %v6993
      %v6995 = vrot.slane %v6734, 3
      %v6996 = vsel %vm1174, %v6987, %v6995
      %v6997 = vrot.slane %v6585, 3
      %v6998 = vsel %vm1174, %v6989, %v6997
      %v6999 = vrot.slane %v6603, 3
      %v7000 = vsel %vm1174, %v6991, %v6999
      %v7001 = vrot.slane %v6621, 3
      %v7002 = vsel %vm1174, %v6993, %v7001
      %v7003 = vrot.slane %v6736, 3
      %v7004 = vsel %vm1174, %v6995, %v7003
      %v7005 = vrot.slane %v6586, 3
      %v7006 = vsel %vm1174, %v6997, %v7005
      %v7007 = vrot.slane %v6604, 3
      %v7008 = vsel %vm1174, %v6999, %v7007
      %v7009 = vrot.slane %v6622, 3
      %v7010 = vsel %vm1174, %v7001, %v7009
      %v7019 = vrot.slane %v6583, 2
      %v7020 = vrot.slane %v6601, 2
      %v7021 = vrot.slane %v6619, 2
      %v7022 = vrot.slane %v6637, 2
      %v7023 = vrot.slane %v6584, 2
      %v7024 = vsel %vm1420, %v7019, %v7023
      %v7025 = vrot.slane %v6602, 2
      %v7026 = vsel %vm1420, %v7020, %v7025
      %v7027 = vrot.slane %v6620, 2
      %v7028 = vsel %vm1420, %v7021, %v7027
      %v7029 = vrot.slane %v6638, 2
      %v7030 = vsel %vm1420, %v7022, %v7029
      %v7031 = vrot.slane %v6585, 2
      %v7032 = vsel %vm1420, %v7023, %v7031
      %v7033 = vrot.slane %v6603, 2
      %v7034 = vsel %vm1420, %v7025, %v7033
      %v7035 = vrot.slane %v6621, 2
      %v7036 = vsel %vm1420, %v7027, %v7035
      %v7037 = vrot.slane %v6639, 2
      %v7038 = vsel %vm1420, %v7029, %v7037
      %v7039 = vrot.slane %v6586, 2
      %v7040 = vsel %vm1420, %v7031, %v7039
      %v7041 = vrot.slane %v6604, 2
      %v7042 = vsel %vm1420, %v7033, %v7041
      %v7043 = vrot.slane %v6622, 2
      %v7044 = vsel %vm1420, %v7035, %v7043
      %v7045 = vrot.slane %v6640, 2
      %v7046 = vsel %vm1420, %v7037, %v7045
      %v7059 = vrot.slane %v6601, 1
      %v7060 = vrot.slane %v6619, 1
      %v7061 = vrot.slane %v6637, 1
      %v7062 = vrot.slane %v6742, 1
      %v7063 = vrot.slane %v6602, 1
      %v7064 = vsel %vm5353, %v7059, %v7063
      %v7065 = vrot.slane %v6620, 1
      %v7066 = vsel %vm5353, %v7060, %v7065
      %v7067 = vrot.slane %v6638, 1
      %v7068 = vsel %vm5353, %v7061, %v7067
      %v7069 = vrot.slane %v6744, 1
      %v7070 = vsel %vm5353, %v7062, %v7069
      %v7071 = vrot.slane %v6603, 1
      %v7072 = vsel %vm5353, %v7063, %v7071
      %v7073 = vrot.slane %v6621, 1
      %v7074 = vsel %vm5353, %v7065, %v7073
      %v7075 = vrot.slane %v6639, 1
      %v7076 = vsel %vm5353, %v7067, %v7075
      %v7077 = vrot.slane %v6746, 1
      %v7078 = vsel %vm5353, %v7069, %v7077
      %v7079 = vrot.slane %v6604, 1
      %v7080 = vsel %vm5353, %v7071, %v7079
      %v7081 = vrot.slane %v6622, 1
      %v7082 = vsel %vm5353, %v7073, %v7081
      %v7083 = vrot.slane %v6640, 1
      %v7084 = vsel %vm5353, %v7075, %v7083
      %v7085 = vrot.slane %v6748, 1
      %v7086 = vsel %vm5353, %v7077, %v7085
      %v7107 = vrot.slane %v6637, 7
      %v7108 = vrot.slane %v6742, 7
      %v7109 = vrot.slane %v6757, 7
      %v7110 = vrot.slane %v6772, 7
      %v7111 = vrot.slane %v6638, 7
      %v7112 = vsel %vm1504, %v7107, %v7111
      %v7113 = vrot.slane %v6744, 7
      %v7114 = vsel %vm1504, %v7108, %v7113
      %v7115 = vrot.slane %v6759, 7
      %v7116 = vsel %vm1504, %v7109, %v7115
      %v7117 = vrot.slane %v6774, 7
      %v7118 = vsel %vm1504, %v7110, %v7117
      %v7119 = vrot.slane %v6639, 7
      %v7120 = vsel %vm1504, %v7111, %v7119
      %v7121 = vrot.slane %v6746, 7
      %v7122 = vsel %vm1504, %v7113, %v7121
      %v7123 = vrot.slane %v6761, 7
      %v7124 = vsel %vm1504, %v7115, %v7123
      %v7125 = vrot.slane %v6776, 7
      %v7126 = vsel %vm1504, %v7117, %v7125
      %v7127 = vrot.slane %v6640, 7
      %v7128 = vsel %vm1504, %v7119, %v7127
      %v7129 = vrot.slane %v6748, 7
      %v7130 = vsel %vm1504, %v7121, %v7129
      %v7131 = vrot.slane %v6763, 7
      %v7132 = vsel %vm1504, %v7123, %v7131
      %v7133 = vrot.slane %v6778, 7
      %v7134 = vsel %vm1504, %v7125, %v7133
      %v7147 = vrot.slane %v6742, 6
      %v7148 = vrot.slane %v6757, 6
      %v7149 = vrot.slane %v6772, 6
      %v7150 = vrot.slane %v6784, 6
      %v7151 = vrot.slane %v6744, 6
      %v7152 = vsel %vm1090, %v7147, %v7151
      %v7153 = vrot.slane %v6759, 6
      %v7154 = vsel %vm1090, %v7148, %v7153
      %v7155 = vrot.slane %v6774, 6
      %v7156 = vsel %vm1090, %v7149, %v7155
      %v7157 = vrot.slane %v6786, 6
      %v7158 = vsel %vm1090, %v7150, %v7157
      %v7159 = vrot.slane %v6746, 6
      %v7160 = vsel %vm1090, %v7151, %v7159
      %v7161 = vrot.slane %v6761, 6
      %v7162 = vsel %vm1090, %v7153, %v7161
      %v7163 = vrot.slane %v6776, 6
      %v7164 = vsel %vm1090, %v7155, %v7163
      %v7165 = vrot.slane %v6788, 6
      %v7166 = vsel %vm1090, %v7157, %v7165
      %v7167 = vrot.slane %v6748, 6
      %v7168 = vsel %vm1090, %v7159, %v7167
      %v7169 = vrot.slane %v6763, 6
      %v7170 = vsel %vm1090, %v7161, %v7169
      %v7171 = vrot.slane %v6778, 6
      %v7172 = vsel %vm1090, %v7163, %v7171
      %v7173 = vrot.slane %v6790, 6
      %v7174 = vsel %vm1090, %v7165, %v7173
      %v7187 = vrot.slane %v6757, 5
      %v7188 = vrot.slane %v6772, 5
      %v7189 = vrot.slane %v6784, 5
      %v7190 = vrot.slane %v6796, 5
      %v7191 = vrot.slane %v6759, 5
      %v7192 = vsel %vm1336, %v7187, %v7191
      %v7193 = vrot.slane %v6774, 5
      %v7194 = vsel %vm1336, %v7188, %v7193
      %v7195 = vrot.slane %v6786, 5
      %v7196 = vsel %vm1336, %v7189, %v7195
      %v7197 = vrot.slane %v6798, 5
      %v7198 = vsel %vm1336, %v7190, %v7197
      %v7199 = vrot.slane %v6761, 5
      %v7200 = vsel %vm1336, %v7191, %v7199
      %v7201 = vrot.slane %v6776, 5
      %v7202 = vsel %vm1336, %v7193, %v7201
      %v7203 = vrot.slane %v6788, 5
      %v7204 = vsel %vm1336, %v7195, %v7203
      %v7205 = vrot.slane %v6800, 5
      %v7206 = vsel %vm1336, %v7197, %v7205
      %v7207 = vrot.slane %v6763, 5
      %v7208 = vsel %vm1336, %v7199, %v7207
      %v7209 = vrot.slane %v6778, 5
      %v7210 = vsel %vm1336, %v7201, %v7209
      %v7211 = vrot.slane %v6790, 5
      %v7212 = vsel %vm1336, %v7203, %v7211
      %v7213 = vrot.slane %v6802, 5
      %v7214 = vsel %vm1336, %v7205, %v7213
      %v7227 = vrot.slane %v6772, 4
      %v7228 = vrot.slane %v6784, 4
      %v7229 = vrot.slane %v6796, 4
      %v7230 = vrot.slane %v6808, 4
      %v7231 = vrot.slane %v6774, 4
      %v7232 = vsel %vm5008, %v7227, %v7231
      %v7233 = vrot.slane %v6786, 4
      %v7234 = vsel %vm5008, %v7228, %v7233
      %v7235 = vrot.slane %v6798, 4
      %v7236 = vsel %vm5008, %v7229, %v7235
      %v7237 = vrot.slane %v6810, 4
      %v7238 = vsel %vm5008, %v7230, %v7237
      %v7239 = vrot.slane %v6776, 4
      %v7240 = vsel %vm5008, %v7231, %v7239
      %v7241 = vrot.slane %v6788, 4
      %v7242 = vsel %vm5008, %v7233, %v7241
      %v7243 = vrot.slane %v6800, 4
      %v7244 = vsel %vm5008, %v7235, %v7243
      %v7245 = vrot.slane %v6812, 4
      %v7246 = vsel %vm5008, %v7237, %v7245
      %v7247 = vrot.slane %v6778, 4
      %v7248 = vsel %vm5008, %v7239, %v7247
      %v7249 = vrot.slane %v6790, 4
      %v7250 = vsel %vm5008, %v7241, %v7249
      %v7251 = vrot.slane %v6802, 4
      %v7252 = vsel %vm5008, %v7243, %v7251
      %v7253 = vrot.slane %v6814, 4
      %v7254 = vsel %vm5008, %v7245, %v7253
      %v7264 = vsel %vm1277, %v6652, %v6835
      %v7267 = vsel %vm1277, %v6671, %v6836
      %v7270 = vsel %vm1277, %v6690, %v6837
      %v7273 = vsel %vm1277, %v6709, %v6838
      %v7277 = vsel %vm1517, %v6856, %v6875
      %v7281 = vsel %vm1517, %v6858, %v6876
      %v7285 = vsel %vm1517, %v6860, %v6877
      %v7289 = vsel %vm1517, %v6862, %v6878
      %v7293 = vsel %vm1109, %v6896, %v6911
      %v7297 = vsel %vm1109, %v6898, %v6912
      %v7301 = vsel %vm1109, %v6900, %v6913
      %v7305 = vsel %vm1109, %v6902, %v6914
      %v7309 = vsel %vm1355, %v6932, %v6947
      %v7313 = vsel %vm1355, %v6934, %v6948
      %v7317 = vsel %vm1355, %v6936, %v6949
      %v7321 = vsel %vm1355, %v6938, %v6950
      %v7325 = vsel %vm3460, %v6968, %v6983
      %v7329 = vsel %vm3460, %v6970, %v6984
      %v7333 = vsel %vm3460, %v6972, %v6985
      %v7337 = vsel %vm3460, %v6974, %v6986
      %v7341 = vsel %vm1193, %v7004, %v7019
      %v7345 = vsel %vm1193, %v7006, %v7020
      %v7349 = vsel %vm1193, %v7008, %v7021
      %v7353 = vsel %vm1193, %v7010, %v7022
      %v7357 = vsel %vm1439, %v7040, %v7059
      %v7361 = vsel %vm1439, %v7042, %v7060
      %v7365 = vsel %vm1439, %v7044, %v7061
      %v7369 = vsel %vm1439, %v7046, %v7062
      %v7373 = vsel %vm1277, %v6622, %v7107
      %v7377 = vsel %vm1277, %v6640, %v7108
      %v7380 = vsel %vm1277, %v6748, %v7109
      %v7383 = vsel %vm1277, %v6763, %v7110
      %v7387 = vsel %vm1517, %v7128, %v7147
      %v7391 = vsel %vm1517, %v7130, %v7148
      %v7395 = vsel %vm1517, %v7132, %v7149
      %v7399 = vsel %vm1517, %v7134, %v7150
      %v7403 = vsel %vm1109, %v7168, %v7187
      %v7407 = vsel %vm1109, %v7170, %v7188
      %v7411 = vsel %vm1109, %v7172, %v7189
      %v7415 = vsel %vm1109, %v7174, %v7190
      %v7419 = vsel %vm1355, %v7208, %v7227
      %v7423 = vsel %vm1355, %v7210, %v7228
      %v7427 = vsel %vm1355, %v7212, %v7229
      %v7431 = vsel %vm1355, %v7214, %v7230
      %v7433 = vld [vmem:[%s7] sm:$0xff]
      %v7434 = vld [vmem:[%s7 + $0x8] sm:$0xff]
      %v7435 = vld [vmem:[%s7 + $0x10] sm:$0xff]
      %v7436 = vld [vmem:[%s7 + $0x18] sm:$0xff]
      %v7437 = vld [vmem:[%s7 + $0x20] sm:$0xff]
      %v7438 = vld [vmem:[%s7 + $0x28] sm:$0xff]
      %v7439 = vld [vmem:[%s7 + $0x30] sm:$0xff]
      %v7440 = vld [vmem:[%s7 + $0x38] sm:$0xff]
      %v7441 = vld [vmem:[%s7 + $0x40] sm:$0xff]
      %v7442 = vld [vmem:[%s7 + $0x48] sm:$0xff]
      %v7443 = vld [vmem:[%s7 + $0x50] sm:$0xff]
      %v7444 = vld [vmem:[%s7 + $0x58] sm:$0xff]
      %v7445 = vld [vmem:[%s7 + $0x60] sm:$0xff]
      %v7446 = vld [vmem:[%s7 + $0x68] sm:$0xff]
      %v7447 = vld [vmem:[%s7 + $0x70] sm:$0xff]
      %v7448 = vld [vmem:[%s7 + $0x78] sm:$0xff]
      %v7449 = vld [vmem:[%s7 + $0x80] sm:$0xff]
      %v7450 = vld [vmem:[%s7 + $0x88] sm:$0xff]
      %v7451 = vld [vmem:[%s7 + $0x90] sm:$0xff]
      %v7452 = vld [vmem:[%s7 + $0x98] sm:$0xff]
      %v7453 = vld [vmem:[%s7 + $0xa0] sm:$0xff]
      %v7454 = vld [vmem:[%s7 + $0xa8] sm:$0xff]
      %v7455 = vld [vmem:[%s7 + $0xb0] sm:$0xff]
      %v7456 = vld [vmem:[%s7 + $0xb8] sm:$0xff]
      %v7457 = vld [vmem:[%s7 + $0xc0] sm:$0xff]
      %v7458 = vld [vmem:[%s7 + $0xc8] sm:$0xff]
      %v7459 = vld [vmem:[%s7 + $0xd0] sm:$0xff]
      %v7460 = vld [vmem:[%s7 + $0xd8] sm:$0xff]
      %v7461 = vld [vmem:[%s7 + $0xe0] sm:$0xff]
      %v7462 = vld [vmem:[%s7 + $0xe8] sm:$0xff]
      %v7463 = vld [vmem:[%s7 + $0xf0] sm:$0xff]
      %v7464 = vld [vmem:[%s7 + $0xf8] sm:$0xff]
      %v7465 = vld [vmem:[%s7 + $0x100] sm:$0xff]
      %v7466 = vld [vmem:[%s7 + $0x108] sm:$0xff]
      %v7467 = vld [vmem:[%s7 + $0x110] sm:$0xff]
      %v7468 = vld [vmem:[%s7 + $0x118] sm:$0xff]
      %v7469 = vld [vmem:[%s7 + $0x120] sm:$0x33]
      %v7470 = vld [vmem:[%s7 + $0x128] sm:$0x33]
      %v7471 = vld [vmem:[%s7 + $0x130] sm:$0x33]
      %v7472 = vld [vmem:[%s8] sm:$0xff]
      %v7473 = vld [vmem:[%s8 + $0x8] sm:$0xff]
      %v7474 = vld [vmem:[%s8 + $0x10] sm:$0xff]
      %v7475 = vld [vmem:[%s8 + $0x18] sm:$0xff]
      %v7476 = vld [vmem:[%s8 + $0x20] sm:$0xff]
      %v7477 = vld [vmem:[%s8 + $0x28] sm:$0xff]
      %v7478 = vld [vmem:[%s8 + $0x30] sm:$0xff]
      %v7479 = vld [vmem:[%s8 + $0x38] sm:$0xff]
      %v7480 = vld [vmem:[%s8 + $0x40] sm:$0xff]
      %v7481 = vld [vmem:[%s8 + $0x48] sm:$0xff]
      %v7482 = vld [vmem:[%s8 + $0x50] sm:$0xff]
      %v7483 = vld [vmem:[%s8 + $0x58] sm:$0xff]
      %v7484 = vld [vmem:[%s8 + $0x60] sm:$0xf]
      %7486 = vset.pattern.permute.xlu0 0
      %7487 = vperm.xlu0 %7486, %v7472
      %v7488 = vpop.permute.xlu0 %7487
      %7491 = vset.pattern.permute.xlu0 0
      %7492 = vperm.xlu0 %7491, %v7473
      %v7493 = vpop.permute.xlu0 %7492
      %7496 = vset.pattern.permute.xlu0 0
      %7497 = vperm.xlu0 %7496, %v7474
      %v7498 = vpop.permute.xlu0 %7497
      %7501 = vset.pattern.permute.xlu0 0
      %7502 = vperm.xlu0 %7501, %v7475
      %v7503 = vpop.permute.xlu0 %7502
      %7506 = vset.pattern.permute.xlu0 0
      %7507 = vperm.xlu0 %7506, %v7476
      %v7508 = vpop.permute.xlu0 %7507
      %7511 = vset.pattern.permute.xlu0 0
      %7512 = vperm.xlu0 %7511, %v7477
      %v7513 = vpop.permute.xlu0 %7512
      %7516 = vset.pattern.permute.xlu0 0
      %7517 = vperm.xlu0 %7516, %v7478
      %v7518 = vpop.permute.xlu0 %7517
      %7521 = vset.pattern.permute.xlu0 0
      %7522 = vperm.xlu0 %7521, %v7479
      %v7523 = vpop.permute.xlu0 %7522
      %7526 = vset.pattern.permute.xlu0 0
      %7527 = vperm.xlu0 %7526, %v7480
      %v7528 = vpop.permute.xlu0 %7527
      %7531 = vset.pattern.permute.xlu0 0
      %7532 = vperm.xlu0 %7531, %v7481
      %v7533 = vpop.permute.xlu0 %7532
      %7536 = vset.pattern.permute.xlu0 0
      %7537 = vperm.xlu0 %7536, %v7482
      %v7538 = vpop.permute.xlu0 %7537
      %7541 = vset.pattern.permute.xlu0 0
      %7542 = vperm.xlu0 %7541, %v7483
      %v7543 = vpop.permute.xlu0 %7542
      %7546 = vset.pattern.permute.xlu0 0
      %7547 = vperm.xlu0 %7546, %v7484
      %v7548 = vpop.permute.xlu0 %7547
      %v7589 = vunpack.c.l.b16 %v7433
      %v7590 = vunpack.c.h.b16 %v7433
      %v7591 = vunpack.c.l.b16 %v7434
      %v7592 = vunpack.c.h.b16 %v7434
      %v7593 = vunpack.c.l.b16 %v7435
      %v7594 = vunpack.c.h.b16 %v7435
      %v7595 = vunpack.c.l.b16 %v7436
      %v7596 = vunpack.c.h.b16 %v7436
      %v7597 = vunpack.c.l.b16 %v7437
      %v7598 = vunpack.c.h.b16 %v7437
      %v7599 = vunpack.c.l.b16 %v7438
      %v7600 = vunpack.c.h.b16 %v7438
      %v7601 = vunpack.c.l.b16 %v7439
      %v7602 = vunpack.c.h.b16 %v7439
      %v7603 = vunpack.c.l.b16 %v7440
      %v7604 = vunpack.c.h.b16 %v7440
      %v7605 = vunpack.c.l.b16 %v7441
      %v7606 = vunpack.c.h.b16 %v7441
      %v7607 = vunpack.c.l.b16 %v7442
      %v7608 = vunpack.c.h.b16 %v7442
      %v7609 = vunpack.c.l.b16 %v7443
      %v7610 = vunpack.c.h.b16 %v7443
      %v7611 = vunpack.c.l.b16 %v7444
      %v7612 = vunpack.c.h.b16 %v7444
      %v7613 = vunpack.c.l.b16 %v7445
      %v7614 = vunpack.c.h.b16 %v7445
      %v7615 = vunpack.c.l.b16 %v7446
      %v7616 = vunpack.c.h.b16 %v7446
      %v7617 = vunpack.c.l.b16 %v7447
      %v7618 = vunpack.c.h.b16 %v7447
      %v7619 = vunpack.c.l.b16 %v7448
      %v7620 = vunpack.c.h.b16 %v7448
      %v7621 = vunpack.c.l.b16 %v7449
      %v7622 = vunpack.c.h.b16 %v7449
      %v7623 = vunpack.c.l.b16 %v7450
      %v7624 = vunpack.c.h.b16 %v7450
      %v7625 = vunpack.c.l.b16 %v7451
      %v7626 = vunpack.c.h.b16 %v7451
      %v7627 = vunpack.c.l.b16 %v7452
      %v7628 = vunpack.c.h.b16 %v7452
      %v7629 = vunpack.c.l.b16 %v7453
      %v7630 = vunpack.c.h.b16 %v7453
      %v7631 = vunpack.c.l.b16 %v7454
      %v7632 = vunpack.c.h.b16 %v7454
      %v7633 = vunpack.c.l.b16 %v7455
      %v7634 = vunpack.c.h.b16 %v7455
      %v7635 = vunpack.c.l.b16 %v7456
      %v7636 = vunpack.c.h.b16 %v7456
      %v7637 = vunpack.c.l.b16 %v7457
      %v7638 = vunpack.c.h.b16 %v7457
      %v7639 = vunpack.c.l.b16 %v7458
      %v7640 = vunpack.c.h.b16 %v7458
      %v7641 = vunpack.c.l.b16 %v7459
      %v7642 = vunpack.c.h.b16 %v7459
      %v7643 = vunpack.c.l.b16 %v7460
      %v7644 = vunpack.c.h.b16 %v7460
      %v7645 = vunpack.c.l.b16 %v7461
      %v7646 = vunpack.c.h.b16 %v7461
      %v7647 = vunpack.c.l.b16 %v7462
      %v7648 = vunpack.c.h.b16 %v7462
      %v7649 = vunpack.c.l.b16 %v7463
      %v7650 = vunpack.c.h.b16 %v7463
      %v7651 = vunpack.c.l.b16 %v7464
      %v7652 = vunpack.c.h.b16 %v7464
      %v7653 = vunpack.c.l.b16 %v7465
      %v7654 = vunpack.c.h.b16 %v7465
      %v7655 = vunpack.c.l.b16 %v7466
      %v7656 = vunpack.c.h.b16 %v7466
      %v7657 = vunpack.c.l.b16 %v7467
      %v7658 = vunpack.c.h.b16 %v7467
      %v7659 = vunpack.c.l.b16 %v7468
      %v7660 = vunpack.c.h.b16 %v7468
      %v7661 = vunpack.c.l.b16 %v7469
      %v7662 = vunpack.c.h.b16 %v7469
      %v7663 = vunpack.c.l.b16 %v7470
      %v7664 = vunpack.c.h.b16 %v7470
      %v7665 = vunpack.c.l.b16 %v7471
      %v7666 = vunpack.c.h.b16 %v7471
      %v7667 = vpack.c.b16 %v7595, %v7589
      %v7668 = vpack.c.b16 %v7596, %v7590
      %v7669 = vpack.c.b16 %v7597, %v7591
      %v7670 = vpack.c.b16 %v7598, %v7592
      %v7671 = vpack.c.b16 %v7599, %v7593
      %v7672 = vpack.c.b16 %v7600, %v7594
      %v7673 = vpack.c.b16 %v7607, %v7601
      %v7674 = vpack.c.b16 %v7608, %v7602
      %v7675 = vpack.c.b16 %v7609, %v7603
      %v7676 = vpack.c.b16 %v7610, %v7604
      %v7677 = vpack.c.b16 %v7611, %v7605
      %v7678 = vpack.c.b16 %v7612, %v7606
      %v7679 = vpack.c.b16 %v7619, %v7613
      %v7680 = vpack.c.b16 %v7620, %v7614
      %v7681 = vpack.c.b16 %v7621, %v7615
      %v7682 = vpack.c.b16 %v7622, %v7616
      %v7683 = vpack.c.b16 %v7623, %v7617
      %v7684 = vpack.c.b16 %v7624, %v7618
      %v7685 = vpack.c.b16 %v7631, %v7625
      %v7686 = vpack.c.b16 %v7632, %v7626
      %v7687 = vpack.c.b16 %v7633, %v7627
      %v7688 = vpack.c.b16 %v7634, %v7628
      %v7689 = vpack.c.b16 %v7635, %v7629
      %v7690 = vpack.c.b16 %v7636, %v7630
      %v7691 = vpack.c.b16 %v7643, %v7637
      %v7692 = vpack.c.b16 %v7644, %v7638
      %v7693 = vpack.c.b16 %v7645, %v7639
      %v7694 = vpack.c.b16 %v7646, %v7640
      %v7695 = vpack.c.b16 %v7647, %v7641
      %v7696 = vpack.c.b16 %v7648, %v7642
      %v7697 = vpack.c.b16 %v7655, %v7649
      %v7698 = vpack.c.b16 %v7656, %v7650
      %v7699 = vpack.c.b16 %v7657, %v7651
      %v7700 = vpack.c.b16 %v7658, %v7652
      %v7701 = vpack.c.b16 %v7659, %v7653
      %v7702 = vpack.c.b16 %v7660, %v7654
      %v7703 = vpack.c.b16 %v7661, %v7661
      %v7704 = vpack.c.b16 %v7662, %v7662
      %v7705 = vpack.c.b16 %v7663, %v7663
      %v7706 = vpack.c.b16 %v7664, %v7664
      %v7707 = vpack.c.b16 %v7665, %v7665
      %v7708 = vpack.c.b16 %v7666, %v7666
      %vm7744 = vcmask 80896
      %v7746 = vsel %vm7744, %v7672, 0
      %v7749 = vsel %vm7744, %v7678, 0
      %v7752 = vsel %vm7744, %v7684, 0
      %v7755 = vsel %vm7744, %v7690, 0
      %v7758 = vsel %vm7744, %v7696, 0
      %v7761 = vsel %vm7744, %v7702, 0
      %v7764 = vsel %vm7744, %v7708, 0
      %v7767 = vsel %vm3460, %v7248, 0
      %v7770 = vsel %vm3460, %v7250, 0
      %v7773 = vsel %vm3460, %v7252, 0
      %v7776 = vsel %vm3460, %v7254, 0
      %7778 = vmatprep.subr.bf16.mxu0 %v6665
      %7779 = vmatpush1.bf16.msra.mxu0 %v6646
      %7780 = vmatprep.subr.bf16.mxu0 %v6667
      %7781 = vmatpush1.bf16.msra.mxu0 %v6648
      %7782 = vmatprep.subr.bf16.mxu0 %v6669
      %7783 = vmatpush1.bf16.msra.mxu0 %v6650
      %7784 = vmatprep.subr.bf16.mxu0 %v7267
      %7785 = vmatpush1.bf16.msra.mxu0 %v7264
      %7786 = vmatprep.subr.bf16.mxu0 %v6842
      %7787 = vmatpush1.bf16.msra.mxu0 %v6840
      %7788 = vmatprep.subr.bf16.mxu0 %v6850
      %7789 = vmatpush1.bf16.msra.mxu0 %v6848
      %7790 = vmatprep.subr.bf16.mxu0 %v7281
      %7791 = vmatpush1.bf16.msra.mxu0 %v7277
      %7792 = vmatprep.subr.bf16.mxu0 %v6882
      %7793 = vmatpush1.bf16.msra.mxu0 %v6880
      %7794 = vmatprep.subr.bf16.mxu0 %v6890
      %7795 = vmatpush1.bf16.msra.mxu0 %v6888
      %7796 = vmatprep.subr.bf16.mxu0 %v7297
      %7797 = vmatpush1.bf16.msra.mxu0 %v7293
      %7798 = vmatprep.subr.bf16.mxu0 %v6918
      %7799 = vmatpush1.bf16.msra.mxu0 %v6916
      %7800 = vmatprep.subr.bf16.mxu0 %v6926
      %7801 = vmatpush1.bf16.msra.mxu0 %v6924
      %7802 = vmatprep.subr.bf16.mxu0 %v7313
      %7803 = vmatpush1.bf16.msra.mxu0 %v7309
      %7804 = vmatprep.subr.bf16.mxu0 %v6954
      %7805 = vmatpush1.bf16.msra.mxu0 %v6952
      %7806 = vmatprep.subr.bf16.mxu0 %v6962
      %7807 = vmatpush1.bf16.msra.mxu0 %v6960
      %7808 = vmatprep.subr.bf16.mxu0 %v7329
      %7809 = vmatpush1.bf16.msra.mxu0 %v7325
      %7810 = vmatprep.mubr.bf16.mxu0 %v7668
      %7811 = vmatmul.mubr.bf16.gmra.mrb[0].mxu0 %v7667
      %v7812 = vpop.f32.mrb[0].mxu0
      %v7813 = vadd.f32 %v7488, %v7812
      %v7814 = vpop.f32.mrb[0].mxu0
      %v7815 = vadd.f32 %v7488, %v7814
      %v7816 = vpop.f32.mrb[0].mxu0
      %v7817 = vadd.f32 %v7493, %v7816
      %v7818 = vpop.f32.mrb[0].mxu0
      %v7819 = vadd.f32 %v7493, %v7818
      %7820 = vmatprep.mubr.bf16.mxu0 %v7674
      %7821 = vmatmul.mubr.bf16.gmra.mrb[0].mxu0 %v7673
      %v7822 = vpop.f32.mrb[0].mxu0
      %v7823 = vadd.f32 %v7498, %v7822
      %v7824 = vpop.f32.mrb[0].mxu0
      %v7825 = vadd.f32 %v7498, %v7824
      %v7826 = vpop.f32.mrb[0].mxu0
      %v7827 = vadd.f32 %v7503, %v7826
      %v7828 = vpop.f32.mrb[0].mxu0
      %v7829 = vadd.f32 %v7503, %v7828
      %7830 = vmatprep.mubr.bf16.mxu0 %v7680
      %7831 = vmatmul.mubr.bf16.gmra.mrb[0].mxu0 %v7679
      %v7832 = vpop.f32.mrb[0].mxu0
      %v7833 = vadd.f32 %v7508, %v7832
      %v7834 = vpop.f32.mrb[0].mxu0
      %v7835 = vadd.f32 %v7508, %v7834
      %v7836 = vpop.f32.mrb[0].mxu0
      %v7837 = vadd.f32 %v7513, %v7836
      %v7838 = vpop.f32.mrb[0].mxu0
      %v7839 = vadd.f32 %v7513, %v7838
      %7840 = vmatprep.mubr.bf16.mxu0 %v7686
      %7841 = vmatmul.mubr.bf16.gmra.mrb[0].mxu0 %v7685
      %v7842 = vpop.f32.mrb[0].mxu0
      %v7843 = vadd.f32 %v7518, %v7842
      %v7844 = vpop.f32.mrb[0].mxu0
      %v7845 = vadd.f32 %v7518, %v7844
      %v7846 = vpop.f32.mrb[0].mxu0
      %v7847 = vadd.f32 %v7523, %v7846
      %v7848 = vpop.f32.mrb[0].mxu0
      %v7849 = vadd.f32 %v7523, %v7848
      %7850 = vmatprep.mubr.bf16.mxu0 %v7692
      %7851 = vmatmul.mubr.bf16.gmra.mrb[0].mxu0 %v7691
      %v7852 = vpop.f32.mrb[0].mxu0
      %v7853 = vadd.f32 %v7528, %v7852
      %v7854 = vpop.f32.mrb[0].mxu0
      %v7855 = vadd.f32 %v7528, %v7854
      %v7856 = vpop.f32.mrb[0].mxu0
      %v7857 = vadd.f32 %v7533, %v7856
      %v7858 = vpop.f32.mrb[0].mxu0
      %v7859 = vadd.f32 %v7533, %v7858
      %7860 = vmatprep.mubr.bf16.mxu0 %v7698
      %7861 = vmatmul.mubr.bf16.gmra.mrb[0].mxu0 %v7697
      %v7862 = vpop.f32.mrb[0].mxu0
      %v7863 = vadd.f32 %v7538, %v7862
      %v7864 = vpop.f32.mrb[0].mxu0
      %v7865 = vadd.f32 %v7538, %v7864
      %v7866 = vpop.f32.mrb[0].mxu0
      %v7867 = vadd.f32 %v7543, %v7866
      %v7868 = vpop.f32.mrb[0].mxu0
      %v7869 = vadd.f32 %v7543, %v7868
      %7870 = vmatprep.mubr.bf16.mxu0 %v7704
      %7871 = vmatmul.mubr.bf16.gmra.mrb[0].mxu0 %v7703
      %v7872 = vpop.f32.mrb[0].mxu0
      %v7873 = vadd.f32 %v7548, %v7872
      %v7874 = vpop.f32.mrb[0].mxu0
      %v7875 = vadd.f32 %v7548, %v7874
      %v7876 = vpop.f32.mrb[0].mxu0
      %v7877 = vpop.f32.mrb[0].mxu0
      %7878 = vdwg.mxu0
      %7879 = vmatprep.subr.bf16.mxu0 %v6990
      %7880 = vmatpush1.bf16.msra.mxu0 %v6988
      %7881 = vmatprep.subr.bf16.mxu0 %v6998
      %7882 = vmatpush1.bf16.msra.mxu0 %v6996
      %7883 = vmatprep.subr.bf16.mxu0 %v7345
      %7884 = vmatpush1.bf16.msra.mxu0 %v7341
      %7885 = vmatprep.subr.bf16.mxu0 %v7026
      %7886 = vmatpush1.bf16.msra.mxu0 %v7024
      %7887 = vmatprep.subr.bf16.mxu0 %v7034
      %7888 = vmatpush1.bf16.msra.mxu0 %v7032
      %7889 = vmatprep.subr.bf16.mxu0 %v7361
      %7890 = vmatpush1.bf16.msra.mxu0 %v7357
      %7891 = vmatprep.subr.bf16.mxu0 %v7066
      %7892 = vmatpush1.bf16.msra.mxu0 %v7064
      %7893 = vmatprep.subr.bf16.mxu0 %v7074
      %7894 = vmatpush1.bf16.msra.mxu0 %v7072
      %7895 = vmatprep.subr.bf16.mxu0 %v7082
      %7896 = vmatpush1.bf16.msra.mxu0 %v7080
      %7897 = vmatprep.subr.bf16.mxu0 %v6637
      %7898 = vmatpush1.bf16.msra.mxu0 %v6619
      %7899 = vmatprep.subr.bf16.mxu0 %v6638
      %7900 = vmatpush1.bf16.msra.mxu0 %v6620
      %7901 = vmatprep.subr.bf16.mxu0 %v6639
      %7902 = vmatpush1.bf16.msra.mxu0 %v6621
      %7903 = vmatprep.subr.bf16.mxu0 %v7377
      %7904 = vmatpush1.bf16.msra.mxu0 %v7373
      %7905 = vmatprep.subr.bf16.mxu0 %v7114
      %7906 = vmatpush1.bf16.msra.mxu0 %v7112
      %7907 = vmatprep.subr.bf16.mxu0 %v7122
      %7908 = vmatpush1.bf16.msra.mxu0 %v7120
      %7909 = vmatprep.subr.bf16.mxu0 %v7391
      %7910 = vmatpush1.bf16.msra.mxu0 %v7387
      %7911 = vmatprep.mubr.bf16.mxu0 %v7670
      %7912 = vmatmul.mubr.bf16.gmra.mrb[0].mxu0 %v7669
      %v7913 = vpop.f32.mrb[0].mxu0
      %v7914 = vadd.f32 %v7813, %v7913
      %v7915 = vpop.f32.mrb[0].mxu0
      %v7916 = vadd.f32 %v7815, %v7915
      %v7917 = vpop.f32.mrb[0].mxu0
      %v7918 = vadd.f32 %v7817, %v7917
      %v7919 = vpop.f32.mrb[0].mxu0
      %v7920 = vadd.f32 %v7819, %v7919
      %7921 = vmatprep.mubr.bf16.mxu0 %v7676
      %7922 = vmatmul.mubr.bf16.gmra.mrb[0].mxu0 %v7675
      %v7923 = vpop.f32.mrb[0].mxu0
      %v7924 = vadd.f32 %v7823, %v7923
      %v7925 = vpop.f32.mrb[0].mxu0
      %v7926 = vadd.f32 %v7825, %v7925
      %v7927 = vpop.f32.mrb[0].mxu0
      %v7928 = vadd.f32 %v7827, %v7927
      %v7929 = vpop.f32.mrb[0].mxu0
      %v7930 = vadd.f32 %v7829, %v7929
      %7931 = vmatprep.mubr.bf16.mxu0 %v7682
      %7932 = vmatmul.mubr.bf16.gmra.mrb[0].mxu0 %v7681
      %v7933 = vpop.f32.mrb[0].mxu0
      %v7934 = vadd.f32 %v7833, %v7933
      %v7935 = vpop.f32.mrb[0].mxu0
      %v7936 = vadd.f32 %v7835, %v7935
      %v7937 = vpop.f32.mrb[0].mxu0
      %v7938 = vadd.f32 %v7837, %v7937
      %v7939 = vpop.f32.mrb[0].mxu0
      %v7940 = vadd.f32 %v7839, %v7939
      %7941 = vmatprep.mubr.bf16.mxu0 %v7688
      %7942 = vmatmul.mubr.bf16.gmra.mrb[0].mxu0 %v7687
      %v7943 = vpop.f32.mrb[0].mxu0
      %v7944 = vadd.f32 %v7843, %v7943
      %v7945 = vpop.f32.mrb[0].mxu0
      %v7946 = vadd.f32 %v7845, %v7945
      %v7947 = vpop.f32.mrb[0].mxu0
      %v7948 = vadd.f32 %v7847, %v7947
      %v7949 = vpop.f32.mrb[0].mxu0
      %v7950 = vadd.f32 %v7849, %v7949
      %7951 = vmatprep.mubr.bf16.mxu0 %v7694
      %7952 = vmatmul.mubr.bf16.gmra.mrb[0].mxu0 %v7693
      %v7953 = vpop.f32.mrb[0].mxu0
      %v7954 = vadd.f32 %v7853, %v7953
      %v7955 = vpop.f32.mrb[0].mxu0
      %v7956 = vadd.f32 %v7855, %v7955
      %v7957 = vpop.f32.mrb[0].mxu0
      %v7958 = vadd.f32 %v7857, %v7957
      %v7959 = vpop.f32.mrb[0].mxu0
      %v7960 = vadd.f32 %v7859, %v7959
      %7961 = vmatprep.mubr.bf16.mxu0 %v7700
      %7962 = vmatmul.mubr.bf16.gmra.mrb[0].mxu0 %v7699
      %v7963 = vpop.f32.mrb[0].mxu0
      %v7964 = vadd.f32 %v7863, %v7963
      %v7965 = vpop.f32.mrb[0].mxu0
      %v7966 = vadd.f32 %v7865, %v7965
      %v7967 = vpop.f32.mrb[0].mxu0
      %v7968 = vadd.f32 %v7867, %v7967
      %v7969 = vpop.f32.mrb[0].mxu0
      %v7970 = vadd.f32 %v7869, %v7969
      %7971 = vmatprep.mubr.bf16.mxu0 %v7706
      %7972 = vmatmul.mubr.bf16.gmra.mrb[0].mxu0 %v7705
      %v7973 = vpop.f32.mrb[0].mxu0
      %v7974 = vadd.f32 %v7873, %v7973
      %v7975 = vpop.f32.mrb[0].mxu0
      %v7976 = vadd.f32 %v7875, %v7975
      %v7977 = vpop.f32.mrb[0].mxu0
      %v7978 = vpop.f32.mrb[0].mxu0
      %7979 = vdwg.mxu0
      %7980 = vmatprep.subr.bf16.mxu0 %v7154
      %7981 = vmatpush1.bf16.msra.mxu0 %v7152
      %7982 = vmatprep.subr.bf16.mxu0 %v7162
      %7983 = vmatpush1.bf16.msra.mxu0 %v7160
      %7984 = vmatprep.subr.bf16.mxu0 %v7407
      %7985 = vmatpush1.bf16.msra.mxu0 %v7403
      %7986 = vmatprep.subr.bf16.mxu0 %v7194
      %7987 = vmatpush1.bf16.msra.mxu0 %v7192
      %7988 = vmatprep.subr.bf16.mxu0 %v7202
      %7989 = vmatpush1.bf16.msra.mxu0 %v7200
      %7990 = vmatprep.subr.bf16.mxu0 %v7423
      %7991 = vmatpush1.bf16.msra.mxu0 %v7419
      %7992 = vmatprep.subr.bf16.mxu0 %v7234
      %7993 = vmatpush1.bf16.msra.mxu0 %v7232
      %7994 = vmatprep.subr.bf16.mxu0 %v7242
      %7995 = vmatpush1.bf16.msra.mxu0 %v7240
      %7996 = vmatprep.subr.bf16.mxu0 %v7770
      %7997 = vmatpush1.bf16.msra.mxu0 %v7767
      %7998 = vmatprep.subr.bf16.mxu0 0
      %7999 = vmatpush1.bf16.msra.mxu0 0
      %8000 = vmatprep.subr.bf16.mxu0 0
      %8001 = vmatpush1.bf16.msra.mxu0 0
      %8002 = vmatprep.subr.bf16.mxu0 0
      %8003 = vmatpush1.bf16.msra.mxu0 0
      %8004 = vmatprep.subr.bf16.mxu0 0
      %8005 = vmatpush1.bf16.msra.mxu0 0
      %8006 = vmatprep.subr.bf16.mxu0 0
      %8007 = vmatpush1.bf16.msra.mxu0 0
      %8008 = vmatprep.subr.bf16.mxu0 0
      %8009 = vmatpush1.bf16.msra.mxu0 0
      %8010 = vmatprep.subr.bf16.mxu0 0
      %8011 = vmatpush1.bf16.msra.mxu0 0
      %8012 = vmatprep.mubr.bf16.mxu0 %v7746
      %8013 = vmatmul.mubr.bf16.gmra.mrb[0].mxu0 %v7671
      %v8014 = vpop.f32.mrb[0].mxu0
      %v8015 = vadd.f32 %v7914, %v8014
      %v8016 = vpop.f32.mrb[0].mxu0
      %v8017 = vadd.f32 %v7916, %v8016
      %v8018 = vpop.f32.mrb[0].mxu0
      %v8019 = vadd.f32 %v7918, %v8018
      %v8020 = vpop.f32.mrb[0].mxu0
      %v8021 = vadd.f32 %v7920, %v8020
      %8022 = vmatprep.mubr.bf16.mxu0 %v7749
      %8023 = vmatmul.mubr.bf16.gmra.mrb[0].mxu0 %v7677
      %v8024 = vpop.f32.mrb[0].mxu0
      %v8025 = vadd.f32 %v7924, %v8024
      %v8026 = vpop.f32.mrb[0].mxu0
      %v8027 = vadd.f32 %v7926, %v8026
      %v8028 = vpop.f32.mrb[0].mxu0
      %v8029 = vadd.f32 %v7928, %v8028
      %v8030 = vpop.f32.mrb[0].mxu0
      %v8031 = vadd.f32 %v7930, %v8030
      %8032 = vmatprep.mubr.bf16.mxu0 %v7752
      %8033 = vmatmul.mubr.bf16.gmra.mrb[0].mxu0 %v7683
      %v8034 = vpop.f32.mrb[0].mxu0
      %v8035 = vadd.f32 %v7934, %v8034
      %v8036 = vpop.f32.mrb[0].mxu0
      %v8037 = vadd.f32 %v7936, %v8036
      %v8038 = vpop.f32.mrb[0].mxu0
      %v8039 = vadd.f32 %v7938, %v8038
      %v8040 = vpop.f32.mrb[0].mxu0
      %v8041 = vadd.f32 %v7940, %v8040
      %8042 = vmatprep.mubr.bf16.mxu0 %v7755
      %8043 = vmatmul.mubr.bf16.gmra.mrb[0].mxu0 %v7689
      %v8044 = vpop.f32.mrb[0].mxu0
      %v8045 = vadd.f32 %v7944, %v8044
      %v8046 = vpop.f32.mrb[0].mxu0
      %v8047 = vadd.f32 %v7946, %v8046
      %v8048 = vpop.f32.mrb[0].mxu0
      %v8049 = vadd.f32 %v7948, %v8048
      %v8050 = vpop.f32.mrb[0].mxu0
      %v8051 = vadd.f32 %v7950, %v8050
      %8052 = vmatprep.mubr.bf16.mxu0 %v7758
      %8053 = vmatmul.mubr.bf16.gmra.mrb[0].mxu0 %v7695
      %v8054 = vpop.f32.mrb[0].mxu0
      %v8055 = vadd.f32 %v7954, %v8054
      %v8056 = vpop.f32.mrb[0].mxu0
      %v8057 = vadd.f32 %v7956, %v8056
      %v8058 = vpop.f32.mrb[0].mxu0
      %v8059 = vadd.f32 %v7958, %v8058
      %v8060 = vpop.f32.mrb[0].mxu0
      %v8061 = vadd.f32 %v7960, %v8060
      %8062 = vmatprep.mubr.bf16.mxu0 %v7761
      %8063 = vmatmul.mubr.bf16.gmra.mrb[0].mxu0 %v7701
      %v8064 = vpop.f32.mrb[0].mxu0
      %v8065 = vadd.f32 %v7964, %v8064
      %v8066 = vpop.f32.mrb[0].mxu0
      %v8067 = vadd.f32 %v7966, %v8066
      %v8068 = vpop.f32.mrb[0].mxu0
      %v8069 = vadd.f32 %v7968, %v8068
      %v8070 = vpop.f32.mrb[0].mxu0
      %v8071 = vadd.f32 %v7970, %v8070
      %8072 = vmatprep.mubr.bf16.mxu0 %v7764
      %8073 = vmatmul.mubr.bf16.gmra.mrb[0].mxu0 %v7707
      %v8074 = vpop.f32.mrb[0].mxu0
      %v8075 = vadd.f32 %v7974, %v8074
      %v8076 = vpop.f32.mrb[0].mxu0
      %v8077 = vadd.f32 %v7976, %v8076
      %v8078 = vpop.f32.mrb[0].mxu0
      %v8079 = vpop.f32.mrb[0].mxu0
      %8080 = vdwg.mxu0
      %8081 = vmatprep.subr.bf16.mxu0 %v6703
      %8082 = vmatpush1.bf16.msra.mxu0 %v6684
      %8083 = vmatprep.subr.bf16.mxu0 %v6705
      %8084 = vmatpush1.bf16.msra.mxu0 %v6686
      %8085 = vmatprep.subr.bf16.mxu0 %v6707
      %8086 = vmatpush1.bf16.msra.mxu0 %v6688
      %8087 = vmatprep.subr.bf16.mxu0 %v7273
      %8088 = vmatpush1.bf16.msra.mxu0 %v7270
      %8089 = vmatprep.subr.bf16.mxu0 %v6846
      %8090 = vmatpush1.bf16.msra.mxu0 %v6844
      %8091 = vmatprep.subr.bf16.mxu0 %v6854
      %8092 = vmatpush1.bf16.msra.mxu0 %v6852
      %8093 = vmatprep.subr.bf16.mxu0 %v7289
      %8094 = vmatpush1.bf16.msra.mxu0 %v7285
      %8095 = vmatprep.subr.bf16.mxu0 %v6886
      %8096 = vmatpush1.bf16.msra.mxu0 %v6884
      %8097 = vmatprep.subr.bf16.mxu0 %v6894
      %8098 = vmatpush1.bf16.msra.mxu0 %v6892
      %8099 = vmatprep.subr.bf16.mxu0 %v7305
      %8100 = vmatpush1.bf16.msra.mxu0 %v7301
      %8101 = vmatprep.subr.bf16.mxu0 %v6922
      %8102 = vmatpush1.bf16.msra.mxu0 %v6920
      %8103 = vmatprep.subr.bf16.mxu0 %v6930
      %8104 = vmatpush1.bf16.msra.mxu0 %v6928
      %8105 = vmatprep.subr.bf16.mxu0 %v7321
      %8106 = vmatpush1.bf16.msra.mxu0 %v7317
      %8107 = vmatprep.subr.bf16.mxu0 %v6958
      %8108 = vmatpush1.bf16.msra.mxu0 %v6956
      %8109 = vmatprep.subr.bf16.mxu0 %v6966
      %8110 = vmatpush1.bf16.msra.mxu0 %v6964
      %8111 = vmatprep.subr.bf16.mxu0 %v7337
      %8112 = vmatpush1.bf16.msra.mxu0 %v7333
      %8113 = vmatprep.mubr.bf16.mxu0 %v7668
      %8114 = vmatmul.mubr.bf16.gmra.mrb[0].mxu0 %v7667
      %v8115 = vpop.f32.mrb[0].mxu0
      %v8116 = vadd.f32 %v7488, %v8115
      %v8117 = vpop.f32.mrb[0].mxu0
      %v8118 = vadd.f32 %v7488, %v8117
      %v8119 = vpop.f32.mrb[0].mxu0
      %v8120 = vadd.f32 %v7493, %v8119
      %v8121 = vpop.f32.mrb[0].mxu0
      %v8122 = vadd.f32 %v7493, %v8121
      %8123 = vmatprep.mubr.bf16.mxu0 %v7674
      %8124 = vmatmul.mubr.bf16.gmra.mrb[0].mxu0 %v7673
      %v8125 = vpop.f32.mrb[0].mxu0
      %v8126 = vadd.f32 %v7498, %v8125
      %v8127 = vpop.f32.mrb[0].mxu0
      %v8128 = vadd.f32 %v7498, %v8127
      %v8129 = vpop.f32.mrb[0].mxu0
      %v8130 = vadd.f32 %v7503, %v8129
      %v8131 = vpop.f32.mrb[0].mxu0
      %v8132 = vadd.f32 %v7503, %v8131
      %8133 = vmatprep.mubr.bf16.mxu0 %v7680
      %8134 = vmatmul.mubr.bf16.gmra.mrb[0].mxu0 %v7679
      %v8135 = vpop.f32.mrb[0].mxu0
      %v8136 = vadd.f32 %v7508, %v8135
      %v8137 = vpop.f32.mrb[0].mxu0
      %v8138 = vadd.f32 %v7508, %v8137
      %v8139 = vpop.f32.mrb[0].mxu0
      %v8140 = vadd.f32 %v7513, %v8139
      %v8141 = vpop.f32.mrb[0].mxu0
      %v8142 = vadd.f32 %v7513, %v8141
      %8143 = vmatprep.mubr.bf16.mxu0 %v7686
      %8144 = vmatmul.mubr.bf16.gmra.mrb[0].mxu0 %v7685
      %v8145 = vpop.f32.mrb[0].mxu0
      %v8146 = vadd.f32 %v7518, %v8145
      %v8147 = vpop.f32.mrb[0].mxu0
      %v8148 = vadd.f32 %v7518, %v8147
      %v8149 = vpop.f32.mrb[0].mxu0
      %v8150 = vadd.f32 %v7523, %v8149
      %v8151 = vpop.f32.mrb[0].mxu0
      %v8152 = vadd.f32 %v7523, %v8151
      %8153 = vmatprep.mubr.bf16.mxu0 %v7692
      %8154 = vmatmul.mubr.bf16.gmra.mrb[0].mxu0 %v7691
      %v8155 = vpop.f32.mrb[0].mxu0
      %v8156 = vadd.f32 %v7528, %v8155
      %v8157 = vpop.f32.mrb[0].mxu0
      %v8158 = vadd.f32 %v7528, %v8157
      %v8159 = vpop.f32.mrb[0].mxu0
      %v8160 = vadd.f32 %v7533, %v8159
      %v8161 = vpop.f32.mrb[0].mxu0
      %v8162 = vadd.f32 %v7533, %v8161
      %8163 = vmatprep.mubr.bf16.mxu0 %v7698
      %8164 = vmatmul.mubr.bf16.gmra.mrb[0].mxu0 %v7697
      %v8165 = vpop.f32.mrb[0].mxu0
      %v8166 = vadd.f32 %v7538, %v8165
      %v8167 = vpop.f32.mrb[0].mxu0
      %v8168 = vadd.f32 %v7538, %v8167
      %v8169 = vpop.f32.mrb[0].mxu0
      %v8170 = vadd.f32 %v7543, %v8169
      %v8171 = vpop.f32.mrb[0].mxu0
      %v8172 = vadd.f32 %v7543, %v8171
      %8173 = vmatprep.mubr.bf16.mxu0 %v7704
      %8174 = vmatmul.mubr.bf16.gmra.mrb[0].mxu0 %v7703
      %v8175 = vpop.f32.mrb[0].mxu0
      %v8176 = vadd.f32 %v7548, %v8175
      %v8177 = vpop.f32.mrb[0].mxu0
      %v8178 = vadd.f32 %v7548, %v8177
      %v8179 = vpop.f32.mrb[0].mxu0
      %v8180 = vpop.f32.mrb[0].mxu0
      %8181 = vdwg.mxu0
      %8182 = vmatprep.subr.bf16.mxu0 %v6994
      %8183 = vmatpush1.bf16.msra.mxu0 %v6992
      %8184 = vmatprep.subr.bf16.mxu0 %v7002
      %8185 = vmatpush1.bf16.msra.mxu0 %v7000
      %8186 = vmatprep.subr.bf16.mxu0 %v7353
      %8187 = vmatpush1.bf16.msra.mxu0 %v7349
      %8188 = vmatprep.subr.bf16.mxu0 %v7030
      %8189 = vmatpush1.bf16.msra.mxu0 %v7028
      %8190 = vmatprep.subr.bf16.mxu0 %v7038
      %8191 = vmatpush1.bf16.msra.mxu0 %v7036
      %8192 = vmatprep.subr.bf16.mxu0 %v7369
      %8193 = vmatpush1.bf16.msra.mxu0 %v7365
      %8194 = vmatprep.subr.bf16.mxu0 %v7070
      %8195 = vmatpush1.bf16.msra.mxu0 %v7068
      %8196 = vmatprep.subr.bf16.mxu0 %v7078
      %8197 = vmatpush1.bf16.msra.mxu0 %v7076
      %8198 = vmatprep.subr.bf16.mxu0 %v7086
      %8199 = vmatpush1.bf16.msra.mxu0 %v7084
      %8200 = vmatprep.subr.bf16.mxu0 %v6757
      %8201 = vmatpush1.bf16.msra.mxu0 %v6742
      %8202 = vmatprep.subr.bf16.mxu0 %v6759
      %8203 = vmatpush1.bf16.msra.mxu0 %v6744
      %8204 = vmatprep.subr.bf16.mxu0 %v6761
      %8205 = vmatpush1.bf16.msra.mxu0 %v6746
      %8206 = vmatprep.subr.bf16.mxu0 %v7383
      %8207 = vmatpush1.bf16.msra.mxu0 %v7380
      %8208 = vmatprep.subr.bf16.mxu0 %v7118
      %8209 = vmatpush1.bf16.msra.mxu0 %v7116
      %8210 = vmatprep.subr.bf16.mxu0 %v7126
      %8211 = vmatpush1.bf16.msra.mxu0 %v7124
      %8212 = vmatprep.subr.bf16.mxu0 %v7399
      %8213 = vmatpush1.bf16.msra.mxu0 %v7395
      %8214 = vmatprep.mubr.bf16.mxu0 %v7670
      %8215 = vmatmul.mubr.bf16.gmra.mrb[0].mxu0 %v7669
      %v8216 = vpop.f32.mrb[0].mxu0
      %v8217 = vadd.f32 %v8116, %v8216
      %v8218 = vpop.f32.mrb[0].mxu0
      %v8219 = vadd.f32 %v8118, %v8218
      %v8220 = vpop.f32.mrb[0].mxu0
      %v8221 = vadd.f32 %v8120, %v8220
      %v8222 = vpop.f32.mrb[0].mxu0
      %v8223 = vadd.f32 %v8122, %v8222
      %8224 = vmatprep.mubr.bf16.mxu0 %v7676
      %8225 = vmatmul.mubr.bf16.gmra.mrb[0].mxu0 %v7675
      %v8226 = vpop.f32.mrb[0].mxu0
      %v8227 = vadd.f32 %v8126, %v8226
      %v8228 = vpop.f32.mrb[0].mxu0
      %v8229 = vadd.f32 %v8128, %v8228
      %v8230 = vpop.f32.mrb[0].mxu0
      %v8231 = vadd.f32 %v8130, %v8230
      %v8232 = vpop.f32.mrb[0].mxu0
      %v8233 = vadd.f32 %v8132, %v8232
      %8234 = vmatprep.mubr.bf16.mxu0 %v7682
      %8235 = vmatmul.mubr.bf16.gmra.mrb[0].mxu0 %v7681
      %v8236 = vpop.f32.mrb[0].mxu0
      %v8237 = vadd.f32 %v8136, %v8236
      %v8238 = vpop.f32.mrb[0].mxu0
      %v8239 = vadd.f32 %v8138, %v8238
      %v8240 = vpop.f32.mrb[0].mxu0
      %v8241 = vadd.f32 %v8140, %v8240
      %v8242 = vpop.f32.mrb[0].mxu0
      %v8243 = vadd.f32 %v8142, %v8242
      %8244 = vmatprep.mubr.bf16.mxu0 %v7688
      %8245 = vmatmul.mubr.bf16.gmra.mrb[0].mxu0 %v7687
      %v8246 = vpop.f32.mrb[0].mxu0
      %v8247 = vadd.f32 %v8146, %v8246
      %v8248 = vpop.f32.mrb[0].mxu0
      %v8249 = vadd.f32 %v8148, %v8248
      %v8250 = vpop.f32.mrb[0].mxu0
      %v8251 = vadd.f32 %v8150, %v8250
      %v8252 = vpop.f32.mrb[0].mxu0
      %v8253 = vadd.f32 %v8152, %v8252
      %8254 = vmatprep.mubr.bf16.mxu0 %v7694
      %8255 = vmatmul.mubr.bf16.gmra.mrb[0].mxu0 %v7693
      %v8256 = vpop.f32.mrb[0].mxu0
      %v8257 = vadd.f32 %v8156, %v8256
      %v8258 = vpop.f32.mrb[0].mxu0
      %v8259 = vadd.f32 %v8158, %v8258
      %v8260 = vpop.f32.mrb[0].mxu0
      %v8261 = vadd.f32 %v8160, %v8260
      %v8262 = vpop.f32.mrb[0].mxu0
      %v8263 = vadd.f32 %v8162, %v8262
      %8264 = vmatprep.mubr.bf16.mxu0 %v7700
      %8265 = vmatmul.mubr.bf16.gmra.mrb[0].mxu0 %v7699
      %v8266 = vpop.f32.mrb[0].mxu0
      %v8267 = vadd.f32 %v8166, %v8266
      %v8268 = vpop.f32.mrb[0].mxu0
      %v8269 = vadd.f32 %v8168, %v8268
      %v8270 = vpop.f32.mrb[0].mxu0
      %v8271 = vadd.f32 %v8170, %v8270
      %v8272 = vpop.f32.mrb[0].mxu0
      %v8273 = vadd.f32 %v8172, %v8272
      %8274 = vmatprep.mubr.bf16.mxu0 %v7706
      %8275 = vmatmul.mubr.bf16.gmra.mrb[0].mxu0 %v7705
      %v8276 = vpop.f32.mrb[0].mxu0
      %v8277 = vadd.f32 %v8176, %v8276
      %v8278 = vpop.f32.mrb[0].mxu0
      %v8279 = vadd.f32 %v8178, %v8278
      %v8280 = vpop.f32.mrb[0].mxu0
      %v8281 = vpop.f32.mrb[0].mxu0
      %8282 = vdwg.mxu0
      %8283 = vmatprep.subr.bf16.mxu0 %v7158
      %8284 = vmatpush1.bf16.msra.mxu0 %v7156
      %8285 = vmatprep.subr.bf16.mxu0 %v7166
      %8286 = vmatpush1.bf16.msra.mxu0 %v7164
      %8287 = vmatprep.subr.bf16.mxu0 %v7415
      %8288 = vmatpush1.bf16.msra.mxu0 %v7411
      %8289 = vmatprep.subr.bf16.mxu0 %v7198
      %8290 = vmatpush1.bf16.msra.mxu0 %v7196
      %8291 = vmatprep.subr.bf16.mxu0 %v7206
      %8292 = vmatpush1.bf16.msra.mxu0 %v7204
      %8293 = vmatprep.subr.bf16.mxu0 %v7431
      %8294 = vmatpush1.bf16.msra.mxu0 %v7427
      %8295 = vmatprep.subr.bf16.mxu0 %v7238
      %8296 = vmatpush1.bf16.msra.mxu0 %v7236
      %8297 = vmatprep.subr.bf16.mxu0 %v7246
      %8298 = vmatpush1.bf16.msra.mxu0 %v7244
      %8299 = vmatprep.subr.bf16.mxu0 %v7776
      %8300 = vmatpush1.bf16.msra.mxu0 %v7773
      %8301 = vmatprep.subr.bf16.mxu0 0
      %8302 = vmatpush1.bf16.msra.mxu0 0
      %8303 = vmatprep.subr.bf16.mxu0 0
      %8304 = vmatpush1.bf16.msra.mxu0 0
      %8305 = vmatprep.subr.bf16.mxu0 0
      %8306 = vmatpush1.bf16.msra.mxu0 0
      %8307 = vmatprep.subr.bf16.mxu0 0
      %8308 = vmatpush1.bf16.msra.mxu0 0
      %8309 = vmatprep.subr.bf16.mxu0 0
      %8310 = vmatpush1.bf16.msra.mxu0 0
      %8311 = vmatprep.subr.bf16.mxu0 0
      %8312 = vmatpush1.bf16.msra.mxu0 0
      %8313 = vmatprep.subr.bf16.mxu0 0
      %8314 = vmatpush1.bf16.msra.mxu0 0
      %8315 = vmatprep.mubr.bf16.mxu0 %v7746
      %8316 = vmatmul.mubr.bf16.gmra.mrb[0].mxu0 %v7671
      %v8317 = vpop.f32.mrb[0].mxu0
      %v8318 = vadd.f32 %v8217, %v8317
      %v8319 = vpop.f32.mrb[0].mxu0
      %v8320 = vadd.f32 %v8219, %v8319
      %v8321 = vpop.f32.mrb[0].mxu0
      %v8322 = vadd.f32 %v8221, %v8321
      %v8323 = vpop.f32.mrb[0].mxu0
      %v8324 = vadd.f32 %v8223, %v8323
      %8325 = vmatprep.mubr.bf16.mxu0 %v7749
      %8326 = vmatmul.mubr.bf16.gmra.mrb[0].mxu0 %v7677
      %v8327 = vpop.f32.mrb[0].mxu0
      %v8328 = vadd.f32 %v8227, %v8327
      %v8329 = vpop.f32.mrb[0].mxu0
      %v8330 = vadd.f32 %v8229, %v8329
      %v8331 = vpop.f32.mrb[0].mxu0
      %v8332 = vadd.f32 %v8231, %v8331
      %v8333 = vpop.f32.mrb[0].mxu0
      %v8334 = vadd.f32 %v8233, %v8333
      %8335 = vmatprep.mubr.bf16.mxu0 %v7752
      %8336 = vmatmul.mubr.bf16.gmra.mrb[0].mxu0 %v7683
      %v8337 = vpop.f32.mrb[0].mxu0
      %v8338 = vadd.f32 %v8237, %v8337
      %v8339 = vpop.f32.mrb[0].mxu0
      %v8340 = vadd.f32 %v8239, %v8339
      %v8341 = vpop.f32.mrb[0].mxu0
      %v8342 = vadd.f32 %v8241, %v8341
      %v8343 = vpop.f32.mrb[0].mxu0
      %v8344 = vadd.f32 %v8243, %v8343
      %8345 = vmatprep.mubr.bf16.mxu0 %v7755
      %8346 = vmatmul.mubr.bf16.gmra.mrb[0].mxu0 %v7689
      %v8347 = vpop.f32.mrb[0].mxu0
      %v8348 = vadd.f32 %v8247, %v8347
      %v8349 = vpop.f32.mrb[0].mxu0
      %v8350 = vadd.f32 %v8249, %v8349
      %v8351 = vpop.f32.mrb[0].mxu0
      %v8352 = vadd.f32 %v8251, %v8351
      %v8353 = vpop.f32.mrb[0].mxu0
      %v8354 = vadd.f32 %v8253, %v8353
      %8355 = vmatprep.mubr.bf16.mxu0 %v7758
      %8356 = vmatmul.mubr.bf16.gmra.mrb[0].mxu0 %v7695
      %v8357 = vpop.f32.mrb[0].mxu0
      %v8358 = vadd.f32 %v8257, %v8357
      %v8359 = vpop.f32.mrb[0].mxu0
      %v8360 = vadd.f32 %v8259, %v8359
      %v8361 = vpop.f32.mrb[0].mxu0
      %v8362 = vadd.f32 %v8261, %v8361
      %v8363 = vpop.f32.mrb[0].mxu0
      %v8364 = vadd.f32 %v8263, %v8363
      %8365 = vmatprep.mubr.bf16.mxu0 %v7761
      %8366 = vmatmul.mubr.bf16.gmra.mrb[0].mxu0 %v7701
      %v8367 = vpop.f32.mrb[0].mxu0
      %v8368 = vadd.f32 %v8267, %v8367
      %v8369 = vpop.f32.mrb[0].mxu0
      %v8370 = vadd.f32 %v8269, %v8369
      %v8371 = vpop.f32.mrb[0].mxu0
      %v8372 = vadd.f32 %v8271, %v8371
      %v8373 = vpop.f32.mrb[0].mxu0
      %v8374 = vadd.f32 %v8273, %v8373
      %8375 = vmatprep.mubr.bf16.mxu0 %v7764
      %8376 = vmatmul.mubr.bf16.gmra.mrb[0].mxu0 %v7707
      %v8377 = vpop.f32.mrb[0].mxu0
      %v8378 = vadd.f32 %v8277, %v8377
      %v8379 = vpop.f32.mrb[0].mxu0
      %v8380 = vadd.f32 %v8279, %v8379
      %v8381 = vpop.f32.mrb[0].mxu0
      %v8382 = vpop.f32.mrb[0].mxu0
      %8383 = vdwg.mxu0
      %vm8384 = vcmp.gt.f32.partialorder %v8015, 0.0
      %vm8385 = vcmp.gt.f32.partialorder %v8017, 0.0
      %vm8386 = vcmp.gt.f32.partialorder %v8318, 0.0
      %vm8387 = vcmp.gt.f32.partialorder %v8320, 0.0
      %vm8388 = vcmp.gt.f32.partialorder %v8019, 0.0
      %vm8389 = vcmp.gt.f32.partialorder %v8021, 0.0
      %vm8390 = vcmp.gt.f32.partialorder %v8322, 0.0
      %vm8391 = vcmp.gt.f32.partialorder %v8324, 0.0
      %vm8392 = vcmp.gt.f32.partialorder %v8025, 0.0
      %vm8393 = vcmp.gt.f32.partialorder %v8027, 0.0
      %vm8394 = vcmp.gt.f32.partialorder %v8328, 0.0
      %vm8395 = vcmp.gt.f32.partialorder %v8330, 0.0
      %vm8396 = vcmp.gt.f32.partialorder %v8029, 0.0
      %vm8397 = vcmp.gt.f32.partialorder %v8031, 0.0
      %vm8398 = vcmp.gt.f32.partialorder %v8332, 0.0
      %vm8399 = vcmp.gt.f32.partialorder %v8334, 0.0
      %vm8400 = vcmp.gt.f32.partialorder %v8035, 0.0
      %vm8401 = vcmp.gt.f32.partialorder %v8037, 0.0
      %vm8402 = vcmp.gt.f32.partialorder %v8338, 0.0
      %vm8403 = vcmp.gt.f32.partialorder %v8340, 0.0
      %vm8404 = vcmp.gt.f32.partialorder %v8039, 0.0
      %vm8405 = vcmp.gt.f32.partialorder %v8041, 0.0
      %vm8406 = vcmp.gt.f32.partialorder %v8342, 0.0
      %vm8407 = vcmp.gt.f32.partialorder %v8344, 0.0
      %vm8408 = vcmp.gt.f32.partialorder %v8045, 0.0
      %vm8409 = vcmp.gt.f32.partialorder %v8047, 0.0
      %vm8410 = vcmp.gt.f32.partialorder %v8348, 0.0
      %vm8411 = vcmp.gt.f32.partialorder %v8350, 0.0
      %vm8412 = vcmp.gt.f32.partialorder %v8049, 0.0
      %vm8413 = vcmp.gt.f32.partialorder %v8051, 0.0
      %vm8414 = vcmp.gt.f32.partialorder %v8352, 0.0
      %vm8415 = vcmp.gt.f32.partialorder %v8354, 0.0
      %vm8416 = vcmp.gt.f32.partialorder %v8055, 0.0
      %vm8417 = vcmp.gt.f32.partialorder %v8057, 0.0
      %vm8418 = vcmp.gt.f32.partialorder %v8358, 0.0
      %vm8419 = vcmp.gt.f32.partialorder %v8360, 0.0
      %vm8420 = vcmp.gt.f32.partialorder %v8059, 0.0
      %vm8421 = vcmp.gt.f32.partialorder %v8061, 0.0
      %vm8422 = vcmp.gt.f32.partialorder %v8362, 0.0
      %vm8423 = vcmp.gt.f32.partialorder %v8364, 0.0
      %vm8424 = vcmp.gt.f32.partialorder %v8065, 0.0
      %vm8425 = vcmp.gt.f32.partialorder %v8067, 0.0
      %vm8426 = vcmp.gt.f32.partialorder %v8368, 0.0
      %vm8427 = vcmp.gt.f32.partialorder %v8370, 0.0
      %vm8428 = vcmp.gt.f32.partialorder %v8069, 0.0
      %vm8429 = vcmp.gt.f32.partialorder %v8071, 0.0
      %vm8430 = vcmp.gt.f32.partialorder %v8372, 0.0
      %vm8431 = vcmp.gt.f32.partialorder %v8374, 0.0
      %vm8432 = vcmp.gt.f32.partialorder %v8075, 0.0
      %vm8433 = vcmp.gt.f32.partialorder %v8077, 0.0
      %vm8434 = vcmp.gt.f32.partialorder %v8378, 0.0
      %vm8435 = vcmp.gt.f32.partialorder %v8380, 0.0
      %v8436 = vmin.f32 %v8015, 0.0
      %v8437 = vmin.f32 %v8017, 0.0
      %v8438 = vmin.f32 %v8318, 0.0
      %v8439 = vmin.f32 %v8320, 0.0
      %v8440 = vmin.f32 %v8019, 0.0
      %v8441 = vmin.f32 %v8021, 0.0
      %v8442 = vmin.f32 %v8322, 0.0
      %v8443 = vmin.f32 %v8324, 0.0
      %v8444 = vmin.f32 %v8025, 0.0
      %v8445 = vmin.f32 %v8027, 0.0
      %v8446 = vmin.f32 %v8328, 0.0
      %v8447 = vmin.f32 %v8330, 0.0
      %v8448 = vmin.f32 %v8029, 0.0
      %v8449 = vmin.f32 %v8031, 0.0
      %v8450 = vmin.f32 %v8332, 0.0
      %v8451 = vmin.f32 %v8334, 0.0
      %v8452 = vmin.f32 %v8035, 0.0
      %v8453 = vmin.f32 %v8037, 0.0
      %v8454 = vmin.f32 %v8338, 0.0
      %v8455 = vmin.f32 %v8340, 0.0
      %v8456 = vmin.f32 %v8039, 0.0
      %v8457 = vmin.f32 %v8041, 0.0
      %v8458 = vmin.f32 %v8342, 0.0
      %v8459 = vmin.f32 %v8344, 0.0
      %v8460 = vmin.f32 %v8045, 0.0
      %v8461 = vmin.f32 %v8047, 0.0
      %v8462 = vmin.f32 %v8348, 0.0
      %v8463 = vmin.f32 %v8350, 0.0
      %v8464 = vmin.f32 %v8049, 0.0
      %v8465 = vmin.f32 %v8051, 0.0
      %v8466 = vmin.f32 %v8352, 0.0
      %v8467 = vmin.f32 %v8354, 0.0
      %v8468 = vmin.f32 %v8055, 0.0
      %v8469 = vmin.f32 %v8057, 0.0
      %v8470 = vmin.f32 %v8358, 0.0
      %v8471 = vmin.f32 %v8360, 0.0
      %v8472 = vmin.f32 %v8059, 0.0
      %v8473 = vmin.f32 %v8061, 0.0
      %v8474 = vmin.f32 %v8362, 0.0
      %v8475 = vmin.f32 %v8364, 0.0
      %v8476 = vmin.f32 %v8065, 0.0
      %v8477 = vmin.f32 %v8067, 0.0
      %v8478 = vmin.f32 %v8368, 0.0
      %v8479 = vmin.f32 %v8370, 0.0
      %v8480 = vmin.f32 %v8069, 0.0
      %v8481 = vmin.f32 %v8071, 0.0
      %v8482 = vmin.f32 %v8372, 0.0
      %v8483 = vmin.f32 %v8374, 0.0
      %v8484 = vmin.f32 %v8075, 0.0
      %v8485 = vmin.f32 %v8077, 0.0
      %v8486 = vmin.f32 %v8378, 0.0
      %v8487 = vmin.f32 %v8380, 0.0
      %v8488 = vmul.f32 %v8436, 1.442695
      %v8489 = vpow.pop %v8488
      %v8490 = vmul.f32 %v8437, 1.442695
      %v8491 = vpow.pop %v8490
      %v8492 = vmul.f32 %v8438, 1.442695
      %v8493 = vpow.pop %v8492
      %v8494 = vmul.f32 %v8439, 1.442695
      %v8495 = vpow.pop %v8494
      %v8496 = vmul.f32 %v8440, 1.442695
      %v8497 = vpow.pop %v8496
      %v8498 = vmul.f32 %v8441, 1.442695
      %v8499 = vpow.pop %v8498
      %v8500 = vmul.f32 %v8442, 1.442695
      %v8501 = vpow.pop %v8500
      %v8502 = vmul.f32 %v8443, 1.442695
      %v8503 = vpow.pop %v8502
      %v8504 = vmul.f32 %v8444, 1.442695
      %v8505 = vpow.pop %v8504
      %v8506 = vmul.f32 %v8445, 1.442695
      %v8507 = vpow.pop %v8506
      %v8508 = vmul.f32 %v8446, 1.442695
      %v8509 = vpow.pop %v8508
      %v8510 = vmul.f32 %v8447, 1.442695
      %v8511 = vpow.pop %v8510
      %v8512 = vmul.f32 %v8448, 1.442695
      %v8513 = vpow.pop %v8512
      %v8514 = vmul.f32 %v8449, 1.442695
      %v8515 = vpow.pop %v8514
      %v8516 = vmul.f32 %v8450, 1.442695
      %v8517 = vpow.pop %v8516
      %v8518 = vmul.f32 %v8451, 1.442695
      %v8519 = vpow.pop %v8518
      %v8520 = vmul.f32 %v8452, 1.442695
      %v8521 = vpow.pop %v8520
      %v8522 = vmul.f32 %v8453, 1.442695
      %v8523 = vpow.pop %v8522
      %v8524 = vmul.f32 %v8454, 1.442695
      %v8525 = vpow.pop %v8524
      %v8526 = vmul.f32 %v8455, 1.442695
      %v8527 = vpow.pop %v8526
      %v8528 = vmul.f32 %v8456, 1.442695
      %v8529 = vpow.pop %v8528
      %v8530 = vmul.f32 %v8457, 1.442695
      %v8531 = vpow.pop %v8530
      %v8532 = vmul.f32 %v8458, 1.442695
      %v8533 = vpow.pop %v8532
      %v8534 = vmul.f32 %v8459, 1.442695
      %v8535 = vpow.pop %v8534
      %v8536 = vmul.f32 %v8460, 1.442695
      %v8537 = vpow.pop %v8536
      %v8538 = vmul.f32 %v8461, 1.442695
      %v8539 = vpow.pop %v8538
      %v8540 = vmul.f32 %v8462, 1.442695
      %v8541 = vpow.pop %v8540
      %v8542 = vmul.f32 %v8463, 1.442695
      %v8543 = vpow.pop %v8542
      %v8544 = vmul.f32 %v8464, 1.442695
      %v8545 = vpow.pop %v8544
      %v8546 = vmul.f32 %v8465, 1.442695
      %v8547 = vpow.pop %v8546
      %v8548 = vmul.f32 %v8466, 1.442695
      %v8549 = vpow.pop %v8548
      %v8550 = vmul.f32 %v8467, 1.442695
      %v8551 = vpow.pop %v8550
      %v8552 = vmul.f32 %v8468, 1.442695
      %v8553 = vpow.pop %v8552
      %v8554 = vmul.f32 %v8469, 1.442695
      %v8555 = vpow.pop %v8554
      %v8556 = vmul.f32 %v8470, 1.442695
      %v8557 = vpow.pop %v8556
      %v8558 = vmul.f32 %v8471, 1.442695
      %v8559 = vpow.pop %v8558
      %v8560 = vmul.f32 %v8472, 1.442695
      %v8561 = vpow.pop %v8560
      %v8562 = vmul.f32 %v8473, 1.442695
      %v8563 = vpow.pop %v8562
      %v8564 = vmul.f32 %v8474, 1.442695
      %v8565 = vpow.pop %v8564
      %v8566 = vmul.f32 %v8475, 1.442695
      %v8567 = vpow.pop %v8566
      %v8568 = vmul.f32 %v8476, 1.442695
      %v8569 = vpow.pop %v8568
      %v8570 = vmul.f32 %v8477, 1.442695
      %v8571 = vpow.pop %v8570
      %v8572 = vmul.f32 %v8478, 1.442695
      %v8573 = vpow.pop %v8572
      %v8574 = vmul.f32 %v8479, 1.442695
      %v8575 = vpow.pop %v8574
      %v8576 = vmul.f32 %v8480, 1.442695
      %v8577 = vpow.pop %v8576
      %v8578 = vmul.f32 %v8481, 1.442695
      %v8579 = vpow.pop %v8578
      %v8580 = vmul.f32 %v8482, 1.442695
      %v8581 = vpow.pop %v8580
      %v8582 = vmul.f32 %v8483, 1.442695
      %v8583 = vpow.pop %v8582
      %v8584 = vmul.f32 %v8484, 1.442695
      %v8585 = vpow.pop %v8584
      %v8586 = vmul.f32 %v8485, 1.442695
      %v8587 = vpow.pop %v8586
      %v8588 = vmul.f32 %v8486, 1.442695
      %v8589 = vpow.pop %v8588
      %v8590 = vmul.f32 %v8487, 1.442695
      %v8591 = vpow.pop %v8590
      %v8592 = vsub.f32 %v8489, 1.0
      %v8593 = vsub.f32 %v8491, 1.0
      %v8594 = vsub.f32 %v8493, 1.0
      %v8595 = vsub.f32 %v8495, 1.0
      %v8596 = vsub.f32 %v8497, 1.0
      %v8597 = vsub.f32 %v8499, 1.0
      %v8598 = vsub.f32 %v8501, 1.0
      %v8599 = vsub.f32 %v8503, 1.0
      %v8600 = vsub.f32 %v8505, 1.0
      %v8601 = vsub.f32 %v8507, 1.0
      %v8602 = vsub.f32 %v8509, 1.0
      %v8603 = vsub.f32 %v8511, 1.0
      %v8604 = vsub.f32 %v8513, 1.0
      %v8605 = vsub.f32 %v8515, 1.0
      %v8606 = vsub.f32 %v8517, 1.0
      %v8607 = vsub.f32 %v8519, 1.0
      %v8608 = vsub.f32 %v8521, 1.0
      %v8609 = vsub.f32 %v8523, 1.0
      %v8610 = vsub.f32 %v8525, 1.0
      %v8611 = vsub.f32 %v8527, 1.0
      %v8612 = vsub.f32 %v8529, 1.0
      %v8613 = vsub.f32 %v8531, 1.0
      %v8614 = vsub.f32 %v8533, 1.0
      %v8615 = vsub.f32 %v8535, 1.0
      %v8616 = vsub.f32 %v8537, 1.0
      %v8617 = vsub.f32 %v8539, 1.0
      %v8618 = vsub.f32 %v8541, 1.0
      %v8619 = vsub.f32 %v8543, 1.0
      %v8620 = vsub.f32 %v8545, 1.0
      %v8621 = vsub.f32 %v8547, 1.0
      %v8622 = vsub.f32 %v8549, 1.0
      %v8623 = vsub.f32 %v8551, 1.0
      %v8624 = vsub.f32 %v8553, 1.0
      %v8625 = vsub.f32 %v8555, 1.0
      %v8626 = vsub.f32 %v8557, 1.0
      %v8627 = vsub.f32 %v8559, 1.0
      %v8628 = vsub.f32 %v8561, 1.0
      %v8629 = vsub.f32 %v8563, 1.0
      %v8630 = vsub.f32 %v8565, 1.0
      %v8631 = vsub.f32 %v8567, 1.0
      %v8632 = vsub.f32 %v8569, 1.0
      %v8633 = vsub.f32 %v8571, 1.0
      %v8634 = vsub.f32 %v8573, 1.0
      %v8635 = vsub.f32 %v8575, 1.0
      %v8636 = vsub.f32 %v8577, 1.0
      %v8637 = vsub.f32 %v8579, 1.0
      %v8638 = vsub.f32 %v8581, 1.0
      %v8639 = vsub.f32 %v8583, 1.0
      %v8640 = vsub.f32 %v8585, 1.0
      %v8641 = vsub.f32 %v8587, 1.0
      %v8642 = vsub.f32 %v8589, 1.0
      %v8643 = vsub.f32 %v8591, 1.0
      %v8644 = vsel %vm8384, %v8015, %v8592
      %v8645 = vsel %vm8385, %v8017, %v8593
      %v8646 = vsel %vm8386, %v8318, %v8594
      %v8647 = vsel %vm8387, %v8320, %v8595
      %v8648 = vsel %vm8388, %v8019, %v8596
      %v8649 = vsel %vm8389, %v8021, %v8597
      %v8650 = vsel %vm8390, %v8322, %v8598
      %v8651 = vsel %vm8391, %v8324, %v8599
      %v8652 = vsel %vm8392, %v8025, %v8600
      %v8653 = vsel %vm8393, %v8027, %v8601
      %v8654 = vsel %vm8394, %v8328, %v8602
      %v8655 = vsel %vm8395, %v8330, %v8603
      %v8656 = vsel %vm8396, %v8029, %v8604
      %v8657 = vsel %vm8397, %v8031, %v8605
      %v8658 = vsel %vm8398, %v8332, %v8606
      %v8659 = vsel %vm8399, %v8334, %v8607
      %v8660 = vsel %vm8400, %v8035, %v8608
      %v8661 = vsel %vm8401, %v8037, %v8609
      %v8662 = vsel %vm8402, %v8338, %v8610
      %v8663 = vsel %vm8403, %v8340, %v8611
      %v8664 = vsel %vm8404, %v8039, %v8612
      %v8665 = vsel %vm8405, %v8041, %v8613
      %v8666 = vsel %vm8406, %v8342, %v8614
      %v8667 = vsel %vm8407, %v8344, %v8615
      %v8668 = vsel %vm8408, %v8045, %v8616
      %v8669 = vsel %vm8409, %v8047, %v8617
      %v8670 = vsel %vm8410, %v8348, %v8618
      %v8671 = vsel %vm8411, %v8350, %v8619
      %v8672 = vsel %vm8412, %v8049, %v8620
      %v8673 = vsel %vm8413, %v8051, %v8621
      %v8674 = vsel %vm8414, %v8352, %v8622
      %v8675 = vsel %vm8415, %v8354, %v8623
      %v8676 = vsel %vm8416, %v8055, %v8624
      %v8677 = vsel %vm8417, %v8057, %v8625
      %v8678 = vsel %vm8418, %v8358, %v8626
      %v8679 = vsel %vm8419, %v8360, %v8627
      %v8680 = vsel %vm8420, %v8059, %v8628
      %v8681 = vsel %vm8421, %v8061, %v8629
      %v8682 = vsel %vm8422, %v8362, %v8630
      %v8683 = vsel %vm8423, %v8364, %v8631
      %v8684 = vsel %vm8424, %v8065, %v8632
      %v8685 = vsel %vm8425, %v8067, %v8633
      %v8686 = vsel %vm8426, %v8368, %v8634
      %v8687 = vsel %vm8427, %v8370, %v8635
      %v8688 = vsel %vm8428, %v8069, %v8636
      %v8689 = vsel %vm8429, %v8071, %v8637
      %v8690 = vsel %vm8430, %v8372, %v8638
      %v8691 = vsel %vm8431, %v8374, %v8639
      %v8692 = vsel %vm8432, %v8075, %v8640
      %v8693 = vsel %vm8433, %v8077, %v8641
      %v8694 = vsel %vm8434, %v8378, %v8642
      %v8695 = vsel %vm8435, %v8380, %v8643
      %v8696 = vadd.f32 %v8644, %v8645
      %v8697 = vadd.f32 %v8648, %v8649
      %v8698 = vadd.f32 %v8652, %v8653
      %v8699 = vadd.f32 %v8656, %v8657
      %v8700 = vadd.f32 %v8660, %v8661
      %v8701 = vadd.f32 %v8664, %v8665
      %v8702 = vadd.f32 %v8668, %v8669
      %v8703 = vadd.f32 %v8672, %v8673
      %v8704 = vadd.f32 %v8676, %v8677
      %v8705 = vadd.f32 %v8680, %v8681
      %v8706 = vadd.f32 %v8684, %v8685
      %v8707 = vadd.f32 %v8688, %v8689
      %v8708 = vadd.f32 %v8692, %v8693
      %v8709 = vmul.f32 %v8696, %v447
      %v8710 = vmul.f32 %v8697, %v447
      %v8711 = vmul.f32 %v8698, %v447
      %v8712 = vmul.f32 %v8699, %v447
      %v8713 = vmul.f32 %v8700, %v447
      %v8714 = vmul.f32 %v8701, %v447
      %v8715 = vmul.f32 %v8702, %v447
      %v8716 = vmul.f32 %v8703, %v447
      %v8717 = vmul.f32 %v8704, %v447
      %v8718 = vmul.f32 %v8705, %v447
      %v8719 = vmul.f32 %v8706, %v447
      %v8720 = vmul.f32 %v8707, %v447
      %v8721 = vmul.f32 %v8708, %v447
      %v8722 = vpack.c.bf16 %v8710, %v8709
      %v8723 = vpack.c.bf16 %v8712, %v8711
      %v8724 = vpack.c.bf16 %v8714, %v8713
      %v8725 = vpack.c.bf16 %v8716, %v8715
      %v8726 = vpack.c.bf16 %v8718, %v8717
      %v8727 = vpack.c.bf16 %v8720, %v8719
      %v8728 = vpack.c.bf16 %v8721, %v8721
      %v8729 = vadd.f32 %v8646, %v8647
      %v8730 = vadd.f32 %v8650, %v8651
      %v8731 = vadd.f32 %v8654, %v8655
      %v8732 = vadd.f32 %v8658, %v8659
      %v8733 = vadd.f32 %v8662, %v8663
      %v8734 = vadd.f32 %v8666, %v8667
      %v8735 = vadd.f32 %v8670, %v8671
      %v8736 = vadd.f32 %v8674, %v8675
      %v8737 = vadd.f32 %v8678, %v8679
      %v8738 = vadd.f32 %v8682, %v8683
      %v8739 = vadd.f32 %v8686, %v8687
      %v8740 = vadd.f32 %v8690, %v8691
      %v8741 = vadd.f32 %v8694, %v8695
      %v8742 = vmul.f32 %v8729, %v447
      %v8743 = vmul.f32 %v8730, %v447
      %v8744 = vmul.f32 %v8731, %v447
      %v8745 = vmul.f32 %v8732, %v447
      %v8746 = vmul.f32 %v8733, %v447
      %v8747 = vmul.f32 %v8734, %v447
      %v8748 = vmul.f32 %v8735, %v447
      %v8749 = vmul.f32 %v8736, %v447
      %v8750 = vmul.f32 %v8737, %v447
      %v8751 = vmul.f32 %v8738, %v447
      %v8752 = vmul.f32 %v8739, %v447
      %v8753 = vmul.f32 %v8740, %v447
      %v8754 = vmul.f32 %v8741, %v447
      %v8755 = vpack.c.bf16 %v8743, %v8742
      %v8756 = vpack.c.bf16 %v8745, %v8744
      %v8757 = vpack.c.bf16 %v8747, %v8746
      %v8758 = vpack.c.bf16 %v8749, %v8748
      %v8759 = vpack.c.bf16 %v8751, %v8750
      %v8760 = vpack.c.bf16 %v8753, %v8752
      %v8761 = vpack.c.bf16 %v8754, %v8754
      %8769 = vrot.lane.b32.xlu0 %v8722, 3
      %v8770 = vpop.permute.xlu0 %8769
      %8771 = vrot.lane.b32.xlu0 %v8723, 3
      %v8772 = vpop.permute.xlu0 %8771
      %8773 = vrot.lane.b32.xlu0 %v8724, 3
      %v8774 = vpop.permute.xlu0 %8773
      %8775 = vrot.lane.b32.xlu0 %v8725, 3
      %v8776 = vpop.permute.xlu0 %8775
      %8777 = vrot.lane.b32.xlu0 %v8726, 3
      %v8778 = vpop.permute.xlu0 %8777
      %8779 = vrot.lane.b32.xlu0 %v8727, 3
      %v8780 = vpop.permute.xlu0 %8779
      %8781 = vrot.lane.b32.xlu0 %v8728, 3
      %v8782 = vpop.permute.xlu0 %8781
      %8803 = vrot.lane.b32.xlu0 %v8755, 3
      %v8804 = vpop.permute.xlu0 %8803
      %8805 = vrot.lane.b32.xlu0 %v8756, 3
      %v8806 = vpop.permute.xlu0 %8805
      %8807 = vrot.lane.b32.xlu0 %v8757, 3
      %v8808 = vpop.permute.xlu0 %8807
      %8809 = vrot.lane.b32.xlu0 %v8758, 3
      %v8810 = vpop.permute.xlu0 %8809
      %8811 = vrot.lane.b32.xlu0 %v8759, 3
      %v8812 = vpop.permute.xlu0 %8811
      %8813 = vrot.lane.b32.xlu0 %v8760, 3
      %v8814 = vpop.permute.xlu0 %8813
      %8815 = vrot.lane.b32.xlu0 %v8761, 3
      %v8816 = vpop.permute.xlu0 %8815
      %8830 = vrot.lane.b32.xlu0 %v8722, 2
      %v8831 = vpop.permute.xlu0 %8830
      %8832 = vrot.lane.b32.xlu0 %v8723, 2
      %v8833 = vpop.permute.xlu0 %8832
      %8834 = vrot.lane.b32.xlu0 %v8724, 2
      %v8835 = vpop.permute.xlu0 %8834
      %8836 = vrot.lane.b32.xlu0 %v8725, 2
      %v8837 = vpop.permute.xlu0 %8836
      %8838 = vrot.lane.b32.xlu0 %v8726, 2
      %v8839 = vpop.permute.xlu0 %8838
      %8840 = vrot.lane.b32.xlu0 %v8727, 2
      %v8841 = vpop.permute.xlu0 %8840
      %8842 = vrot.lane.b32.xlu0 %v8728, 2
      %v8843 = vpop.permute.xlu0 %8842
      %8851 = vrot.lane.b32.xlu0 %v8755, 2
      %v8852 = vpop.permute.xlu0 %8851
      %8853 = vrot.lane.b32.xlu0 %v8756, 2
      %v8854 = vpop.permute.xlu0 %8853
      %8855 = vrot.lane.b32.xlu0 %v8757, 2
      %v8856 = vpop.permute.xlu0 %8855
      %8857 = vrot.lane.b32.xlu0 %v8758, 2
      %v8858 = vpop.permute.xlu0 %8857
      %8859 = vrot.lane.b32.xlu0 %v8759, 2
      %v8860 = vpop.permute.xlu0 %8859
      %8861 = vrot.lane.b32.xlu0 %v8760, 2
      %v8862 = vpop.permute.xlu0 %8861
      %8863 = vrot.lane.b32.xlu0 %v8761, 2
      %v8864 = vpop.permute.xlu0 %8863
      %8872 = vrot.lane.b32.xlu0 %v8722, 1
      %v8873 = vpop.permute.xlu0 %8872
      %8874 = vrot.lane.b32.xlu0 %v8723, 1
      %v8875 = vpop.permute.xlu0 %8874
      %8876 = vrot.lane.b32.xlu0 %v8724, 1
      %v8877 = vpop.permute.xlu0 %8876
      %8878 = vrot.lane.b32.xlu0 %v8725, 1
      %v8879 = vpop.permute.xlu0 %8878
      %8880 = vrot.lane.b32.xlu0 %v8726, 1
      %v8881 = vpop.permute.xlu0 %8880
      %8882 = vrot.lane.b32.xlu0 %v8727, 1
      %v8883 = vpop.permute.xlu0 %8882
      %8884 = vrot.lane.b32.xlu0 %v8728, 1
      %v8885 = vpop.permute.xlu0 %8884
      %8899 = vrot.lane.b32.xlu0 %v8755, 1
      %v8900 = vpop.permute.xlu0 %8899
      %8901 = vrot.lane.b32.xlu0 %v8756, 1
      %v8902 = vpop.permute.xlu0 %8901
      %8903 = vrot.lane.b32.xlu0 %v8757, 1
      %v8904 = vpop.permute.xlu0 %8903
      %8905 = vrot.lane.b32.xlu0 %v8758, 1
      %v8906 = vpop.permute.xlu0 %8905
      %8907 = vrot.lane.b32.xlu0 %v8759, 1
      %v8908 = vpop.permute.xlu0 %8907
      %8909 = vrot.lane.b32.xlu0 %v8760, 1
      %v8910 = vpop.permute.xlu0 %8909
      %8911 = vrot.lane.b32.xlu0 %v8761, 1
      %v8912 = vpop.permute.xlu0 %8911
      %8926 = vrot.lane.b32.xlu0 %v8722, 127
      %v8927 = vpop.permute.xlu0 %8926
      %8928 = vrot.lane.b32.xlu0 %v8723, 127
      %v8929 = vpop.permute.xlu0 %8928
      %8930 = vrot.lane.b32.xlu0 %v8724, 127
      %v8931 = vpop.permute.xlu0 %8930
      %8932 = vrot.lane.b32.xlu0 %v8725, 127
      %v8933 = vpop.permute.xlu0 %8932
      %8934 = vrot.lane.b32.xlu0 %v8726, 127
      %v8935 = vpop.permute.xlu0 %8934
      %8936 = vrot.lane.b32.xlu0 %v8727, 127
      %v8937 = vpop.permute.xlu0 %8936
      %8938 = vrot.lane.b32.xlu0 %v8728, 127
      %v8939 = vpop.permute.xlu0 %8938
      %8953 = vrot.lane.b32.xlu0 %v8755, 127
      %v8954 = vpop.permute.xlu0 %8953
      %8955 = vrot.lane.b32.xlu0 %v8756, 127
      %v8956 = vpop.permute.xlu0 %8955
      %8957 = vrot.lane.b32.xlu0 %v8757, 127
      %v8958 = vpop.permute.xlu0 %8957
      %8959 = vrot.lane.b32.xlu0 %v8758, 127
      %v8960 = vpop.permute.xlu0 %8959
      %8961 = vrot.lane.b32.xlu0 %v8759, 127
      %v8962 = vpop.permute.xlu0 %8961
      %8963 = vrot.lane.b32.xlu0 %v8760, 127
      %v8964 = vpop.permute.xlu0 %8963
      %8965 = vrot.lane.b32.xlu0 %v8761, 127
      %v8966 = vpop.permute.xlu0 %8965
      %8980 = vrot.lane.b32.xlu0 %v8722, 126
      %v8981 = vpop.permute.xlu0 %8980
      %8982 = vrot.lane.b32.xlu0 %v8723, 126
      %v8983 = vpop.permute.xlu0 %8982
      %8984 = vrot.lane.b32.xlu0 %v8724, 126
      %v8985 = vpop.permute.xlu0 %8984
      %8986 = vrot.lane.b32.xlu0 %v8725, 126
      %v8987 = vpop.permute.xlu0 %8986
      %8988 = vrot.lane.b32.xlu0 %v8726, 126
      %v8989 = vpop.permute.xlu0 %8988
      %8990 = vrot.lane.b32.xlu0 %v8727, 126
      %v8991 = vpop.permute.xlu0 %8990
      %8992 = vrot.lane.b32.xlu0 %v8728, 126
      %v8993 = vpop.permute.xlu0 %8992
      %9001 = vrot.lane.b32.xlu0 %v8755, 126
      %v9002 = vpop.permute.xlu0 %9001
      %9003 = vrot.lane.b32.xlu0 %v8756, 126
      %v9004 = vpop.permute.xlu0 %9003
      %9005 = vrot.lane.b32.xlu0 %v8757, 126
      %v9006 = vpop.permute.xlu0 %9005
      %9007 = vrot.lane.b32.xlu0 %v8758, 126
      %v9008 = vpop.permute.xlu0 %9007
      %9009 = vrot.lane.b32.xlu0 %v8759, 126
      %v9010 = vpop.permute.xlu0 %9009
      %9011 = vrot.lane.b32.xlu0 %v8760, 126
      %v9012 = vpop.permute.xlu0 %9011
      %9013 = vrot.lane.b32.xlu0 %v8761, 126
      %v9014 = vpop.permute.xlu0 %9013
      %9022 = vrot.lane.b32.xlu0 %v8722, 125
      %v9023 = vpop.permute.xlu0 %9022
      %9024 = vrot.lane.b32.xlu0 %v8723, 125
      %v9025 = vpop.permute.xlu0 %9024
      %9026 = vrot.lane.b32.xlu0 %v8724, 125
      %v9027 = vpop.permute.xlu0 %9026
      %9028 = vrot.lane.b32.xlu0 %v8725, 125
      %v9029 = vpop.permute.xlu0 %9028
      %9030 = vrot.lane.b32.xlu0 %v8726, 125
      %v9031 = vpop.permute.xlu0 %9030
      %9032 = vrot.lane.b32.xlu0 %v8727, 125
      %v9033 = vpop.permute.xlu0 %9032
      %9034 = vrot.lane.b32.xlu0 %v8728, 125
      %v9035 = vpop.permute.xlu0 %9034
      %9049 = vrot.lane.b32.xlu0 %v8755, 125
      %v9050 = vpop.permute.xlu0 %9049
      %9051 = vrot.lane.b32.xlu0 %v8756, 125
      %v9052 = vpop.permute.xlu0 %9051
      %9053 = vrot.lane.b32.xlu0 %v8757, 125
      %v9054 = vpop.permute.xlu0 %9053
      %9055 = vrot.lane.b32.xlu0 %v8758, 125
      %v9056 = vpop.permute.xlu0 %9055
      %9057 = vrot.lane.b32.xlu0 %v8759, 125
      %v9058 = vpop.permute.xlu0 %9057
      %9059 = vrot.lane.b32.xlu0 %v8760, 125
      %v9060 = vpop.permute.xlu0 %9059
      %9061 = vrot.lane.b32.xlu0 %v8761, 125
      %v9062 = vpop.permute.xlu0 %9061
      %v9090 = vrot.slane %v8804, 6
      %v9091 = vrot.slane %v8831, 6
      %v9092 = vrot.slane %v8806, 6
      %v9093 = vsel %vm1090, %v9090, %v9092
      %v9094 = vrot.slane %v8833, 6
      %v9095 = vsel %vm1090, %v9091, %v9094
      %v9096 = vrot.slane %v8808, 6
      %v9097 = vsel %vm1090, %v9092, %v9096
      %v9098 = vrot.slane %v8835, 6
      %v9099 = vsel %vm1090, %v9094, %v9098
      %v9100 = vrot.slane %v8810, 6
      %v9101 = vsel %vm1090, %v9096, %v9100
      %v9102 = vrot.slane %v8837, 6
      %v9103 = vsel %vm1090, %v9098, %v9102
      %v9104 = vrot.slane %v8812, 6
      %v9105 = vsel %vm1090, %v9100, %v9104
      %v9106 = vrot.slane %v8839, 6
      %v9107 = vsel %vm1090, %v9102, %v9106
      %v9108 = vrot.slane %v8814, 6
      %v9109 = vsel %vm1090, %v9104, %v9108
      %v9110 = vrot.slane %v8841, 6
      %v9111 = vsel %vm1090, %v9106, %v9110
      %v9112 = vrot.slane %v8816, 6
      %v9113 = vsel %vm1090, %v9108, %v9112
      %v9114 = vrot.slane %v8843, 6
      %v9115 = vsel %vm1090, %v9110, %v9114
      %v9133 = vrot.slane %v8831, 4
      %v9134 = vrot.slane %v8852, 4
      %v9135 = vrot.slane %v8833, 4
      %v9136 = vsel %vm5008, %v9133, %v9135
      %v9137 = vrot.slane %v8854, 4
      %v9138 = vsel %vm5008, %v9134, %v9137
      %v9139 = vrot.slane %v8835, 4
      %v9140 = vsel %vm5008, %v9135, %v9139
      %v9141 = vrot.slane %v8856, 4
      %v9142 = vsel %vm5008, %v9137, %v9141
      %v9143 = vrot.slane %v8837, 4
      %v9144 = vsel %vm5008, %v9139, %v9143
      %v9145 = vrot.slane %v8858, 4
      %v9146 = vsel %vm5008, %v9141, %v9145
      %v9147 = vrot.slane %v8839, 4
      %v9148 = vsel %vm5008, %v9143, %v9147
      %v9149 = vrot.slane %v8860, 4
      %v9150 = vsel %vm5008, %v9145, %v9149
      %v9151 = vrot.slane %v8841, 4
      %v9152 = vsel %vm5008, %v9147, %v9151
      %v9153 = vrot.slane %v8862, 4
      %v9154 = vsel %vm5008, %v9149, %v9153
      %v9155 = vrot.slane %v8843, 4
      %v9156 = vsel %vm5008, %v9151, %v9155
      %v9157 = vrot.slane %v8864, 4
      %v9158 = vsel %vm5008, %v9153, %v9157
      %v9176 = vrot.slane %v8852, 2
      %v9177 = vrot.slane %v8873, 2
      %v9178 = vrot.slane %v8854, 2
      %v9179 = vsel %vm1420, %v9176, %v9178
      %v9180 = vrot.slane %v8875, 2
      %v9181 = vsel %vm1420, %v9177, %v9180
      %v9182 = vrot.slane %v8856, 2
      %v9183 = vsel %vm1420, %v9178, %v9182
      %v9184 = vrot.slane %v8877, 2
      %v9185 = vsel %vm1420, %v9180, %v9184
      %v9186 = vrot.slane %v8858, 2
      %v9187 = vsel %vm1420, %v9182, %v9186
      %v9188 = vrot.slane %v8879, 2
      %v9189 = vsel %vm1420, %v9184, %v9188
      %v9190 = vrot.slane %v8860, 2
      %v9191 = vsel %vm1420, %v9186, %v9190
      %v9192 = vrot.slane %v8881, 2
      %v9193 = vsel %vm1420, %v9188, %v9192
      %v9194 = vrot.slane %v8862, 2
      %v9195 = vsel %vm1420, %v9190, %v9194
      %v9196 = vrot.slane %v8883, 2
      %v9197 = vsel %vm1420, %v9192, %v9196
      %v9198 = vrot.slane %v8864, 2
      %v9199 = vsel %vm1420, %v9194, %v9198
      %v9200 = vrot.slane %v8885, 2
      %v9201 = vsel %vm1420, %v9196, %v9200
      %v9221 = vrot.slane %v8900, 6
      %v9222 = vrot.slane %v8722, 6
      %v9223 = vrot.slane %v8902, 6
      %v9224 = vsel %vm1090, %v9221, %v9223
      %v9225 = vrot.slane %v8723, 6
      %v9226 = vsel %vm1090, %v9222, %v9225
      %v9227 = vrot.slane %v8904, 6
      %v9228 = vsel %vm1090, %v9223, %v9227
      %v9229 = vrot.slane %v8724, 6
      %v9230 = vsel %vm1090, %v9225, %v9229
      %v9231 = vrot.slane %v8906, 6
      %v9232 = vsel %vm1090, %v9227, %v9231
      %v9233 = vrot.slane %v8725, 6
      %v9234 = vsel %vm1090, %v9229, %v9233
      %v9235 = vrot.slane %v8908, 6
      %v9236 = vsel %vm1090, %v9231, %v9235
      %v9237 = vrot.slane %v8726, 6
      %v9238 = vsel %vm1090, %v9233, %v9237
      %v9239 = vrot.slane %v8910, 6
      %v9240 = vsel %vm1090, %v9235, %v9239
      %v9241 = vrot.slane %v8727, 6
      %v9242 = vsel %vm1090, %v9237, %v9241
      %v9243 = vrot.slane %v8912, 6
      %v9244 = vsel %vm1090, %v9239, %v9243
      %v9245 = vrot.slane %v8728, 6
      %v9246 = vsel %vm1090, %v9241, %v9245
      %v9257 = vrot.slane %v8722, 4
      %v9258 = vrot.slane %v8755, 4
      %v9259 = vrot.slane %v8723, 4
      %v9260 = vsel %vm5008, %v9257, %v9259
      %v9261 = vrot.slane %v8756, 4
      %v9262 = vsel %vm5008, %v9258, %v9261
      %v9263 = vrot.slane %v8724, 4
      %v9264 = vsel %vm5008, %v9259, %v9263
      %v9265 = vrot.slane %v8757, 4
      %v9266 = vsel %vm5008, %v9261, %v9265
      %v9267 = vrot.slane %v8725, 4
      %v9268 = vsel %vm5008, %v9263, %v9267
      %v9269 = vrot.slane %v8758, 4
      %v9270 = vsel %vm5008, %v9265, %v9269
      %v9271 = vrot.slane %v8726, 4
      %v9272 = vsel %vm5008, %v9267, %v9271
      %v9273 = vrot.slane %v8759, 4
      %v9274 = vsel %vm5008, %v9269, %v9273
      %v9275 = vrot.slane %v8727, 4
      %v9276 = vsel %vm5008, %v9271, %v9275
      %v9277 = vrot.slane %v8760, 4
      %v9278 = vsel %vm5008, %v9273, %v9277
      %v9279 = vrot.slane %v8728, 4
      %v9280 = vsel %vm5008, %v9275, %v9279
      %v9281 = vrot.slane %v8761, 4
      %v9282 = vsel %vm5008, %v9277, %v9281
      %v9300 = vrot.slane %v8755, 2
      %v9301 = vrot.slane %v8927, 2
      %v9302 = vrot.slane %v8756, 2
      %v9303 = vsel %vm1420, %v9300, %v9302
      %v9304 = vrot.slane %v8929, 2
      %v9305 = vsel %vm1420, %v9301, %v9304
      %v9306 = vrot.slane %v8757, 2
      %v9307 = vsel %vm1420, %v9302, %v9306
      %v9308 = vrot.slane %v8931, 2
      %v9309 = vsel %vm1420, %v9304, %v9308
      %v9310 = vrot.slane %v8758, 2
      %v9311 = vsel %vm1420, %v9306, %v9310
      %v9312 = vrot.slane %v8933, 2
      %v9313 = vsel %vm1420, %v9308, %v9312
      %v9314 = vrot.slane %v8759, 2
      %v9315 = vsel %vm1420, %v9310, %v9314
      %v9316 = vrot.slane %v8935, 2
      %v9317 = vsel %vm1420, %v9312, %v9316
      %v9318 = vrot.slane %v8760, 2
      %v9319 = vsel %vm1420, %v9314, %v9318
      %v9320 = vrot.slane %v8937, 2
      %v9321 = vsel %vm1420, %v9316, %v9320
      %v9322 = vrot.slane %v8761, 2
      %v9323 = vsel %vm1420, %v9318, %v9322
      %v9324 = vrot.slane %v8939, 2
      %v9325 = vsel %vm1420, %v9320, %v9324
      %v9352 = vrot.slane %v8954, 6
      %v9353 = vrot.slane %v8981, 6
      %v9354 = vrot.slane %v8956, 6
      %v9355 = vsel %vm1090, %v9352, %v9354
      %v9356 = vrot.slane %v8983, 6
      %v9357 = vsel %vm1090, %v9353, %v9356
      %v9358 = vrot.slane %v8958, 6
      %v9359 = vsel %vm1090, %v9354, %v9358
      %v9360 = vrot.slane %v8985, 6
      %v9361 = vsel %vm1090, %v9356, %v9360
      %v9362 = vrot.slane %v8960, 6
      %v9363 = vsel %vm1090, %v9358, %v9362
      %v9364 = vrot.slane %v8987, 6
      %v9365 = vsel %vm1090, %v9360, %v9364
      %v9366 = vrot.slane %v8962, 6
      %v9367 = vsel %vm1090, %v9362, %v9366
      %v9368 = vrot.slane %v8989, 6
      %v9369 = vsel %vm1090, %v9364, %v9368
      %v9370 = vrot.slane %v8964, 6
      %v9371 = vsel %vm1090, %v9366, %v9370
      %v9372 = vrot.slane %v8991, 6
      %v9373 = vsel %vm1090, %v9368, %v9372
      %v9374 = vrot.slane %v8966, 6
      %v9375 = vsel %vm1090, %v9370, %v9374
      %v9376 = vrot.slane %v8993, 6
      %v9377 = vsel %vm1090, %v9372, %v9376
      %v9395 = vrot.slane %v8981, 4
      %v9396 = vrot.slane %v9002, 4
      %v9397 = vrot.slane %v8983, 4
      %v9398 = vsel %vm5008, %v9395, %v9397
      %v9399 = vrot.slane %v9004, 4
      %v9400 = vsel %vm5008, %v9396, %v9399
      %v9401 = vrot.slane %v8985, 4
      %v9402 = vsel %vm5008, %v9397, %v9401
      %v9403 = vrot.slane %v9006, 4
      %v9404 = vsel %vm5008, %v9399, %v9403
      %v9405 = vrot.slane %v8987, 4
      %v9406 = vsel %vm5008, %v9401, %v9405
      %v9407 = vrot.slane %v9008, 4
      %v9408 = vsel %vm5008, %v9403, %v9407
      %v9409 = vrot.slane %v8989, 4
      %v9410 = vsel %vm5008, %v9405, %v9409
      %v9411 = vrot.slane %v9010, 4
      %v9412 = vsel %vm5008, %v9407, %v9411
      %v9413 = vrot.slane %v8991, 4
      %v9414 = vsel %vm5008, %v9409, %v9413
      %v9415 = vrot.slane %v9012, 4
      %v9416 = vsel %vm5008, %v9411, %v9415
      %v9417 = vrot.slane %v8993, 4
      %v9418 = vsel %vm5008, %v9413, %v9417
      %v9419 = vrot.slane %v9014, 4
      %v9420 = vsel %vm5008, %v9415, %v9419
      %v9438 = vrot.slane %v9002, 2
      %v9439 = vrot.slane %v9023, 2
      %v9440 = vrot.slane %v9004, 2
      %v9441 = vsel %vm1420, %v9438, %v9440
      %v9442 = vrot.slane %v9025, 2
      %v9443 = vsel %vm1420, %v9439, %v9442
      %v9444 = vrot.slane %v9006, 2
      %v9445 = vsel %vm1420, %v9440, %v9444
      %v9446 = vrot.slane %v9027, 2
      %v9447 = vsel %vm1420, %v9442, %v9446
      %v9448 = vrot.slane %v9008, 2
      %v9449 = vsel %vm1420, %v9444, %v9448
      %v9450 = vrot.slane %v9029, 2
      %v9451 = vsel %vm1420, %v9446, %v9450
      %v9452 = vrot.slane %v9010, 2
      %v9453 = vsel %vm1420, %v9448, %v9452
      %v9454 = vrot.slane %v9031, 2
      %v9455 = vsel %vm1420, %v9450, %v9454
      %v9456 = vrot.slane %v9012, 2
      %v9457 = vsel %vm1420, %v9452, %v9456
      %v9458 = vrot.slane %v9033, 2
      %v9459 = vsel %vm1420, %v9454, %v9458
      %v9460 = vrot.slane %v9014, 2
      %v9461 = vsel %vm1420, %v9456, %v9460
      %v9462 = vrot.slane %v9035, 2
      %v9463 = vsel %vm1420, %v9458, %v9462
      %v9477 = vsel %vm1517, %v8782, %v9090
      %v9480 = vsel %vm1517, %v8816, %v9091
      %v9484 = vsel %vm1355, %v9113, %v9133
      %v9488 = vsel %vm1355, %v9115, %v9134
      %v9492 = vsel %vm1193, %v9156, %v9176
      %v9496 = vsel %vm1193, %v9158, %v9177
      %v9499 = vsel %vm1517, %v8885, %v9221
      %v9502 = vsel %vm1517, %v8912, %v9222
      %v9506 = vsel %vm1355, %v9244, %v9257
      %v9510 = vsel %vm1355, %v9246, %v9258
      %v9514 = vsel %vm1193, %v9280, %v9300
      %v9518 = vsel %vm1193, %v9282, %v9301
      %v9521 = vsel %vm1517, %v8939, %v9352
      %v9524 = vsel %vm1517, %v8966, %v9353
      %v9528 = vsel %vm1355, %v9375, %v9395
      %v9532 = vsel %vm1355, %v9377, %v9396
      %v9536 = vsel %vm1193, %v9418, %v9438
      %v9540 = vsel %vm1193, %v9420, %v9439
      %v9542 = vld [vmem:[%s9] sm:$0xff]
      %v9543 = vld [vmem:[%s9 + $0x8] sm:$0xff]
      %v9544 = vld [vmem:[%s9 + $0x10] sm:$0xff]
      %v9545 = vld [vmem:[%s9 + $0x18] sm:$0xff]
      %v9546 = vld [vmem:[%s9 + $0x20] sm:$0xff]
      %v9547 = vld [vmem:[%s9 + $0x28] sm:$0xf]
      %v9548 = vld [vmem:[%s9 + $0x2c] sm:$0xff]
      %v9549 = vld [vmem:[%s9 + $0x34] sm:$0xff]
      %v9550 = vld [vmem:[%s9 + $0x3c] sm:$0xff]
      %v9551 = vld [vmem:[%s9 + $0x44] sm:$0xff]
      %v9552 = vld [vmem:[%s9 + $0x4c] sm:$0xff]
      %v9553 = vld [vmem:[%s9 + $0x54] sm:$0xf]
      %v9554 = vld [vmem:[%s9 + $0x58] sm:$0xff]
      %v9555 = vld [vmem:[%s9 + $0x60] sm:$0xff]
      %v9556 = vld [vmem:[%s9 + $0x68] sm:$0xff]
      %v9557 = vld [vmem:[%s9 + $0x70] sm:$0xff]
      %v9558 = vld [vmem:[%s9 + $0x78] sm:$0xff]
      %v9559 = vld [vmem:[%s9 + $0x80] sm:$0xf]
      %v9560 = vld [vmem:[%s9 + $0x84] sm:$0xff]
      %v9561 = vld [vmem:[%s9 + $0x8c] sm:$0xff]
      %v9562 = vld [vmem:[%s9 + $0x94] sm:$0xff]
      %v9563 = vld [vmem:[%s9 + $0x9c] sm:$0xff]
      %v9564 = vld [vmem:[%s9 + $0xa4] sm:$0xff]
      %v9565 = vld [vmem:[%s9 + $0xac] sm:$0xf]
      %v9566 = vld [vmem:[%s9 + $0xb0] sm:$0xff]
      %v9567 = vld [vmem:[%s9 + $0xb8] sm:$0xff]
      %v9568 = vld [vmem:[%s9 + $0xc0] sm:$0xff]
      %v9569 = vld [vmem:[%s9 + $0xc8] sm:$0xff]
      %v9570 = vld [vmem:[%s9 + $0xd0] sm:$0xff]
      %v9571 = vld [vmem:[%s9 + $0xd8] sm:$0xf]
      %v9572 = vld [vmem:[%s9 + $0xdc] sm:$0xff]
      %v9573 = vld [vmem:[%s9 + $0xe4] sm:$0xff]
      %v9574 = vld [vmem:[%s9 + $0xec] sm:$0xff]
      %v9575 = vld [vmem:[%s9 + $0xf4] sm:$0xff]
      %v9576 = vld [vmem:[%s9 + $0xfc] sm:$0xff]
      %v9577 = vld [vmem:[%s9 + $0x104] sm:$0xf]
      %v9578 = vld [vmem:[%s9 + $0x108] sm:$0xff]
      %v9579 = vld [vmem:[%s9 + $0x110] sm:$0xff]
      %v9580 = vld [vmem:[%s9 + $0x118] sm:$0xff]
      %v9581 = vld [vmem:[%s9 + $0x120] sm:$0xff]
      %v9582 = vld [vmem:[%s9 + $0x128] sm:$0xff]
      %v9583 = vld [vmem:[%s9 + $0x130] sm:$0xf]
      %v9584 = vld [vmem:[%s9 + $0x134] sm:$0xff]
      %v9585 = vld [vmem:[%s9 + $0x13c] sm:$0xff]
      %v9586 = vld [vmem:[%s9 + $0x144] sm:$0xff]
      %v9587 = vld [vmem:[%s9 + $0x14c] sm:$0xff]
      %v9588 = vld [vmem:[%s9 + $0x154] sm:$0xff]
      %v9589 = vld [vmem:[%s9 + $0x15c] sm:$0xf]
      %v9590 = vld [vmem:[%s9 + $0x160] sm:$0xff]
      %v9591 = vld [vmem:[%s9 + $0x168] sm:$0xff]
      %v9592 = vld [vmem:[%s9 + $0x170] sm:$0xff]
      %v9593 = vld [vmem:[%s9 + $0x178] sm:$0xff]
      %v9594 = vld [vmem:[%s9 + $0x180] sm:$0xff]
      %v9595 = vld [vmem:[%s9 + $0x188] sm:$0xf]
      %v9596 = vld [vmem:[%s9 + $0x18c] sm:$0xff]
      %v9597 = vld [vmem:[%s9 + $0x194] sm:$0xff]
      %v9598 = vld [vmem:[%s9 + $0x19c] sm:$0xff]
      %v9599 = vld [vmem:[%s9 + $0x1a4] sm:$0xff]
      %v9600 = vld [vmem:[%s9 + $0x1ac] sm:$0xff]
      %v9601 = vld [vmem:[%s9 + $0x1b4] sm:$0xf]
      %v9602 = vld [vmem:[%s9 + $0x1b8] sm:$0xff]
      %v9603 = vld [vmem:[%s9 + $0x1c0] sm:$0xff]
      %v9604 = vld [vmem:[%s9 + $0x1c8] sm:$0xff]
      %v9605 = vld [vmem:[%s9 + $0x1d0] sm:$0xff]
      %v9606 = vld [vmem:[%s9 + $0x1d8] sm:$0xff]
      %v9607 = vld [vmem:[%s9 + $0x1e0] sm:$0xf]
      %v9608 = vld [vmem:[%s9 + $0x1e4] sm:$0xff]
      %v9609 = vld [vmem:[%s9 + $0x1ec] sm:$0xff]
      %v9610 = vld [vmem:[%s9 + $0x1f4] sm:$0xff]
      %v9611 = vld [vmem:[%s9 + $0x1fc] sm:$0xff]
      %v9612 = vld [vmem:[%s9 + $0x204] sm:$0xff]
      %v9613 = vld [vmem:[%s9 + $0x20c] sm:$0xf]
      %v9614 = vld [vmem:[%s9 + $0x210] sm:$0xff]
      %v9615 = vld [vmem:[%s9 + $0x218] sm:$0xff]
      %v9616 = vld [vmem:[%s9 + $0x220] sm:$0xff]
      %v9617 = vld [vmem:[%s9 + $0x228] sm:$0xff]
      %v9618 = vld [vmem:[%s9 + $0x230] sm:$0xff]
      %v9619 = vld [vmem:[%s9 + $0x238] sm:$0xf]
      %v9620 = vld [vmem:[%s9 + $0x23c] sm:$0xff]
      %v9621 = vld [vmem:[%s9 + $0x244] sm:$0xff]
      %v9622 = vld [vmem:[%s9 + $0x24c] sm:$0xff]
      %v9623 = vld [vmem:[%s9 + $0x254] sm:$0xff]
      %v9624 = vld [vmem:[%s9 + $0x25c] sm:$0xff]
      %v9625 = vld [vmem:[%s9 + $0x264] sm:$0xf]
      %v9626 = vld [vmem:[%s9 + $0x268] sm:$0xff]
      %v9627 = vld [vmem:[%s9 + $0x270] sm:$0xff]
      %v9628 = vld [vmem:[%s9 + $0x278] sm:$0xff]
      %v9629 = vld [vmem:[%s9 + $0x280] sm:$0xff]
      %v9630 = vld [vmem:[%s9 + $0x288] sm:$0xff]
      %v9631 = vld [vmem:[%s9 + $0x290] sm:$0xf]
      %v9632 = vld [vmem:[%s9 + $0x294] sm:$0xff]
      %v9633 = vld [vmem:[%s9 + $0x29c] sm:$0xff]
      %v9634 = vld [vmem:[%s9 + $0x2a4] sm:$0xff]
      %v9635 = vld [vmem:[%s9 + $0x2ac] sm:$0xff]
      %v9636 = vld [vmem:[%s9 + $0x2b4] sm:$0xff]
      %v9637 = vld [vmem:[%s9 + $0x2bc] sm:$0xf]
      %v9638 = vld [vmem:[%s9 + $0x2c0] sm:$0xff]
      %v9639 = vld [vmem:[%s9 + $0x2c8] sm:$0xff]
      %v9640 = vld [vmem:[%s9 + $0x2d0] sm:$0xff]
      %v9641 = vld [vmem:[%s9 + $0x2d8] sm:$0xff]
      %v9642 = vld [vmem:[%s9 + $0x2e0] sm:$0xff]
      %v9643 = vld [vmem:[%s9 + $0x2e8] sm:$0xf]
      %v9644 = vld [vmem:[%s9 + $0x2ec] sm:$0xff]
      %v9645 = vld [vmem:[%s9 + $0x2f4] sm:$0xff]
      %v9646 = vld [vmem:[%s9 + $0x2fc] sm:$0xff]
      %v9647 = vld [vmem:[%s9 + $0x304] sm:$0xff]
      %v9648 = vld [vmem:[%s9 + $0x30c] sm:$0xff]
      %v9649 = vld [vmem:[%s9 + $0x314] sm:$0xf]
      %v9650 = vld [vmem:[%s9 + $0x318] sm:$0xff]
      %v9651 = vld [vmem:[%s9 + $0x320] sm:$0xff]
      %v9652 = vld [vmem:[%s9 + $0x328] sm:$0xff]
      %v9653 = vld [vmem:[%s9 + $0x330] sm:$0xff]
      %v9654 = vld [vmem:[%s9 + $0x338] sm:$0xff]
      %v9655 = vld [vmem:[%s9 + $0x340] sm:$0xf]
      %v9656 = vld [vmem:[%s9 + $0x344] sm:$0xff]
      %v9657 = vld [vmem:[%s9 + $0x34c] sm:$0xff]
      %v9658 = vld [vmem:[%s9 + $0x354] sm:$0xff]
      %v9659 = vld [vmem:[%s9 + $0x35c] sm:$0xff]
      %v9660 = vld [vmem:[%s9 + $0x364] sm:$0xff]
      %v9661 = vld [vmem:[%s9 + $0x36c] sm:$0xf]
      %v9662 = vld [vmem:[%s9 + $0x370] sm:$0xff]
      %v9663 = vld [vmem:[%s9 + $0x378] sm:$0xff]
      %v9664 = vld [vmem:[%s9 + $0x380] sm:$0xff]
      %v9665 = vld [vmem:[%s9 + $0x388] sm:$0xff]
      %v9666 = vld [vmem:[%s9 + $0x390] sm:$0xff]
      %v9667 = vld [vmem:[%s9 + $0x398] sm:$0xf]
      %v9668 = vld [vmem:[%s9 + $0x39c] sm:$0xff]
      %v9669 = vld [vmem:[%s9 + $0x3a4] sm:$0xff]
      %v9670 = vld [vmem:[%s9 + $0x3ac] sm:$0xff]
      %v9671 = vld [vmem:[%s9 + $0x3b4] sm:$0xff]
      %v9672 = vld [vmem:[%s9 + $0x3bc] sm:$0xff]
      %v9673 = vld [vmem:[%s9 + $0x3c4] sm:$0xf]
      %v9674 = vld [vmem:[%s9 + $0x3c8] sm:$0xff]
      %v9675 = vld [vmem:[%s9 + $0x3d0] sm:$0xff]
      %v9676 = vld [vmem:[%s9 + $0x3d8] sm:$0xff]
      %v9677 = vld [vmem:[%s9 + $0x3e0] sm:$0xff]
      %v9678 = vld [vmem:[%s9 + $0x3e8] sm:$0xff]
      %v9679 = vld [vmem:[%s9 + $0x3f0] sm:$0xf]
      %v9680 = vld [vmem:[%s9 + $0x3f4] sm:$0xff]
      %v9681 = vld [vmem:[%s9 + $0x3fc] sm:$0xff]
      %v9682 = vld [vmem:[%s9 + $0x404] sm:$0xff]
      %v9683 = vld [vmem:[%s9 + $0x40c] sm:$0xff]
      %v9684 = vld [vmem:[%s9 + $0x414] sm:$0xff]
      %v9685 = vld [vmem:[%s9 + $0x41c] sm:$0xf]
      %v9686 = vld [vmem:[%s9 + $0x420] sm:$0xff]
      %v9687 = vld [vmem:[%s9 + $0x428] sm:$0xff]
      %v9688 = vld [vmem:[%s9 + $0x430] sm:$0xff]
      %v9689 = vld [vmem:[%s9 + $0x438] sm:$0xff]
      %v9690 = vld [vmem:[%s9 + $0x440] sm:$0xff]
      %v9691 = vld [vmem:[%s9 + $0x448] sm:$0xf]
      %v9692 = vld [vmem:[%s10] sm:$0xff]
      %v9693 = vld [vmem:[%s10 + $0x8] sm:$0xff]
      %v9694 = vld [vmem:[%s10 + $0x10] sm:$0xff]
      %v9695 = vld [vmem:[%s10 + $0x18] sm:$0xff]
      %v9696 = vld [vmem:[%s10 + $0x20] sm:$0xff]
      %v9697 = vld [vmem:[%s10 + $0x28] sm:$0xff]
      %v9698 = vld [vmem:[%s10 + $0x30] sm:$0xff]
      %v9699 = vld [vmem:[%s10 + $0x38] sm:$0xff]
      %v9700 = vld [vmem:[%s10 + $0x40] sm:$0xff]
      %v9701 = vld [vmem:[%s10 + $0x48] sm:$0xff]
      %v9702 = vld [vmem:[%s10 + $0x50] sm:$0xff]
      %v9703 = vld [vmem:[%s10 + $0x58] sm:$0xff]
      %v9704 = vld [vmem:[%s10 + $0x60] sm:$0xff]
      %v9705 = vld [vmem:[%s10 + $0x68] sm:$0xff]
      %v9706 = vld [vmem:[%s10 + $0x70] sm:$0xff]
      %v9707 = vld [vmem:[%s10 + $0x78] sm:$0xff]
      %v9708 = vld [vmem:[%s10 + $0x80] sm:$0xff]
      %v9709 = vld [vmem:[%s10 + $0x88] sm:$0xff]
      %v9710 = vld [vmem:[%s10 + $0x90] sm:$0xff]
      %v9711 = vld [vmem:[%s10 + $0x98] sm:$0xff]
      %v9712 = vld [vmem:[%s10 + $0xa0] sm:$0xff]
      %v9713 = vld [vmem:[%s10 + $0xa8] sm:$0xff]
      %v9714 = vld [vmem:[%s10 + $0xb0] sm:$0xff]
      %v9715 = vld [vmem:[%s10 + $0xb8] sm:$0xff]
      %v9716 = vld [vmem:[%s10 + $0xc0] sm:$0xff]
      %9718 = vset.pattern.permute.xlu0 0
      %9719 = vperm.xlu0 %9718, %v9692
      %v9720 = vpop.permute.xlu0 %9719
      %9723 = vset.pattern.permute.xlu0 0
      %9724 = vperm.xlu0 %9723, %v9693
      %v9725 = vpop.permute.xlu0 %9724
      %9728 = vset.pattern.permute.xlu0 0
      %9729 = vperm.xlu0 %9728, %v9694
      %v9730 = vpop.permute.xlu0 %9729
      %9733 = vset.pattern.permute.xlu0 0
      %9734 = vperm.xlu0 %9733, %v9695
      %v9735 = vpop.permute.xlu0 %9734
      %9738 = vset.pattern.permute.xlu0 0
      %9739 = vperm.xlu0 %9738, %v9696
      %v9740 = vpop.permute.xlu0 %9739
      %9743 = vset.pattern.permute.xlu0 0
      %9744 = vperm.xlu0 %9743, %v9697
      %v9745 = vpop.permute.xlu0 %9744
      %9748 = vset.pattern.permute.xlu0 0
      %9749 = vperm.xlu0 %9748, %v9698
      %v9750 = vpop.permute.xlu0 %9749
      %9753 = vset.pattern.permute.xlu0 0
      %9754 = vperm.xlu0 %9753, %v9699
      %v9755 = vpop.permute.xlu0 %9754
      %9758 = vset.pattern.permute.xlu0 0
      %9759 = vperm.xlu0 %9758, %v9700
      %v9760 = vpop.permute.xlu0 %9759
      %9763 = vset.pattern.permute.xlu0 0
      %9764 = vperm.xlu0 %9763, %v9701
      %v9765 = vpop.permute.xlu0 %9764
      %9768 = vset.pattern.permute.xlu0 0
      %9769 = vperm.xlu0 %9768, %v9702
      %v9770 = vpop.permute.xlu0 %9769
      %9773 = vset.pattern.permute.xlu0 0
      %9774 = vperm.xlu0 %9773, %v9703
      %v9775 = vpop.permute.xlu0 %9774
      %9778 = vset.pattern.permute.xlu0 0
      %9779 = vperm.xlu0 %9778, %v9704
      %v9780 = vpop.permute.xlu0 %9779
      %9783 = vset.pattern.permute.xlu0 0
      %9784 = vperm.xlu0 %9783, %v9705
      %v9785 = vpop.permute.xlu0 %9784
      %9788 = vset.pattern.permute.xlu0 0
      %9789 = vperm.xlu0 %9788, %v9706
      %v9790 = vpop.permute.xlu0 %9789
      %9793 = vset.pattern.permute.xlu0 0
      %9794 = vperm.xlu0 %9793, %v9707
      %v9795 = vpop.permute.xlu0 %9794
      %9798 = vset.pattern.permute.xlu0 0
      %9799 = vperm.xlu0 %9798, %v9708
      %v9800 = vpop.permute.xlu0 %9799
      %9803 = vset.pattern.permute.xlu0 0
      %9804 = vperm.xlu0 %9803, %v9709
      %v9805 = vpop.permute.xlu0 %9804
      %9808 = vset.pattern.permute.xlu0 0
      %9809 = vperm.xlu0 %9808, %v9710
      %v9810 = vpop.permute.xlu0 %9809
      %9813 = vset.pattern.permute.xlu0 0
      %9814 = vperm.xlu0 %9813, %v9711
      %v9815 = vpop.permute.xlu0 %9814
      %9818 = vset.pattern.permute.xlu0 0
      %9819 = vperm.xlu0 %9818, %v9712
      %v9820 = vpop.permute.xlu0 %9819
      %9823 = vset.pattern.permute.xlu0 0
      %9824 = vperm.xlu0 %9823, %v9713
      %v9825 = vpop.permute.xlu0 %9824
      %9828 = vset.pattern.permute.xlu0 0
      %9829 = vperm.xlu0 %9828, %v9714
      %v9830 = vpop.permute.xlu0 %9829
      %9833 = vset.pattern.permute.xlu0 0
      %9834 = vperm.xlu0 %9833, %v9715
      %v9835 = vpop.permute.xlu0 %9834
      %9838 = vset.pattern.permute.xlu0 0
      %9839 = vperm.xlu0 %9838, %v9716
      %v9840 = vpop.permute.xlu0 %9839
      %v9992 = vunpack.c.l.b16 %v9542
      %v9993 = vunpack.c.h.b16 %v9542
      %v9994 = vunpack.c.l.b16 %v9543
      %v9995 = vunpack.c.h.b16 %v9543
      %v9996 = vunpack.c.l.b16 %v9544
      %v9997 = vunpack.c.h.b16 %v9544
      %v9998 = vunpack.c.l.b16 %v9545
      %v9999 = vunpack.c.h.b16 %v9545
      %v10000 = vunpack.c.l.b16 %v9546
      %v10001 = vunpack.c.h.b16 %v9546
      %v10002 = vunpack.c.l.b16 %v9547
      %v10003 = vunpack.c.l.b16 %v9548
      %v10004 = vunpack.c.h.b16 %v9548
      %v10005 = vunpack.c.l.b16 %v9549
      %v10006 = vunpack.c.h.b16 %v9549
      %v10007 = vunpack.c.l.b16 %v9550
      %v10008 = vunpack.c.h.b16 %v9550
      %v10009 = vunpack.c.l.b16 %v9551
      %v10010 = vunpack.c.h.b16 %v9551
      %v10011 = vunpack.c.l.b16 %v9552
      %v10012 = vunpack.c.h.b16 %v9552
      %v10013 = vunpack.c.l.b16 %v9553
      %v10014 = vunpack.c.l.b16 %v9554
      %v10015 = vunpack.c.h.b16 %v9554
      %v10016 = vunpack.c.l.b16 %v9555
      %v10017 = vunpack.c.h.b16 %v9555
      %v10018 = vunpack.c.l.b16 %v9556
      %v10019 = vunpack.c.h.b16 %v9556
      %v10020 = vunpack.c.l.b16 %v9557
      %v10021 = vunpack.c.h.b16 %v9557
      %v10022 = vunpack.c.l.b16 %v9558
      %v10023 = vunpack.c.h.b16 %v9558
      %v10024 = vunpack.c.l.b16 %v9559
      %v10025 = vunpack.c.l.b16 %v9560
      %v10026 = vunpack.c.h.b16 %v9560
      %v10027 = vunpack.c.l.b16 %v9561
      %v10028 = vunpack.c.h.b16 %v9561
      %v10029 = vunpack.c.l.b16 %v9562
      %v10030 = vunpack.c.h.b16 %v9562
      %v10031 = vunpack.c.l.b16 %v9563
      %v10032 = vunpack.c.h.b16 %v9563
      %v10033 = vunpack.c.l.b16 %v9564
      %v10034 = vunpack.c.h.b16 %v9564
      %v10035 = vunpack.c.l.b16 %v9565
      %v10036 = vunpack.c.l.b16 %v9566
      %v10037 = vunpack.c.h.b16 %v9566
      %v10038 = vunpack.c.l.b16 %v9567
      %v10039 = vunpack.c.h.b16 %v9567
      %v10040 = vunpack.c.l.b16 %v9568
      %v10041 = vunpack.c.h.b16 %v9568
      %v10042 = vunpack.c.l.b16 %v9569
      %v10043 = vunpack.c.h.b16 %v9569
      %v10044 = vunpack.c.l.b16 %v9570
      %v10045 = vunpack.c.h.b16 %v9570
      %v10046 = vunpack.c.l.b16 %v9571
      %v10047 = vunpack.c.l.b16 %v9572
      %v10048 = vunpack.c.h.b16 %v9572
      %v10049 = vunpack.c.l.b16 %v9573
      %v10050 = vunpack.c.h.b16 %v9573
      %v10051 = vunpack.c.l.b16 %v9574
      %v10052 = vunpack.c.h.b16 %v9574
      %v10053 = vunpack.c.l.b16 %v9575
      %v10054 = vunpack.c.h.b16 %v9575
      %v10055 = vunpack.c.l.b16 %v9576
      %v10056 = vunpack.c.h.b16 %v9576
      %v10057 = vunpack.c.l.b16 %v9577
      %v10058 = vunpack.c.l.b16 %v9578
      %v10059 = vunpack.c.h.b16 %v9578
      %v10060 = vunpack.c.l.b16 %v9579
      %v10061 = vunpack.c.h.b16 %v9579
      %v10062 = vunpack.c.l.b16 %v9580
      %v10063 = vunpack.c.h.b16 %v9580
      %v10064 = vunpack.c.l.b16 %v9581
      %v10065 = vunpack.c.h.b16 %v9581
      %v10066 = vunpack.c.l.b16 %v9582
      %v10067 = vunpack.c.h.b16 %v9582
      %v10068 = vunpack.c.l.b16 %v9583
      %v10069 = vunpack.c.l.b16 %v9584
      %v10070 = vunpack.c.h.b16 %v9584
      %v10071 = vunpack.c.l.b16 %v9585
      %v10072 = vunpack.c.h.b16 %v9585
      %v10073 = vunpack.c.l.b16 %v9586
      %v10074 = vunpack.c.h.b16 %v9586
      %v10075 = vunpack.c.l.b16 %v9587
      %v10076 = vunpack.c.h.b16 %v9587
      %v10077 = vunpack.c.l.b16 %v9588
      %v10078 = vunpack.c.h.b16 %v9588
      %v10079 = vunpack.c.l.b16 %v9589
      %v10080 = vunpack.c.l.b16 %v9590
      %v10081 = vunpack.c.h.b16 %v9590
      %v10082 = vunpack.c.l.b16 %v9591
      %v10083 = vunpack.c.h.b16 %v9591
      %v10084 = vunpack.c.l.b16 %v9592
      %v10085 = vunpack.c.h.b16 %v9592
      %v10086 = vunpack.c.l.b16 %v9593
      %v10087 = vunpack.c.h.b16 %v9593
      %v10088 = vunpack.c.l.b16 %v9594
      %v10089 = vunpack.c.h.b16 %v9594
      %v10090 = vunpack.c.l.b16 %v9595
      %v10091 = vunpack.c.l.b16 %v9596
      %v10092 = vunpack.c.h.b16 %v9596
      %v10093 = vunpack.c.l.b16 %v9597
      %v10094 = vunpack.c.h.b16 %v9597
      %v10095 = vunpack.c.l.b16 %v9598
      %v10096 = vunpack.c.h.b16 %v9598
      %v10097 = vunpack.c.l.b16 %v9599
      %v10098 = vunpack.c.h.b16 %v9599
      %v10099 = vunpack.c.l.b16 %v9600
      %v10100 = vunpack.c.h.b16 %v9600
      %v10101 = vunpack.c.l.b16 %v9601
      %v10102 = vunpack.c.l.b16 %v9602
      %v10103 = vunpack.c.h.b16 %v9602
      %v10104 = vunpack.c.l.b16 %v9603
      %v10105 = vunpack.c.h.b16 %v9603
      %v10106 = vunpack.c.l.b16 %v9604
      %v10107 = vunpack.c.h.b16 %v9604
      %v10108 = vunpack.c.l.b16 %v9605
      %v10109 = vunpack.c.h.b16 %v9605
      %v10110 = vunpack.c.l.b16 %v9606
      %v10111 = vunpack.c.h.b16 %v9606
      %v10112 = vunpack.c.l.b16 %v9607
      %v10113 = vunpack.c.l.b16 %v9608
      %v10114 = vunpack.c.h.b16 %v9608
      %v10115 = vunpack.c.l.b16 %v9609
      %v10116 = vunpack.c.h.b16 %v9609
      %v10117 = vunpack.c.l.b16 %v9610
      %v10118 = vunpack.c.h.b16 %v9610
      %v10119 = vunpack.c.l.b16 %v9611
      %v10120 = vunpack.c.h.b16 %v9611
      %v10121 = vunpack.c.l.b16 %v9612
      %v10122 = vunpack.c.h.b16 %v9612
      %v10123 = vunpack.c.l.b16 %v9613
      %v10124 = vunpack.c.l.b16 %v9614
      %v10125 = vunpack.c.h.b16 %v9614
      %v10126 = vunpack.c.l.b16 %v9615
      %v10127 = vunpack.c.h.b16 %v9615
      %v10128 = vunpack.c.l.b16 %v9616
      %v10129 = vunpack.c.h.b16 %v9616
      %v10130 = vunpack.c.l.b16 %v9617
      %v10131 = vunpack.c.h.b16 %v9617
      %v10132 = vunpack.c.l.b16 %v9618
      %v10133 = vunpack.c.h.b16 %v9618
      %v10134 = vunpack.c.l.b16 %v9619
      %v10135 = vunpack.c.l.b16 %v9620
      %v10136 = vunpack.c.h.b16 %v9620
      %v10137 = vunpack.c.l.b16 %v9621
      %v10138 = vunpack.c.h.b16 %v9621
      %v10139 = vunpack.c.l.b16 %v9622
      %v10140 = vunpack.c.h.b16 %v9622
      %v10141 = vunpack.c.l.b16 %v9623
      %v10142 = vunpack.c.h.b16 %v9623
      %v10143 = vunpack.c.l.b16 %v9624
      %v10144 = vunpack.c.h.b16 %v9624
      %v10145 = vunpack.c.l.b16 %v9625
      %v10146 = vunpack.c.l.b16 %v9626
      %v10147 = vunpack.c.h.b16 %v9626
      %v10148 = vunpack.c.l.b16 %v9627
      %v10149 = vunpack.c.h.b16 %v9627
      %v10150 = vunpack.c.l.b16 %v9628
      %v10151 = vunpack.c.h.b16 %v9628
      %v10152 = vunpack.c.l.b16 %v9629
      %v10153 = vunpack.c.h.b16 %v9629
      %v10154 = vunpack.c.l.b16 %v9630
      %v10155 = vunpack.c.h.b16 %v9630
      %v10156 = vunpack.c.l.b16 %v9631
      %v10157 = vunpack.c.l.b16 %v9632
      %v10158 = vunpack.c.h.b16 %v9632
      %v10159 = vunpack.c.l.b16 %v9633
      %v10160 = vunpack.c.h.b16 %v9633
      %v10161 = vunpack.c.l.b16 %v9634
      %v10162 = vunpack.c.h.b16 %v9634
      %v10163 = vunpack.c.l.b16 %v9635
      %v10164 = vunpack.c.h.b16 %v9635
      %v10165 = vunpack.c.l.b16 %v9636
      %v10166 = vunpack.c.h.b16 %v9636
      %v10167 = vunpack.c.l.b16 %v9637
      %v10168 = vunpack.c.l.b16 %v9638
      %v10169 = vunpack.c.h.b16 %v9638
      %v10170 = vunpack.c.l.b16 %v9639
      %v10171 = vunpack.c.h.b16 %v9639
      %v10172 = vunpack.c.l.b16 %v9640
      %v10173 = vunpack.c.h.b16 %v9640
      %v10174 = vunpack.c.l.b16 %v9641
      %v10175 = vunpack.c.h.b16 %v9641
      %v10176 = vunpack.c.l.b16 %v9642
      %v10177 = vunpack.c.h.b16 %v9642
      %v10178 = vunpack.c.l.b16 %v9643
      %v10179 = vunpack.c.l.b16 %v9644
      %v10180 = vunpack.c.h.b16 %v9644
      %v10181 = vunpack.c.l.b16 %v9645
      %v10182 = vunpack.c.h.b16 %v9645
      %v10183 = vunpack.c.l.b16 %v9646
      %v10184 = vunpack.c.h.b16 %v9646
      %v10185 = vunpack.c.l.b16 %v9647
      %v10186 = vunpack.c.h.b16 %v9647
      %v10187 = vunpack.c.l.b16 %v9648
      %v10188 = vunpack.c.h.b16 %v9648
      %v10189 = vunpack.c.l.b16 %v9649
      %v10190 = vunpack.c.l.b16 %v9650
      %v10191 = vunpack.c.h.b16 %v9650
      %v10192 = vunpack.c.l.b16 %v9651
      %v10193 = vunpack.c.h.b16 %v9651
      %v10194 = vunpack.c.l.b16 %v9652
      %v10195 = vunpack.c.h.b16 %v9652
      %v10196 = vunpack.c.l.b16 %v9653
      %v10197 = vunpack.c.h.b16 %v9653
      %v10198 = vunpack.c.l.b16 %v9654
      %v10199 = vunpack.c.h.b16 %v9654
      %v10200 = vunpack.c.l.b16 %v9655
      %v10201 = vunpack.c.l.b16 %v9656
      %v10202 = vunpack.c.h.b16 %v9656
      %v10203 = vunpack.c.l.b16 %v9657
      %v10204 = vunpack.c.h.b16 %v9657
      %v10205 = vunpack.c.l.b16 %v9658
      %v10206 = vunpack.c.h.b16 %v9658
      %v10207 = vunpack.c.l.b16 %v9659
      %v10208 = vunpack.c.h.b16 %v9659
      %v10209 = vunpack.c.l.b16 %v9660
      %v10210 = vunpack.c.h.b16 %v9660
      %v10211 = vunpack.c.l.b16 %v9661
      %v10212 = vunpack.c.l.b16 %v9662
      %v10213 = vunpack.c.h.b16 %v9662
      %v10214 = vunpack.c.l.b16 %v9663
      %v10215 = vunpack.c.h.b16 %v9663
      %v10216 = vunpack.c.l.b16 %v9664
      %v10217 = vunpack.c.h.b16 %v9664
      %v10218 = vunpack.c.l.b16 %v9665
      %v10219 = vunpack.c.h.b16 %v9665
      %v10220 = vunpack.c.l.b16 %v9666
      %v10221 = vunpack.c.h.b16 %v9666
      %v10222 = vunpack.c.l.b16 %v9667
      %v10223 = vunpack.c.l.b16 %v9668
      %v10224 = vunpack.c.h.b16 %v9668
      %v10225 = vunpack.c.l.b16 %v9669
      %v10226 = vunpack.c.h.b16 %v9669
      %v10227 = vunpack.c.l.b16 %v9670
      %v10228 = vunpack.c.h.b16 %v9670
      %v10229 = vunpack.c.l.b16 %v9671
      %v10230 = vunpack.c.h.b16 %v9671
      %v10231 = vunpack.c.l.b16 %v9672
      %v10232 = vunpack.c.h.b16 %v9672
      %v10233 = vunpack.c.l.b16 %v9673
      %v10234 = vunpack.c.l.b16 %v9674
      %v10235 = vunpack.c.h.b16 %v9674
      %v10236 = vunpack.c.l.b16 %v9675
      %v10237 = vunpack.c.h.b16 %v9675
      %v10238 = vunpack.c.l.b16 %v9676
      %v10239 = vunpack.c.h.b16 %v9676
      %v10240 = vunpack.c.l.b16 %v9677
      %v10241 = vunpack.c.h.b16 %v9677
      %v10242 = vunpack.c.l.b16 %v9678
      %v10243 = vunpack.c.h.b16 %v9678
      %v10244 = vunpack.c.l.b16 %v9679
      %v10245 = vunpack.c.l.b16 %v9680
      %v10246 = vunpack.c.h.b16 %v9680
      %v10247 = vunpack.c.l.b16 %v9681
      %v10248 = vunpack.c.h.b16 %v9681
      %v10249 = vunpack.c.l.b16 %v9682
      %v10250 = vunpack.c.h.b16 %v9682
      %v10251 = vunpack.c.l.b16 %v9683
      %v10252 = vunpack.c.h.b16 %v9683
      %v10253 = vunpack.c.l.b16 %v9684
      %v10254 = vunpack.c.h.b16 %v9684
      %v10255 = vunpack.c.l.b16 %v9685
      %v10256 = vunpack.c.l.b16 %v9686
      %v10257 = vunpack.c.h.b16 %v9686
      %v10258 = vunpack.c.l.b16 %v9687
      %v10259 = vunpack.c.h.b16 %v9687
      %v10260 = vunpack.c.l.b16 %v9688
      %v10261 = vunpack.c.h.b16 %v9688
      %v10262 = vunpack.c.l.b16 %v9689
      %v10263 = vunpack.c.h.b16 %v9689
      %v10264 = vunpack.c.l.b16 %v9690
      %v10265 = vunpack.c.h.b16 %v9690
      %v10266 = vunpack.c.l.b16 %v9691
      %v10267 = vpack.c.b16 %v10003, %v9992
      %v10268 = vpack.c.b16 %v10004, %v9993
      %v10269 = vpack.c.b16 %v10005, %v9994
      %v10270 = vpack.c.b16 %v10006, %v9995
      %v10271 = vpack.c.b16 %v10007, %v9996
      %v10272 = vpack.c.b16 %v10008, %v9997
      %v10273 = vpack.c.b16 %v10009, %v9998
      %v10274 = vpack.c.b16 %v10010, %v9999
      %v10275 = vpack.c.b16 %v10011, %v10000
      %v10276 = vpack.c.b16 %v10012, %v10001
      %v10277 = vpack.c.b16 %v10013, %v10002
      %v10278 = vpack.c.b16 %v10025, %v10014
      %v10279 = vpack.c.b16 %v10026, %v10015
      %v10280 = vpack.c.b16 %v10027, %v10016
      %v10281 = vpack.c.b16 %v10028, %v10017
      %v10282 = vpack.c.b16 %v10029, %v10018
      %v10283 = vpack.c.b16 %v10030, %v10019
      %v10284 = vpack.c.b16 %v10031, %v10020
      %v10285 = vpack.c.b16 %v10032, %v10021
      %v10286 = vpack.c.b16 %v10033, %v10022
      %v10287 = vpack.c.b16 %v10034, %v10023
      %v10288 = vpack.c.b16 %v10035, %v10024
      %v10289 = vpack.c.b16 %v10047, %v10036
      %v10290 = vpack.c.b16 %v10048, %v10037
      %v10291 = vpack.c.b16 %v10049, %v10038
      %v10292 = vpack.c.b16 %v10050, %v10039
      %v10293 = vpack.c.b16 %v10051, %v10040
      %v10294 = vpack.c.b16 %v10052, %v10041
      %v10295 = vpack.c.b16 %v10053, %v10042
      %v10296 = vpack.c.b16 %v10054, %v10043
      %v10297 = vpack.c.b16 %v10055, %v10044
      %v10298 = vpack.c.b16 %v10056, %v10045
      %v10299 = vpack.c.b16 %v10057, %v10046
      %v10300 = vpack.c.b16 %v10069, %v10058
      %v10301 = vpack.c.b16 %v10070, %v10059
      %v10302 = vpack.c.b16 %v10071, %v10060
      %v10303 = vpack.c.b16 %v10072, %v10061
      %v10304 = vpack.c.b16 %v10073, %v10062
      %v10305 = vpack.c.b16 %v10074, %v10063
      %v10306 = vpack.c.b16 %v10075, %v10064
      %v10307 = vpack.c.b16 %v10076, %v10065
      %v10308 = vpack.c.b16 %v10077, %v10066
      %v10309 = vpack.c.b16 %v10078, %v10067
      %v10310 = vpack.c.b16 %v10079, %v10068
      %v10311 = vpack.c.b16 %v10091, %v10080
      %v10312 = vpack.c.b16 %v10092, %v10081
      %v10313 = vpack.c.b16 %v10093, %v10082
      %v10314 = vpack.c.b16 %v10094, %v10083
      %v10315 = vpack.c.b16 %v10095, %v10084
      %v10316 = vpack.c.b16 %v10096, %v10085
      %v10317 = vpack.c.b16 %v10097, %v10086
      %v10318 = vpack.c.b16 %v10098, %v10087
      %v10319 = vpack.c.b16 %v10099, %v10088
      %v10320 = vpack.c.b16 %v10100, %v10089
      %v10321 = vpack.c.b16 %v10101, %v10090
      %v10322 = vpack.c.b16 %v10113, %v10102
      %v10323 = vpack.c.b16 %v10114, %v10103
      %v10324 = vpack.c.b16 %v10115, %v10104
      %v10325 = vpack.c.b16 %v10116, %v10105
      %v10326 = vpack.c.b16 %v10117, %v10106
      %v10327 = vpack.c.b16 %v10118, %v10107
      %v10328 = vpack.c.b16 %v10119, %v10108
      %v10329 = vpack.c.b16 %v10120, %v10109
      %v10330 = vpack.c.b16 %v10121, %v10110
      %v10331 = vpack.c.b16 %v10122, %v10111
      %v10332 = vpack.c.b16 %v10123, %v10112
      %v10333 = vpack.c.b16 %v10135, %v10124
      %v10334 = vpack.c.b16 %v10136, %v10125
      %v10335 = vpack.c.b16 %v10137, %v10126
      %v10336 = vpack.c.b16 %v10138, %v10127
      %v10337 = vpack.c.b16 %v10139, %v10128
      %v10338 = vpack.c.b16 %v10140, %v10129
      %v10339 = vpack.c.b16 %v10141, %v10130
      %v10340 = vpack.c.b16 %v10142, %v10131
      %v10341 = vpack.c.b16 %v10143, %v10132
      %v10342 = vpack.c.b16 %v10144, %v10133
      %v10343 = vpack.c.b16 %v10145, %v10134
      %v10344 = vpack.c.b16 %v10157, %v10146
      %v10345 = vpack.c.b16 %v10158, %v10147
      %v10346 = vpack.c.b16 %v10159, %v10148
      %v10347 = vpack.c.b16 %v10160, %v10149
      %v10348 = vpack.c.b16 %v10161, %v10150
      %v10349 = vpack.c.b16 %v10162, %v10151
      %v10350 = vpack.c.b16 %v10163, %v10152
      %v10351 = vpack.c.b16 %v10164, %v10153
      %v10352 = vpack.c.b16 %v10165, %v10154
      %v10353 = vpack.c.b16 %v10166, %v10155
      %v10354 = vpack.c.b16 %v10167, %v10156
      %v10355 = vpack.c.b16 %v10179, %v10168
      %v10356 = vpack.c.b16 %v10180, %v10169
      %v10357 = vpack.c.b16 %v10181, %v10170
      %v10358 = vpack.c.b16 %v10182, %v10171
      %v10359 = vpack.c.b16 %v10183, %v10172
      %v10360 = vpack.c.b16 %v10184, %v10173
      %v10361 = vpack.c.b16 %v10185, %v10174
      %v10362 = vpack.c.b16 %v10186, %v10175
      %v10363 = vpack.c.b16 %v10187, %v10176
      %v10364 = vpack.c.b16 %v10188, %v10177
      %v10365 = vpack.c.b16 %v10189, %v10178
      %v10366 = vpack.c.b16 %v10201, %v10190
      %v10367 = vpack.c.b16 %v10202, %v10191
      %v10368 = vpack.c.b16 %v10203, %v10192
      %v10369 = vpack.c.b16 %v10204, %v10193
      %v10370 = vpack.c.b16 %v10205, %v10194
      %v10371 = vpack.c.b16 %v10206, %v10195
      %v10372 = vpack.c.b16 %v10207, %v10196
      %v10373 = vpack.c.b16 %v10208, %v10197
      %v10374 = vpack.c.b16 %v10209, %v10198
      %v10375 = vpack.c.b16 %v10210, %v10199
      %v10376 = vpack.c.b16 %v10211, %v10200
      %v10377 = vpack.c.b16 %v10223, %v10212
      %v10378 = vpack.c.b16 %v10224, %v10213
      %v10379 = vpack.c.b16 %v10225, %v10214
      %v10380 = vpack.c.b16 %v10226, %v10215
      %v10381 = vpack.c.b16 %v10227, %v10216
      %v10382 = vpack.c.b16 %v10228, %v10217
      %v10383 = vpack.c.b16 %v10229, %v10218
      %v10384 = vpack.c.b16 %v10230, %v10219
      %v10385 = vpack.c.b16 %v10231, %v10220
      %v10386 = vpack.c.b16 %v10232, %v10221
      %v10387 = vpack.c.b16 %v10233, %v10222
      %v10388 = vpack.c.b16 %v10245, %v10234
      %v10389 = vpack.c.b16 %v10246, %v10235
      %v10390 = vpack.c.b16 %v10247, %v10236
      %v10391 = vpack.c.b16 %v10248, %v10237
      %v10392 = vpack.c.b16 %v10249, %v10238
      %v10393 = vpack.c.b16 %v10250, %v10239
      %v10394 = vpack.c.b16 %v10251, %v10240
      %v10395 = vpack.c.b16 %v10252, %v10241
      %v10396 = vpack.c.b16 %v10253, %v10242
      %v10397 = vpack.c.b16 %v10254, %v10243
      %v10398 = vpack.c.b16 %v10255, %v10244
      %v10399 = vpack.c.b16 %v10256, %v10256
      %v10400 = vpack.c.b16 %v10257, %v10257
      %v10401 = vpack.c.b16 %v10258, %v10258
      %v10402 = vpack.c.b16 %v10259, %v10259
      %v10403 = vpack.c.b16 %v10260, %v10260
      %v10404 = vpack.c.b16 %v10261, %v10261
      %v10405 = vpack.c.b16 %v10262, %v10262
      %v10406 = vpack.c.b16 %v10263, %v10263
      %v10407 = vpack.c.b16 %v10264, %v10264
      %v10408 = vpack.c.b16 %v10265, %v10265
      %v10409 = vpack.c.b16 %v10266, %v10266
      %vm10540 = vcmask 162816
      %v10542 = vsel %vm10540, %v10277, 0
      %v10545 = vsel %vm10540, %v10288, 0
      %v10548 = vsel %vm10540, %v10299, 0
      %v10551 = vsel %vm10540, %v10310, 0
      %v10554 = vsel %vm10540, %v10321, 0
      %v10557 = vsel %vm10540, %v10332, 0
      %v10560 = vsel %vm10540, %v10343, 0
      %v10563 = vsel %vm10540, %v10354, 0
      %v10566 = vsel %vm10540, %v10365, 0
      %v10569 = vsel %vm10540, %v10376, 0
      %v10572 = vsel %vm10540, %v10387, 0
      %v10575 = vsel %vm10540, %v10398, 0
      %v10578 = vsel %vm10540, %v10409, 0
      %v10580 = vsel %vm1517, %v9035, 0
      %v10582 = vsel %vm1517, %v9062, 0
      %10584 = vmatprep.subr.bf16.mxu0 %v8804
      %10585 = vmatpush1.bf16.msra.mxu0 %v8770
      %10586 = vmatprep.subr.bf16.mxu0 %v8806
      %10587 = vmatpush1.bf16.msra.mxu0 %v8772
      %10588 = vmatprep.subr.bf16.mxu0 %v8808
      %10589 = vmatpush1.bf16.msra.mxu0 %v8774
      %10590 = vmatprep.subr.bf16.mxu0 %v8810
      %10591 = vmatpush1.bf16.msra.mxu0 %v8776
      %10592 = vmatprep.subr.bf16.mxu0 %v8812
      %10593 = vmatpush1.bf16.msra.mxu0 %v8778
      %10594 = vmatprep.subr.bf16.mxu0 %v8814
      %10595 = vmatpush1.bf16.msra.mxu0 %v8780
      %10596 = vmatprep.subr.bf16.mxu0 %v9480
      %10597 = vmatpush1.bf16.msra.mxu0 %v9477
      %10598 = vmatprep.subr.bf16.mxu0 %v9095
      %10599 = vmatpush1.bf16.msra.mxu0 %v9093
      %10600 = vmatprep.subr.bf16.mxu0 %v9099
      %10601 = vmatpush1.bf16.msra.mxu0 %v9097
      %10602 = vmatprep.subr.bf16.mxu0 %v9103
      %10603 = vmatpush1.bf16.msra.mxu0 %v9101
      %10604 = vmatprep.subr.bf16.mxu0 %v9107
      %10605 = vmatpush1.bf16.msra.mxu0 %v9105
      %10606 = vmatprep.subr.bf16.mxu0 %v9111
      %10607 = vmatpush1.bf16.msra.mxu0 %v9109
      %10608 = vmatprep.subr.bf16.mxu0 %v9488
      %10609 = vmatpush1.bf16.msra.mxu0 %v9484
      %10610 = vmatprep.subr.bf16.mxu0 %v9138
      %10611 = vmatpush1.bf16.msra.mxu0 %v9136
      %10612 = vmatprep.subr.bf16.mxu0 %v9142
      %10613 = vmatpush1.bf16.msra.mxu0 %v9140
      %10614 = vmatprep.subr.bf16.mxu0 %v9146
      %10615 = vmatpush1.bf16.msra.mxu0 %v9144
      %10616 = vmatprep.mubr.bf16.mxu0 %v10268
      %10617 = vmatmul.mubr.bf16.gmra.mrb[0].mxu0 %v10267
      %v10618 = vpop.f32.mrb[0].mxu0
      %v10619 = vadd.f32 %v9720, %v10618
      %v10620 = vpop.f32.mrb[0].mxu0
      %v10621 = vadd.f32 %v9720, %v10620
      %v10622 = vpop.f32.mrb[0].mxu0
      %v10623 = vadd.f32 %v9725, %v10622
      %v10624 = vpop.f32.mrb[0].mxu0
      %v10625 = vadd.f32 %v9725, %v10624
      %10626 = vmatprep.mubr.bf16.mxu0 %v10279
      %10627 = vmatmul.mubr.bf16.gmra.mrb[0].mxu0 %v10278
      %v10628 = vpop.f32.mrb[0].mxu0
      %v10629 = vadd.f32 %v9730, %v10628
      %v10630 = vpop.f32.mrb[0].mxu0
      %v10631 = vadd.f32 %v9730, %v10630
      %v10632 = vpop.f32.mrb[0].mxu0
      %v10633 = vadd.f32 %v9735, %v10632
      %v10634 = vpop.f32.mrb[0].mxu0
      %v10635 = vadd.f32 %v9735, %v10634
      %10636 = vmatprep.mubr.bf16.mxu0 %v10290
      %10637 = vmatmul.mubr.bf16.gmra.mrb[0].mxu0 %v10289
      %v10638 = vpop.f32.mrb[0].mxu0
      %v10639 = vadd.f32 %v9740, %v10638
      %v10640 = vpop.f32.mrb[0].mxu0
      %v10641 = vadd.f32 %v9740, %v10640
      %v10642 = vpop.f32.mrb[0].mxu0
      %v10643 = vadd.f32 %v9745, %v10642
      %v10644 = vpop.f32.mrb[0].mxu0
      %v10645 = vadd.f32 %v9745, %v10644
      %10646 = vmatprep.mubr.bf16.mxu0 %v10301
      %10647 = vmatmul.mubr.bf16.gmra.mrb[0].mxu0 %v10300
      %v10648 = vpop.f32.mrb[0].mxu0
      %v10649 = vadd.f32 %v9750, %v10648
      %v10650 = vpop.f32.mrb[0].mxu0
      %v10651 = vadd.f32 %v9750, %v10650
      %v10652 = vpop.f32.mrb[0].mxu0
      %v10653 = vadd.f32 %v9755, %v10652
      %v10654 = vpop.f32.mrb[0].mxu0
      %v10655 = vadd.f32 %v9755, %v10654
      %10656 = vmatprep.mubr.bf16.mxu0 %v10312
      %10657 = vmatmul.mubr.bf16.gmra.mrb[0].mxu0 %v10311
      %v10658 = vpop.f32.mrb[0].mxu0
      %v10659 = vadd.f32 %v9760, %v10658
      %v10660 = vpop.f32.mrb[0].mxu0
      %v10661 = vadd.f32 %v9760, %v10660
      %v10662 = vpop.f32.mrb[0].mxu0
      %v10663 = vadd.f32 %v9765, %v10662
      %v10664 = vpop.f32.mrb[0].mxu0
      %v10665 = vadd.f32 %v9765, %v10664
      %10666 = vmatprep.mubr.bf16.mxu0 %v10323
      %10667 = vmatmul.mubr.bf16.gmra.mrb[0].mxu0 %v10322
      %v10668 = vpop.f32.mrb[0].mxu0
      %v10669 = vadd.f32 %v9770, %v10668
      %v10670 = vpop.f32.mrb[0].mxu0
      %v10671 = vadd.f32 %v9770, %v10670
      %v10672 = vpop.f32.mrb[0].mxu0
      %v10673 = vadd.f32 %v9775, %v10672
      %v10674 = vpop.f32.mrb[0].mxu0
      %v10675 = vadd.f32 %v9775, %v10674
      %10676 = vmatprep.mubr.bf16.mxu0 %v10334
      %10677 = vmatmul.mubr.bf16.gmra.mrb[0].mxu0 %v10333
      %v10678 = vpop.f32.mrb[0].mxu0
      %v10679 = vadd.f32 %v9780, %v10678
      %v10680 = vpop.f32.mrb[0].mxu0
      %v10681 = vadd.f32 %v9780, %v10680
      %v10682 = vpop.f32.mrb[0].mxu0
      %v10683 = vadd.f32 %v9785, %v10682
      %v10684 = vpop.f32.mrb[0].mxu0
      %v10685 = vadd.f32 %v9785, %v10684
      %10686 = vmatprep.mubr.bf16.mxu0 %v10345
      %10687 = vmatmul.mubr.bf16.gmra.mrb[0].mxu0 %v10344
      %v10688 = vpop.f32.mrb[0].mxu0
      %v10689 = vadd.f32 %v9790, %v10688
      %v10690 = vpop.f32.mrb[0].mxu0
      %v10691 = vadd.f32 %v9790, %v10690
      %v10692 = vpop.f32.mrb[0].mxu0
      %v10693 = vadd.f32 %v9795, %v10692
      %v10694 = vpop.f32.mrb[0].mxu0
      %v10695 = vadd.f32 %v9795, %v10694
      %10696 = vmatprep.mubr.bf16.mxu0 %v10356
      %10697 = vmatmul.mubr.bf16.gmra.mrb[0].mxu0 %v10355
      %v10698 = vpop.f32.mrb[0].mxu0
      %v10699 = vadd.f32 %v9800, %v10698
      %v10700 = vpop.f32.mrb[0].mxu0
      %v10701 = vadd.f32 %v9800, %v10700
      %v10702 = vpop.f32.mrb[0].mxu0
      %v10703 = vadd.f32 %v9805, %v10702
      %v10704 = vpop.f32.mrb[0].mxu0
      %v10705 = vadd.f32 %v9805, %v10704
      %10706 = vmatprep.mubr.bf16.mxu0 %v10367
      %10707 = vmatmul.mubr.bf16.gmra.mrb[0].mxu0 %v10366
      %v10708 = vpop.f32.mrb[0].mxu0
      %v10709 = vadd.f32 %v9810, %v10708
      %v10710 = vpop.f32.mrb[0].mxu0
      %v10711 = vadd.f32 %v9810, %v10710
      %v10712 = vpop.f32.mrb[0].mxu0
      %v10713 = vadd.f32 %v9815, %v10712
      %v10714 = vpop.f32.mrb[0].mxu0
      %v10715 = vadd.f32 %v9815, %v10714
      %10716 = vmatprep.mubr.bf16.mxu0 %v10378
      %10717 = vmatmul.mubr.bf16.gmra.mrb[0].mxu0 %v10377
      %v10718 = vpop.f32.mrb[0].mxu0
      %v10719 = vadd.f32 %v9820, %v10718
      %v10720 = vpop.f32.mrb[0].mxu0
      %v10721 = vadd.f32 %v9820, %v10720
      %v10722 = vpop.f32.mrb[0].mxu0
      %v10723 = vadd.f32 %v9825, %v10722
      %v10724 = vpop.f32.mrb[0].mxu0
      %v10725 = vadd.f32 %v9825, %v10724
      %10726 = vmatprep.mubr.bf16.mxu0 %v10389
      %10727 = vmatmul.mubr.bf16.gmra.mrb[0].mxu0 %v10388
      %v10728 = vpop.f32.mrb[0].mxu0
      %v10729 = vadd.f32 %v9830, %v10728
      %v10730 = vpop.f32.mrb[0].mxu0
      %v10731 = vadd.f32 %v9830, %v10730
      %v10732 = vpop.f32.mrb[0].mxu0
      %v10733 = vadd.f32 %v9835, %v10732
      %v10734 = vpop.f32.mrb[0].mxu0
      %v10735 = vadd.f32 %v9835, %v10734
      %10736 = vmatprep.mubr.bf16.mxu0 %v10400
      %10737 = vmatmul.mubr.bf16.gmra.mrb[0].mxu0 %v10399
      %v10738 = vpop.f32.mrb[0].mxu0
      %v10739 = vadd.f32 %v9840, %v10738
      %v10740 = vpop.f32.mrb[0].mxu0
      %v10741 = vadd.f32 %v9840, %v10740
      %v10742 = vpop.f32.mrb[0].mxu0
      %v10743 = vpop.f32.mrb[0].mxu0
      %10744 = vdwg.mxu0
      %10745 = vmatprep.subr.bf16.mxu0 %v9150
      %10746 = vmatpush1.bf16.msra.mxu0 %v9148
      %10747 = vmatprep.subr.bf16.mxu0 %v9154
      %10748 = vmatpush1.bf16.msra.mxu0 %v9152
      %10749 = vmatprep.subr.bf16.mxu0 %v9496
      %10750 = vmatpush1.bf16.msra.mxu0 %v9492
      %10751 = vmatprep.subr.bf16.mxu0 %v9181
      %10752 = vmatpush1.bf16.msra.mxu0 %v9179
      %10753 = vmatprep.subr.bf16.mxu0 %v9185
      %10754 = vmatpush1.bf16.msra.mxu0 %v9183
      %10755 = vmatprep.subr.bf16.mxu0 %v9189
      %10756 = vmatpush1.bf16.msra.mxu0 %v9187
      %10757 = vmatprep.subr.bf16.mxu0 %v9193
      %10758 = vmatpush1.bf16.msra.mxu0 %v9191
      %10759 = vmatprep.subr.bf16.mxu0 %v9197
      %10760 = vmatpush1.bf16.msra.mxu0 %v9195
      %10761 = vmatprep.subr.bf16.mxu0 %v9201
      %10762 = vmatpush1.bf16.msra.mxu0 %v9199
      %10763 = vmatprep.subr.bf16.mxu0 %v8900
      %10764 = vmatpush1.bf16.msra.mxu0 %v8873
      %10765 = vmatprep.subr.bf16.mxu0 %v8902
      %10766 = vmatpush1.bf16.msra.mxu0 %v8875
      %10767 = vmatprep.subr.bf16.mxu0 %v8904
      %10768 = vmatpush1.bf16.msra.mxu0 %v8877
      %10769 = vmatprep.subr.bf16.mxu0 %v8906
      %10770 = vmatpush1.bf16.msra.mxu0 %v8879
      %10771 = vmatprep.subr.bf16.mxu0 %v8908
      %10772 = vmatpush1.bf16.msra.mxu0 %v8881
      %10773 = vmatprep.subr.bf16.mxu0 %v8910
      %10774 = vmatpush1.bf16.msra.mxu0 %v8883
      %10775 = vmatprep.subr.bf16.mxu0 %v9502
      %10776 = vmatpush1.bf16.msra.mxu0 %v9499
      %10777 = vmatprep.mubr.bf16.mxu0 %v10270
      %10778 = vmatmul.mubr.bf16.gmra.mrb[0].mxu0 %v10269
      %v10779 = vpop.f32.mrb[0].mxu0
      %v10780 = vadd.f32 %v10619, %v10779
      %v10781 = vpop.f32.mrb[0].mxu0
      %v10782 = vadd.f32 %v10621, %v10781
      %v10783 = vpop.f32.mrb[0].mxu0
      %v10784 = vadd.f32 %v10623, %v10783
      %v10785 = vpop.f32.mrb[0].mxu0
      %v10786 = vadd.f32 %v10625, %v10785
      %10787 = vmatprep.mubr.bf16.mxu0 %v10281
      %10788 = vmatmul.mubr.bf16.gmra.mrb[0].mxu0 %v10280
      %v10789 = vpop.f32.mrb[0].mxu0
      %v10790 = vadd.f32 %v10629, %v10789
      %v10791 = vpop.f32.mrb[0].mxu0
      %v10792 = vadd.f32 %v10631, %v10791
      %v10793 = vpop.f32.mrb[0].mxu0
      %v10794 = vadd.f32 %v10633, %v10793
      %v10795 = vpop.f32.mrb[0].mxu0
      %v10796 = vadd.f32 %v10635, %v10795
      %10797 = vmatprep.mubr.bf16.mxu0 %v10292
      %10798 = vmatmul.mubr.bf16.gmra.mrb[0].mxu0 %v10291
      %v10799 = vpop.f32.mrb[0].mxu0
      %v10800 = vadd.f32 %v10639, %v10799
      %v10801 = vpop.f32.mrb[0].mxu0
      %v10802 = vadd.f32 %v10641, %v10801
      %v10803 = vpop.f32.mrb[0].mxu0
      %v10804 = vadd.f32 %v10643, %v10803
      %v10805 = vpop.f32.mrb[0].mxu0
      %v10806 = vadd.f32 %v10645, %v10805
      %10807 = vmatprep.mubr.bf16.mxu0 %v10303
      %10808 = vmatmul.mubr.bf16.gmra.mrb[0].mxu0 %v10302
      %v10809 = vpop.f32.mrb[0].mxu0
      %v10810 = vadd.f32 %v10649, %v10809
      %v10811 = vpop.f32.mrb[0].mxu0
      %v10812 = vadd.f32 %v10651, %v10811
      %v10813 = vpop.f32.mrb[0].mxu0
      %v10814 = vadd.f32 %v10653, %v10813
      %v10815 = vpop.f32.mrb[0].mxu0
      %v10816 = vadd.f32 %v10655, %v10815
      %10817 = vmatprep.mubr.bf16.mxu0 %v10314
      %10818 = vmatmul.mubr.bf16.gmra.mrb[0].mxu0 %v10313
      %v10819 = vpop.f32.mrb[0].mxu0
      %v10820 = vadd.f32 %v10659, %v10819
      %v10821 = vpop.f32.mrb[0].mxu0
      %v10822 = vadd.f32 %v10661, %v10821
      %v10823 = vpop.f32.mrb[0].mxu0
      %v10824 = vadd.f32 %v10663, %v10823
      %v10825 = vpop.f32.mrb[0].mxu0
      %v10826 = vadd.f32 %v10665, %v10825
      %10827 = vmatprep.mubr.bf16.mxu0 %v10325
      %10828 = vmatmul.mubr.bf16.gmra.mrb[0].mxu0 %v10324
      %v10829 = vpop.f32.mrb[0].mxu0
      %v10830 = vadd.f32 %v10669, %v10829
      %v10831 = vpop.f32.mrb[0].mxu0
      %v10832 = vadd.f32 %v10671, %v10831
      %v10833 = vpop.f32.mrb[0].mxu0
      %v10834 = vadd.f32 %v10673, %v10833
      %v10835 = vpop.f32.mrb[0].mxu0
      %v10836 = vadd.f32 %v10675, %v10835
      %10837 = vmatprep.mubr.bf16.mxu0 %v10336
      %10838 = vmatmul.mubr.bf16.gmra.mrb[0].mxu0 %v10335
      %v10839 = vpop.f32.mrb[0].mxu0
      %v10840 = vadd.f32 %v10679, %v10839
      %v10841 = vpop.f32.mrb[0].mxu0
      %v10842 = vadd.f32 %v10681, %v10841
      %v10843 = vpop.f32.mrb[0].mxu0
      %v10844 = vadd.f32 %v10683, %v10843
      %v10845 = vpop.f32.mrb[0].mxu0
      %v10846 = vadd.f32 %v10685, %v10845
      %10847 = vmatprep.mubr.bf16.mxu0 %v10347
      %10848 = vmatmul.mubr.bf16.gmra.mrb[0].mxu0 %v10346
      %v10849 = vpop.f32.mrb[0].mxu0
      %v10850 = vadd.f32 %v10689, %v10849
      %v10851 = vpop.f32.mrb[0].mxu0
      %v10852 = vadd.f32 %v10691, %v10851
      %v10853 = vpop.f32.mrb[0].mxu0
      %v10854 = vadd.f32 %v10693, %v10853
      %v10855 = vpop.f32.mrb[0].mxu0
      %v10856 = vadd.f32 %v10695, %v10855
      %10857 = vmatprep.mubr.bf16.mxu0 %v10358
      %10858 = vmatmul.mubr.bf16.gmra.mrb[0].mxu0 %v10357
      %v10859 = vpop.f32.mrb[0].mxu0
      %v10860 = vadd.f32 %v10699, %v10859
      %v10861 = vpop.f32.mrb[0].mxu0
      %v10862 = vadd.f32 %v10701, %v10861
      %v10863 = vpop.f32.mrb[0].mxu0
      %v10864 = vadd.f32 %v10703, %v10863
      %v10865 = vpop.f32.mrb[0].mxu0
      %v10866 = vadd.f32 %v10705, %v10865
      %10867 = vmatprep.mubr.bf16.mxu0 %v10369
      %10868 = vmatmul.mubr.bf16.gmra.mrb[0].mxu0 %v10368
      %v10869 = vpop.f32.mrb[0].mxu0
      %v10870 = vadd.f32 %v10709, %v10869
      %v10871 = vpop.f32.mrb[0].mxu0
      %v10872 = vadd.f32 %v10711, %v10871
      %v10873 = vpop.f32.mrb[0].mxu0
      %v10874 = vadd.f32 %v10713, %v10873
      %v10875 = vpop.f32.mrb[0].mxu0
      %v10876 = vadd.f32 %v10715, %v10875
      %10877 = vmatprep.mubr.bf16.mxu0 %v10380
      %10878 = vmatmul.mubr.bf16.gmra.mrb[0].mxu0 %v10379
      %v10879 = vpop.f32.mrb[0].mxu0
      %v10880 = vadd.f32 %v10719, %v10879
      %v10881 = vpop.f32.mrb[0].mxu0
      %v10882 = vadd.f32 %v10721, %v10881
      %v10883 = vpop.f32.mrb[0].mxu0
      %v10884 = vadd.f32 %v10723, %v10883
      %v10885 = vpop.f32.mrb[0].mxu0
      %v10886 = vadd.f32 %v10725, %v10885
      %10887 = vmatprep.mubr.bf16.mxu0 %v10391
      %10888 = vmatmul.mubr.bf16.gmra.mrb[0].mxu0 %v10390
      %v10889 = vpop.f32.mrb[0].mxu0
      %v10890 = vadd.f32 %v10729, %v10889
      %v10891 = vpop.f32.mrb[0].mxu0
      %v10892 = vadd.f32 %v10731, %v10891
      %v10893 = vpop.f32.mrb[0].mxu0
      %v10894 = vadd.f32 %v10733, %v10893
      %v10895 = vpop.f32.mrb[0].mxu0
      %v10896 = vadd.f32 %v10735, %v10895
      %10897 = vmatprep.mubr.bf16.mxu0 %v10402
      %10898 = vmatmul.mubr.bf16.gmra.mrb[0].mxu0 %v10401
      %v10899 = vpop.f32.mrb[0].mxu0
      %v10900 = vadd.f32 %v10739, %v10899
      %v10901 = vpop.f32.mrb[0].mxu0
      %v10902 = vadd.f32 %v10741, %v10901
      %v10903 = vpop.f32.mrb[0].mxu0
      %v10904 = vpop.f32.mrb[0].mxu0
      %10905 = vdwg.mxu0
      %10906 = vmatprep.subr.bf16.mxu0 %v9226
      %10907 = vmatpush1.bf16.msra.mxu0 %v9224
      %10908 = vmatprep.subr.bf16.mxu0 %v9230
      %10909 = vmatpush1.bf16.msra.mxu0 %v9228
      %10910 = vmatprep.subr.bf16.mxu0 %v9234
      %10911 = vmatpush1.bf16.msra.mxu0 %v9232
      %10912 = vmatprep.subr.bf16.mxu0 %v9238
      %10913 = vmatpush1.bf16.msra.mxu0 %v9236
      %10914 = vmatprep.subr.bf16.mxu0 %v9242
      %10915 = vmatpush1.bf16.msra.mxu0 %v9240
      %10916 = vmatprep.subr.bf16.mxu0 %v9510
      %10917 = vmatpush1.bf16.msra.mxu0 %v9506
      %10918 = vmatprep.subr.bf16.mxu0 %v9262
      %10919 = vmatpush1.bf16.msra.mxu0 %v9260
      %10920 = vmatprep.subr.bf16.mxu0 %v9266
      %10921 = vmatpush1.bf16.msra.mxu0 %v9264
      %10922 = vmatprep.subr.bf16.mxu0 %v9270
      %10923 = vmatpush1.bf16.msra.mxu0 %v9268
      %10924 = vmatprep.subr.bf16.mxu0 %v9274
      %10925 = vmatpush1.bf16.msra.mxu0 %v9272
      %10926 = vmatprep.subr.bf16.mxu0 %v9278
      %10927 = vmatpush1.bf16.msra.mxu0 %v9276
      %10928 = vmatprep.subr.bf16.mxu0 %v9518
      %10929 = vmatpush1.bf16.msra.mxu0 %v9514
      %10930 = vmatprep.subr.bf16.mxu0 %v9305
      %10931 = vmatpush1.bf16.msra.mxu0 %v9303
      %10932 = vmatprep.subr.bf16.mxu0 %v9309
      %10933 = vmatpush1.bf16.msra.mxu0 %v9307
      %10934 = vmatprep.subr.bf16.mxu0 %v9313
      %10935 = vmatpush1.bf16.msra.mxu0 %v9311
      %10936 = vmatprep.subr.bf16.mxu0 %v9317
      %10937 = vmatpush1.bf16.msra.mxu0 %v9315
      %10938 = vmatprep.mubr.bf16.mxu0 %v10272
      %10939 = vmatmul.mubr.bf16.gmra.mrb[0].mxu0 %v10271
      %v10940 = vpop.f32.mrb[0].mxu0
      %v10941 = vadd.f32 %v10780, %v10940
      %v10942 = vpop.f32.mrb[0].mxu0
      %v10943 = vadd.f32 %v10782, %v10942
      %v10944 = vpop.f32.mrb[0].mxu0
      %v10945 = vadd.f32 %v10784, %v10944
      %v10946 = vpop.f32.mrb[0].mxu0
      %v10947 = vadd.f32 %v10786, %v10946
      %10948 = vmatprep.mubr.bf16.mxu0 %v10283
      %10949 = vmatmul.mubr.bf16.gmra.mrb[0].mxu0 %v10282
      %v10950 = vpop.f32.mrb[0].mxu0
      %v10951 = vadd.f32 %v10790, %v10950
      %v10952 = vpop.f32.mrb[0].mxu0
      %v10953 = vadd.f32 %v10792, %v10952
      %v10954 = vpop.f32.mrb[0].mxu0
      %v10955 = vadd.f32 %v10794, %v10954
      %v10956 = vpop.f32.mrb[0].mxu0
      %v10957 = vadd.f32 %v10796, %v10956
      %10958 = vmatprep.mubr.bf16.mxu0 %v10294
      %10959 = vmatmul.mubr.bf16.gmra.mrb[0].mxu0 %v10293
      %v10960 = vpop.f32.mrb[0].mxu0
      %v10961 = vadd.f32 %v10800, %v10960
      %v10962 = vpop.f32.mrb[0].mxu0
      %v10963 = vadd.f32 %v10802, %v10962
      %v10964 = vpop.f32.mrb[0].mxu0
      %v10965 = vadd.f32 %v10804, %v10964
      %v10966 = vpop.f32.mrb[0].mxu0
      %v10967 = vadd.f32 %v10806, %v10966
      %10968 = vmatprep.mubr.bf16.mxu0 %v10305
      %10969 = vmatmul.mubr.bf16.gmra.mrb[0].mxu0 %v10304
      %v10970 = vpop.f32.mrb[0].mxu0
      %v10971 = vadd.f32 %v10810, %v10970
      %v10972 = vpop.f32.mrb[0].mxu0
      %v10973 = vadd.f32 %v10812, %v10972
      %v10974 = vpop.f32.mrb[0].mxu0
      %v10975 = vadd.f32 %v10814, %v10974
      %v10976 = vpop.f32.mrb[0].mxu0
      %v10977 = vadd.f32 %v10816, %v10976
      %10978 = vmatprep.mubr.bf16.mxu0 %v10316
      %10979 = vmatmul.mubr.bf16.gmra.mrb[0].mxu0 %v10315
      %v10980 = vpop.f32.mrb[0].mxu0
      %v10981 = vadd.f32 %v10820, %v10980
      %v10982 = vpop.f32.mrb[0].mxu0
      %v10983 = vadd.f32 %v10822, %v10982
      %v10984 = vpop.f32.mrb[0].mxu0
      %v10985 = vadd.f32 %v10824, %v10984
      %v10986 = vpop.f32.mrb[0].mxu0
      %v10987 = vadd.f32 %v10826, %v10986
      %10988 = vmatprep.mubr.bf16.mxu0 %v10327
      %10989 = vmatmul.mubr.bf16.gmra.mrb[0].mxu0 %v10326
      %v10990 = vpop.f32.mrb[0].mxu0
      %v10991 = vadd.f32 %v10830, %v10990
      %v10992 = vpop.f32.mrb[0].mxu0
      %v10993 = vadd.f32 %v10832, %v10992
      %v10994 = vpop.f32.mrb[0].mxu0
      %v10995 = vadd.f32 %v10834, %v10994
      %v10996 = vpop.f32.mrb[0].mxu0
      %v10997 = vadd.f32 %v10836, %v10996
      %10998 = vmatprep.mubr.bf16.mxu0 %v10338
      %10999 = vmatmul.mubr.bf16.gmra.mrb[0].mxu0 %v10337
      %v11000 = vpop.f32.mrb[0].mxu0
      %v11001 = vadd.f32 %v10840, %v11000
      %v11002 = vpop.f32.mrb[0].mxu0
      %v11003 = vadd.f32 %v10842, %v11002
      %v11004 = vpop.f32.mrb[0].mxu0
      %v11005 = vadd.f32 %v10844, %v11004
      %v11006 = vpop.f32.mrb[0].mxu0
      %v11007 = vadd.f32 %v10846, %v11006
      %11008 = vmatprep.mubr.bf16.mxu0 %v10349
      %11009 = vmatmul.mubr.bf16.gmra.mrb[0].mxu0 %v10348
      %v11010 = vpop.f32.mrb[0].mxu0
      %v11011 = vadd.f32 %v10850, %v11010
      %v11012 = vpop.f32.mrb[0].mxu0
      %v11013 = vadd.f32 %v10852, %v11012
      %v11014 = vpop.f32.mrb[0].mxu0
      %v11015 = vadd.f32 %v10854, %v11014
      %v11016 = vpop.f32.mrb[0].mxu0
      %v11017 = vadd.f32 %v10856, %v11016
      %11018 = vmatprep.mubr.bf16.mxu0 %v10360
      %11019 = vmatmul.mubr.bf16.gmra.mrb[0].mxu0 %v10359
      %v11020 = vpop.f32.mrb[0].mxu0
      %v11021 = vadd.f32 %v10860, %v11020
      %v11022 = vpop.f32.mrb[0].mxu0
      %v11023 = vadd.f32 %v10862, %v11022
      %v11024 = vpop.f32.mrb[0].mxu0
      %v11025 = vadd.f32 %v10864, %v11024
      %v11026 = vpop.f32.mrb[0].mxu0
      %v11027 = vadd.f32 %v10866, %v11026
      %11028 = vmatprep.mubr.bf16.mxu0 %v10371
      %11029 = vmatmul.mubr.bf16.gmra.mrb[0].mxu0 %v10370
      %v11030 = vpop.f32.mrb[0].mxu0
      %v11031 = vadd.f32 %v10870, %v11030
      %v11032 = vpop.f32.mrb[0].mxu0
      %v11033 = vadd.f32 %v10872, %v11032
      %v11034 = vpop.f32.mrb[0].mxu0
      %v11035 = vadd.f32 %v10874, %v11034
      %v11036 = vpop.f32.mrb[0].mxu0
      %v11037 = vadd.f32 %v10876, %v11036
      %11038 = vmatprep.mubr.bf16.mxu0 %v10382
      %11039 = vmatmul.mubr.bf16.gmra.mrb[0].mxu0 %v10381
      %v11040 = vpop.f32.mrb[0].mxu0
      %v11041 = vadd.f32 %v10880, %v11040
      %v11042 = vpop.f32.mrb[0].mxu0
      %v11043 = vadd.f32 %v10882, %v11042
      %v11044 = vpop.f32.mrb[0].mxu0
      %v11045 = vadd.f32 %v10884, %v11044
      %v11046 = vpop.f32.mrb[0].mxu0
      %v11047 = vadd.f32 %v10886, %v11046
      %11048 = vmatprep.mubr.bf16.mxu0 %v10393
      %11049 = vmatmul.mubr.bf16.gmra.mrb[0].mxu0 %v10392
      %v11050 = vpop.f32.mrb[0].mxu0
      %v11051 = vadd.f32 %v10890, %v11050
      %v11052 = vpop.f32.mrb[0].mxu0
      %v11053 = vadd.f32 %v10892, %v11052
      %v11054 = vpop.f32.mrb[0].mxu0
      %v11055 = vadd.f32 %v10894, %v11054
      %v11056 = vpop.f32.mrb[0].mxu0
      %v11057 = vadd.f32 %v10896, %v11056
      %11058 = vmatprep.mubr.bf16.mxu0 %v10404
      %11059 = vmatmul.mubr.bf16.gmra.mrb[0].mxu0 %v10403
      %v11060 = vpop.f32.mrb[0].mxu0
      %v11061 = vadd.f32 %v10900, %v11060
      %v11062 = vpop.f32.mrb[0].mxu0
      %v11063 = vadd.f32 %v10902, %v11062
      %v11064 = vpop.f32.mrb[0].mxu0
      %v11065 = vpop.f32.mrb[0].mxu0
      %11066 = vdwg.mxu0
      %11067 = vmatprep.subr.bf16.mxu0 %v9321
      %11068 = vmatpush1.bf16.msra.mxu0 %v9319
      %11069 = vmatprep.subr.bf16.mxu0 %v9325
      %11070 = vmatpush1.bf16.msra.mxu0 %v9323
      %11071 = vmatprep.subr.bf16.mxu0 %v8954
      %11072 = vmatpush1.bf16.msra.mxu0 %v8927
      %11073 = vmatprep.subr.bf16.mxu0 %v8956
      %11074 = vmatpush1.bf16.msra.mxu0 %v8929
      %11075 = vmatprep.subr.bf16.mxu0 %v8958
      %11076 = vmatpush1.bf16.msra.mxu0 %v8931
      %11077 = vmatprep.subr.bf16.mxu0 %v8960
      %11078 = vmatpush1.bf16.msra.mxu0 %v8933
      %11079 = vmatprep.subr.bf16.mxu0 %v8962
      %11080 = vmatpush1.bf16.msra.mxu0 %v8935
      %11081 = vmatprep.subr.bf16.mxu0 %v8964
      %11082 = vmatpush1.bf16.msra.mxu0 %v8937
      %11083 = vmatprep.subr.bf16.mxu0 %v9524
      %11084 = vmatpush1.bf16.msra.mxu0 %v9521
      %11085 = vmatprep.subr.bf16.mxu0 %v9357
      %11086 = vmatpush1.bf16.msra.mxu0 %v9355
      %11087 = vmatprep.subr.bf16.mxu0 %v9361
      %11088 = vmatpush1.bf16.msra.mxu0 %v9359
      %11089 = vmatprep.subr.bf16.mxu0 %v9365
      %11090 = vmatpush1.bf16.msra.mxu0 %v9363
      %11091 = vmatprep.subr.bf16.mxu0 %v9369
      %11092 = vmatpush1.bf16.msra.mxu0 %v9367
      %11093 = vmatprep.subr.bf16.mxu0 %v9373
      %11094 = vmatpush1.bf16.msra.mxu0 %v9371
      %11095 = vmatprep.subr.bf16.mxu0 %v9532
      %11096 = vmatpush1.bf16.msra.mxu0 %v9528
      %11097 = vmatprep.subr.bf16.mxu0 %v9400
      %11098 = vmatpush1.bf16.msra.mxu0 %v9398
      %11099 = vmatprep.mubr.bf16.mxu0 %v10274
      %11100 = vmatmul.mubr.bf16.gmra.mrb[0].mxu0 %v10273
      %v11101 = vpop.f32.mrb[0].mxu0
      %v11102 = vadd.f32 %v10941, %v11101
      %v11103 = vpop.f32.mrb[0].mxu0
      %v11104 = vadd.f32 %v10943, %v11103
      %v11105 = vpop.f32.mrb[0].mxu0
      %v11106 = vadd.f32 %v10945, %v11105
      %v11107 = vpop.f32.mrb[0].mxu0
      %v11108 = vadd.f32 %v10947, %v11107
      %11109 = vmatprep.mubr.bf16.mxu0 %v10285
      %11110 = vmatmul.mubr.bf16.gmra.mrb[0].mxu0 %v10284
      %v11111 = vpop.f32.mrb[0].mxu0
      %v11112 = vadd.f32 %v10951, %v11111
      %v11113 = vpop.f32.mrb[0].mxu0
      %v11114 = vadd.f32 %v10953, %v11113
      %v11115 = vpop.f32.mrb[0].mxu0
      %v11116 = vadd.f32 %v10955, %v11115
      %v11117 = vpop.f32.mrb[0].mxu0
      %v11118 = vadd.f32 %v10957, %v11117
      %11119 = vmatprep.mubr.bf16.mxu0 %v10296
      %11120 = vmatmul.mubr.bf16.gmra.mrb[0].mxu0 %v10295
      %v11121 = vpop.f32.mrb[0].mxu0
      %v11122 = vadd.f32 %v10961, %v11121
      %v11123 = vpop.f32.mrb[0].mxu0
      %v11124 = vadd.f32 %v10963, %v11123
      %v11125 = vpop.f32.mrb[0].mxu0
      %v11126 = vadd.f32 %v10965, %v11125
      %v11127 = vpop.f32.mrb[0].mxu0
      %v11128 = vadd.f32 %v10967, %v11127
      %11129 = vmatprep.mubr.bf16.mxu0 %v10307
      %11130 = vmatmul.mubr.bf16.gmra.mrb[0].mxu0 %v10306
      %v11131 = vpop.f32.mrb[0].mxu0
      %v11132 = vadd.f32 %v10971, %v11131
      %v11133 = vpop.f32.mrb[0].mxu0
      %v11134 = vadd.f32 %v10973, %v11133
      %v11135 = vpop.f32.mrb[0].mxu0
      %v11136 = vadd.f32 %v10975, %v11135
      %v11137 = vpop.f32.mrb[0].mxu0
      %v11138 = vadd.f32 %v10977, %v11137
      %11139 = vmatprep.mubr.bf16.mxu0 %v10318
      %11140 = vmatmul.mubr.bf16.gmra.mrb[0].mxu0 %v10317
      %v11141 = vpop.f32.mrb[0].mxu0
      %v11142 = vadd.f32 %v10981, %v11141
      %v11143 = vpop.f32.mrb[0].mxu0
      %v11144 = vadd.f32 %v10983, %v11143
      %v11145 = vpop.f32.mrb[0].mxu0
      %v11146 = vadd.f32 %v10985, %v11145
      %v11147 = vpop.f32.mrb[0].mxu0
      %v11148 = vadd.f32 %v10987, %v11147
      %11149 = vmatprep.mubr.bf16.mxu0 %v10329
      %11150 = vmatmul.mubr.bf16.gmra.mrb[0].mxu0 %v10328
      %v11151 = vpop.f32.mrb[0].mxu0
      %v11152 = vadd.f32 %v10991, %v11151
      %v11153 = vpop.f32.mrb[0].mxu0
      %v11154 = vadd.f32 %v10993, %v11153
      %v11155 = vpop.f32.mrb[0].mxu0
      %v11156 = vadd.f32 %v10995, %v11155
      %v11157 = vpop.f32.mrb[0].mxu0
      %v11158 = vadd.f32 %v10997, %v11157
      %11159 = vmatprep.mubr.bf16.mxu0 %v10340
      %11160 = vmatmul.mubr.bf16.gmra.mrb[0].mxu0 %v10339
      %v11161 = vpop.f32.mrb[0].mxu0
      %v11162 = vadd.f32 %v11001, %v11161
      %v11163 = vpop.f32.mrb[0].mxu0
      %v11164 = vadd.f32 %v11003, %v11163
      %v11165 = vpop.f32.mrb[0].mxu0
      %v11166 = vadd.f32 %v11005, %v11165
      %v11167 = vpop.f32.mrb[0].mxu0
      %v11168 = vadd.f32 %v11007, %v11167
      %11169 = vmatprep.mubr.bf16.mxu0 %v10351
      %11170 = vmatmul.mubr.bf16.gmra.mrb[0].mxu0 %v10350
      %v11171 = vpop.f32.mrb[0].mxu0
      %v11172 = vadd.f32 %v11011, %v11171
      %v11173 = vpop.f32.mrb[0].mxu0
      %v11174 = vadd.f32 %v11013, %v11173
      %v11175 = vpop.f32.mrb[0].mxu0
      %v11176 = vadd.f32 %v11015, %v11175
      %v11177 = vpop.f32.mrb[0].mxu0
      %v11178 = vadd.f32 %v11017, %v11177
      %11179 = vmatprep.mubr.bf16.mxu0 %v10362
      %11180 = vmatmul.mubr.bf16.gmra.mrb[0].mxu0 %v10361
      %v11181 = vpop.f32.mrb[0].mxu0
      %v11182 = vadd.f32 %v11021, %v11181
      %v11183 = vpop.f32.mrb[0].mxu0
      %v11184 = vadd.f32 %v11023, %v11183
      %v11185 = vpop.f32.mrb[0].mxu0
      %v11186 = vadd.f32 %v11025, %v11185
      %v11187 = vpop.f32.mrb[0].mxu0
      %v11188 = vadd.f32 %v11027, %v11187
      %11189 = vmatprep.mubr.bf16.mxu0 %v10373
      %11190 = vmatmul.mubr.bf16.gmra.mrb[0].mxu0 %v10372
      %v11191 = vpop.f32.mrb[0].mxu0
      %v11192 = vadd.f32 %v11031, %v11191
      %v11193 = vpop.f32.mrb[0].mxu0
      %v11194 = vadd.f32 %v11033, %v11193
      %v11195 = vpop.f32.mrb[0].mxu0
      %v11196 = vadd.f32 %v11035, %v11195
      %v11197 = vpop.f32.mrb[0].mxu0
      %v11198 = vadd.f32 %v11037, %v11197
      %11199 = vmatprep.mubr.bf16.mxu0 %v10384
      %11200 = vmatmul.mubr.bf16.gmra.mrb[0].mxu0 %v10383
      %v11201 = vpop.f32.mrb[0].mxu0
      %v11202 = vadd.f32 %v11041, %v11201
      %v11203 = vpop.f32.mrb[0].mxu0
      %v11204 = vadd.f32 %v11043, %v11203
      %v11205 = vpop.f32.mrb[0].mxu0
      %v11206 = vadd.f32 %v11045, %v11205
      %v11207 = vpop.f32.mrb[0].mxu0
      %v11208 = vadd.f32 %v11047, %v11207
      %11209 = vmatprep.mubr.bf16.mxu0 %v10395
      %11210 = vmatmul.mubr.bf16.gmra.mrb[0].mxu0 %v10394
      %v11211 = vpop.f32.mrb[0].mxu0
      %v11212 = vadd.f32 %v11051, %v11211
      %v11213 = vpop.f32.mrb[0].mxu0
      %v11214 = vadd.f32 %v11053, %v11213
      %v11215 = vpop.f32.mrb[0].mxu0
      %v11216 = vadd.f32 %v11055, %v11215
      %v11217 = vpop.f32.mrb[0].mxu0
      %v11218 = vadd.f32 %v11057, %v11217
      %11219 = vmatprep.mubr.bf16.mxu0 %v10406
      %11220 = vmatmul.mubr.bf16.gmra.mrb[0].mxu0 %v10405
      %v11221 = vpop.f32.mrb[0].mxu0
      %v11222 = vadd.f32 %v11061, %v11221
      %v11223 = vpop.f32.mrb[0].mxu0
      %v11224 = vadd.f32 %v11063, %v11223
      %v11225 = vpop.f32.mrb[0].mxu0
      %v11226 = vpop.f32.mrb[0].mxu0
      %11227 = vdwg.mxu0
      %11228 = vmatprep.subr.bf16.mxu0 %v9404
      %11229 = vmatpush1.bf16.msra.mxu0 %v9402
      %11230 = vmatprep.subr.bf16.mxu0 %v9408
      %11231 = vmatpush1.bf16.msra.mxu0 %v9406
      %11232 = vmatprep.subr.bf16.mxu0 %v9412
      %11233 = vmatpush1.bf16.msra.mxu0 %v9410
      %11234 = vmatprep.subr.bf16.mxu0 %v9416
      %11235 = vmatpush1.bf16.msra.mxu0 %v9414
      %11236 = vmatprep.subr.bf16.mxu0 %v9540
      %11237 = vmatpush1.bf16.msra.mxu0 %v9536
      %11238 = vmatprep.subr.bf16.mxu0 %v9443
      %11239 = vmatpush1.bf16.msra.mxu0 %v9441
      %11240 = vmatprep.subr.bf16.mxu0 %v9447
      %11241 = vmatpush1.bf16.msra.mxu0 %v9445
      %11242 = vmatprep.subr.bf16.mxu0 %v9451
      %11243 = vmatpush1.bf16.msra.mxu0 %v9449
      %11244 = vmatprep.subr.bf16.mxu0 %v9455
      %11245 = vmatpush1.bf16.msra.mxu0 %v9453
      %11246 = vmatprep.subr.bf16.mxu0 %v9459
      %11247 = vmatpush1.bf16.msra.mxu0 %v9457
      %11248 = vmatprep.subr.bf16.mxu0 %v9463
      %11249 = vmatpush1.bf16.msra.mxu0 %v9461
      %11250 = vmatprep.subr.bf16.mxu0 %v9050
      %11251 = vmatpush1.bf16.msra.mxu0 %v9023
      %11252 = vmatprep.subr.bf16.mxu0 %v9052
      %11253 = vmatpush1.bf16.msra.mxu0 %v9025
      %11254 = vmatprep.subr.bf16.mxu0 %v9054
      %11255 = vmatpush1.bf16.msra.mxu0 %v9027
      %11256 = vmatprep.subr.bf16.mxu0 %v9056
      %11257 = vmatpush1.bf16.msra.mxu0 %v9029
      %11258 = vmatprep.subr.bf16.mxu0 %v9058
      %11259 = vmatpush1.bf16.msra.mxu0 %v9031
      %11260 = vmatprep.mubr.bf16.mxu0 %v10276
      %11261 = vmatmul.mubr.bf16.gmra.mrb[0].mxu0 %v10275
      %v11262 = vpop.f32.mrb[0].mxu0
      %v11263 = vadd.f32 %v11102, %v11262
      %v11264 = vpop.f32.mrb[0].mxu0
      %v11265 = vadd.f32 %v11104, %v11264
      %v11266 = vpop.f32.mrb[0].mxu0
      %v11267 = vadd.f32 %v11106, %v11266
      %v11268 = vpop.f32.mrb[0].mxu0
      %v11269 = vadd.f32 %v11108, %v11268
      %11270 = vmatprep.mubr.bf16.mxu0 %v10287
      %11271 = vmatmul.mubr.bf16.gmra.mrb[0].mxu0 %v10286
      %v11272 = vpop.f32.mrb[0].mxu0
      %v11273 = vadd.f32 %v11112, %v11272
      %v11274 = vpop.f32.mrb[0].mxu0
      %v11275 = vadd.f32 %v11114, %v11274
      %v11276 = vpop.f32.mrb[0].mxu0
      %v11277 = vadd.f32 %v11116, %v11276
      %v11278 = vpop.f32.mrb[0].mxu0
      %v11279 = vadd.f32 %v11118, %v11278
      %11280 = vmatprep.mubr.bf16.mxu0 %v10298
      %11281 = vmatmul.mubr.bf16.gmra.mrb[0].mxu0 %v10297
      %v11282 = vpop.f32.mrb[0].mxu0
      %v11283 = vadd.f32 %v11122, %v11282
      %v11284 = vpop.f32.mrb[0].mxu0
      %v11285 = vadd.f32 %v11124, %v11284
      %v11286 = vpop.f32.mrb[0].mxu0
      %v11287 = vadd.f32 %v11126, %v11286
      %v11288 = vpop.f32.mrb[0].mxu0
      %v11289 = vadd.f32 %v11128, %v11288
      %11290 = vmatprep.mubr.bf16.mxu0 %v10309
      %11291 = vmatmul.mubr.bf16.gmra.mrb[0].mxu0 %v10308
      %v11292 = vpop.f32.mrb[0].mxu0
      %v11293 = vadd.f32 %v11132, %v11292
      %v11294 = vpop.f32.mrb[0].mxu0
      %v11295 = vadd.f32 %v11134, %v11294
      %v11296 = vpop.f32.mrb[0].mxu0
      %v11297 = vadd.f32 %v11136, %v11296
      %v11298 = vpop.f32.mrb[0].mxu0
      %v11299 = vadd.f32 %v11138, %v11298
      %11300 = vmatprep.mubr.bf16.mxu0 %v10320
      %11301 = vmatmul.mubr.bf16.gmra.mrb[0].mxu0 %v10319
      %v11302 = vpop.f32.mrb[0].mxu0
      %v11303 = vadd.f32 %v11142, %v11302
      %v11304 = vpop.f32.mrb[0].mxu0
      %v11305 = vadd.f32 %v11144, %v11304
      %v11306 = vpop.f32.mrb[0].mxu0
      %v11307 = vadd.f32 %v11146, %v11306
      %v11308 = vpop.f32.mrb[0].mxu0
      %v11309 = vadd.f32 %v11148, %v11308
      %11310 = vmatprep.mubr.bf16.mxu0 %v10331
      %11311 = vmatmul.mubr.bf16.gmra.mrb[0].mxu0 %v10330
      %v11312 = vpop.f32.mrb[0].mxu0
      %v11313 = vadd.f32 %v11152, %v11312
      %v11314 = vpop.f32.mrb[0].mxu0
      %v11315 = vadd.f32 %v11154, %v11314
      %v11316 = vpop.f32.mrb[0].mxu0
      %v11317 = vadd.f32 %v11156, %v11316
      %v11318 = vpop.f32.mrb[0].mxu0
      %v11319 = vadd.f32 %v11158, %v11318
      %11320 = vmatprep.mubr.bf16.mxu0 %v10342
      %11321 = vmatmul.mubr.bf16.gmra.mrb[0].mxu0 %v10341
      %v11322 = vpop.f32.mrb[0].mxu0
      %v11323 = vadd.f32 %v11162, %v11322
      %v11324 = vpop.f32.mrb[0].mxu0
      %v11325 = vadd.f32 %v11164, %v11324
      %v11326 = vpop.f32.mrb[0].mxu0
      %v11327 = vadd.f32 %v11166, %v11326
      %v11328 = vpop.f32.mrb[0].mxu0
      %v11329 = vadd.f32 %v11168, %v11328
      %11330 = vmatprep.mubr.bf16.mxu0 %v10353
      %11331 = vmatmul.mubr.bf16.gmra.mrb[0].mxu0 %v10352
      %v11332 = vpop.f32.mrb[0].mxu0
      %v11333 = vadd.f32 %v11172, %v11332
      %v11334 = vpop.f32.mrb[0].mxu0
      %v11335 = vadd.f32 %v11174, %v11334
      %v11336 = vpop.f32.mrb[0].mxu0
      %v11337 = vadd.f32 %v11176, %v11336
      %v11338 = vpop.f32.mrb[0].mxu0
      %v11339 = vadd.f32 %v11178, %v11338
      %11340 = vmatprep.mubr.bf16.mxu0 %v10364
      %11341 = vmatmul.mubr.bf16.gmra.mrb[0].mxu0 %v10363
      %v11342 = vpop.f32.mrb[0].mxu0
      %v11343 = vadd.f32 %v11182, %v11342
      %v11344 = vpop.f32.mrb[0].mxu0
      %v11345 = vadd.f32 %v11184, %v11344
      %v11346 = vpop.f32.mrb[0].mxu0
      %v11347 = vadd.f32 %v11186, %v11346
      %v11348 = vpop.f32.mrb[0].mxu0
      %v11349 = vadd.f32 %v11188, %v11348
      %11350 = vmatprep.mubr.bf16.mxu0 %v10375
      %11351 = vmatmul.mubr.bf16.gmra.mrb[0].mxu0 %v10374
      %v11352 = vpop.f32.mrb[0].mxu0
      %v11353 = vadd.f32 %v11192, %v11352
      %v11354 = vpop.f32.mrb[0].mxu0
      %v11355 = vadd.f32 %v11194, %v11354
      %v11356 = vpop.f32.mrb[0].mxu0
      %v11357 = vadd.f32 %v11196, %v11356
      %v11358 = vpop.f32.mrb[0].mxu0
      %v11359 = vadd.f32 %v11198, %v11358
      %11360 = vmatprep.mubr.bf16.mxu0 %v10386
      %11361 = vmatmul.mubr.bf16.gmra.mrb[0].mxu0 %v10385
      %v11362 = vpop.f32.mrb[0].mxu0
      %v11363 = vadd.f32 %v11202, %v11362
      %v11364 = vpop.f32.mrb[0].mxu0
      %v11365 = vadd.f32 %v11204, %v11364
      %v11366 = vpop.f32.mrb[0].mxu0
      %v11367 = vadd.f32 %v11206, %v11366
      %v11368 = vpop.f32.mrb[0].mxu0
      %v11369 = vadd.f32 %v11208, %v11368
      %11370 = vmatprep.mubr.bf16.mxu0 %v10397
      %11371 = vmatmul.mubr.bf16.gmra.mrb[0].mxu0 %v10396
      %v11372 = vpop.f32.mrb[0].mxu0
      %v11373 = vadd.f32 %v11212, %v11372
      %v11374 = vpop.f32.mrb[0].mxu0
      %v11375 = vadd.f32 %v11214, %v11374
      %v11376 = vpop.f32.mrb[0].mxu0
      %v11377 = vadd.f32 %v11216, %v11376
      %v11378 = vpop.f32.mrb[0].mxu0
      %v11379 = vadd.f32 %v11218, %v11378
      %11380 = vmatprep.mubr.bf16.mxu0 %v10408
      %11381 = vmatmul.mubr.bf16.gmra.mrb[0].mxu0 %v10407
      %v11382 = vpop.f32.mrb[0].mxu0
      %v11383 = vadd.f32 %v11222, %v11382
      %v11384 = vpop.f32.mrb[0].mxu0
      %v11385 = vadd.f32 %v11224, %v11384
      %v11386 = vpop.f32.mrb[0].mxu0
      %v11387 = vpop.f32.mrb[0].mxu0
      %11388 = vdwg.mxu0
      %11389 = vmatprep.subr.bf16.mxu0 %v9060
      %11390 = vmatpush1.bf16.msra.mxu0 %v9033
      %11391 = vmatprep.subr.bf16.mxu0 %v10582
      %11392 = vmatpush1.bf16.msra.mxu0 %v10580
      %11393 = vmatprep.subr.bf16.mxu0 0
      %11394 = vmatpush1.bf16.msra.mxu0 0
      %11395 = vmatprep.subr.bf16.mxu0 0
      %11396 = vmatpush1.bf16.msra.mxu0 0
      %11397 = vmatprep.subr.bf16.mxu0 0
      %11398 = vmatpush1.bf16.msra.mxu0 0
      %11399 = vmatprep.subr.bf16.mxu0 0
      %11400 = vmatpush1.bf16.msra.mxu0 0
      %11401 = vmatprep.subr.bf16.mxu0 0
      %11402 = vmatpush1.bf16.msra.mxu0 0
      %11403 = vmatprep.subr.bf16.mxu0 0
      %11404 = vmatpush1.bf16.msra.mxu0 0
      %11405 = vmatprep.subr.bf16.mxu0 0
      %11406 = vmatpush1.bf16.msra.mxu0 0
      %11407 = vmatprep.subr.bf16.mxu0 0
      %11408 = vmatpush1.bf16.msra.mxu0 0
      %11409 = vmatprep.subr.bf16.mxu0 0
      %11410 = vmatpush1.bf16.msra.mxu0 0
      %11411 = vmatprep.subr.bf16.mxu0 0
      %11412 = vmatpush1.bf16.msra.mxu0 0
      %11413 = vmatprep.subr.bf16.mxu0 0
      %11414 = vmatpush1.bf16.msra.mxu0 0
      %11415 = vmatprep.subr.bf16.mxu0 0
      %11416 = vmatpush1.bf16.msra.mxu0 0
      %11417 = vmatprep.subr.bf16.mxu0 0
      %11418 = vmatpush1.bf16.msra.mxu0 0
      %11419 = vmatprep.subr.bf16.mxu0 0
      %11420 = vmatpush1.bf16.msra.mxu0 0
      %11421 = vmatprep.mubr.bf16.mxu0 0
      %11422 = vmatmul.mubr.bf16.gmra.mrb[0].mxu0 %v10542
      %v11423 = vpop.f32.mrb[0].mxu0
      %v11424 = vadd.f32 %v11263, %v11423
      %v11425 = vpop.f32.mrb[0].mxu0
      %v11426 = vadd.f32 %v11265, %v11425
      %v11427 = vpop.f32.mrb[0].mxu0
      %v11428 = vadd.f32 %v11267, %v11427
      %v11429 = vpop.f32.mrb[0].mxu0
      %v11430 = vadd.f32 %v11269, %v11429
      %11431 = vmatprep.mubr.bf16.mxu0 0
      %11432 = vmatmul.mubr.bf16.gmra.mrb[0].mxu0 %v10545
      %v11433 = vpop.f32.mrb[0].mxu0
      %v11434 = vadd.f32 %v11273, %v11433
      %v11435 = vpop.f32.mrb[0].mxu0
      %v11436 = vadd.f32 %v11275, %v11435
      %v11437 = vpop.f32.mrb[0].mxu0
      %v11438 = vadd.f32 %v11277, %v11437
      %v11439 = vpop.f32.mrb[0].mxu0
      %v11440 = vadd.f32 %v11279, %v11439
      %11441 = vmatprep.mubr.bf16.mxu0 0
      %11442 = vmatmul.mubr.bf16.gmra.mrb[0].mxu0 %v10548
      %v11443 = vpop.f32.mrb[0].mxu0
      %v11444 = vadd.f32 %v11283, %v11443
      %v11445 = vpop.f32.mrb[0].mxu0
      %v11446 = vadd.f32 %v11285, %v11445
      %v11447 = vpop.f32.mrb[0].mxu0
      %v11448 = vadd.f32 %v11287, %v11447
      %v11449 = vpop.f32.mrb[0].mxu0
      %v11450 = vadd.f32 %v11289, %v11449
      %11451 = vmatprep.mubr.bf16.mxu0 0
      %11452 = vmatmul.mubr.bf16.gmra.mrb[0].mxu0 %v10551
      %v11453 = vpop.f32.mrb[0].mxu0
      %v11454 = vadd.f32 %v11293, %v11453
      %v11455 = vpop.f32.mrb[0].mxu0
      %v11456 = vadd.f32 %v11295, %v11455
      %v11457 = vpop.f32.mrb[0].mxu0
      %v11458 = vadd.f32 %v11297, %v11457
      %v11459 = vpop.f32.mrb[0].mxu0
      %v11460 = vadd.f32 %v11299, %v11459
      %11461 = vmatprep.mubr.bf16.mxu0 0
      %11462 = vmatmul.mubr.bf16.gmra.mrb[0].mxu0 %v10554
      %v11463 = vpop.f32.mrb[0].mxu0
      %v11464 = vadd.f32 %v11303, %v11463
      %v11465 = vpop.f32.mrb[0].mxu0
      %v11466 = vadd.f32 %v11305, %v11465
      %v11467 = vpop.f32.mrb[0].mxu0
      %v11468 = vadd.f32 %v11307, %v11467
      %v11469 = vpop.f32.mrb[0].mxu0
      %v11470 = vadd.f32 %v11309, %v11469
      %11471 = vmatprep.mubr.bf16.mxu0 0
      %11472 = vmatmul.mubr.bf16.gmra.mrb[0].mxu0 %v10557
      %v11473 = vpop.f32.mrb[0].mxu0
      %v11474 = vadd.f32 %v11313, %v11473
      %v11475 = vpop.f32.mrb[0].mxu0
      %v11476 = vadd.f32 %v11315, %v11475
      %v11477 = vpop.f32.mrb[0].mxu0
      %v11478 = vadd.f32 %v11317, %v11477
      %v11479 = vpop.f32.mrb[0].mxu0
      %v11480 = vadd.f32 %v11319, %v11479
      %11481 = vmatprep.mubr.bf16.mxu0 0
      %11482 = vmatmul.mubr.bf16.gmra.mrb[0].mxu0 %v10560
      %v11483 = vpop.f32.mrb[0].mxu0
      %v11484 = vadd.f32 %v11323, %v11483
      %v11485 = vpop.f32.mrb[0].mxu0
      %v11486 = vadd.f32 %v11325, %v11485
      %v11487 = vpop.f32.mrb[0].mxu0
      %v11488 = vadd.f32 %v11327, %v11487
      %v11489 = vpop.f32.mrb[0].mxu0
      %v11490 = vadd.f32 %v11329, %v11489
      %11491 = vmatprep.mubr.bf16.mxu0 0
      %11492 = vmatmul.mubr.bf16.gmra.mrb[0].mxu0 %v10563
      %v11493 = vpop.f32.mrb[0].mxu0
      %v11494 = vadd.f32 %v11333, %v11493
      %v11495 = vpop.f32.mrb[0].mxu0
      %v11496 = vadd.f32 %v11335, %v11495
      %v11497 = vpop.f32.mrb[0].mxu0
      %v11498 = vadd.f32 %v11337, %v11497
      %v11499 = vpop.f32.mrb[0].mxu0
      %v11500 = vadd.f32 %v11339, %v11499
      %11501 = vmatprep.mubr.bf16.mxu0 0
      %11502 = vmatmul.mubr.bf16.gmra.mrb[0].mxu0 %v10566
      %v11503 = vpop.f32.mrb[0].mxu0
      %v11504 = vadd.f32 %v11343, %v11503
      %v11505 = vpop.f32.mrb[0].mxu0
      %v11506 = vadd.f32 %v11345, %v11505
      %v11507 = vpop.f32.mrb[0].mxu0
      %v11508 = vadd.f32 %v11347, %v11507
      %v11509 = vpop.f32.mrb[0].mxu0
      %v11510 = vadd.f32 %v11349, %v11509
      %11511 = vmatprep.mubr.bf16.mxu0 0
      %11512 = vmatmul.mubr.bf16.gmra.mrb[0].mxu0 %v10569
      %v11513 = vpop.f32.mrb[0].mxu0
      %v11514 = vadd.f32 %v11353, %v11513
      %v11515 = vpop.f32.mrb[0].mxu0
      %v11516 = vadd.f32 %v11355, %v11515
      %v11517 = vpop.f32.mrb[0].mxu0
      %v11518 = vadd.f32 %v11357, %v11517
      %v11519 = vpop.f32.mrb[0].mxu0
      %v11520 = vadd.f32 %v11359, %v11519
      %11521 = vmatprep.mubr.bf16.mxu0 0
      %11522 = vmatmul.mubr.bf16.gmra.mrb[0].mxu0 %v10572
      %v11523 = vpop.f32.mrb[0].mxu0
      %v11524 = vadd.f32 %v11363, %v11523
      %v11525 = vpop.f32.mrb[0].mxu0
      %v11526 = vadd.f32 %v11365, %v11525
      %v11527 = vpop.f32.mrb[0].mxu0
      %v11528 = vadd.f32 %v11367, %v11527
      %v11529 = vpop.f32.mrb[0].mxu0
      %v11530 = vadd.f32 %v11369, %v11529
      %11531 = vmatprep.mubr.bf16.mxu0 0
      %11532 = vmatmul.mubr.bf16.gmra.mrb[0].mxu0 %v10575
      %v11533 = vpop.f32.mrb[0].mxu0
      %v11534 = vadd.f32 %v11373, %v11533
      %v11535 = vpop.f32.mrb[0].mxu0
      %v11536 = vadd.f32 %v11375, %v11535
      %v11537 = vpop.f32.mrb[0].mxu0
      %v11538 = vadd.f32 %v11377, %v11537
      %v11539 = vpop.f32.mrb[0].mxu0
      %v11540 = vadd.f32 %v11379, %v11539
      %11541 = vmatprep.mubr.bf16.mxu0 0
      %11542 = vmatmul.mubr.bf16.gmra.mrb[0].mxu0 %v10578
      %v11543 = vpop.f32.mrb[0].mxu0
      %v11544 = vadd.f32 %v11383, %v11543
      %v11545 = vpop.f32.mrb[0].mxu0
      %v11546 = vadd.f32 %v11385, %v11545
      %v11547 = vpop.f32.mrb[0].mxu0
      %v11548 = vpop.f32.mrb[0].mxu0
      %11549 = vdwg.mxu0
      %vm11550 = vcmp.gt.f32.partialorder %v11424, 0.0
      %vm11551 = vcmp.gt.f32.partialorder %v11426, 0.0
      %vm11552 = vcmp.gt.f32.partialorder %v11428, 0.0
      %vm11553 = vcmp.gt.f32.partialorder %v11430, 0.0
      %vm11554 = vcmp.gt.f32.partialorder %v11434, 0.0
      %vm11555 = vcmp.gt.f32.partialorder %v11436, 0.0
      %vm11556 = vcmp.gt.f32.partialorder %v11438, 0.0
      %vm11557 = vcmp.gt.f32.partialorder %v11440, 0.0
      %vm11558 = vcmp.gt.f32.partialorder %v11444, 0.0
      %vm11559 = vcmp.gt.f32.partialorder %v11446, 0.0
      %vm11560 = vcmp.gt.f32.partialorder %v11448, 0.0
      %vm11561 = vcmp.gt.f32.partialorder %v11450, 0.0
      %vm11562 = vcmp.gt.f32.partialorder %v11454, 0.0
      %vm11563 = vcmp.gt.f32.partialorder %v11456, 0.0
      %vm11564 = vcmp.gt.f32.partialorder %v11458, 0.0
      %vm11565 = vcmp.gt.f32.partialorder %v11460, 0.0
      %vm11566 = vcmp.gt.f32.partialorder %v11464, 0.0
      %vm11567 = vcmp.gt.f32.partialorder %v11466, 0.0
      %vm11568 = vcmp.gt.f32.partialorder %v11468, 0.0
      %vm11569 = vcmp.gt.f32.partialorder %v11470, 0.0
      %vm11570 = vcmp.gt.f32.partialorder %v11474, 0.0
      %vm11571 = vcmp.gt.f32.partialorder %v11476, 0.0
      %vm11572 = vcmp.gt.f32.partialorder %v11478, 0.0
      %vm11573 = vcmp.gt.f32.partialorder %v11480, 0.0
      %vm11574 = vcmp.gt.f32.partialorder %v11484, 0.0
      %vm11575 = vcmp.gt.f32.partialorder %v11486, 0.0
      %vm11576 = vcmp.gt.f32.partialorder %v11488, 0.0
      %vm11577 = vcmp.gt.f32.partialorder %v11490, 0.0
      %vm11578 = vcmp.gt.f32.partialorder %v11494, 0.0
      %vm11579 = vcmp.gt.f32.partialorder %v11496, 0.0
      %vm11580 = vcmp.gt.f32.partialorder %v11498, 0.0
      %vm11581 = vcmp.gt.f32.partialorder %v11500, 0.0
      %vm11582 = vcmp.gt.f32.partialorder %v11504, 0.0
      %vm11583 = vcmp.gt.f32.partialorder %v11506, 0.0
      %vm11584 = vcmp.gt.f32.partialorder %v11508, 0.0
      %vm11585 = vcmp.gt.f32.partialorder %v11510, 0.0
      %vm11586 = vcmp.gt.f32.partialorder %v11514, 0.0
      %vm11587 = vcmp.gt.f32.partialorder %v11516, 0.0
      %vm11588 = vcmp.gt.f32.partialorder %v11518, 0.0
      %vm11589 = vcmp.gt.f32.partialorder %v11520, 0.0
      %vm11590 = vcmp.gt.f32.partialorder %v11524, 0.0
      %vm11591 = vcmp.gt.f32.partialorder %v11526, 0.0
      %vm11592 = vcmp.gt.f32.partialorder %v11528, 0.0
      %vm11593 = vcmp.gt.f32.partialorder %v11530, 0.0
      %vm11594 = vcmp.gt.f32.partialorder %v11534, 0.0
      %vm11595 = vcmp.gt.f32.partialorder %v11536, 0.0
      %vm11596 = vcmp.gt.f32.partialorder %v11538, 0.0
      %vm11597 = vcmp.gt.f32.partialorder %v11540, 0.0
      %vm11598 = vcmp.gt.f32.partialorder %v11544, 0.0
      %vm11599 = vcmp.gt.f32.partialorder %v11546, 0.0
      %v11600 = vmin.f32 %v11424, 0.0
      %v11601 = vmin.f32 %v11426, 0.0
      %v11602 = vmin.f32 %v11428, 0.0
      %v11603 = vmin.f32 %v11430, 0.0
      %v11604 = vmin.f32 %v11434, 0.0
      %v11605 = vmin.f32 %v11436, 0.0
      %v11606 = vmin.f32 %v11438, 0.0
      %v11607 = vmin.f32 %v11440, 0.0
      %v11608 = vmin.f32 %v11444, 0.0
      %v11609 = vmin.f32 %v11446, 0.0
      %v11610 = vmin.f32 %v11448, 0.0
      %v11611 = vmin.f32 %v11450, 0.0
      %v11612 = vmin.f32 %v11454, 0.0
      %v11613 = vmin.f32 %v11456, 0.0
      %v11614 = vmin.f32 %v11458, 0.0
      %v11615 = vmin.f32 %v11460, 0.0
      %v11616 = vmin.f32 %v11464, 0.0
      %v11617 = vmin.f32 %v11466, 0.0
      %v11618 = vmin.f32 %v11468, 0.0
      %v11619 = vmin.f32 %v11470, 0.0
      %v11620 = vmin.f32 %v11474, 0.0
      %v11621 = vmin.f32 %v11476, 0.0
      %v11622 = vmin.f32 %v11478, 0.0
      %v11623 = vmin.f32 %v11480, 0.0
      %v11624 = vmin.f32 %v11484, 0.0
      %v11625 = vmin.f32 %v11486, 0.0
      %v11626 = vmin.f32 %v11488, 0.0
      %v11627 = vmin.f32 %v11490, 0.0
      %v11628 = vmin.f32 %v11494, 0.0
      %v11629 = vmin.f32 %v11496, 0.0
      %v11630 = vmin.f32 %v11498, 0.0
      %v11631 = vmin.f32 %v11500, 0.0
      %v11632 = vmin.f32 %v11504, 0.0
      %v11633 = vmin.f32 %v11506, 0.0
      %v11634 = vmin.f32 %v11508, 0.0
      %v11635 = vmin.f32 %v11510, 0.0
      %v11636 = vmin.f32 %v11514, 0.0
      %v11637 = vmin.f32 %v11516, 0.0
      %v11638 = vmin.f32 %v11518, 0.0
      %v11639 = vmin.f32 %v11520, 0.0
      %v11640 = vmin.f32 %v11524, 0.0
      %v11641 = vmin.f32 %v11526, 0.0
      %v11642 = vmin.f32 %v11528, 0.0
      %v11643 = vmin.f32 %v11530, 0.0
      %v11644 = vmin.f32 %v11534, 0.0
      %v11645 = vmin.f32 %v11536, 0.0
      %v11646 = vmin.f32 %v11538, 0.0
      %v11647 = vmin.f32 %v11540, 0.0
      %v11648 = vmin.f32 %v11544, 0.0
      %v11649 = vmin.f32 %v11546, 0.0
      %v11650 = vmul.f32 %v11600, 1.442695
      %v11651 = vpow.pop %v11650
      %v11652 = vmul.f32 %v11601, 1.442695
      %v11653 = vpow.pop %v11652
      %v11654 = vmul.f32 %v11602, 1.442695
      %v11655 = vpow.pop %v11654
      %v11656 = vmul.f32 %v11603, 1.442695
      %v11657 = vpow.pop %v11656
      %v11658 = vmul.f32 %v11604, 1.442695
      %v11659 = vpow.pop %v11658
      %v11660 = vmul.f32 %v11605, 1.442695
      %v11661 = vpow.pop %v11660
      %v11662 = vmul.f32 %v11606, 1.442695
      %v11663 = vpow.pop %v11662
      %v11664 = vmul.f32 %v11607, 1.442695
      %v11665 = vpow.pop %v11664
      %v11666 = vmul.f32 %v11608, 1.442695
      %v11667 = vpow.pop %v11666
      %v11668 = vmul.f32 %v11609, 1.442695
      %v11669 = vpow.pop %v11668
      %v11670 = vmul.f32 %v11610, 1.442695
      %v11671 = vpow.pop %v11670
      %v11672 = vmul.f32 %v11611, 1.442695
      %v11673 = vpow.pop %v11672
      %v11674 = vmul.f32 %v11612, 1.442695
      %v11675 = vpow.pop %v11674
      %v11676 = vmul.f32 %v11613, 1.442695
      %v11677 = vpow.pop %v11676
      %v11678 = vmul.f32 %v11614, 1.442695
      %v11679 = vpow.pop %v11678
      %v11680 = vmul.f32 %v11615, 1.442695
      %v11681 = vpow.pop %v11680
      %v11682 = vmul.f32 %v11616, 1.442695
      %v11683 = vpow.pop %v11682
      %v11684 = vmul.f32 %v11617, 1.442695
      %v11685 = vpow.pop %v11684
      %v11686 = vmul.f32 %v11618, 1.442695
      %v11687 = vpow.pop %v11686
      %v11688 = vmul.f32 %v11619, 1.442695
      %v11689 = vpow.pop %v11688
      %v11690 = vmul.f32 %v11620, 1.442695
      %v11691 = vpow.pop %v11690
      %v11692 = vmul.f32 %v11621, 1.442695
      %v11693 = vpow.pop %v11692
      %v11694 = vmul.f32 %v11622, 1.442695
      %v11695 = vpow.pop %v11694
      %v11696 = vmul.f32 %v11623, 1.442695
      %v11697 = vpow.pop %v11696
      %v11698 = vmul.f32 %v11624, 1.442695
      %v11699 = vpow.pop %v11698
      %v11700 = vmul.f32 %v11625, 1.442695
      %v11701 = vpow.pop %v11700
      %v11702 = vmul.f32 %v11626, 1.442695
      %v11703 = vpow.pop %v11702
      %v11704 = vmul.f32 %v11627, 1.442695
      %v11705 = vpow.pop %v11704
      %v11706 = vmul.f32 %v11628, 1.442695
      %v11707 = vpow.pop %v11706
      %v11708 = vmul.f32 %v11629, 1.442695
      %v11709 = vpow.pop %v11708
      %v11710 = vmul.f32 %v11630, 1.442695
      %v11711 = vpow.pop %v11710
      %v11712 = vmul.f32 %v11631, 1.442695
      %v11713 = vpow.pop %v11712
      %v11714 = vmul.f32 %v11632, 1.442695
      %v11715 = vpow.pop %v11714
      %v11716 = vmul.f32 %v11633, 1.442695
      %v11717 = vpow.pop %v11716
      %v11718 = vmul.f32 %v11634, 1.442695
      %v11719 = vpow.pop %v11718
      %v11720 = vmul.f32 %v11635, 1.442695
      %v11721 = vpow.pop %v11720
      %v11722 = vmul.f32 %v11636, 1.442695
      %v11723 = vpow.pop %v11722
      %v11724 = vmul.f32 %v11637, 1.442695
      %v11725 = vpow.pop %v11724
      %v11726 = vmul.f32 %v11638, 1.442695
      %v11727 = vpow.pop %v11726
      %v11728 = vmul.f32 %v11639, 1.442695
      %v11729 = vpow.pop %v11728
      %v11730 = vmul.f32 %v11640, 1.442695
      %v11731 = vpow.pop %v11730
      %v11732 = vmul.f32 %v11641, 1.442695
      %v11733 = vpow.pop %v11732
      %v11734 = vmul.f32 %v11642, 1.442695
      %v11735 = vpow.pop %v11734
      %v11736 = vmul.f32 %v11643, 1.442695
      %v11737 = vpow.pop %v11736
      %v11738 = vmul.f32 %v11644, 1.442695
      %v11739 = vpow.pop %v11738
      %v11740 = vmul.f32 %v11645, 1.442695
      %v11741 = vpow.pop %v11740
      %v11742 = vmul.f32 %v11646, 1.442695
      %v11743 = vpow.pop %v11742
      %v11744 = vmul.f32 %v11647, 1.442695
      %v11745 = vpow.pop %v11744
      %v11746 = vmul.f32 %v11648, 1.442695
      %v11747 = vpow.pop %v11746
      %v11748 = vmul.f32 %v11649, 1.442695
      %v11749 = vpow.pop %v11748
      %v11750 = vsub.f32 %v11651, 1.0
      %v11751 = vsub.f32 %v11653, 1.0
      %v11752 = vsub.f32 %v11655, 1.0
      %v11753 = vsub.f32 %v11657, 1.0
      %v11754 = vsub.f32 %v11659, 1.0
      %v11755 = vsub.f32 %v11661, 1.0
      %v11756 = vsub.f32 %v11663, 1.0
      %v11757 = vsub.f32 %v11665, 1.0
      %v11758 = vsub.f32 %v11667, 1.0
      %v11759 = vsub.f32 %v11669, 1.0
      %v11760 = vsub.f32 %v11671, 1.0
      %v11761 = vsub.f32 %v11673, 1.0
      %v11762 = vsub.f32 %v11675, 1.0
      %v11763 = vsub.f32 %v11677, 1.0
      %v11764 = vsub.f32 %v11679, 1.0
      %v11765 = vsub.f32 %v11681, 1.0
      %v11766 = vsub.f32 %v11683, 1.0
      %v11767 = vsub.f32 %v11685, 1.0
      %v11768 = vsub.f32 %v11687, 1.0
      %v11769 = vsub.f32 %v11689, 1.0
      %v11770 = vsub.f32 %v11691, 1.0
      %v11771 = vsub.f32 %v11693, 1.0
      %v11772 = vsub.f32 %v11695, 1.0
      %v11773 = vsub.f32 %v11697, 1.0
      %v11774 = vsub.f32 %v11699, 1.0
      %v11775 = vsub.f32 %v11701, 1.0
      %v11776 = vsub.f32 %v11703, 1.0
      %v11777 = vsub.f32 %v11705, 1.0
      %v11778 = vsub.f32 %v11707, 1.0
      %v11779 = vsub.f32 %v11709, 1.0
      %v11780 = vsub.f32 %v11711, 1.0
      %v11781 = vsub.f32 %v11713, 1.0
      %v11782 = vsub.f32 %v11715, 1.0
      %v11783 = vsub.f32 %v11717, 1.0
      %v11784 = vsub.f32 %v11719, 1.0
      %v11785 = vsub.f32 %v11721, 1.0
      %v11786 = vsub.f32 %v11723, 1.0
      %v11787 = vsub.f32 %v11725, 1.0
      %v11788 = vsub.f32 %v11727, 1.0
      %v11789 = vsub.f32 %v11729, 1.0
      %v11790 = vsub.f32 %v11731, 1.0
      %v11791 = vsub.f32 %v11733, 1.0
      %v11792 = vsub.f32 %v11735, 1.0
      %v11793 = vsub.f32 %v11737, 1.0
      %v11794 = vsub.f32 %v11739, 1.0
      %v11795 = vsub.f32 %v11741, 1.0
      %v11796 = vsub.f32 %v11743, 1.0
      %v11797 = vsub.f32 %v11745, 1.0
      %v11798 = vsub.f32 %v11747, 1.0
      %v11799 = vsub.f32 %v11749, 1.0
      %v11800 = vsel %vm11550, %v11424, %v11750
      %v11801 = vsel %vm11551, %v11426, %v11751
      %v11802 = vsel %vm11552, %v11428, %v11752
      %v11803 = vsel %vm11553, %v11430, %v11753
      %v11804 = vsel %vm11554, %v11434, %v11754
      %v11805 = vsel %vm11555, %v11436, %v11755
      %v11806 = vsel %vm11556, %v11438, %v11756
      %v11807 = vsel %vm11557, %v11440, %v11757
      %v11808 = vsel %vm11558, %v11444, %v11758
      %v11809 = vsel %vm11559, %v11446, %v11759
      %v11810 = vsel %vm11560, %v11448, %v11760
      %v11811 = vsel %vm11561, %v11450, %v11761
      %v11812 = vsel %vm11562, %v11454, %v11762
      %v11813 = vsel %vm11563, %v11456, %v11763
      %v11814 = vsel %vm11564, %v11458, %v11764
      %v11815 = vsel %vm11565, %v11460, %v11765
      %v11816 = vsel %vm11566, %v11464, %v11766
      %v11817 = vsel %vm11567, %v11466, %v11767
      %v11818 = vsel %vm11568, %v11468, %v11768
      %v11819 = vsel %vm11569, %v11470, %v11769
      %v11820 = vsel %vm11570, %v11474, %v11770
      %v11821 = vsel %vm11571, %v11476, %v11771
      %v11822 = vsel %vm11572, %v11478, %v11772
      %v11823 = vsel %vm11573, %v11480, %v11773
      %v11824 = vsel %vm11574, %v11484, %v11774
      %v11825 = vsel %vm11575, %v11486, %v11775
      %v11826 = vsel %vm11576, %v11488, %v11776
      %v11827 = vsel %vm11577, %v11490, %v11777
      %v11828 = vsel %vm11578, %v11494, %v11778
      %v11829 = vsel %vm11579, %v11496, %v11779
      %v11830 = vsel %vm11580, %v11498, %v11780
      %v11831 = vsel %vm11581, %v11500, %v11781
      %v11832 = vsel %vm11582, %v11504, %v11782
      %v11833 = vsel %vm11583, %v11506, %v11783
      %v11834 = vsel %vm11584, %v11508, %v11784
      %v11835 = vsel %vm11585, %v11510, %v11785
      %v11836 = vsel %vm11586, %v11514, %v11786
      %v11837 = vsel %vm11587, %v11516, %v11787
      %v11838 = vsel %vm11588, %v11518, %v11788
      %v11839 = vsel %vm11589, %v11520, %v11789
      %v11840 = vsel %vm11590, %v11524, %v11790
      %v11841 = vsel %vm11591, %v11526, %v11791
      %v11842 = vsel %vm11592, %v11528, %v11792
      %v11843 = vsel %vm11593, %v11530, %v11793
      %v11844 = vsel %vm11594, %v11534, %v11794
      %v11845 = vsel %vm11595, %v11536, %v11795
      %v11846 = vsel %vm11596, %v11538, %v11796
      %v11847 = vsel %vm11597, %v11540, %v11797
      %v11848 = vsel %vm11598, %v11544, %v11798
      %v11849 = vsel %vm11599, %v11546, %v11799
      %v11850 = vadd.f32 %v11800, %v11801
      %v11851 = vadd.f32 %v11802, %v11803
      %v11852 = vadd.f32 %v11804, %v11805
      %v11853 = vadd.f32 %v11806, %v11807
      %v11854 = vadd.f32 %v11808, %v11809
      %v11855 = vadd.f32 %v11810, %v11811
      %v11856 = vadd.f32 %v11812, %v11813
      %v11857 = vadd.f32 %v11814, %v11815
      %v11858 = vadd.f32 %v11816, %v11817
      %v11859 = vadd.f32 %v11818, %v11819
      %v11860 = vadd.f32 %v11820, %v11821
      %v11861 = vadd.f32 %v11822, %v11823
      %v11862 = vadd.f32 %v11824, %v11825
      %v11863 = vadd.f32 %v11826, %v11827
      %v11864 = vadd.f32 %v11828, %v11829
      %v11865 = vadd.f32 %v11830, %v11831
      %v11866 = vadd.f32 %v11832, %v11833
      %v11867 = vadd.f32 %v11834, %v11835
      %v11868 = vadd.f32 %v11836, %v11837
      %v11869 = vadd.f32 %v11838, %v11839
      %v11870 = vadd.f32 %v11840, %v11841
      %v11871 = vadd.f32 %v11842, %v11843
      %v11872 = vadd.f32 %v11844, %v11845
      %v11873 = vadd.f32 %v11846, %v11847
      %v11874 = vadd.f32 %v11848, %v11849
      %v11875 = vmul.f32 %v11850, %v447
      %v11876 = vmul.f32 %v11851, %v447
      %v11877 = vmul.f32 %v11852, %v447
      %v11878 = vmul.f32 %v11853, %v447
      %v11879 = vmul.f32 %v11854, %v447
      %v11880 = vmul.f32 %v11855, %v447
      %v11881 = vmul.f32 %v11856, %v447
      %v11882 = vmul.f32 %v11857, %v447
      %v11883 = vmul.f32 %v11858, %v447
      %v11884 = vmul.f32 %v11859, %v447
      %v11885 = vmul.f32 %v11860, %v447
      %v11886 = vmul.f32 %v11861, %v447
      %v11887 = vmul.f32 %v11862, %v447
      %v11888 = vmul.f32 %v11863, %v447
      %v11889 = vmul.f32 %v11864, %v447
      %v11890 = vmul.f32 %v11865, %v447
      %v11891 = vmul.f32 %v11866, %v447
      %v11892 = vmul.f32 %v11867, %v447
      %v11893 = vmul.f32 %v11868, %v447
      %v11894 = vmul.f32 %v11869, %v447
      %v11895 = vmul.f32 %v11870, %v447
      %v11896 = vmul.f32 %v11871, %v447
      %v11897 = vmul.f32 %v11872, %v447
      %v11898 = vmul.f32 %v11873, %v447
      %v11899 = vmul.f32 %v11874, %v447
      %11900 = vst [vmem:[%s442] sm:$0xff] %v11875
      %11901 = vst [vmem:[%s442 + $0x8] sm:$0xff] %v11876
      %11902 = vst [vmem:[%s442 + $0x10] sm:$0xff] %v11877
      %11903 = vst [vmem:[%s442 + $0x18] sm:$0xff] %v11878
      %11904 = vst [vmem:[%s442 + $0x20] sm:$0xff] %v11879
      %11905 = vst [vmem:[%s442 + $0x28] sm:$0xff] %v11880
      %11906 = vst [vmem:[%s442 + $0x30] sm:$0xff] %v11881
      %11907 = vst [vmem:[%s442 + $0x38] sm:$0xff] %v11882
      %11908 = vst [vmem:[%s442 + $0x40] sm:$0xff] %v11883
      %11909 = vst [vmem:[%s442 + $0x48] sm:$0xff] %v11884
      %11910 = vst [vmem:[%s442 + $0x50] sm:$0xff] %v11885
      %11911 = vst [vmem:[%s442 + $0x58] sm:$0xff] %v11886
      %11912 = vst [vmem:[%s442 + $0x60] sm:$0xff] %v11887
      %11913 = vst [vmem:[%s442 + $0x68] sm:$0xff] %v11888
      %11914 = vst [vmem:[%s442 + $0x70] sm:$0xff] %v11889
      %11915 = vst [vmem:[%s442 + $0x78] sm:$0xff] %v11890
      %11916 = vst [vmem:[%s442 + $0x80] sm:$0xff] %v11891
      %11917 = vst [vmem:[%s442 + $0x88] sm:$0xff] %v11892
      %11918 = vst [vmem:[%s442 + $0x90] sm:$0xff] %v11893
      %11919 = vst [vmem:[%s442 + $0x98] sm:$0xff] %v11894
      %11920 = vst [vmem:[%s442 + $0xa0] sm:$0xff] %v11895
      %11921 = vst [vmem:[%s442 + $0xa8] sm:$0xff] %v11896
      %11922 = vst [vmem:[%s442 + $0xb0] sm:$0xff] %v11897
      %11923 = vst [vmem:[%s442 + $0xb8] sm:$0xff] %v11898
      %11924 = vst [vmem:[%s442 + $0xc0] sm:$0xff] %v11899
      %p11925 = scmp.lt.s32.totalorder %s26, 1
      %s11926 = scalar_select %p11925, %s26, 1
      %s11927 = smul.addr %s11926, 25
      %s11928 = smul.addr %s11927, 8
      %s11929 = scalar_lea.vmem %s13, %s11928
      // Predicated region
      $region73: #{deep4net_forward.1} parent=71 // pred_check
        %p11930 = pneg %p322
      $region74: #{deep4net_forward.1} parent=71 // pred_check_branch
        %11932 = sbr.rel (%p11930) target = $region76
      $region75: #{deep4net_forward.1} parent=71 // pred_region
        _
      $region76: #{deep4net_forward.1} parent=71 // pred_fallthru
        _
    $region72: #{deep4net_forward.1} parent=5 // pred_fallthru
      _
    %p11933 = scmp.le.s32.totalorder 2, %s21
    // Predicated region
    $region77: #{deep4net_forward.1} parent=5 // pred_check
      %p11934 = pneg %p11933
    $region78: #{deep4net_forward.1} parent=5 // pred_check_branch
      %11936 = sbr.rel (%p11934) target = $region80
    $region79: #{deep4net_forward.1} parent=5 // pred_region
      %s11937 = ssub.s32 %s21, 2
      // Predicated region
      $region81: #{deep4net_forward.1} parent=79 // pred_check
        %p11938 = pneg %p328
      $region82: #{deep4net_forward.1} parent=79 // pred_check_branch
        %11940 = sbr.rel (%p11938) target = $region84
      $region83: #{deep4net_forward.1} parent=79 // pred_region
        %p11941 = scmp.lt.s32.totalorder %s27, 1
        %s11942 = scalar_select %p11941, %s27, 1
        %s11943 = smul.addr %s11942, 25
        %s11944 = smul.addr %s11943, 8
        %s11945 = scalar_lea.vmem %s13, %s11944
      $region84: #{deep4net_forward.1} parent=79 // pred_fallthru
        _
    $region80: #{deep4net_forward.1} parent=5 // pred_fallthru
      _
  $region6: #{deep4net_forward.1} parent=0 // loop_footer
    %s25 = sadd.s32 1, %s21
  $region7: #{deep4net_forward.1} parent=0 // loop_footer_branch
    %20 = sbr.rel target = $region3
  $region8: #{deep4net_forward.1} parent=0 // loop_exit
    _

</llo_original>
